<compile_context>
chip_gen: v7x
topology: tpu7x:2x2x1
jax: 0.10.0
libtpu: 0.0.40
codegen_flags: <defaults>
</compile_context>

<pallas_src>
import functools
import numpy as np

import jax
import jax.numpy as jnp
from jax.experimental import pallas as pl
from jax.experimental.pallas import tpu as pltpu

# ---------------- model hyper-parameters (small synthetic SAM) ----------------
B_DEF = 2
IMG = 32            # input image spatial size
IN_CH = 3
PATCH = 8           # ViT patch size  -> 4x4 token grid
HP = IMG // PATCH   # 4
D_ENC = 32          # ViT encoder width
ENC_HEADS = 2
ENC_MLP = 64
C_EMB = 32          # prompt / mask-decoder transformer dim
EMB_HW = HP         # image embedding spatial size (4)
DEC_HEADS = 2
DEC_MLP = 64
NUM_MASK_TOKENS = 4

N_IMG_TOK = HP * HP                      # 16 image tokens per batch element
N_DEC_TOK = NUM_MASK_TOKENS + 1 + 2      # 7 decoder tokens per batch element
LANE = 128
MASK_NEG = -1e9

_ATTN_NAMES = ("self_attn", "cross_t2i", "cross_i2t", "final_attn")
_NORM_NAMES = ("norm1", "norm2", "norm3", "norm4", "norm_final")


# ============================ host-side constant builders ============================
def _fourier_pe_np(coords01, gauss):
    """SAM PositionEmbeddingRandom._pe_encoding on coords in [0,1] (numpy, build-time)."""
    c = 2.0 * coords01 - 1.0
    c = c @ gauss
    c = 2.0 * np.pi * c
    return np.concatenate([np.sin(c), np.cos(c)], axis=-1)


def _dense_pe_np(gauss):
    """prompt_encoder.get_dense_pe() flattened to [16, C] (numpy, build-time)."""
    h = w = EMB_HW
    ys = (np.arange(h, dtype=np.float32) + 0.5) / h
    xs = (np.arange(w, dtype=np.float32) + 0.5) / w
    X, Y = np.meshgrid(xs, ys, indexing="xy")
    grid = np.stack([X, Y], axis=-1)                 # [h, w, 2] = (x, y)
    return _fourier_pe_np(grid, gauss).reshape(h * w, C_EMB).astype(np.float32)


def _resize_matrix_np(in_size, out_size):
    """Bilinear (align_corners=False) 1-D resize matrix [out, in]."""
    R = np.zeros((out_size, in_size), np.float32)
    scale = in_size / out_size
    for i in range(out_size):
        src = max((i + 0.5) * scale - 0.5, 0.0)
        i0 = min(int(np.floor(src)), in_size - 1)
        i1 = min(i0 + 1, in_size - 1)
        w1 = src - i0
        R[i, i0] += 1.0 - w1
        R[i, i1] += w1
    return R


def _build_resize_matrix(out_h, out_w):
    """Combined (ConvT-scatter + bilinear) matrix, rows ordered (d1*4+d2)*16 + p."""
    low = 4 * EMB_HW                        # 16 (low-res mask size)
    n_src = EMB_HW * EMB_HW                 # 16 source pixels
    Rh = _resize_matrix_np(low, out_h)      # [out_h, 16]
    Rw = _resize_matrix_np(low, out_w)      # [out_w, 16]
    R = np.zeros((16 * n_src, out_h * out_w), np.float32)
    for d1 in range(4):
        d1i, d1j = d1 // 2, d1 % 2
        for d2 in range(4):
            d2i, d2j = d2 // 2, d2 % 2
            s = d1 * 4 + d2
            ysub = 2 * d1i + d2i
            xsub = 2 * d1j + d2j
            for p_ in range(n_src):
                i, j = p_ // EMB_HW, p_ % EMB_HW
                Y = 4 * i + ysub
                X = 4 * j + xsub
                R[s * n_src + p_, :] = np.outer(Rh[:, Y], Rw[:, X]).reshape(-1)
    return R


def _permute_resize_rows(R):
    """Kernel produces mask-vector columns ordered (d2, d1, p); permute R rows to match."""
    n_src = EMB_HW * EMB_HW
    perm = np.empty(16 * n_src, np.int32)
    for d1 in range(4):
        for d2 in range(4):
            for p in range(n_src):
                perm[(d2 * 4 + d1) * n_src + p] = (d1 * 4 + d2) * n_src + p
    return R[perm]


def _block_mask_np(B, Tq, Tk):
    """Block-diagonal batch bias: 0 within a batch element, -1e9 across batch elements."""
    rb = np.repeat(np.arange(B), Tq)
    cb = np.repeat(np.arange(B), Tk)
    return np.where(rb[:, None] == cb[None, :], 0.0, MASK_NEG).astype(np.float32)


# ============================ weight slab packing (host-side, once) ============================
def build_packed(params, B, out_h=IMG, out_w=IMG):
    """Pack every weight / constant into one [R, 128] f32 slab + a bf16 resize matrix."""
    to_np = lambda t: jax.tree_util.tree_map(lambda a: np.asarray(a, np.float32), t)
    e, pr, d = to_np(params["enc"]), to_np(params["prompt"]), to_np(params["dec"])

    items = []

    def add(name, a):
        a = np.asarray(a, np.float32)
        if a.ndim == 1:
            a = a.reshape(1, -1)
        items.append((name, a))

    # ---- image encoder ----
    add("patch_w", e["patch_w"]); add("patch_b", e["patch_b"])
    add("pos_embed_t", np.tile(e["pos_embed"].reshape(N_IMG_TOK, D_ENC), (B, 1)))
    add("ln1_g", e["ln1_g"]); add("ln1_b", e["ln1_b"])
    add("enc_attn_wqkv", e["attn"]["wqkv"]); add("enc_attn_bqkv", e["attn"]["bqkv"])
    add("enc_attn_wo", e["attn"]["wo"]); add("enc_attn_bo", e["attn"]["bo"])
    add("ln2_g", e["ln2_g"]); add("ln2_b", e["ln2_b"])
    add("enc_mlp_w1", e["mlp_w1"]); add("enc_mlp_b1", e["mlp_b1"])
    add("enc_mlp_w2", e["mlp_w2"]); add("enc_mlp_b2", e["mlp_b2"])
    add("neck_w", e["neck_w"])
    add("neck_ln_g", e["neck_ln_g"]); add("neck_ln_b", e["neck_ln_b"])

    # ---- prompt encoder constants (dense part) ----
    add("no_mask_embed", pr["no_mask_embed"])
    add("image_pe_t", np.tile(_dense_pe_np(pr["pe_gauss"]), (B, 1)))

    # ---- decoder token setup (constant part; sparse corners scattered in-kernel) ----
    # token order per batch: [mask0..3, iou, corner0, corner1] -- permutation of the PyTorch
    # order; attention is permutation-equivariant, mask token 0 ends up at row b*7.
    out_tokens = np.concatenate([d["mask_tokens"], d["iou_token"]], axis=0)     # [5, C]
    tokens_base = np.zeros((B * N_DEC_TOK, C_EMB), np.float32)
    sp_scatter = np.zeros((B * N_DEC_TOK, B * 2), np.float32)
    tok0_sel = np.zeros((B, B * N_DEC_TOK), np.float32)
    for b in range(B):
        tokens_base[b * N_DEC_TOK:b * N_DEC_TOK + 5] = out_tokens
        sp_scatter[b * N_DEC_TOK + 5, b * 2 + 0] = 1.0
        sp_scatter[b * N_DEC_TOK + 6, b * 2 + 1] = 1.0
        tok0_sel[b, b * N_DEC_TOK] = 1.0
    add("tokens_base", tokens_base)
    add("sp_scatter", sp_scatter)
    add("tok0_sel", tok0_sel)

    # ---- block-diagonal batch masks (attention stays per-batch with stacked rows) ----
    add("mask_enc", _block_mask_np(B, N_IMG_TOK, N_IMG_TOK))
    add("mask_self", _block_mask_np(B, N_DEC_TOK, N_DEC_TOK))
    add("mask_t2i", _block_mask_np(B, N_DEC_TOK, N_IMG_TOK))
    add("mask_i2t", _block_mask_np(B, N_IMG_TOK, N_DEC_TOK))

    # ---- decoder attention / norms / mlp ----
    for name in _ATTN_NAMES:
        a = d[name]
        add(f"{name}_wqkv", a["wqkv"]); add(f"{name}_bqkv", a["bqkv"])
        add(f"{name}_wo", a["wo"]); add(f"{name}_bo", a["bo"])
    for name in _NORM_NAMES:
        g, b = d[name]
        add(f"{name}_g", g); add(f"{name}_b", b)
    add("dec_mlp_w1", d["mlp_w1"]); add("dec_mlp_b1", d["mlp_b1"])
    add("dec_mlp_w2", d["mlp_w2"]); add("dec_mlp_b2", d["mlp_b2"])

    # ---- output upscaling + hyper MLP 0 (multimask_output=False discards heads 1..3) ----
    add("up1_w", d["up1_w"]); add("up1_b", d["up1_b"])
    add("up_ln_g", d["up_ln_g"]); add("up_ln_b", d["up_ln_b"])
    add("up2_w", d["up2_w"]); add("up2_b", d["up2_b"])
    hyp = d["hyper"][0]
    add("hyp_w1", hyp["w1"]); add("hyp_b1", hyp["b1"])
    add("hyp_w2", hyp["w2"]); add("hyp_b2", hyp["b2"])
    add("hyp_w3", hyp["w3"]); add("hyp_b3", hyp["b3"])

    # ---- pack into one [R, 128] slab, 8-row-aligned static offsets ----
    offsets = {}
    blocks = []
    row = 0
    for name, a in items:
        r, c = a.shape
        assert c <= LANE, (name, a.shape)
        rp = -(-r // 8) * 8
        buf = np.zeros((rp, LANE), np.float32)
        buf[:r, :c] = a
        offsets[name] = (row, r, c)
        blocks.append(buf)
        row += rp
    slab = np.concatenate(blocks, axis=0)

    resize = _permute_resize_rows(_build_resize_matrix(out_h, out_w))   # [256, H*W]

    packed = dict(
        slab=jnp.asarray(slab, jnp.float32),
        resize=jnp.asarray(resize, jnp.bfloat16),     # bf16 MXU input; accumulation stays f32
        pe_gauss=jnp.asarray(pr["pe_gauss"], jnp.float32),
        point_embed=jnp.asarray(pr["point_embed"], jnp.float32),
    )
    return packed, offsets


# ============================ runtime prompt glue (tiny trig, outside the kernel) ============================
def _corner_embeddings(pe_gauss, point_embed, box_flat, B):
    """Box corners -> sparse prompt embeddings [B*2, C]."""
    boxes = box_flat.astype(jnp.float32) + 0.5
    coords = boxes.reshape(B, 2, 2) / jnp.array([float(IMG), float(IMG)], jnp.float32)
    c = 2.0 * coords - 1.0
    c = c @ pe_gauss
    c = 2.0 * np.pi * c
    pe = jnp.concatenate([jnp.sin(c), jnp.cos(c)], axis=-1)            # [B, 2, C]
    pe = pe + point_embed[2:4][None, :, :]                             # corner0 += pe[2], corner1 += pe[3]
    return pe.reshape(B * 2, C_EMB)


# ============================ the fused Pallas kernel ============================
def _make_kernel(offsets, B):
    def kernel(patches_ref, sparse_ref, slab_ref, resize_ref, out_ref):
        def W(name):
            off, r, c = offsets[name]
            return slab_ref[off:off + r, 0:c]

        def mm(a, b):                                    # a @ b
            return jax.lax.dot_general(a, b, (((1,), (0,)), ((), ())),
                                       preferred_element_type=jnp.float32)

        def mm_nt(a, b):                                 # a @ b.T
            return jax.lax.dot_general(a, b, (((1,), (1,)), ((), ())),
                                       preferred_element_type=jnp.float32)

        def gelu(x):
            # TODO(synk): tanh-approx GELU; PyTorch nn.GELU default is exact erf.
            return jax.nn.gelu(x, approximate=True)

        def layer_norm(x, g, b, eps):
            mu = jnp.mean(x, axis=-1, keepdims=True)
            var = jnp.mean((x - mu) ** 2, axis=-1, keepdims=True)
            return (x - mu) * jax.lax.rsqrt(var + eps) * g + b

        def softmax_rows(s):
            m = jnp.max(s, axis=-1, keepdims=True)
            p = jnp.exp(s - m)
            return p * pl.reciprocal(jnp.sum(p, axis=-1, keepdims=True), approx=True)

        def attention(prefix, q_in, k_in, v_in, num_heads, mask):
            """Rows of q_in / k_in hold all B batch elements stacked; `mask` is the
            block-diagonal batch bias, so softmax never mixes batch elements."""
            d_int = offsets[prefix + "_wqkv"][2] // 3
            wqkv = W(prefix + "_wqkv")
            bqkv = W(prefix + "_bqkv")
            if (q_in is k_in) and (k_in is v_in):        # self-attention: fused QKV matmul
                qkv = mm(q_in, wqkv) + bqkv
                q = qkv[:, 0:d_int]
                k = qkv[:, d_int:2 * d_int]
                v = qkv[:, 2 * d_int:3 * d_int]
            else:                                        # cross-attention: distinct inputs
                q = mm(q_in, wqkv[:, 0:d_int]) + bqkv[:, 0:d_int]
                k = mm(k_in, wqkv[:, d_int:2 * d_int]) + bqkv[:, d_int:2 * d_int]
                v = mm(v_in, wqkv[:, 2 * d_int:3 * d_int]) + bqkv[:, 2 * d_int:3 * d_int]
            dh = d_int // num_heads
            scale = 1.0 / float(np.sqrt(dh))
            wo = W(prefix + "_wo")
            o = None
            for h in range(num_heads):                   # heads unrolled (tiny)
                sl = slice(h * dh, (h + 1) * dh)
                s = mm_nt(q[:, sl], k[:, sl]) * scale + mask
                p = softmax_rows(s)
                oh = mm(mm(p, v[:, sl]), wo[sl, :])      # accumulate through wo (no lane concat)
                o = oh if o is None else o + oh
            return o + W(prefix + "_bo")

        # ---------------- image encoder: both batch elements stacked on rows ----------------
        patches = patches_ref[...]                                        # [B*16, 192]
        t = mm(patches, W("patch_w")) + W("patch_b") + W("pos_embed_t")   # patch embed + pos

        h1 = layer_norm(t, W("ln1_g"), W("ln1_b"), 1e-6)
        t = t + attention("enc_attn", h1, h1, h1, ENC_HEADS, W("mask_enc"))
        h2 = layer_norm(t, W("ln2_g"), W("ln2_b"), 1e-6)
        mlp = gelu(mm(h2, W("enc_mlp_w1")) + W("enc_mlp_b1"))
        t = t + mm(mlp, W("enc_mlp_w2")) + W("enc_mlp_b2")

        # neck: 1x1 conv (no bias) + LayerNorm2d
        emb = layer_norm(mm(t, W("neck_w")), W("neck_ln_g"), W("neck_ln_b"), 1e-6)  # [B*16, 32]

        # ---------------- prompt (dense) + mask decoder ----------------
        sparse = sparse_ref[...]                                          # [B*2, 32]
        keys = emb + W("no_mask_embed")                                   # + dense no-mask embed
        kpe = W("image_pe_t")                                             # [B*16, 32]

        tokens = W("tokens_base") + mm(W("sp_scatter"), sparse)           # [B*7, 32]
        queries = tokens
        qpe = tokens

        # TwoWayAttentionBlock (depth=1, skip_first_layer_pe=True)
        queries = attention("self_attn", queries, queries, queries, DEC_HEADS, W("mask_self"))
        queries = layer_norm(queries, W("norm1_g"), W("norm1_b"), 1e-5)

        q = queries + qpe
        k = keys + kpe
        queries = queries + attention("cross_t2i", q, k, keys, DEC_HEADS, W("mask_t2i"))
        queries = layer_norm(queries, W("norm2_g"), W("norm2_b"), 1e-5)

        m = jnp.maximum(mm(queries, W("dec_mlp_w1")) + W("dec_mlp_b1"), 0.0)
        queries = queries + mm(m, W("dec_mlp_w2")) + W("dec_mlp_b2")
        queries = layer_norm(queries, W("norm3_g"), W("norm3_b"), 1e-5)

        q = queries + qpe
        k = keys + kpe
        keys = keys + attention("cross_i2t", k, q, queries, DEC_HEADS, W("mask_i2t"))
        keys = layer_norm(keys, W("norm4_g"), W("norm4_b"), 1e-5)

        # final token-to-image attention
        q = queries + qpe
        k = keys + kpe
        queries = queries + attention("final_attn", q, k, keys, DEC_HEADS, W("mask_t2i"))
        queries = layer_norm(queries, W("norm_final_g"), W("norm_final_b"), 1e-5)

        # hyper MLP on mask-token-0 of every batch element (selection matmul, no row gather).
        # TODO(synk): iou_prediction_head omitted -- its output is discarded by MedSAM.forward.
        t0 = mm(W("tok0_sel"), queries)                                   # [B, 32]
        z = jnp.maximum(mm(t0, W("hyp_w1")) + W("hyp_b1"), 0.0)
        z = jnp.maximum(mm(z, W("hyp_w2")) + W("hyp_b2"), 0.0)
        hyper0 = mm(z, W("hyp_w3")) + W("hyp_b3")                         # [B, c8]

        # output upscaling (ConvT2x2 -> LN2d -> GELU -> ConvT2x2 -> GELU) restructured as
        # row-stacked matmuls; hyper dot-product + (scatter + bilinear) resize fused on top.
        c4 = C_EMB // 4
        c8 = C_EMB // 8
        up1_w = W("up1_w")
        up2_w = W("up2_w")
        u1_parts = []
        for b in range(B):
            kb = keys[b * N_IMG_TOK:(b + 1) * N_IMG_TOK, :]               # [16, 32]
            for d1 in range(4):
                u1_parts.append(mm(kb, up1_w[:, d1 * c4:(d1 + 1) * c4]))
        U1 = jnp.concatenate(u1_parts, axis=0) + W("up1_b")               # [B*64, c4] rows (b,d1,p)
        U1 = gelu(layer_norm(U1, W("up_ln_g"), W("up_ln_b"), 1e-6))
        u2_parts = []
        for b in range(B):
            u1b = U1[b * 64:(b + 1) * 64, :]
            for d2 in range(4):
                u2_parts.append(mm(u1b, up2_w[:, d2 * c8:(d2 + 1) * c8]))
        U2 = gelu(jnp.concatenate(u2_parts, axis=0) + W("up2_b"))         # [B*256, c8] rows (b,d2,d1,p)

        m_rows = [mm_nt(hyper0[b:b + 1, :], U2[b * 256:(b + 1) * 256, :]) for b in range(B)]
        M = jnp.concatenate(m_rows, axis=0)                               # [B, 256]

        # final mask: one lane-dense matmul against the (row-permuted) resize matrix.
        out_ref[...] = mm(M.astype(jnp.bfloat16), resize_ref[...])        # [B, H*W]

    return kernel


# ============================ MedSAM forward ============================
def medsam_forward(packed, images_nchw, box, offsets):
    """MedSAM.forward: images NCHW [B,3,H,W], box [B,4] (xyxy) -> masks [B,1,H,W]."""
    B, Cin, H, Wd = images_nchw.shape
    assert H == IMG and Wd == IMG and Cin == IN_CH, (B, Cin, H, Wd)
    assert offsets["pos_embed_t"][1] == B * N_IMG_TOK, "slab was packed for a different batch size"
    Hp, Wp = H // PATCH, Wd // PATCH

    # --- glue: im2col patch extraction (input prep only), batch folded into rows ---
    x = jnp.transpose(images_nchw.astype(jnp.float32), (0, 2, 3, 1))      # NCHW -> NHWC
    patches = x.reshape(B, Hp, PATCH, Wp, PATCH, Cin).transpose(0, 1, 3, 5, 2, 4)
    patches = patches.reshape(B * Hp * Wp, Cin * PATCH * PATCH)           # [B*16, 192]

    # --- glue: prompt encoder box->Fourier corner embeddings (tiny trig) ---
    box = jnp.asarray(box, jnp.float32)
    if box.ndim == 2:
        box = box[:, None, :]                                             # mirrors box_torch[:, None, :]
    sparse = _corner_embeddings(packed["pe_gauss"], packed["point_embed"],
                                box.reshape(B, 4), B)                     # [B*2, C]

    kernel = _make_kernel(offsets, B)
    vmem = pl.BlockSpec(memory_space=pltpu.MemorySpace.VMEM)              # whole arrays, VMEM-resident
    out = pl.pallas_call(
        kernel,
        out_shape=jax.ShapeDtypeStruct((B, H * Wd), jnp.float32),
        in_specs=[vmem, vmem, vmem, vmem],
        out_specs=vmem,
    )(patches, sparse, packed["slab"], packed["resize"])

    return out.reshape(B, 1, H, Wd)


# ============================ deterministic parameter init ============================
def init_params(key):
    keys = iter(jax.random.split(key, 256))

    def nrm(shape, scale=0.02):
        return (scale * jax.random.normal(next(keys), shape, jnp.float32)).astype(jnp.float32)

    def zeros(shape):
        return jnp.zeros(shape, jnp.float32)

    def ones(shape):
        return jnp.ones(shape, jnp.float32)

    def attn_params(c, d_int):
        return dict(wqkv=nrm((c, 3 * d_int)), bqkv=zeros((3 * d_int,)),
                    wo=nrm((d_int, c)), bo=zeros((c,)))

    enc = dict(
        patch_w=nrm((IN_CH * PATCH * PATCH, D_ENC)), patch_b=zeros((D_ENC,)),
        pos_embed=nrm((1, HP, HP, D_ENC)),
        ln1_g=ones((D_ENC,)), ln1_b=zeros((D_ENC,)),
        attn=attn_params(D_ENC, D_ENC),
        ln2_g=ones((D_ENC,)), ln2_b=zeros((D_ENC,)),
        mlp_w1=nrm((D_ENC, ENC_MLP)), mlp_b1=zeros((ENC_MLP,)),
        mlp_w2=nrm((ENC_MLP, D_ENC)), mlp_b2=zeros((D_ENC,)),
        neck_w=nrm((D_ENC, C_EMB)),
        neck_ln_g=ones((C_EMB,)), neck_ln_b=zeros((C_EMB,)),
    )

    prompt = dict(
        pe_gauss=nrm((2, C_EMB // 2), scale=1.0),
        point_embed=nrm((4, C_EMB)),
        no_mask_embed=nrm((C_EMB,)),
    )

    c4, c8 = C_EMB // 4, C_EMB // 8
    dec = dict(
        iou_token=nrm((1, C_EMB)),
        mask_tokens=nrm((NUM_MASK_TOKENS, C_EMB)),
        self_attn=attn_params(C_EMB, C_EMB),
        cross_t2i=attn_params(C_EMB, C_EMB // 2),
        cross_i2t=attn_params(C_EMB, C_EMB // 2),
        final_attn=attn_params(C_EMB, C_EMB // 2),
        norm1=(ones((C_EMB,)), zeros((C_EMB,))),
        norm2=(ones((C_EMB,)), zeros((C_EMB,))),
        norm3=(ones((C_EMB,)), zeros((C_EMB,))),
        norm4=(ones((C_EMB,)), zeros((C_EMB,))),
        norm_final=(ones((C_EMB,)), zeros((C_EMB,))),
        mlp_w1=nrm((C_EMB, DEC_MLP)), mlp_b1=zeros((DEC_MLP,)),
        mlp_w2=nrm((DEC_MLP, C_EMB)), mlp_b2=zeros((C_EMB,)),
        # ConvTranspose2d(k=2, s=2) weights stored as [Cin, 4*Cout]; column = d*Cout + cout,
        # with d = 2*di + dj the position inside the 2x2 output window; per-channel bias.
        up1_w=nrm((C_EMB, 4 * c4)), up1_b=nrm((c4,)),
        up_ln_g=ones((c4,)), up_ln_b=zeros((c4,)),
        up2_w=nrm((c4, 4 * c8)), up2_b=nrm((c8,)),
        hyper=[dict(w1=nrm((C_EMB, C_EMB)), b1=zeros((C_EMB,)),
                    w2=nrm((C_EMB, C_EMB)), b2=zeros((C_EMB,)),
                    w3=nrm((C_EMB, c8)), b3=zeros((c8,)))
               for _ in range(NUM_MASK_TOKENS)],
    )

    return dict(enc=enc, prompt=prompt, dec=dec)


# ============================ main ============================
if __name__ == "__main__":
    key = jax.random.PRNGKey(0)
    kp, ki = jax.random.split(key)
    params = init_params(kp)

    images = jax.random.normal(ki, (B_DEF, IN_CH, IMG, IMG), jnp.float32)   # NCHW, PyTorch-style
    box = jnp.array([[4.0, 4.0, 24.0, 28.0],
                     [2.0, 6.0, 30.0, 20.0]], jnp.float32)                  # [B, 4] xyxy

    packed, offsets = build_packed(params, B_DEF)                           # host-side, once
    fwd = jax.jit(functools.partial(medsam_forward, offsets=offsets))
    out = fwd(packed, images, box)
    out = jax.block_until_ready(out)
    assert out.shape == (B_DEF, 1, IMG, IMG), out.shape
    assert bool(jnp.all(jnp.isfinite(out)))
    print("KERNEL_OK")
</pallas_src>

<mosaic_0001>
module attributes {stable_mosaic.version = 11 : i64} {
  func.func @kernel(%arg0: memref<32x192xf32, #tpu.memory_space<vmem>>, %arg1: memref<4x32xf32, #tpu.memory_space<vmem>>, %arg2: memref<1336x128xf32, #tpu.memory_space<vmem>>, %arg3: memref<256x1024xbf16, #tpu.memory_space<vmem>>, %arg4: memref<2x1024xf32, #tpu.memory_space<vmem>>) attributes {dimension_semantics = [], scalar_prefetch = 0 : i64, scratch_operands = 0 : i64, tpu.core_type = #tpu.core_type<tc>} {
    %c0 = arith.constant 0 : index
    %c0_0 = arith.constant 0 : index
    %0 = vector.load %arg0[%c0, %c0_0] : memref<32x192xf32, #tpu.memory_space<vmem>>, vector<32x192xf32>
    %c0_1 = arith.constant 0 : index
    %c0_2 = arith.constant 0 : index
    %1 = vector.load %arg2[%c0_1, %c0_2] : memref<1336x128xf32, #tpu.memory_space<vmem>>, vector<192x32xf32>
    %cst = arith.constant dense<0.000000e+00> : vector<32x32xf32>
    %2 = tpu.matmul %0, %1, %cst {dimension_numbers = #tpu.dot_dimension_numbers<[1], [0], [0], [1], [0, 0, 1, 1], [], []>} : vector<32x192xf32>, vector<192x32xf32>, vector<32x32xf32> -> vector<32x32xf32>
    %c192 = arith.constant 192 : index
    %c0_3 = arith.constant 0 : index
    %3 = vector.load %arg2[%c192, %c0_3] : memref<1336x128xf32, #tpu.memory_space<vmem>>, vector<1x32xf32>
    %4 = vector.broadcast %3 : vector<1x32xf32> to vector<32x32xf32>
    %5 = arith.addf %2, %4 : vector<32x32xf32>
    %c200 = arith.constant 200 : index
    %c0_4 = arith.constant 0 : index
    %6 = vector.load %arg2[%c200, %c0_4] : memref<1336x128xf32, #tpu.memory_space<vmem>>, vector<32x32xf32>
    %7 = arith.addf %5, %6 : vector<32x32xf32>
    %c232 = arith.constant 232 : index
    %c0_5 = arith.constant 0 : index
    %8 = vector.load %arg2[%c232, %c0_5] : memref<1336x128xf32, #tpu.memory_space<vmem>>, vector<1x32xf32>
    %c240 = arith.constant 240 : index
    %c0_6 = arith.constant 0 : index
    %9 = vector.load %arg2[%c240, %c0_6] : memref<1336x128xf32, #tpu.memory_space<vmem>>, vector<1x32xf32>
    %cst_7 = arith.constant dense<0.000000e+00> : vector<32xf32>
    %10 = vector.multi_reduction <add>, %7, %cst_7 [1] : vector<32x32xf32> to vector<32xf32>
    %11 = vector.shape_cast %10 : vector<32xf32> to vector<32x1xf32>
    %cst_8 = arith.constant 3.200000e+01 : f32
    %12 = vector.broadcast %cst_8 : f32 to vector<32x1xf32>
    %13 = arith.divf %11, %12 : vector<32x1xf32>
    %14 = vector.broadcast %13 : vector<32x1xf32> to vector<32x32xf32>
    %15 = arith.subf %7, %14 : vector<32x32xf32>
    %16 = arith.mulf %15, %15 : vector<32x32xf32>
    %cst_9 = arith.constant dense<0.000000e+00> : vector<32xf32>
    %17 = vector.multi_reduction <add>, %16, %cst_9 [1] : vector<32x32xf32> to vector<32xf32>
    %18 = vector.shape_cast %17 : vector<32xf32> to vector<32x1xf32>
    %cst_10 = arith.constant 3.200000e+01 : f32
    %19 = vector.broadcast %cst_10 : f32 to vector<32x1xf32>
    %20 = arith.divf %18, %19 : vector<32x1xf32>
    %21 = vector.broadcast %13 : vector<32x1xf32> to vector<32x32xf32>
    %22 = arith.subf %7, %21 : vector<32x32xf32>
    %cst_11 = arith.constant 9.99999997E-7 : f32
    %23 = vector.broadcast %cst_11 : f32 to vector<32x1xf32>
    %24 = arith.addf %20, %23 : vector<32x1xf32>
    %25 = math.rsqrt %24 : vector<32x1xf32>
    %26 = vector.broadcast %25 : vector<32x1xf32> to vector<32x32xf32>
    %27 = arith.mulf %22, %26 : vector<32x32xf32>
    %28 = vector.broadcast %8 : vector<1x32xf32> to vector<32x32xf32>
    %29 = arith.mulf %27, %28 : vector<32x32xf32>
    %30 = vector.broadcast %9 : vector<1x32xf32> to vector<32x32xf32>
    %31 = arith.addf %29, %30 : vector<32x32xf32>
    %c584 = arith.constant 584 : index
    %c0_12 = arith.constant 0 : index
    %32 = vector.load %arg2[%c584, %c0_12] : memref<1336x128xf32, #tpu.memory_space<vmem>>, vector<32x32xf32>
    %c248 = arith.constant 248 : index
    %c0_13 = arith.constant 0 : index
    %33 = vector.load %arg2[%c248, %c0_13] : memref<1336x128xf32, #tpu.memory_space<vmem>>, vector<32x96xf32>
    %c280 = arith.constant 280 : index
    %c0_14 = arith.constant 0 : index
    %34 = vector.load %arg2[%c280, %c0_14] : memref<1336x128xf32, #tpu.memory_space<vmem>>, vector<1x96xf32>
    %cst_15 = arith.constant dense<0.000000e+00> : vector<32x96xf32>
    %35 = tpu.matmul %31, %33, %cst_15 {dimension_numbers = #tpu.dot_dimension_numbers<[1], [0], [0], [1], [0, 0, 1, 1], [], []>} : vector<32x32xf32>, vector<32x96xf32>, vector<32x96xf32> -> vector<32x96xf32>
    %36 = vector.broadcast %34 : vector<1x96xf32> to vector<32x96xf32>
    %37 = arith.addf %35, %36 : vector<32x96xf32>
    %38 = vector.extract_strided_slice %37 {offsets = [0, 0], sizes = [32, 32], strides = [1, 1]} : vector<32x96xf32> to vector<32x32xf32>
    %39 = vector.extract_strided_slice %37 {offsets = [0, 32], sizes = [32, 32], strides = [1, 1]} : vector<32x96xf32> to vector<32x32xf32>
    %40 = vector.extract_strided_slice %37 {offsets = [0, 64], sizes = [32, 32], strides = [1, 1]} : vector<32x96xf32> to vector<32x32xf32>
    %c288 = arith.constant 288 : index
    %c0_16 = arith.constant 0 : index
    %41 = vector.load %arg2[%c288, %c0_16] : memref<1336x128xf32, #tpu.memory_space<vmem>>, vector<32x32xf32>
    %42 = vector.extract_strided_slice %38 {offsets = [0, 0], sizes = [32, 16], strides = [1, 1]} : vector<32x32xf32> to vector<32x16xf32>
    %43 = vector.extract_strided_slice %39 {offsets = [0, 0], sizes = [32, 16], strides = [1, 1]} : vector<32x32xf32> to vector<32x16xf32>
    %cst_17 = arith.constant dense<0.000000e+00> : vector<32x32xf32>
    %44 = tpu.matmul %42, %43, %cst_17 {dimension_numbers = #tpu.dot_dimension_numbers<[1], [1], [0], [0], [0, 0, 1, 0], [], []>} : vector<32x16xf32>, vector<32x16xf32>, vector<32x32xf32> -> vector<32x32xf32>
    %cst_18 = arith.constant 2.500000e-01 : f32
    %45 = vector.broadcast %cst_18 : f32 to vector<32x32xf32>
    %46 = arith.mulf %44, %45 : vector<32x32xf32>
    %47 = arith.addf %46, %32 : vector<32x32xf32>
    %cst_19 = arith.constant dense<0xFF800000> : vector<32xf32>
    %48 = vector.multi_reduction <maximumf>, %47, %cst_19 [1] : vector<32x32xf32> to vector<32xf32>
    %49 = vector.shape_cast %48 : vector<32xf32> to vector<32x1xf32>
    %50 = vector.broadcast %49 : vector<32x1xf32> to vector<32x32xf32>
    %51 = arith.subf %47, %50 : vector<32x32xf32>
    %52 = math.exp %51 : vector<32x32xf32>
    %cst_20 = arith.constant dense<0.000000e+00> : vector<32xf32>
    %53 = vector.multi_reduction <add>, %52, %cst_20 [1] : vector<32x32xf32> to vector<32xf32>
    %54 = vector.shape_cast %53 : vector<32xf32> to vector<32x1xf32>
    %55 = tpu.reciprocal %54 {approx = true} : vector<32x1xf32> -> vector<32x1xf32>
    %56 = vector.broadcast %55 : vector<32x1xf32> to vector<32x32xf32>
    %57 = arith.mulf %52, %56 : vector<32x32xf32>
    %58 = vector.extract_strided_slice %40 {offsets = [0, 0], sizes = [32, 16], strides = [1, 1]} : vector<32x32xf32> to vector<32x16xf32>
    %cst_21 = arith.constant dense<0.000000e+00> : vector<32x16xf32>
    %59 = tpu.matmul %57, %58, %cst_21 {dimension_numbers = #tpu.dot_dimension_numbers<[1], [0], [0], [1], [0, 0, 1, 1], [], []>} : vector<32x32xf32>, vector<32x16xf32>, vector<32x16xf32> -> vector<32x16xf32>
    %60 = vector.extract_strided_slice %41 {offsets = [0, 0], sizes = [16, 32], strides = [1, 1]} : vector<32x32xf32> to vector<16x32xf32>
    %cst_22 = arith.constant dense<0.000000e+00> : vector<32x32xf32>
    %61 = tpu.matmul %59, %60, %cst_22 {dimension_numbers = #tpu.dot_dimension_numbers<[1], [0], [0], [1], [0, 0, 1, 1], [], []>} : vector<32x16xf32>, vector<16x32xf32>, vector<32x32xf32> -> vector<32x32xf32>
    %62 = vector.extract_strided_slice %38 {offsets = [0, 16], sizes = [32, 16], strides = [1, 1]} : vector<32x32xf32> to vector<32x16xf32>
    %63 = vector.extract_strided_slice %39 {offsets = [0, 16], sizes = [32, 16], strides = [1, 1]} : vector<32x32xf32> to vector<32x16xf32>
    %cst_23 = arith.constant dense<0.000000e+00> : vector<32x32xf32>
    %64 = tpu.matmul %62, %63, %cst_23 {dimension_numbers = #tpu.dot_dimension_numbers<[1], [1], [0], [0], [0, 0, 1, 0], [], []>} : vector<32x16xf32>, vector<32x16xf32>, vector<32x32xf32> -> vector<32x32xf32>
    %cst_24 = arith.constant 2.500000e-01 : f32
    %65 = vector.broadcast %cst_24 : f32 to vector<32x32xf32>
    %66 = arith.mulf %64, %65 : vector<32x32xf32>
    %67 = arith.addf %66, %32 : vector<32x32xf32>
    %cst_25 = arith.constant dense<0xFF800000> : vector<32xf32>
    %68 = vector.multi_reduction <maximumf>, %67, %cst_25 [1] : vector<32x32xf32> to vector<32xf32>
    %69 = vector.shape_cast %68 : vector<32xf32> to vector<32x1xf32>
    %70 = vector.broadcast %69 : vector<32x1xf32> to vector<32x32xf32>
    %71 = arith.subf %67, %70 : vector<32x32xf32>
    %72 = math.exp %71 : vector<32x32xf32>
    %cst_26 = arith.constant dense<0.000000e+00> : vector<32xf32>
    %73 = vector.multi_reduction <add>, %72, %cst_26 [1] : vector<32x32xf32> to vector<32xf32>
    %74 = vector.shape_cast %73 : vector<32xf32> to vector<32x1xf32>
    %75 = tpu.reciprocal %74 {approx = true} : vector<32x1xf32> -> vector<32x1xf32>
    %76 = vector.broadcast %75 : vector<32x1xf32> to vector<32x32xf32>
    %77 = arith.mulf %72, %76 : vector<32x32xf32>
    %78 = vector.extract_strided_slice %40 {offsets = [0, 16], sizes = [32, 16], strides = [1, 1]} : vector<32x32xf32> to vector<32x16xf32>
    %cst_27 = arith.constant dense<0.000000e+00> : vector<32x16xf32>
    %79 = tpu.matmul %77, %78, %cst_27 {dimension_numbers = #tpu.dot_dimension_numbers<[1], [0], [0], [1], [0, 0, 1, 1], [], []>} : vector<32x32xf32>, vector<32x16xf32>, vector<32x16xf32> -> vector<32x16xf32>
    %80 = vector.extract_strided_slice %41 {offsets = [16, 0], sizes = [16, 32], strides = [1, 1]} : vector<32x32xf32> to vector<16x32xf32>
    %cst_28 = arith.constant dense<0.000000e+00> : vector<32x32xf32>
    %81 = tpu.matmul %79, %80, %cst_28 {dimension_numbers = #tpu.dot_dimension_numbers<[1], [0], [0], [1], [0, 0, 1, 1], [], []>} : vector<32x16xf32>, vector<16x32xf32>, vector<32x32xf32> -> vector<32x32xf32>
    %82 = arith.addf %61, %81 : vector<32x32xf32>
    %c320 = arith.constant 320 : index
    %c0_29 = arith.constant 0 : index
    %83 = vector.load %arg2[%c320, %c0_29] : memref<1336x128xf32, #tpu.memory_space<vmem>>, vector<1x32xf32>
    %84 = vector.broadcast %83 : vector<1x32xf32> to vector<32x32xf32>
    %85 = arith.addf %82, %84 : vector<32x32xf32>
    %86 = arith.addf %7, %85 : vector<32x32xf32>
    %c328 = arith.constant 328 : index
    %c0_30 = arith.constant 0 : index
    %87 = vector.load %arg2[%c328, %c0_30] : memref<1336x128xf32, #tpu.memory_space<vmem>>, vector<1x32xf32>
    %c336 = arith.constant 336 : index
    %c0_31 = arith.constant 0 : index
    %88 = vector.load %arg2[%c336, %c0_31] : memref<1336x128xf32, #tpu.memory_space<vmem>>, vector<1x32xf32>
    %cst_32 = arith.constant dense<0.000000e+00> : vector<32xf32>
    %89 = vector.multi_reduction <add>, %86, %cst_32 [1] : vector<32x32xf32> to vector<32xf32>
    %90 = vector.shape_cast %89 : vector<32xf32> to vector<32x1xf32>
    %cst_33 = arith.constant 3.200000e+01 : f32
    %91 = vector.broadcast %cst_33 : f32 to vector<32x1xf32>
    %92 = arith.divf %90, %91 : vector<32x1xf32>
    %93 = vector.broadcast %92 : vector<32x1xf32> to vector<32x32xf32>
    %94 = arith.subf %86, %93 : vector<32x32xf32>
    %95 = arith.mulf %94, %94 : vector<32x32xf32>
    %cst_34 = arith.constant dense<0.000000e+00> : vector<32xf32>
    %96 = vector.multi_reduction <add>, %95, %cst_34 [1] : vector<32x32xf32> to vector<32xf32>
    %97 = vector.shape_cast %96 : vector<32xf32> to vector<32x1xf32>
    %cst_35 = arith.constant 3.200000e+01 : f32
    %98 = vector.broadcast %cst_35 : f32 to vector<32x1xf32>
    %99 = arith.divf %97, %98 : vector<32x1xf32>
    %100 = vector.broadcast %92 : vector<32x1xf32> to vector<32x32xf32>
    %101 = arith.subf %86, %100 : vector<32x32xf32>
    %cst_36 = arith.constant 9.99999997E-7 : f32
    %102 = vector.broadcast %cst_36 : f32 to vector<32x1xf32>
    %103 = arith.addf %99, %102 : vector<32x1xf32>
    %104 = math.rsqrt %103 : vector<32x1xf32>
    %105 = vector.broadcast %104 : vector<32x1xf32> to vector<32x32xf32>
    %106 = arith.mulf %101, %105 : vector<32x32xf32>
    %107 = vector.broadcast %87 : vector<1x32xf32> to vector<32x32xf32>
    %108 = arith.mulf %106, %107 : vector<32x32xf32>
    %109 = vector.broadcast %88 : vector<1x32xf32> to vector<32x32xf32>
    %110 = arith.addf %108, %109 : vector<32x32xf32>
    %c344 = arith.constant 344 : index
    %c0_37 = arith.constant 0 : index
    %111 = vector.load %arg2[%c344, %c0_37] : memref<1336x128xf32, #tpu.memory_space<vmem>>, vector<32x64xf32>
    %cst_38 = arith.constant dense<0.000000e+00> : vector<32x64xf32>
    %112 = tpu.matmul %110, %111, %cst_38 {dimension_numbers = #tpu.dot_dimension_numbers<[1], [0], [0], [1], [0, 0, 1, 1], [], []>} : vector<32x32xf32>, vector<32x64xf32>, vector<32x64xf32> -> vector<32x64xf32>
    %c376 = arith.constant 376 : index
    %c0_39 = arith.constant 0 : index
    %113 = vector.load %arg2[%c376, %c0_39] : memref<1336x128xf32, #tpu.memory_space<vmem>>, vector<1x64xf32>
    %114 = vector.broadcast %113 : vector<1x64xf32> to vector<32x64xf32>
    %115 = arith.addf %112, %114 : vector<32x64xf32>
    %116 = arith.mulf %115, %115 : vector<32x64xf32>
    %117 = arith.mulf %115, %116 : vector<32x64xf32>
    %cst_40 = arith.constant 4.471500e-02 : f32
    %118 = vector.broadcast %cst_40 : f32 to vector<32x64xf32>
    %119 = arith.mulf %118, %117 : vector<32x64xf32>
    %120 = arith.addf %115, %119 : vector<32x64xf32>
    %cst_41 = arith.constant 0.797884583 : f32
    %121 = vector.broadcast %cst_41 : f32 to vector<32x64xf32>
    %122 = arith.mulf %121, %120 : vector<32x64xf32>
    %123 = math.tanh %122 : vector<32x64xf32>
    %cst_42 = arith.constant 1.000000e+00 : f32
    %124 = vector.broadcast %cst_42 : f32 to vector<32x64xf32>
    %125 = arith.addf %124, %123 : vector<32x64xf32>
    %cst_43 = arith.constant 5.000000e-01 : f32
    %126 = vector.broadcast %cst_43 : f32 to vector<32x64xf32>
    %127 = arith.mulf %126, %125 : vector<32x64xf32>
    %128 = arith.mulf %115, %127 : vector<32x64xf32>
    %c384 = arith.constant 384 : index
    %c0_44 = arith.constant 0 : index
    %129 = vector.load %arg2[%c384, %c0_44] : memref<1336x128xf32, #tpu.memory_space<vmem>>, vector<64x32xf32>
    %cst_45 = arith.constant dense<0.000000e+00> : vector<32x32xf32>
    %130 = tpu.matmul %128, %129, %cst_45 {dimension_numbers = #tpu.dot_dimension_numbers<[1], [0], [0], [1], [0, 0, 1, 1], [], []>} : vector<32x64xf32>, vector<64x32xf32>, vector<32x32xf32> -> vector<32x32xf32>
    %131 = arith.addf %86, %130 : vector<32x32xf32>
    %c448 = arith.constant 448 : index
    %c0_46 = arith.constant 0 : index
    %132 = vector.load %arg2[%c448, %c0_46] : memref<1336x128xf32, #tpu.memory_space<vmem>>, vector<1x32xf32>
    %133 = vector.broadcast %132 : vector<1x32xf32> to vector<32x32xf32>
    %134 = arith.addf %131, %133 : vector<32x32xf32>
    %c456 = arith.constant 456 : index
    %c0_47 = arith.constant 0 : index
    %135 = vector.load %arg2[%c456, %c0_47] : memref<1336x128xf32, #tpu.memory_space<vmem>>, vector<32x32xf32>
    %cst_48 = arith.constant dense<0.000000e+00> : vector<32x32xf32>
    %136 = tpu.matmul %134, %135, %cst_48 {dimension_numbers = #tpu.dot_dimension_numbers<[1], [0], [0], [1], [0, 0, 1, 1], [], []>} : vector<32x32xf32>, vector<32x32xf32>, vector<32x32xf32> -> vector<32x32xf32>
    %c488 = arith.constant 488 : index
    %c0_49 = arith.constant 0 : index
    %137 = vector.load %arg2[%c488, %c0_49] : memref<1336x128xf32, #tpu.memory_space<vmem>>, vector<1x32xf32>
    %c496 = arith.constant 496 : index
    %c0_50 = arith.constant 0 : index
    %138 = vector.load %arg2[%c496, %c0_50] : memref<1336x128xf32, #tpu.memory_space<vmem>>, vector<1x32xf32>
    %cst_51 = arith.constant dense<0.000000e+00> : vector<32xf32>
    %139 = vector.multi_reduction <add>, %136, %cst_51 [1] : vector<32x32xf32> to vector<32xf32>
    %140 = vector.shape_cast %139 : vector<32xf32> to vector<32x1xf32>
    %cst_52 = arith.constant 3.200000e+01 : f32
    %141 = vector.broadcast %cst_52 : f32 to vector<32x1xf32>
    %142 = arith.divf %140, %141 : vector<32x1xf32>
    %143 = vector.broadcast %142 : vector<32x1xf32> to vector<32x32xf32>
    %144 = arith.subf %136, %143 : vector<32x32xf32>
    %145 = arith.mulf %144, %144 : vector<32x32xf32>
    %cst_53 = arith.constant dense<0.000000e+00> : vector<32xf32>
    %146 = vector.multi_reduction <add>, %145, %cst_53 [1] : vector<32x32xf32> to vector<32xf32>
    %147 = vector.shape_cast %146 : vector<32xf32> to vector<32x1xf32>
    %cst_54 = arith.constant 3.200000e+01 : f32
    %148 = vector.broadcast %cst_54 : f32 to vector<32x1xf32>
    %149 = arith.divf %147, %148 : vector<32x1xf32>
    %150 = vector.broadcast %142 : vector<32x1xf32> to vector<32x32xf32>
    %151 = arith.subf %136, %150 : vector<32x32xf32>
    %cst_55 = arith.constant 9.99999997E-7 : f32
    %152 = vector.broadcast %cst_55 : f32 to vector<32x1xf32>
    %153 = arith.addf %149, %152 : vector<32x1xf32>
    %154 = math.rsqrt %153 : vector<32x1xf32>
    %155 = vector.broadcast %154 : vector<32x1xf32> to vector<32x32xf32>
    %156 = arith.mulf %151, %155 : vector<32x32xf32>
    %157 = vector.broadcast %137 : vector<1x32xf32> to vector<32x32xf32>
    %158 = arith.mulf %156, %157 : vector<32x32xf32>
    %159 = vector.broadcast %138 : vector<1x32xf32> to vector<32x32xf32>
    %160 = arith.addf %158, %159 : vector<32x32xf32>
    %c0_56 = arith.constant 0 : index
    %c0_57 = arith.constant 0 : index
    %161 = vector.load %arg1[%c0_56, %c0_57] : memref<4x32xf32, #tpu.memory_space<vmem>>, vector<4x32xf32>
    %c504 = arith.constant 504 : index
    %c0_58 = arith.constant 0 : index
    %162 = vector.load %arg2[%c504, %c0_58] : memref<1336x128xf32, #tpu.memory_space<vmem>>, vector<1x32xf32>
    %163 = vector.broadcast %162 : vector<1x32xf32> to vector<32x32xf32>
    %164 = arith.addf %160, %163 : vector<32x32xf32>
    %c512 = arith.constant 512 : index
    %c0_59 = arith.constant 0 : index
    %165 = vector.load %arg2[%c512, %c0_59] : memref<1336x128xf32, #tpu.memory_space<vmem>>, vector<32x32xf32>
    %c544 = arith.constant 544 : index
    %c0_60 = arith.constant 0 : index
    %166 = vector.load %arg2[%c544, %c0_60] : memref<1336x128xf32, #tpu.memory_space<vmem>>, vector<14x32xf32>
    %c560 = arith.constant 560 : index
    %c0_61 = arith.constant 0 : index
    %167 = vector.load %arg2[%c560, %c0_61] : memref<1336x128xf32, #tpu.memory_space<vmem>>, vector<14x4xf32>
    %cst_62 = arith.constant dense<0.000000e+00> : vector<14x32xf32>
    %168 = tpu.matmul %167, %161, %cst_62 {dimension_numbers = #tpu.dot_dimension_numbers<[1], [0], [0], [1], [0, 0, 1, 1], [], []>} : vector<14x4xf32>, vector<4x32xf32>, vector<14x32xf32> -> vector<14x32xf32>
    %169 = arith.addf %166, %168 : vector<14x32xf32>
    %c616 = arith.constant 616 : index
    %c0_63 = arith.constant 0 : index
    %170 = vector.load %arg2[%c616, %c0_63] : memref<1336x128xf32, #tpu.memory_space<vmem>>, vector<14x14xf32>
    %c680 = arith.constant 680 : index
    %c0_64 = arith.constant 0 : index
    %171 = vector.load %arg2[%c680, %c0_64] : memref<1336x128xf32, #tpu.memory_space<vmem>>, vector<32x96xf32>
    %c712 = arith.constant 712 : index
    %c0_65 = arith.constant 0 : index
    %172 = vector.load %arg2[%c712, %c0_65] : memref<1336x128xf32, #tpu.memory_space<vmem>>, vector<1x96xf32>
    %cst_66 = arith.constant dense<0.000000e+00> : vector<14x96xf32>
    %173 = tpu.matmul %169, %171, %cst_66 {dimension_numbers = #tpu.dot_dimension_numbers<[1], [0], [0], [1], [0, 0, 1, 1], [], []>} : vector<14x32xf32>, vector<32x96xf32>, vector<14x96xf32> -> vector<14x96xf32>
    %174 = vector.broadcast %172 : vector<1x96xf32> to vector<14x96xf32>
    %175 = arith.addf %173, %174 : vector<14x96xf32>
    %176 = vector.extract_strided_slice %175 {offsets = [0, 0], sizes = [14, 32], strides = [1, 1]} : vector<14x96xf32> to vector<14x32xf32>
    %177 = vector.extract_strided_slice %175 {offsets = [0, 32], sizes = [14, 32], strides = [1, 1]} : vector<14x96xf32> to vector<14x32xf32>
    %178 = vector.extract_strided_slice %175 {offsets = [0, 64], sizes = [14, 32], strides = [1, 1]} : vector<14x96xf32> to vector<14x32xf32>
    %c720 = arith.constant 720 : index
    %c0_67 = arith.constant 0 : index
    %179 = vector.load %arg2[%c720, %c0_67] : memref<1336x128xf32, #tpu.memory_space<vmem>>, vector<32x32xf32>
    %180 = vector.extract_strided_slice %176 {offsets = [0, 0], sizes = [14, 16], strides = [1, 1]} : vector<14x32xf32> to vector<14x16xf32>
    %181 = vector.extract_strided_slice %177 {offsets = [0, 0], sizes = [14, 16], strides = [1, 1]} : vector<14x32xf32> to vector<14x16xf32>
    %cst_68 = arith.constant dense<0.000000e+00> : vector<14x14xf32>
    %182 = tpu.matmul %180, %181, %cst_68 {dimension_numbers = #tpu.dot_dimension_numbers<[1], [1], [0], [0], [0, 0, 1, 0], [], []>} : vector<14x16xf32>, vector<14x16xf32>, vector<14x14xf32> -> vector<14x14xf32>
    %cst_69 = arith.constant 2.500000e-01 : f32
    %183 = vector.broadcast %cst_69 : f32 to vector<14x14xf32>
    %184 = arith.mulf %182, %183 : vector<14x14xf32>
    %185 = arith.addf %184, %170 : vector<14x14xf32>
    %cst_70 = arith.constant dense<0xFF800000> : vector<14xf32>
    %186 = vector.multi_reduction <maximumf>, %185, %cst_70 [1] : vector<14x14xf32> to vector<14xf32>
    %187 = vector.shape_cast %186 : vector<14xf32> to vector<14x1xf32>
    %188 = vector.broadcast %187 : vector<14x1xf32> to vector<14x14xf32>
    %189 = arith.subf %185, %188 : vector<14x14xf32>
    %190 = math.exp %189 : vector<14x14xf32>
    %cst_71 = arith.constant dense<0.000000e+00> : vector<14xf32>
    %191 = vector.multi_reduction <add>, %190, %cst_71 [1] : vector<14x14xf32> to vector<14xf32>
    %192 = vector.shape_cast %191 : vector<14xf32> to vector<14x1xf32>
    %193 = tpu.reciprocal %192 {approx = true} : vector<14x1xf32> -> vector<14x1xf32>
    %194 = vector.broadcast %193 : vector<14x1xf32> to vector<14x14xf32>
    %195 = arith.mulf %190, %194 : vector<14x14xf32>
    %196 = vector.extract_strided_slice %178 {offsets = [0, 0], sizes = [14, 16], strides = [1, 1]} : vector<14x32xf32> to vector<14x16xf32>
    %cst_72 = arith.constant dense<0.000000e+00> : vector<14x16xf32>
    %197 = tpu.matmul %195, %196, %cst_72 {dimension_numbers = #tpu.dot_dimension_numbers<[1], [0], [0], [1], [0, 0, 1, 1], [], []>} : vector<14x14xf32>, vector<14x16xf32>, vector<14x16xf32> -> vector<14x16xf32>
    %198 = vector.extract_strided_slice %179 {offsets = [0, 0], sizes = [16, 32], strides = [1, 1]} : vector<32x32xf32> to vector<16x32xf32>
    %cst_73 = arith.constant dense<0.000000e+00> : vector<14x32xf32>
    %199 = tpu.matmul %197, %198, %cst_73 {dimension_numbers = #tpu.dot_dimension_numbers<[1], [0], [0], [1], [0, 0, 1, 1], [], []>} : vector<14x16xf32>, vector<16x32xf32>, vector<14x32xf32> -> vector<14x32xf32>
    %200 = vector.extract_strided_slice %176 {offsets = [0, 16], sizes = [14, 16], strides = [1, 1]} : vector<14x32xf32> to vector<14x16xf32>
    %201 = vector.extract_strided_slice %177 {offsets = [0, 16], sizes = [14, 16], strides = [1, 1]} : vector<14x32xf32> to vector<14x16xf32>
    %cst_74 = arith.constant dense<0.000000e+00> : vector<14x14xf32>
    %202 = tpu.matmul %200, %201, %cst_74 {dimension_numbers = #tpu.dot_dimension_numbers<[1], [1], [0], [0], [0, 0, 1, 0], [], []>} : vector<14x16xf32>, vector<14x16xf32>, vector<14x14xf32> -> vector<14x14xf32>
    %cst_75 = arith.constant 2.500000e-01 : f32
    %203 = vector.broadcast %cst_75 : f32 to vector<14x14xf32>
    %204 = arith.mulf %202, %203 : vector<14x14xf32>
    %205 = arith.addf %204, %170 : vector<14x14xf32>
    %cst_76 = arith.constant dense<0xFF800000> : vector<14xf32>
    %206 = vector.multi_reduction <maximumf>, %205, %cst_76 [1] : vector<14x14xf32> to vector<14xf32>
    %207 = vector.shape_cast %206 : vector<14xf32> to vector<14x1xf32>
    %208 = vector.broadcast %207 : vector<14x1xf32> to vector<14x14xf32>
    %209 = arith.subf %205, %208 : vector<14x14xf32>
    %210 = math.exp %209 : vector<14x14xf32>
    %cst_77 = arith.constant dense<0.000000e+00> : vector<14xf32>
    %211 = vector.multi_reduction <add>, %210, %cst_77 [1] : vector<14x14xf32> to vector<14xf32>
    %212 = vector.shape_cast %211 : vector<14xf32> to vector<14x1xf32>
    %213 = tpu.reciprocal %212 {approx = true} : vector<14x1xf32> -> vector<14x1xf32>
    %214 = vector.broadcast %213 : vector<14x1xf32> to vector<14x14xf32>
    %215 = arith.mulf %210, %214 : vector<14x14xf32>
    %216 = vector.extract_strided_slice %178 {offsets = [0, 16], sizes = [14, 16], strides = [1, 1]} : vector<14x32xf32> to vector<14x16xf32>
    %cst_78 = arith.constant dense<0.000000e+00> : vector<14x16xf32>
    %217 = tpu.matmul %215, %216, %cst_78 {dimension_numbers = #tpu.dot_dimension_numbers<[1], [0], [0], [1], [0, 0, 1, 1], [], []>} : vector<14x14xf32>, vector<14x16xf32>, vector<14x16xf32> -> vector<14x16xf32>
    %218 = vector.extract_strided_slice %179 {offsets = [16, 0], sizes = [16, 32], strides = [1, 1]} : vector<32x32xf32> to vector<16x32xf32>
    %cst_79 = arith.constant dense<0.000000e+00> : vector<14x32xf32>
    %219 = tpu.matmul %217, %218, %cst_79 {dimension_numbers = #tpu.dot_dimension_numbers<[1], [0], [0], [1], [0, 0, 1, 1], [], []>} : vector<14x16xf32>, vector<16x32xf32>, vector<14x32xf32> -> vector<14x32xf32>
    %220 = arith.addf %199, %219 : vector<14x32xf32>
    %c752 = arith.constant 752 : index
    %c0_80 = arith.constant 0 : index
    %221 = vector.load %arg2[%c752, %c0_80] : memref<1336x128xf32, #tpu.memory_space<vmem>>, vector<1x32xf32>
    %222 = vector.broadcast %221 : vector<1x32xf32> to vector<14x32xf32>
    %223 = arith.addf %220, %222 : vector<14x32xf32>
    %c952 = arith.constant 952 : index
    %c0_81 = arith.constant 0 : index
    %224 = vector.load %arg2[%c952, %c0_81] : memref<1336x128xf32, #tpu.memory_space<vmem>>, vector<1x32xf32>
    %c960 = arith.constant 960 : index
    %c0_82 = arith.constant 0 : index
    %225 = vector.load %arg2[%c960, %c0_82] : memref<1336x128xf32, #tpu.memory_space<vmem>>, vector<1x32xf32>
    %cst_83 = arith.constant dense<0.000000e+00> : vector<14xf32>
    %226 = vector.multi_reduction <add>, %223, %cst_83 [1] : vector<14x32xf32> to vector<14xf32>
    %227 = vector.shape_cast %226 : vector<14xf32> to vector<14x1xf32>
    %cst_84 = arith.constant 3.200000e+01 : f32
    %228 = vector.broadcast %cst_84 : f32 to vector<14x1xf32>
    %229 = arith.divf %227, %228 : vector<14x1xf32>
    %230 = vector.broadcast %229 : vector<14x1xf32> to vector<14x32xf32>
    %231 = arith.subf %223, %230 : vector<14x32xf32>
    %232 = arith.mulf %231, %231 : vector<14x32xf32>
    %cst_85 = arith.constant dense<0.000000e+00> : vector<14xf32>
    %233 = vector.multi_reduction <add>, %232, %cst_85 [1] : vector<14x32xf32> to vector<14xf32>
    %234 = vector.shape_cast %233 : vector<14xf32> to vector<14x1xf32>
    %cst_86 = arith.constant 3.200000e+01 : f32
    %235 = vector.broadcast %cst_86 : f32 to vector<14x1xf32>
    %236 = arith.divf %234, %235 : vector<14x1xf32>
    %237 = vector.broadcast %229 : vector<14x1xf32> to vector<14x32xf32>
    %238 = arith.subf %223, %237 : vector<14x32xf32>
    %cst_87 = arith.constant 9.99999974E-6 : f32
    %239 = vector.broadcast %cst_87 : f32 to vector<14x1xf32>
    %240 = arith.addf %236, %239 : vector<14x1xf32>
    %241 = math.rsqrt %240 : vector<14x1xf32>
    %242 = vector.broadcast %241 : vector<14x1xf32> to vector<14x32xf32>
    %243 = arith.mulf %238, %242 : vector<14x32xf32>
    %244 = vector.broadcast %224 : vector<1x32xf32> to vector<14x32xf32>
    %245 = arith.mulf %243, %244 : vector<14x32xf32>
    %246 = vector.broadcast %225 : vector<1x32xf32> to vector<14x32xf32>
    %247 = arith.addf %245, %246 : vector<14x32xf32>
    %248 = arith.addf %247, %169 : vector<14x32xf32>
    %249 = arith.addf %164, %165 : vector<32x32xf32>
    %c632 = arith.constant 632 : index
    %c0_88 = arith.constant 0 : index
    %250 = vector.load %arg2[%c632, %c0_88] : memref<1336x128xf32, #tpu.memory_space<vmem>>, vector<14x32xf32>
    %c760 = arith.constant 760 : index
    %c0_89 = arith.constant 0 : index
    %251 = vector.load %arg2[%c760, %c0_89] : memref<1336x128xf32, #tpu.memory_space<vmem>>, vector<32x48xf32>
    %c792 = arith.constant 792 : index
    %c0_90 = arith.constant 0 : index
    %252 = vector.load %arg2[%c792, %c0_90] : memref<1336x128xf32, #tpu.memory_space<vmem>>, vector<1x48xf32>
    %253 = vector.extract_strided_slice %251 {offsets = [0, 0], sizes = [32, 16], strides = [1, 1]} : vector<32x48xf32> to vector<32x16xf32>
    %cst_91 = arith.constant dense<0.000000e+00> : vector<14x16xf32>
    %254 = tpu.matmul %248, %253, %cst_91 {dimension_numbers = #tpu.dot_dimension_numbers<[1], [0], [0], [1], [0, 0, 1, 1], [], []>} : vector<14x32xf32>, vector<32x16xf32>, vector<14x16xf32> -> vector<14x16xf32>
    %255 = vector.extract_strided_slice %252 {offsets = [0, 0], sizes = [1, 16], strides = [1, 1]} : vector<1x48xf32> to vector<1x16xf32>
    %256 = vector.broadcast %255 : vector<1x16xf32> to vector<14x16xf32>
    %257 = arith.addf %254, %256 : vector<14x16xf32>
    %258 = vector.extract_strided_slice %251 {offsets = [0, 16], sizes = [32, 16], strides = [1, 1]} : vector<32x48xf32> to vector<32x16xf32>
    %cst_92 = arith.constant dense<0.000000e+00> : vector<32x16xf32>
    %259 = tpu.matmul %249, %258, %cst_92 {dimension_numbers = #tpu.dot_dimension_numbers<[1], [0], [0], [1], [0, 0, 1, 1], [], []>} : vector<32x32xf32>, vector<32x16xf32>, vector<32x16xf32> -> vector<32x16xf32>
    %260 = vector.extract_strided_slice %252 {offsets = [0, 16], sizes = [1, 16], strides = [1, 1]} : vector<1x48xf32> to vector<1x16xf32>
    %261 = vector.broadcast %260 : vector<1x16xf32> to vector<32x16xf32>
    %262 = arith.addf %259, %261 : vector<32x16xf32>
    %263 = vector.extract_strided_slice %251 {offsets = [0, 32], sizes = [32, 16], strides = [1, 1]} : vector<32x48xf32> to vector<32x16xf32>
    %cst_93 = arith.constant dense<0.000000e+00> : vector<32x16xf32>
    %264 = tpu.matmul %164, %263, %cst_93 {dimension_numbers = #tpu.dot_dimension_numbers<[1], [0], [0], [1], [0, 0, 1, 1], [], []>} : vector<32x32xf32>, vector<32x16xf32>, vector<32x16xf32> -> vector<32x16xf32>
    %265 = vector.extract_strided_slice %252 {offsets = [0, 32], sizes = [1, 16], strides = [1, 1]} : vector<1x48xf32> to vector<1x16xf32>
    %266 = vector.broadcast %265 : vector<1x16xf32> to vector<32x16xf32>
    %267 = arith.addf %264, %266 : vector<32x16xf32>
    %c800 = arith.constant 800 : index
    %c0_94 = arith.constant 0 : index
    %268 = vector.load %arg2[%c800, %c0_94] : memref<1336x128xf32, #tpu.memory_space<vmem>>, vector<16x32xf32>
    %269 = vector.extract_strided_slice %257 {offsets = [0, 0], sizes = [14, 8], strides = [1, 1]} : vector<14x16xf32> to vector<14x8xf32>
    %270 = vector.extract_strided_slice %262 {offsets = [0, 0], sizes = [32, 8], strides = [1, 1]} : vector<32x16xf32> to vector<32x8xf32>
    %cst_95 = arith.constant dense<0.000000e+00> : vector<14x32xf32>
    %271 = tpu.matmul %269, %270, %cst_95 {dimension_numbers = #tpu.dot_dimension_numbers<[1], [1], [0], [0], [0, 0, 1, 0], [], []>} : vector<14x8xf32>, vector<32x8xf32>, vector<14x32xf32> -> vector<14x32xf32>
    %cst_96 = arith.constant 0.353553385 : f32
    %272 = vector.broadcast %cst_96 : f32 to vector<14x32xf32>
    %273 = arith.mulf %271, %272 : vector<14x32xf32>
    %274 = arith.addf %273, %250 : vector<14x32xf32>
    %cst_97 = arith.constant dense<0xFF800000> : vector<14xf32>
    %275 = vector.multi_reduction <maximumf>, %274, %cst_97 [1] : vector<14x32xf32> to vector<14xf32>
    %276 = vector.shape_cast %275 : vector<14xf32> to vector<14x1xf32>
    %277 = vector.broadcast %276 : vector<14x1xf32> to vector<14x32xf32>
    %278 = arith.subf %274, %277 : vector<14x32xf32>
    %279 = math.exp %278 : vector<14x32xf32>
    %cst_98 = arith.constant dense<0.000000e+00> : vector<14xf32>
    %280 = vector.multi_reduction <add>, %279, %cst_98 [1] : vector<14x32xf32> to vector<14xf32>
    %281 = vector.shape_cast %280 : vector<14xf32> to vector<14x1xf32>
    %282 = tpu.reciprocal %281 {approx = true} : vector<14x1xf32> -> vector<14x1xf32>
    %283 = vector.broadcast %282 : vector<14x1xf32> to vector<14x32xf32>
    %284 = arith.mulf %279, %283 : vector<14x32xf32>
    %285 = vector.extract_strided_slice %267 {offsets = [0, 0], sizes = [32, 8], strides = [1, 1]} : vector<32x16xf32> to vector<32x8xf32>
    %cst_99 = arith.constant dense<0.000000e+00> : vector<14x8xf32>
    %286 = tpu.matmul %284, %285, %cst_99 {dimension_numbers = #tpu.dot_dimension_numbers<[1], [0], [0], [1], [0, 0, 1, 1], [], []>} : vector<14x32xf32>, vector<32x8xf32>, vector<14x8xf32> -> vector<14x8xf32>
    %287 = vector.extract_strided_slice %268 {offsets = [0, 0], sizes = [8, 32], strides = [1, 1]} : vector<16x32xf32> to vector<8x32xf32>
    %cst_100 = arith.constant dense<0.000000e+00> : vector<14x32xf32>
    %288 = tpu.matmul %286, %287, %cst_100 {dimension_numbers = #tpu.dot_dimension_numbers<[1], [0], [0], [1], [0, 0, 1, 1], [], []>} : vector<14x8xf32>, vector<8x32xf32>, vector<14x32xf32> -> vector<14x32xf32>
    %289 = vector.extract_strided_slice %257 {offsets = [0, 8], sizes = [14, 8], strides = [1, 1]} : vector<14x16xf32> to vector<14x8xf32>
    %290 = vector.extract_strided_slice %262 {offsets = [0, 8], sizes = [32, 8], strides = [1, 1]} : vector<32x16xf32> to vector<32x8xf32>
    %cst_101 = arith.constant dense<0.000000e+00> : vector<14x32xf32>
    %291 = tpu.matmul %289, %290, %cst_101 {dimension_numbers = #tpu.dot_dimension_numbers<[1], [1], [0], [0], [0, 0, 1, 0], [], []>} : vector<14x8xf32>, vector<32x8xf32>, vector<14x32xf32> -> vector<14x32xf32>
    %cst_102 = arith.constant 0.353553385 : f32
    %292 = vector.broadcast %cst_102 : f32 to vector<14x32xf32>
    %293 = arith.mulf %291, %292 : vector<14x32xf32>
    %294 = arith.addf %293, %250 : vector<14x32xf32>
    %cst_103 = arith.constant dense<0xFF800000> : vector<14xf32>
    %295 = vector.multi_reduction <maximumf>, %294, %cst_103 [1] : vector<14x32xf32> to vector<14xf32>
    %296 = vector.shape_cast %295 : vector<14xf32> to vector<14x1xf32>
    %297 = vector.broadcast %296 : vector<14x1xf32> to vector<14x32xf32>
    %298 = arith.subf %294, %297 : vector<14x32xf32>
    %299 = math.exp %298 : vector<14x32xf32>
    %cst_104 = arith.constant dense<0.000000e+00> : vector<14xf32>
    %300 = vector.multi_reduction <add>, %299, %cst_104 [1] : vector<14x32xf32> to vector<14xf32>
    %301 = vector.shape_cast %300 : vector<14xf32> to vector<14x1xf32>
    %302 = tpu.reciprocal %301 {approx = true} : vector<14x1xf32> -> vector<14x1xf32>
    %303 = vector.broadcast %302 : vector<14x1xf32> to vector<14x32xf32>
    %304 = arith.mulf %299, %303 : vector<14x32xf32>
    %305 = vector.extract_strided_slice %267 {offsets = [0, 8], sizes = [32, 8], strides = [1, 1]} : vector<32x16xf32> to vector<32x8xf32>
    %cst_105 = arith.constant dense<0.000000e+00> : vector<14x8xf32>
    %306 = tpu.matmul %304, %305, %cst_105 {dimension_numbers = #tpu.dot_dimension_numbers<[1], [0], [0], [1], [0, 0, 1, 1], [], []>} : vector<14x32xf32>, vector<32x8xf32>, vector<14x8xf32> -> vector<14x8xf32>
    %307 = vector.extract_strided_slice %268 {offsets = [8, 0], sizes = [8, 32], strides = [1, 1]} : vector<16x32xf32> to vector<8x32xf32>
    %cst_106 = arith.constant dense<0.000000e+00> : vector<14x32xf32>
    %308 = tpu.matmul %306, %307, %cst_106 {dimension_numbers = #tpu.dot_dimension_numbers<[1], [0], [0], [1], [0, 0, 1, 1], [], []>} : vector<14x8xf32>, vector<8x32xf32>, vector<14x32xf32> -> vector<14x32xf32>
    %309 = arith.addf %288, %308 : vector<14x32xf32>
    %c816 = arith.constant 816 : index
    %c0_107 = arith.constant 0 : index
    %310 = vector.load %arg2[%c816, %c0_107] : memref<1336x128xf32, #tpu.memory_space<vmem>>, vector<1x32xf32>
    %311 = vector.broadcast %310 : vector<1x32xf32> to vector<14x32xf32>
    %312 = arith.addf %309, %311 : vector<14x32xf32>
    %313 = arith.addf %247, %312 : vector<14x32xf32>
    %c968 = arith.constant 968 : index
    %c0_108 = arith.constant 0 : index
    %314 = vector.load %arg2[%c968, %c0_108] : memref<1336x128xf32, #tpu.memory_space<vmem>>, vector<1x32xf32>
    %c976 = arith.constant 976 : index
    %c0_109 = arith.constant 0 : index
    %315 = vector.load %arg2[%c976, %c0_109] : memref<1336x128xf32, #tpu.memory_space<vmem>>, vector<1x32xf32>
    %cst_110 = arith.constant dense<0.000000e+00> : vector<14xf32>
    %316 = vector.multi_reduction <add>, %313, %cst_110 [1] : vector<14x32xf32> to vector<14xf32>
    %317 = vector.shape_cast %316 : vector<14xf32> to vector<14x1xf32>
    %cst_111 = arith.constant 3.200000e+01 : f32
    %318 = vector.broadcast %cst_111 : f32 to vector<14x1xf32>
    %319 = arith.divf %317, %318 : vector<14x1xf32>
    %320 = vector.broadcast %319 : vector<14x1xf32> to vector<14x32xf32>
    %321 = arith.subf %313, %320 : vector<14x32xf32>
    %322 = arith.mulf %321, %321 : vector<14x32xf32>
    %cst_112 = arith.constant dense<0.000000e+00> : vector<14xf32>
    %323 = vector.multi_reduction <add>, %322, %cst_112 [1] : vector<14x32xf32> to vector<14xf32>
    %324 = vector.shape_cast %323 : vector<14xf32> to vector<14x1xf32>
    %cst_113 = arith.constant 3.200000e+01 : f32
    %325 = vector.broadcast %cst_113 : f32 to vector<14x1xf32>
    %326 = arith.divf %324, %325 : vector<14x1xf32>
    %327 = vector.broadcast %319 : vector<14x1xf32> to vector<14x32xf32>
    %328 = arith.subf %313, %327 : vector<14x32xf32>
    %cst_114 = arith.constant 9.99999974E-6 : f32
    %329 = vector.broadcast %cst_114 : f32 to vector<14x1xf32>
    %330 = arith.addf %326, %329 : vector<14x1xf32>
    %331 = math.rsqrt %330 : vector<14x1xf32>
    %332 = vector.broadcast %331 : vector<14x1xf32> to vector<14x32xf32>
    %333 = arith.mulf %328, %332 : vector<14x32xf32>
    %334 = vector.broadcast %314 : vector<1x32xf32> to vector<14x32xf32>
    %335 = arith.mulf %333, %334 : vector<14x32xf32>
    %336 = vector.broadcast %315 : vector<1x32xf32> to vector<14x32xf32>
    %337 = arith.addf %335, %336 : vector<14x32xf32>
    %c1032 = arith.constant 1032 : index
    %c0_115 = arith.constant 0 : index
    %338 = vector.load %arg2[%c1032, %c0_115] : memref<1336x128xf32, #tpu.memory_space<vmem>>, vector<32x64xf32>
    %cst_116 = arith.constant dense<0.000000e+00> : vector<14x64xf32>
    %339 = tpu.matmul %337, %338, %cst_116 {dimension_numbers = #tpu.dot_dimension_numbers<[1], [0], [0], [1], [0, 0, 1, 1], [], []>} : vector<14x32xf32>, vector<32x64xf32>, vector<14x64xf32> -> vector<14x64xf32>
    %c1064 = arith.constant 1064 : index
    %c0_117 = arith.constant 0 : index
    %340 = vector.load %arg2[%c1064, %c0_117] : memref<1336x128xf32, #tpu.memory_space<vmem>>, vector<1x64xf32>
    %341 = vector.broadcast %340 : vector<1x64xf32> to vector<14x64xf32>
    %342 = arith.addf %339, %341 : vector<14x64xf32>
    %cst_118 = arith.constant 0.000000e+00 : f32
    %343 = vector.broadcast %cst_118 : f32 to vector<14x64xf32>
    %344 = arith.maximumf %342, %343 : vector<14x64xf32>
    %c1072 = arith.constant 1072 : index
    %c0_119 = arith.constant 0 : index
    %345 = vector.load %arg2[%c1072, %c0_119] : memref<1336x128xf32, #tpu.memory_space<vmem>>, vector<64x32xf32>
    %cst_120 = arith.constant dense<0.000000e+00> : vector<14x32xf32>
    %346 = tpu.matmul %344, %345, %cst_120 {dimension_numbers = #tpu.dot_dimension_numbers<[1], [0], [0], [1], [0, 0, 1, 1], [], []>} : vector<14x64xf32>, vector<64x32xf32>, vector<14x32xf32> -> vector<14x32xf32>
    %347 = arith.addf %337, %346 : vector<14x32xf32>
    %c1136 = arith.constant 1136 : index
    %c0_121 = arith.constant 0 : index
    %348 = vector.load %arg2[%c1136, %c0_121] : memref<1336x128xf32, #tpu.memory_space<vmem>>, vector<1x32xf32>
    %349 = vector.broadcast %348 : vector<1x32xf32> to vector<14x32xf32>
    %350 = arith.addf %347, %349 : vector<14x32xf32>
    %c984 = arith.constant 984 : index
    %c0_122 = arith.constant 0 : index
    %351 = vector.load %arg2[%c984, %c0_122] : memref<1336x128xf32, #tpu.memory_space<vmem>>, vector<1x32xf32>
    %c992 = arith.constant 992 : index
    %c0_123 = arith.constant 0 : index
    %352 = vector.load %arg2[%c992, %c0_123] : memref<1336x128xf32, #tpu.memory_space<vmem>>, vector<1x32xf32>
    %cst_124 = arith.constant dense<0.000000e+00> : vector<14xf32>
    %353 = vector.multi_reduction <add>, %350, %cst_124 [1] : vector<14x32xf32> to vector<14xf32>
    %354 = vector.shape_cast %353 : vector<14xf32> to vector<14x1xf32>
    %cst_125 = arith.constant 3.200000e+01 : f32
    %355 = vector.broadcast %cst_125 : f32 to vector<14x1xf32>
    %356 = arith.divf %354, %355 : vector<14x1xf32>
    %357 = vector.broadcast %356 : vector<14x1xf32> to vector<14x32xf32>
    %358 = arith.subf %350, %357 : vector<14x32xf32>
    %359 = arith.mulf %358, %358 : vector<14x32xf32>
    %cst_126 = arith.constant dense<0.000000e+00> : vector<14xf32>
    %360 = vector.multi_reduction <add>, %359, %cst_126 [1] : vector<14x32xf32> to vector<14xf32>
    %361 = vector.shape_cast %360 : vector<14xf32> to vector<14x1xf32>
    %cst_127 = arith.constant 3.200000e+01 : f32
    %362 = vector.broadcast %cst_127 : f32 to vector<14x1xf32>
    %363 = arith.divf %361, %362 : vector<14x1xf32>
    %364 = vector.broadcast %356 : vector<14x1xf32> to vector<14x32xf32>
    %365 = arith.subf %350, %364 : vector<14x32xf32>
    %cst_128 = arith.constant 9.99999974E-6 : f32
    %366 = vector.broadcast %cst_128 : f32 to vector<14x1xf32>
    %367 = arith.addf %363, %366 : vector<14x1xf32>
    %368 = math.rsqrt %367 : vector<14x1xf32>
    %369 = vector.broadcast %368 : vector<14x1xf32> to vector<14x32xf32>
    %370 = arith.mulf %365, %369 : vector<14x32xf32>
    %371 = vector.broadcast %351 : vector<1x32xf32> to vector<14x32xf32>
    %372 = arith.mulf %370, %371 : vector<14x32xf32>
    %373 = vector.broadcast %352 : vector<1x32xf32> to vector<14x32xf32>
    %374 = arith.addf %372, %373 : vector<14x32xf32>
    %375 = arith.addf %374, %169 : vector<14x32xf32>
    %376 = arith.addf %164, %165 : vector<32x32xf32>
    %c648 = arith.constant 648 : index
    %c0_129 = arith.constant 0 : index
    %377 = vector.load %arg2[%c648, %c0_129] : memref<1336x128xf32, #tpu.memory_space<vmem>>, vector<32x14xf32>
    %c824 = arith.constant 824 : index
    %c0_130 = arith.constant 0 : index
    %378 = vector.load %arg2[%c824, %c0_130] : memref<1336x128xf32, #tpu.memory_space<vmem>>, vector<32x48xf32>
    %c856 = arith.constant 856 : index
    %c0_131 = arith.constant 0 : index
    %379 = vector.load %arg2[%c856, %c0_131] : memref<1336x128xf32, #tpu.memory_space<vmem>>, vector<1x48xf32>
    %380 = vector.extract_strided_slice %378 {offsets = [0, 0], sizes = [32, 16], strides = [1, 1]} : vector<32x48xf32> to vector<32x16xf32>
    %cst_132 = arith.constant dense<0.000000e+00> : vector<32x16xf32>
    %381 = tpu.matmul %376, %380, %cst_132 {dimension_numbers = #tpu.dot_dimension_numbers<[1], [0], [0], [1], [0, 0, 1, 1], [], []>} : vector<32x32xf32>, vector<32x16xf32>, vector<32x16xf32> -> vector<32x16xf32>
    %382 = vector.extract_strided_slice %379 {offsets = [0, 0], sizes = [1, 16], strides = [1, 1]} : vector<1x48xf32> to vector<1x16xf32>
    %383 = vector.broadcast %382 : vector<1x16xf32> to vector<32x16xf32>
    %384 = arith.addf %381, %383 : vector<32x16xf32>
    %385 = vector.extract_strided_slice %378 {offsets = [0, 16], sizes = [32, 16], strides = [1, 1]} : vector<32x48xf32> to vector<32x16xf32>
    %cst_133 = arith.constant dense<0.000000e+00> : vector<14x16xf32>
    %386 = tpu.matmul %375, %385, %cst_133 {dimension_numbers = #tpu.dot_dimension_numbers<[1], [0], [0], [1], [0, 0, 1, 1], [], []>} : vector<14x32xf32>, vector<32x16xf32>, vector<14x16xf32> -> vector<14x16xf32>
    %387 = vector.extract_strided_slice %379 {offsets = [0, 16], sizes = [1, 16], strides = [1, 1]} : vector<1x48xf32> to vector<1x16xf32>
    %388 = vector.broadcast %387 : vector<1x16xf32> to vector<14x16xf32>
    %389 = arith.addf %386, %388 : vector<14x16xf32>
    %390 = vector.extract_strided_slice %378 {offsets = [0, 32], sizes = [32, 16], strides = [1, 1]} : vector<32x48xf32> to vector<32x16xf32>
    %cst_134 = arith.constant dense<0.000000e+00> : vector<14x16xf32>
    %391 = tpu.matmul %374, %390, %cst_134 {dimension_numbers = #tpu.dot_dimension_numbers<[1], [0], [0], [1], [0, 0, 1, 1], [], []>} : vector<14x32xf32>, vector<32x16xf32>, vector<14x16xf32> -> vector<14x16xf32>
    %392 = vector.extract_strided_slice %379 {offsets = [0, 32], sizes = [1, 16], strides = [1, 1]} : vector<1x48xf32> to vector<1x16xf32>
    %393 = vector.broadcast %392 : vector<1x16xf32> to vector<14x16xf32>
    %394 = arith.addf %391, %393 : vector<14x16xf32>
    %c864 = arith.constant 864 : index
    %c0_135 = arith.constant 0 : index
    %395 = vector.load %arg2[%c864, %c0_135] : memref<1336x128xf32, #tpu.memory_space<vmem>>, vector<16x32xf32>
    %396 = vector.extract_strided_slice %384 {offsets = [0, 0], sizes = [32, 8], strides = [1, 1]} : vector<32x16xf32> to vector<32x8xf32>
    %397 = vector.extract_strided_slice %389 {offsets = [0, 0], sizes = [14, 8], strides = [1, 1]} : vector<14x16xf32> to vector<14x8xf32>
    %cst_136 = arith.constant dense<0.000000e+00> : vector<32x14xf32>
    %398 = tpu.matmul %396, %397, %cst_136 {dimension_numbers = #tpu.dot_dimension_numbers<[1], [1], [0], [0], [0, 0, 1, 0], [], []>} : vector<32x8xf32>, vector<14x8xf32>, vector<32x14xf32> -> vector<32x14xf32>
    %cst_137 = arith.constant 0.353553385 : f32
    %399 = vector.broadcast %cst_137 : f32 to vector<32x14xf32>
    %400 = arith.mulf %398, %399 : vector<32x14xf32>
    %401 = arith.addf %400, %377 : vector<32x14xf32>
    %cst_138 = arith.constant dense<0xFF800000> : vector<32xf32>
    %402 = vector.multi_reduction <maximumf>, %401, %cst_138 [1] : vector<32x14xf32> to vector<32xf32>
    %403 = vector.shape_cast %402 : vector<32xf32> to vector<32x1xf32>
    %404 = vector.broadcast %403 : vector<32x1xf32> to vector<32x14xf32>
    %405 = arith.subf %401, %404 : vector<32x14xf32>
    %406 = math.exp %405 : vector<32x14xf32>
    %cst_139 = arith.constant dense<0.000000e+00> : vector<32xf32>
    %407 = vector.multi_reduction <add>, %406, %cst_139 [1] : vector<32x14xf32> to vector<32xf32>
    %408 = vector.shape_cast %407 : vector<32xf32> to vector<32x1xf32>
    %409 = tpu.reciprocal %408 {approx = true} : vector<32x1xf32> -> vector<32x1xf32>
    %410 = vector.broadcast %409 : vector<32x1xf32> to vector<32x14xf32>
    %411 = arith.mulf %406, %410 : vector<32x14xf32>
    %412 = vector.extract_strided_slice %394 {offsets = [0, 0], sizes = [14, 8], strides = [1, 1]} : vector<14x16xf32> to vector<14x8xf32>
    %cst_140 = arith.constant dense<0.000000e+00> : vector<32x8xf32>
    %413 = tpu.matmul %411, %412, %cst_140 {dimension_numbers = #tpu.dot_dimension_numbers<[1], [0], [0], [1], [0, 0, 1, 1], [], []>} : vector<32x14xf32>, vector<14x8xf32>, vector<32x8xf32> -> vector<32x8xf32>
    %414 = vector.extract_strided_slice %395 {offsets = [0, 0], sizes = [8, 32], strides = [1, 1]} : vector<16x32xf32> to vector<8x32xf32>
    %cst_141 = arith.constant dense<0.000000e+00> : vector<32x32xf32>
    %415 = tpu.matmul %413, %414, %cst_141 {dimension_numbers = #tpu.dot_dimension_numbers<[1], [0], [0], [1], [0, 0, 1, 1], [], []>} : vector<32x8xf32>, vector<8x32xf32>, vector<32x32xf32> -> vector<32x32xf32>
    %416 = vector.extract_strided_slice %384 {offsets = [0, 8], sizes = [32, 8], strides = [1, 1]} : vector<32x16xf32> to vector<32x8xf32>
    %417 = vector.extract_strided_slice %389 {offsets = [0, 8], sizes = [14, 8], strides = [1, 1]} : vector<14x16xf32> to vector<14x8xf32>
    %cst_142 = arith.constant dense<0.000000e+00> : vector<32x14xf32>
    %418 = tpu.matmul %416, %417, %cst_142 {dimension_numbers = #tpu.dot_dimension_numbers<[1], [1], [0], [0], [0, 0, 1, 0], [], []>} : vector<32x8xf32>, vector<14x8xf32>, vector<32x14xf32> -> vector<32x14xf32>
    %cst_143 = arith.constant 0.353553385 : f32
    %419 = vector.broadcast %cst_143 : f32 to vector<32x14xf32>
    %420 = arith.mulf %418, %419 : vector<32x14xf32>
    %421 = arith.addf %420, %377 : vector<32x14xf32>
    %cst_144 = arith.constant dense<0xFF800000> : vector<32xf32>
    %422 = vector.multi_reduction <maximumf>, %421, %cst_144 [1] : vector<32x14xf32> to vector<32xf32>
    %423 = vector.shape_cast %422 : vector<32xf32> to vector<32x1xf32>
    %424 = vector.broadcast %423 : vector<32x1xf32> to vector<32x14xf32>
    %425 = arith.subf %421, %424 : vector<32x14xf32>
    %426 = math.exp %425 : vector<32x14xf32>
    %cst_145 = arith.constant dense<0.000000e+00> : vector<32xf32>
    %427 = vector.multi_reduction <add>, %426, %cst_145 [1] : vector<32x14xf32> to vector<32xf32>
    %428 = vector.shape_cast %427 : vector<32xf32> to vector<32x1xf32>
    %429 = tpu.reciprocal %428 {approx = true} : vector<32x1xf32> -> vector<32x1xf32>
    %430 = vector.broadcast %429 : vector<32x1xf32> to vector<32x14xf32>
    %431 = arith.mulf %426, %430 : vector<32x14xf32>
    %432 = vector.extract_strided_slice %394 {offsets = [0, 8], sizes = [14, 8], strides = [1, 1]} : vector<14x16xf32> to vector<14x8xf32>
    %cst_146 = arith.constant dense<0.000000e+00> : vector<32x8xf32>
    %433 = tpu.matmul %431, %432, %cst_146 {dimension_numbers = #tpu.dot_dimension_numbers<[1], [0], [0], [1], [0, 0, 1, 1], [], []>} : vector<32x14xf32>, vector<14x8xf32>, vector<32x8xf32> -> vector<32x8xf32>
    %434 = vector.extract_strided_slice %395 {offsets = [8, 0], sizes = [8, 32], strides = [1, 1]} : vector<16x32xf32> to vector<8x32xf32>
    %cst_147 = arith.constant dense<0.000000e+00> : vector<32x32xf32>
    %435 = tpu.matmul %433, %434, %cst_147 {dimension_numbers = #tpu.dot_dimension_numbers<[1], [0], [0], [1], [0, 0, 1, 1], [], []>} : vector<32x8xf32>, vector<8x32xf32>, vector<32x32xf32> -> vector<32x32xf32>
    %436 = arith.addf %415, %435 : vector<32x32xf32>
    %c880 = arith.constant 880 : index
    %c0_148 = arith.constant 0 : index
    %437 = vector.load %arg2[%c880, %c0_148] : memref<1336x128xf32, #tpu.memory_space<vmem>>, vector<1x32xf32>
    %438 = vector.broadcast %437 : vector<1x32xf32> to vector<32x32xf32>
    %439 = arith.addf %436, %438 : vector<32x32xf32>
    %440 = arith.addf %164, %439 : vector<32x32xf32>
    %c1000 = arith.constant 1000 : index
    %c0_149 = arith.constant 0 : index
    %441 = vector.load %arg2[%c1000, %c0_149] : memref<1336x128xf32, #tpu.memory_space<vmem>>, vector<1x32xf32>
    %c1008 = arith.constant 1008 : index
    %c0_150 = arith.constant 0 : index
    %442 = vector.load %arg2[%c1008, %c0_150] : memref<1336x128xf32, #tpu.memory_space<vmem>>, vector<1x32xf32>
    %cst_151 = arith.constant dense<0.000000e+00> : vector<32xf32>
    %443 = vector.multi_reduction <add>, %440, %cst_151 [1] : vector<32x32xf32> to vector<32xf32>
    %444 = vector.shape_cast %443 : vector<32xf32> to vector<32x1xf32>
    %cst_152 = arith.constant 3.200000e+01 : f32
    %445 = vector.broadcast %cst_152 : f32 to vector<32x1xf32>
    %446 = arith.divf %444, %445 : vector<32x1xf32>
    %447 = vector.broadcast %446 : vector<32x1xf32> to vector<32x32xf32>
    %448 = arith.subf %440, %447 : vector<32x32xf32>
    %449 = arith.mulf %448, %448 : vector<32x32xf32>
    %cst_153 = arith.constant dense<0.000000e+00> : vector<32xf32>
    %450 = vector.multi_reduction <add>, %449, %cst_153 [1] : vector<32x32xf32> to vector<32xf32>
    %451 = vector.shape_cast %450 : vector<32xf32> to vector<32x1xf32>
    %cst_154 = arith.constant 3.200000e+01 : f32
    %452 = vector.broadcast %cst_154 : f32 to vector<32x1xf32>
    %453 = arith.divf %451, %452 : vector<32x1xf32>
    %454 = vector.broadcast %446 : vector<32x1xf32> to vector<32x32xf32>
    %455 = arith.subf %440, %454 : vector<32x32xf32>
    %cst_155 = arith.constant 9.99999974E-6 : f32
    %456 = vector.broadcast %cst_155 : f32 to vector<32x1xf32>
    %457 = arith.addf %453, %456 : vector<32x1xf32>
    %458 = math.rsqrt %457 : vector<32x1xf32>
    %459 = vector.broadcast %458 : vector<32x1xf32> to vector<32x32xf32>
    %460 = arith.mulf %455, %459 : vector<32x32xf32>
    %461 = vector.broadcast %441 : vector<1x32xf32> to vector<32x32xf32>
    %462 = arith.mulf %460, %461 : vector<32x32xf32>
    %463 = vector.broadcast %442 : vector<1x32xf32> to vector<32x32xf32>
    %464 = arith.addf %462, %463 : vector<32x32xf32>
    %465 = arith.addf %374, %169 : vector<14x32xf32>
    %466 = arith.addf %464, %165 : vector<32x32xf32>
    %c632_156 = arith.constant 632 : index
    %c0_157 = arith.constant 0 : index
    %467 = vector.load %arg2[%c632_156, %c0_157] : memref<1336x128xf32, #tpu.memory_space<vmem>>, vector<14x32xf32>
    %c888 = arith.constant 888 : index
    %c0_158 = arith.constant 0 : index
    %468 = vector.load %arg2[%c888, %c0_158] : memref<1336x128xf32, #tpu.memory_space<vmem>>, vector<32x48xf32>
    %c920 = arith.constant 920 : index
    %c0_159 = arith.constant 0 : index
    %469 = vector.load %arg2[%c920, %c0_159] : memref<1336x128xf32, #tpu.memory_space<vmem>>, vector<1x48xf32>
    %470 = vector.extract_strided_slice %468 {offsets = [0, 0], sizes = [32, 16], strides = [1, 1]} : vector<32x48xf32> to vector<32x16xf32>
    %cst_160 = arith.constant dense<0.000000e+00> : vector<14x16xf32>
    %471 = tpu.matmul %465, %470, %cst_160 {dimension_numbers = #tpu.dot_dimension_numbers<[1], [0], [0], [1], [0, 0, 1, 1], [], []>} : vector<14x32xf32>, vector<32x16xf32>, vector<14x16xf32> -> vector<14x16xf32>
    %472 = vector.extract_strided_slice %469 {offsets = [0, 0], sizes = [1, 16], strides = [1, 1]} : vector<1x48xf32> to vector<1x16xf32>
    %473 = vector.broadcast %472 : vector<1x16xf32> to vector<14x16xf32>
    %474 = arith.addf %471, %473 : vector<14x16xf32>
    %475 = vector.extract_strided_slice %468 {offsets = [0, 16], sizes = [32, 16], strides = [1, 1]} : vector<32x48xf32> to vector<32x16xf32>
    %cst_161 = arith.constant dense<0.000000e+00> : vector<32x16xf32>
    %476 = tpu.matmul %466, %475, %cst_161 {dimension_numbers = #tpu.dot_dimension_numbers<[1], [0], [0], [1], [0, 0, 1, 1], [], []>} : vector<32x32xf32>, vector<32x16xf32>, vector<32x16xf32> -> vector<32x16xf32>
    %477 = vector.extract_strided_slice %469 {offsets = [0, 16], sizes = [1, 16], strides = [1, 1]} : vector<1x48xf32> to vector<1x16xf32>
    %478 = vector.broadcast %477 : vector<1x16xf32> to vector<32x16xf32>
    %479 = arith.addf %476, %478 : vector<32x16xf32>
    %480 = vector.extract_strided_slice %468 {offsets = [0, 32], sizes = [32, 16], strides = [1, 1]} : vector<32x48xf32> to vector<32x16xf32>
    %cst_162 = arith.constant dense<0.000000e+00> : vector<32x16xf32>
    %481 = tpu.matmul %464, %480, %cst_162 {dimension_numbers = #tpu.dot_dimension_numbers<[1], [0], [0], [1], [0, 0, 1, 1], [], []>} : vector<32x32xf32>, vector<32x16xf32>, vector<32x16xf32> -> vector<32x16xf32>
    %482 = vector.extract_strided_slice %469 {offsets = [0, 32], sizes = [1, 16], strides = [1, 1]} : vector<1x48xf32> to vector<1x16xf32>
    %483 = vector.broadcast %482 : vector<1x16xf32> to vector<32x16xf32>
    %484 = arith.addf %481, %483 : vector<32x16xf32>
    %c928 = arith.constant 928 : index
    %c0_163 = arith.constant 0 : index
    %485 = vector.load %arg2[%c928, %c0_163] : memref<1336x128xf32, #tpu.memory_space<vmem>>, vector<16x32xf32>
    %486 = vector.extract_strided_slice %474 {offsets = [0, 0], sizes = [14, 8], strides = [1, 1]} : vector<14x16xf32> to vector<14x8xf32>
    %487 = vector.extract_strided_slice %479 {offsets = [0, 0], sizes = [32, 8], strides = [1, 1]} : vector<32x16xf32> to vector<32x8xf32>
    %cst_164 = arith.constant dense<0.000000e+00> : vector<14x32xf32>
    %488 = tpu.matmul %486, %487, %cst_164 {dimension_numbers = #tpu.dot_dimension_numbers<[1], [1], [0], [0], [0, 0, 1, 0], [], []>} : vector<14x8xf32>, vector<32x8xf32>, vector<14x32xf32> -> vector<14x32xf32>
    %cst_165 = arith.constant 0.353553385 : f32
    %489 = vector.broadcast %cst_165 : f32 to vector<14x32xf32>
    %490 = arith.mulf %488, %489 : vector<14x32xf32>
    %491 = arith.addf %490, %467 : vector<14x32xf32>
    %cst_166 = arith.constant dense<0xFF800000> : vector<14xf32>
    %492 = vector.multi_reduction <maximumf>, %491, %cst_166 [1] : vector<14x32xf32> to vector<14xf32>
    %493 = vector.shape_cast %492 : vector<14xf32> to vector<14x1xf32>
    %494 = vector.broadcast %493 : vector<14x1xf32> to vector<14x32xf32>
    %495 = arith.subf %491, %494 : vector<14x32xf32>
    %496 = math.exp %495 : vector<14x32xf32>
    %cst_167 = arith.constant dense<0.000000e+00> : vector<14xf32>
    %497 = vector.multi_reduction <add>, %496, %cst_167 [1] : vector<14x32xf32> to vector<14xf32>
    %498 = vector.shape_cast %497 : vector<14xf32> to vector<14x1xf32>
    %499 = tpu.reciprocal %498 {approx = true} : vector<14x1xf32> -> vector<14x1xf32>
    %500 = vector.broadcast %499 : vector<14x1xf32> to vector<14x32xf32>
    %501 = arith.mulf %496, %500 : vector<14x32xf32>
    %502 = vector.extract_strided_slice %484 {offsets = [0, 0], sizes = [32, 8], strides = [1, 1]} : vector<32x16xf32> to vector<32x8xf32>
    %cst_168 = arith.constant dense<0.000000e+00> : vector<14x8xf32>
    %503 = tpu.matmul %501, %502, %cst_168 {dimension_numbers = #tpu.dot_dimension_numbers<[1], [0], [0], [1], [0, 0, 1, 1], [], []>} : vector<14x32xf32>, vector<32x8xf32>, vector<14x8xf32> -> vector<14x8xf32>
    %504 = vector.extract_strided_slice %485 {offsets = [0, 0], sizes = [8, 32], strides = [1, 1]} : vector<16x32xf32> to vector<8x32xf32>
    %cst_169 = arith.constant dense<0.000000e+00> : vector<14x32xf32>
    %505 = tpu.matmul %503, %504, %cst_169 {dimension_numbers = #tpu.dot_dimension_numbers<[1], [0], [0], [1], [0, 0, 1, 1], [], []>} : vector<14x8xf32>, vector<8x32xf32>, vector<14x32xf32> -> vector<14x32xf32>
    %506 = vector.extract_strided_slice %474 {offsets = [0, 8], sizes = [14, 8], strides = [1, 1]} : vector<14x16xf32> to vector<14x8xf32>
    %507 = vector.extract_strided_slice %479 {offsets = [0, 8], sizes = [32, 8], strides = [1, 1]} : vector<32x16xf32> to vector<32x8xf32>
    %cst_170 = arith.constant dense<0.000000e+00> : vector<14x32xf32>
    %508 = tpu.matmul %506, %507, %cst_170 {dimension_numbers = #tpu.dot_dimension_numbers<[1], [1], [0], [0], [0, 0, 1, 0], [], []>} : vector<14x8xf32>, vector<32x8xf32>, vector<14x32xf32> -> vector<14x32xf32>
    %cst_171 = arith.constant 0.353553385 : f32
    %509 = vector.broadcast %cst_171 : f32 to vector<14x32xf32>
    %510 = arith.mulf %508, %509 : vector<14x32xf32>
    %511 = arith.addf %510, %467 : vector<14x32xf32>
    %cst_172 = arith.constant dense<0xFF800000> : vector<14xf32>
    %512 = vector.multi_reduction <maximumf>, %511, %cst_172 [1] : vector<14x32xf32> to vector<14xf32>
    %513 = vector.shape_cast %512 : vector<14xf32> to vector<14x1xf32>
    %514 = vector.broadcast %513 : vector<14x1xf32> to vector<14x32xf32>
    %515 = arith.subf %511, %514 : vector<14x32xf32>
    %516 = math.exp %515 : vector<14x32xf32>
    %cst_173 = arith.constant dense<0.000000e+00> : vector<14xf32>
    %517 = vector.multi_reduction <add>, %516, %cst_173 [1] : vector<14x32xf32> to vector<14xf32>
    %518 = vector.shape_cast %517 : vector<14xf32> to vector<14x1xf32>
    %519 = tpu.reciprocal %518 {approx = true} : vector<14x1xf32> -> vector<14x1xf32>
    %520 = vector.broadcast %519 : vector<14x1xf32> to vector<14x32xf32>
    %521 = arith.mulf %516, %520 : vector<14x32xf32>
    %522 = vector.extract_strided_slice %484 {offsets = [0, 8], sizes = [32, 8], strides = [1, 1]} : vector<32x16xf32> to vector<32x8xf32>
    %cst_174 = arith.constant dense<0.000000e+00> : vector<14x8xf32>
    %523 = tpu.matmul %521, %522, %cst_174 {dimension_numbers = #tpu.dot_dimension_numbers<[1], [0], [0], [1], [0, 0, 1, 1], [], []>} : vector<14x32xf32>, vector<32x8xf32>, vector<14x8xf32> -> vector<14x8xf32>
    %524 = vector.extract_strided_slice %485 {offsets = [8, 0], sizes = [8, 32], strides = [1, 1]} : vector<16x32xf32> to vector<8x32xf32>
    %cst_175 = arith.constant dense<0.000000e+00> : vector<14x32xf32>
    %525 = tpu.matmul %523, %524, %cst_175 {dimension_numbers = #tpu.dot_dimension_numbers<[1], [0], [0], [1], [0, 0, 1, 1], [], []>} : vector<14x8xf32>, vector<8x32xf32>, vector<14x32xf32> -> vector<14x32xf32>
    %526 = arith.addf %505, %525 : vector<14x32xf32>
    %c944 = arith.constant 944 : index
    %c0_176 = arith.constant 0 : index
    %527 = vector.load %arg2[%c944, %c0_176] : memref<1336x128xf32, #tpu.memory_space<vmem>>, vector<1x32xf32>
    %528 = vector.broadcast %527 : vector<1x32xf32> to vector<14x32xf32>
    %529 = arith.addf %526, %528 : vector<14x32xf32>
    %530 = arith.addf %374, %529 : vector<14x32xf32>
    %c1016 = arith.constant 1016 : index
    %c0_177 = arith.constant 0 : index
    %531 = vector.load %arg2[%c1016, %c0_177] : memref<1336x128xf32, #tpu.memory_space<vmem>>, vector<1x32xf32>
    %c1024 = arith.constant 1024 : index
    %c0_178 = arith.constant 0 : index
    %532 = vector.load %arg2[%c1024, %c0_178] : memref<1336x128xf32, #tpu.memory_space<vmem>>, vector<1x32xf32>
    %cst_179 = arith.constant dense<0.000000e+00> : vector<14xf32>
    %533 = vector.multi_reduction <add>, %530, %cst_179 [1] : vector<14x32xf32> to vector<14xf32>
    %534 = vector.shape_cast %533 : vector<14xf32> to vector<14x1xf32>
    %cst_180 = arith.constant 3.200000e+01 : f32
    %535 = vector.broadcast %cst_180 : f32 to vector<14x1xf32>
    %536 = arith.divf %534, %535 : vector<14x1xf32>
    %537 = vector.broadcast %536 : vector<14x1xf32> to vector<14x32xf32>
    %538 = arith.subf %530, %537 : vector<14x32xf32>
    %539 = arith.mulf %538, %538 : vector<14x32xf32>
    %cst_181 = arith.constant dense<0.000000e+00> : vector<14xf32>
    %540 = vector.multi_reduction <add>, %539, %cst_181 [1] : vector<14x32xf32> to vector<14xf32>
    %541 = vector.shape_cast %540 : vector<14xf32> to vector<14x1xf32>
    %cst_182 = arith.constant 3.200000e+01 : f32
    %542 = vector.broadcast %cst_182 : f32 to vector<14x1xf32>
    %543 = arith.divf %541, %542 : vector<14x1xf32>
    %544 = vector.broadcast %536 : vector<14x1xf32> to vector<14x32xf32>
    %545 = arith.subf %530, %544 : vector<14x32xf32>
    %cst_183 = arith.constant 9.99999974E-6 : f32
    %546 = vector.broadcast %cst_183 : f32 to vector<14x1xf32>
    %547 = arith.addf %543, %546 : vector<14x1xf32>
    %548 = math.rsqrt %547 : vector<14x1xf32>
    %549 = vector.broadcast %548 : vector<14x1xf32> to vector<14x32xf32>
    %550 = arith.mulf %545, %549 : vector<14x32xf32>
    %551 = vector.broadcast %531 : vector<1x32xf32> to vector<14x32xf32>
    %552 = arith.mulf %550, %551 : vector<14x32xf32>
    %553 = vector.broadcast %532 : vector<1x32xf32> to vector<14x32xf32>
    %554 = arith.addf %552, %553 : vector<14x32xf32>
    %c576 = arith.constant 576 : index
    %c0_184 = arith.constant 0 : index
    %555 = vector.load %arg2[%c576, %c0_184] : memref<1336x128xf32, #tpu.memory_space<vmem>>, vector<2x14xf32>
    %cst_185 = arith.constant dense<0.000000e+00> : vector<2x32xf32>
    %556 = tpu.matmul %555, %554, %cst_185 {dimension_numbers = #tpu.dot_dimension_numbers<[1], [0], [0], [1], [0, 0, 1, 1], [], []>} : vector<2x14xf32>, vector<14x32xf32>, vector<2x32xf32> -> vector<2x32xf32>
    %c1216 = arith.constant 1216 : index
    %c0_186 = arith.constant 0 : index
    %557 = vector.load %arg2[%c1216, %c0_186] : memref<1336x128xf32, #tpu.memory_space<vmem>>, vector<32x32xf32>
    %cst_187 = arith.constant dense<0.000000e+00> : vector<2x32xf32>
    %558 = tpu.matmul %556, %557, %cst_187 {dimension_numbers = #tpu.dot_dimension_numbers<[1], [0], [0], [1], [0, 0, 1, 1], [], []>} : vector<2x32xf32>, vector<32x32xf32>, vector<2x32xf32> -> vector<2x32xf32>
    %c1248 = arith.constant 1248 : index
    %c0_188 = arith.constant 0 : index
    %559 = vector.load %arg2[%c1248, %c0_188] : memref<1336x128xf32, #tpu.memory_space<vmem>>, vector<1x32xf32>
    %560 = vector.broadcast %559 : vector<1x32xf32> to vector<2x32xf32>
    %561 = arith.addf %558, %560 : vector<2x32xf32>
    %cst_189 = arith.constant 0.000000e+00 : f32
    %562 = vector.broadcast %cst_189 : f32 to vector<2x32xf32>
    %563 = arith.maximumf %561, %562 : vector<2x32xf32>
    %c1256 = arith.constant 1256 : index
    %c0_190 = arith.constant 0 : index
    %564 = vector.load %arg2[%c1256, %c0_190] : memref<1336x128xf32, #tpu.memory_space<vmem>>, vector<32x32xf32>
    %cst_191 = arith.constant dense<0.000000e+00> : vector<2x32xf32>
    %565 = tpu.matmul %563, %564, %cst_191 {dimension_numbers = #tpu.dot_dimension_numbers<[1], [0], [0], [1], [0, 0, 1, 1], [], []>} : vector<2x32xf32>, vector<32x32xf32>, vector<2x32xf32> -> vector<2x32xf32>
    %c1288 = arith.constant 1288 : index
    %c0_192 = arith.constant 0 : index
    %566 = vector.load %arg2[%c1288, %c0_192] : memref<1336x128xf32, #tpu.memory_space<vmem>>, vector<1x32xf32>
    %567 = vector.broadcast %566 : vector<1x32xf32> to vector<2x32xf32>
    %568 = arith.addf %565, %567 : vector<2x32xf32>
    %cst_193 = arith.constant 0.000000e+00 : f32
    %569 = vector.broadcast %cst_193 : f32 to vector<2x32xf32>
    %570 = arith.maximumf %568, %569 : vector<2x32xf32>
    %c1296 = arith.constant 1296 : index
    %c0_194 = arith.constant 0 : index
    %571 = vector.load %arg2[%c1296, %c0_194] : memref<1336x128xf32, #tpu.memory_space<vmem>>, vector<32x4xf32>
    %cst_195 = arith.constant dense<0.000000e+00> : vector<2x4xf32>
    %572 = tpu.matmul %570, %571, %cst_195 {dimension_numbers = #tpu.dot_dimension_numbers<[1], [0], [0], [1], [0, 0, 1, 1], [], []>} : vector<2x32xf32>, vector<32x4xf32>, vector<2x4xf32> -> vector<2x4xf32>
    %c1328 = arith.constant 1328 : index
    %c0_196 = arith.constant 0 : index
    %573 = vector.load %arg2[%c1328, %c0_196] : memref<1336x128xf32, #tpu.memory_space<vmem>>, vector<1x4xf32>
    %574 = vector.broadcast %573 : vector<1x4xf32> to vector<2x4xf32>
    %575 = arith.addf %572, %574 : vector<2x4xf32>
    %c1144 = arith.constant 1144 : index
    %c0_197 = arith.constant 0 : index
    %576 = vector.load %arg2[%c1144, %c0_197] : memref<1336x128xf32, #tpu.memory_space<vmem>>, vector<32x32xf32>
    %c1200 = arith.constant 1200 : index
    %c0_198 = arith.constant 0 : index
    %577 = vector.load %arg2[%c1200, %c0_198] : memref<1336x128xf32, #tpu.memory_space<vmem>>, vector<8x16xf32>
    %578 = vector.extract_strided_slice %464 {offsets = [0, 0], sizes = [16, 32], strides = [1, 1]} : vector<32x32xf32> to vector<16x32xf32>
    %579 = vector.extract_strided_slice %576 {offsets = [0, 0], sizes = [32, 8], strides = [1, 1]} : vector<32x32xf32> to vector<32x8xf32>
    %cst_199 = arith.constant dense<0.000000e+00> : vector<16x8xf32>
    %580 = tpu.matmul %578, %579, %cst_199 {dimension_numbers = #tpu.dot_dimension_numbers<[1], [0], [0], [1], [0, 0, 1, 1], [], []>} : vector<16x32xf32>, vector<32x8xf32>, vector<16x8xf32> -> vector<16x8xf32>
    %581 = vector.extract_strided_slice %576 {offsets = [0, 8], sizes = [32, 8], strides = [1, 1]} : vector<32x32xf32> to vector<32x8xf32>
    %cst_200 = arith.constant dense<0.000000e+00> : vector<16x8xf32>
    %582 = tpu.matmul %578, %581, %cst_200 {dimension_numbers = #tpu.dot_dimension_numbers<[1], [0], [0], [1], [0, 0, 1, 1], [], []>} : vector<16x32xf32>, vector<32x8xf32>, vector<16x8xf32> -> vector<16x8xf32>
    %583 = vector.extract_strided_slice %576 {offsets = [0, 16], sizes = [32, 8], strides = [1, 1]} : vector<32x32xf32> to vector<32x8xf32>
    %cst_201 = arith.constant dense<0.000000e+00> : vector<16x8xf32>
    %584 = tpu.matmul %578, %583, %cst_201 {dimension_numbers = #tpu.dot_dimension_numbers<[1], [0], [0], [1], [0, 0, 1, 1], [], []>} : vector<16x32xf32>, vector<32x8xf32>, vector<16x8xf32> -> vector<16x8xf32>
    %585 = vector.extract_strided_slice %576 {offsets = [0, 24], sizes = [32, 8], strides = [1, 1]} : vector<32x32xf32> to vector<32x8xf32>
    %cst_202 = arith.constant dense<0.000000e+00> : vector<16x8xf32>
    %586 = tpu.matmul %578, %585, %cst_202 {dimension_numbers = #tpu.dot_dimension_numbers<[1], [0], [0], [1], [0, 0, 1, 1], [], []>} : vector<16x32xf32>, vector<32x8xf32>, vector<16x8xf32> -> vector<16x8xf32>
    %587 = vector.extract_strided_slice %464 {offsets = [16, 0], sizes = [16, 32], strides = [1, 1]} : vector<32x32xf32> to vector<16x32xf32>
    %588 = vector.extract_strided_slice %576 {offsets = [0, 0], sizes = [32, 8], strides = [1, 1]} : vector<32x32xf32> to vector<32x8xf32>
    %cst_203 = arith.constant dense<0.000000e+00> : vector<16x8xf32>
    %589 = tpu.matmul %587, %588, %cst_203 {dimension_numbers = #tpu.dot_dimension_numbers<[1], [0], [0], [1], [0, 0, 1, 1], [], []>} : vector<16x32xf32>, vector<32x8xf32>, vector<16x8xf32> -> vector<16x8xf32>
    %590 = vector.extract_strided_slice %576 {offsets = [0, 8], sizes = [32, 8], strides = [1, 1]} : vector<32x32xf32> to vector<32x8xf32>
    %cst_204 = arith.constant dense<0.000000e+00> : vector<16x8xf32>
    %591 = tpu.matmul %587, %590, %cst_204 {dimension_numbers = #tpu.dot_dimension_numbers<[1], [0], [0], [1], [0, 0, 1, 1], [], []>} : vector<16x32xf32>, vector<32x8xf32>, vector<16x8xf32> -> vector<16x8xf32>
    %592 = vector.extract_strided_slice %576 {offsets = [0, 16], sizes = [32, 8], strides = [1, 1]} : vector<32x32xf32> to vector<32x8xf32>
    %cst_205 = arith.constant dense<0.000000e+00> : vector<16x8xf32>
    %593 = tpu.matmul %587, %592, %cst_205 {dimension_numbers = #tpu.dot_dimension_numbers<[1], [0], [0], [1], [0, 0, 1, 1], [], []>} : vector<16x32xf32>, vector<32x8xf32>, vector<16x8xf32> -> vector<16x8xf32>
    %594 = vector.extract_strided_slice %576 {offsets = [0, 24], sizes = [32, 8], strides = [1, 1]} : vector<32x32xf32> to vector<32x8xf32>
    %cst_206 = arith.constant dense<0.000000e+00> : vector<16x8xf32>
    %595 = tpu.matmul %587, %594, %cst_206 {dimension_numbers = #tpu.dot_dimension_numbers<[1], [0], [0], [1], [0, 0, 1, 1], [], []>} : vector<16x32xf32>, vector<32x8xf32>, vector<16x8xf32> -> vector<16x8xf32>
    %596 = tpu.concatenate %580, %582, %584, %586, %589, %591, %593, %595 in 0 : vector<16x8xf32>, vector<16x8xf32>, vector<16x8xf32>, vector<16x8xf32>, vector<16x8xf32>, vector<16x8xf32>, vector<16x8xf32>, vector<16x8xf32> -> vector<128x8xf32>
    %c1176 = arith.constant 1176 : index
    %c0_207 = arith.constant 0 : index
    %597 = vector.load %arg2[%c1176, %c0_207] : memref<1336x128xf32, #tpu.memory_space<vmem>>, vector<1x8xf32>
    %598 = vector.broadcast %597 : vector<1x8xf32> to vector<128x8xf32>
    %599 = arith.addf %596, %598 : vector<128x8xf32>
    %c1184 = arith.constant 1184 : index
    %c0_208 = arith.constant 0 : index
    %600 = vector.load %arg2[%c1184, %c0_208] : memref<1336x128xf32, #tpu.memory_space<vmem>>, vector<1x8xf32>
    %c1192 = arith.constant 1192 : index
    %c0_209 = arith.constant 0 : index
    %601 = vector.load %arg2[%c1192, %c0_209] : memref<1336x128xf32, #tpu.memory_space<vmem>>, vector<1x8xf32>
    %cst_210 = arith.constant dense<0.000000e+00> : vector<128xf32>
    %602 = vector.multi_reduction <add>, %599, %cst_210 [1] : vector<128x8xf32> to vector<128xf32>
    %603 = vector.shape_cast %602 : vector<128xf32> to vector<128x1xf32>
    %cst_211 = arith.constant 8.000000e+00 : f32
    %604 = vector.broadcast %cst_211 : f32 to vector<128x1xf32>
    %605 = arith.divf %603, %604 : vector<128x1xf32>
    %606 = vector.broadcast %605 : vector<128x1xf32> to vector<128x8xf32>
    %607 = arith.subf %599, %606 : vector<128x8xf32>
    %608 = arith.mulf %607, %607 : vector<128x8xf32>
    %cst_212 = arith.constant dense<0.000000e+00> : vector<128xf32>
    %609 = vector.multi_reduction <add>, %608, %cst_212 [1] : vector<128x8xf32> to vector<128xf32>
    %610 = vector.shape_cast %609 : vector<128xf32> to vector<128x1xf32>
    %cst_213 = arith.constant 8.000000e+00 : f32
    %611 = vector.broadcast %cst_213 : f32 to vector<128x1xf32>
    %612 = arith.divf %610, %611 : vector<128x1xf32>
    %613 = vector.broadcast %605 : vector<128x1xf32> to vector<128x8xf32>
    %614 = arith.subf %599, %613 : vector<128x8xf32>
    %cst_214 = arith.constant 9.99999997E-7 : f32
    %615 = vector.broadcast %cst_214 : f32 to vector<128x1xf32>
    %616 = arith.addf %612, %615 : vector<128x1xf32>
    %617 = math.rsqrt %616 : vector<128x1xf32>
    %618 = vector.broadcast %617 : vector<128x1xf32> to vector<128x8xf32>
    %619 = arith.mulf %614, %618 : vector<128x8xf32>
    %620 = vector.broadcast %600 : vector<1x8xf32> to vector<128x8xf32>
    %621 = arith.mulf %619, %620 : vector<128x8xf32>
    %622 = vector.broadcast %601 : vector<1x8xf32> to vector<128x8xf32>
    %623 = arith.addf %621, %622 : vector<128x8xf32>
    %624 = arith.mulf %623, %623 : vector<128x8xf32>
    %625 = arith.mulf %623, %624 : vector<128x8xf32>
    %cst_215 = arith.constant 4.471500e-02 : f32
    %626 = vector.broadcast %cst_215 : f32 to vector<128x8xf32>
    %627 = arith.mulf %626, %625 : vector<128x8xf32>
    %628 = arith.addf %623, %627 : vector<128x8xf32>
    %cst_216 = arith.constant 0.797884583 : f32
    %629 = vector.broadcast %cst_216 : f32 to vector<128x8xf32>
    %630 = arith.mulf %629, %628 : vector<128x8xf32>
    %631 = math.tanh %630 : vector<128x8xf32>
    %cst_217 = arith.constant 1.000000e+00 : f32
    %632 = vector.broadcast %cst_217 : f32 to vector<128x8xf32>
    %633 = arith.addf %632, %631 : vector<128x8xf32>
    %cst_218 = arith.constant 5.000000e-01 : f32
    %634 = vector.broadcast %cst_218 : f32 to vector<128x8xf32>
    %635 = arith.mulf %634, %633 : vector<128x8xf32>
    %636 = arith.mulf %623, %635 : vector<128x8xf32>
    %637 = vector.extract_strided_slice %636 {offsets = [0, 0], sizes = [64, 8], strides = [1, 1]} : vector<128x8xf32> to vector<64x8xf32>
    %638 = vector.extract_strided_slice %577 {offsets = [0, 0], sizes = [8, 4], strides = [1, 1]} : vector<8x16xf32> to vector<8x4xf32>
    %cst_219 = arith.constant dense<0.000000e+00> : vector<64x4xf32>
    %639 = tpu.matmul %637, %638, %cst_219 {dimension_numbers = #tpu.dot_dimension_numbers<[1], [0], [0], [1], [0, 0, 1, 1], [], []>} : vector<64x8xf32>, vector<8x4xf32>, vector<64x4xf32> -> vector<64x4xf32>
    %640 = vector.extract_strided_slice %577 {offsets = [0, 4], sizes = [8, 4], strides = [1, 1]} : vector<8x16xf32> to vector<8x4xf32>
    %cst_220 = arith.constant dense<0.000000e+00> : vector<64x4xf32>
    %641 = tpu.matmul %637, %640, %cst_220 {dimension_numbers = #tpu.dot_dimension_numbers<[1], [0], [0], [1], [0, 0, 1, 1], [], []>} : vector<64x8xf32>, vector<8x4xf32>, vector<64x4xf32> -> vector<64x4xf32>
    %642 = vector.extract_strided_slice %577 {offsets = [0, 8], sizes = [8, 4], strides = [1, 1]} : vector<8x16xf32> to vector<8x4xf32>
    %cst_221 = arith.constant dense<0.000000e+00> : vector<64x4xf32>
    %643 = tpu.matmul %637, %642, %cst_221 {dimension_numbers = #tpu.dot_dimension_numbers<[1], [0], [0], [1], [0, 0, 1, 1], [], []>} : vector<64x8xf32>, vector<8x4xf32>, vector<64x4xf32> -> vector<64x4xf32>
    %644 = vector.extract_strided_slice %577 {offsets = [0, 12], sizes = [8, 4], strides = [1, 1]} : vector<8x16xf32> to vector<8x4xf32>
    %cst_222 = arith.constant dense<0.000000e+00> : vector<64x4xf32>
    %645 = tpu.matmul %637, %644, %cst_222 {dimension_numbers = #tpu.dot_dimension_numbers<[1], [0], [0], [1], [0, 0, 1, 1], [], []>} : vector<64x8xf32>, vector<8x4xf32>, vector<64x4xf32> -> vector<64x4xf32>
    %646 = vector.extract_strided_slice %636 {offsets = [64, 0], sizes = [64, 8], strides = [1, 1]} : vector<128x8xf32> to vector<64x8xf32>
    %647 = vector.extract_strided_slice %577 {offsets = [0, 0], sizes = [8, 4], strides = [1, 1]} : vector<8x16xf32> to vector<8x4xf32>
    %cst_223 = arith.constant dense<0.000000e+00> : vector<64x4xf32>
    %648 = tpu.matmul %646, %647, %cst_223 {dimension_numbers = #tpu.dot_dimension_numbers<[1], [0], [0], [1], [0, 0, 1, 1], [], []>} : vector<64x8xf32>, vector<8x4xf32>, vector<64x4xf32> -> vector<64x4xf32>
    %649 = vector.extract_strided_slice %577 {offsets = [0, 4], sizes = [8, 4], strides = [1, 1]} : vector<8x16xf32> to vector<8x4xf32>
    %cst_224 = arith.constant dense<0.000000e+00> : vector<64x4xf32>
    %650 = tpu.matmul %646, %649, %cst_224 {dimension_numbers = #tpu.dot_dimension_numbers<[1], [0], [0], [1], [0, 0, 1, 1], [], []>} : vector<64x8xf32>, vector<8x4xf32>, vector<64x4xf32> -> vector<64x4xf32>
    %651 = vector.extract_strided_slice %577 {offsets = [0, 8], sizes = [8, 4], strides = [1, 1]} : vector<8x16xf32> to vector<8x4xf32>
    %cst_225 = arith.constant dense<0.000000e+00> : vector<64x4xf32>
    %652 = tpu.matmul %646, %651, %cst_225 {dimension_numbers = #tpu.dot_dimension_numbers<[1], [0], [0], [1], [0, 0, 1, 1], [], []>} : vector<64x8xf32>, vector<8x4xf32>, vector<64x4xf32> -> vector<64x4xf32>
    %653 = vector.extract_strided_slice %577 {offsets = [0, 12], sizes = [8, 4], strides = [1, 1]} : vector<8x16xf32> to vector<8x4xf32>
    %cst_226 = arith.constant dense<0.000000e+00> : vector<64x4xf32>
    %654 = tpu.matmul %646, %653, %cst_226 {dimension_numbers = #tpu.dot_dimension_numbers<[1], [0], [0], [1], [0, 0, 1, 1], [], []>} : vector<64x8xf32>, vector<8x4xf32>, vector<64x4xf32> -> vector<64x4xf32>
    %655 = tpu.concatenate %639, %641, %643, %645, %648, %650, %652, %654 in 0 : vector<64x4xf32>, vector<64x4xf32>, vector<64x4xf32>, vector<64x4xf32>, vector<64x4xf32>, vector<64x4xf32>, vector<64x4xf32>, vector<64x4xf32> -> vector<512x4xf32>
    %c1208 = arith.constant 1208 : index
    %c0_227 = arith.constant 0 : index
    %656 = vector.load %arg2[%c1208, %c0_227] : memref<1336x128xf32, #tpu.memory_space<vmem>>, vector<1x4xf32>
    %657 = vector.broadcast %656 : vector<1x4xf32> to vector<512x4xf32>
    %658 = arith.addf %655, %657 : vector<512x4xf32>
    %659 = arith.mulf %658, %658 : vector<512x4xf32>
    %660 = arith.mulf %658, %659 : vector<512x4xf32>
    %cst_228 = arith.constant 4.471500e-02 : f32
    %661 = vector.broadcast %cst_228 : f32 to vector<512x4xf32>
    %662 = arith.mulf %661, %660 : vector<512x4xf32>
    %663 = arith.addf %658, %662 : vector<512x4xf32>
    %cst_229 = arith.constant 0.797884583 : f32
    %664 = vector.broadcast %cst_229 : f32 to vector<512x4xf32>
    %665 = arith.mulf %664, %663 : vector<512x4xf32>
    %666 = math.tanh %665 : vector<512x4xf32>
    %cst_230 = arith.constant 1.000000e+00 : f32
    %667 = vector.broadcast %cst_230 : f32 to vector<512x4xf32>
    %668 = arith.addf %667, %666 : vector<512x4xf32>
    %cst_231 = arith.constant 5.000000e-01 : f32
    %669 = vector.broadcast %cst_231 : f32 to vector<512x4xf32>
    %670 = arith.mulf %669, %668 : vector<512x4xf32>
    %671 = arith.mulf %658, %670 : vector<512x4xf32>
    %672 = vector.extract_strided_slice %575 {offsets = [0, 0], sizes = [1, 4], strides = [1, 1]} : vector<2x4xf32> to vector<1x4xf32>
    %673 = vector.extract_strided_slice %671 {offsets = [0, 0], sizes = [256, 4], strides = [1, 1]} : vector<512x4xf32> to vector<256x4xf32>
    %cst_232 = arith.constant dense<0.000000e+00> : vector<1x256xf32>
    %674 = tpu.matmul %672, %673, %cst_232 {dimension_numbers = #tpu.dot_dimension_numbers<[1], [1], [0], [0], [0, 0, 1, 0], [], []>} : vector<1x4xf32>, vector<256x4xf32>, vector<1x256xf32> -> vector<1x256xf32>
    %675 = vector.extract_strided_slice %575 {offsets = [1, 0], sizes = [1, 4], strides = [1, 1]} : vector<2x4xf32> to vector<1x4xf32>
    %676 = vector.extract_strided_slice %671 {offsets = [256, 0], sizes = [256, 4], strides = [1, 1]} : vector<512x4xf32> to vector<256x4xf32>
    %cst_233 = arith.constant dense<0.000000e+00> : vector<1x256xf32>
    %677 = tpu.matmul %675, %676, %cst_233 {dimension_numbers = #tpu.dot_dimension_numbers<[1], [1], [0], [0], [0, 0, 1, 0], [], []>} : vector<1x4xf32>, vector<256x4xf32>, vector<1x256xf32> -> vector<1x256xf32>
    %678 = tpu.concatenate %674, %677 in 0 : vector<1x256xf32>, vector<1x256xf32> -> vector<2x256xf32>
    %679 = arith.truncf %678 : vector<2x256xf32> to vector<2x256xbf16>
    %c0_234 = arith.constant 0 : index
    %c0_235 = arith.constant 0 : index
    %680 = vector.load %arg3[%c0_234, %c0_235] : memref<256x1024xbf16, #tpu.memory_space<vmem>>, vector<256x1024xbf16>
    %cst_236 = arith.constant dense<0.000000e+00> : vector<2x1024xf32>
    %681 = tpu.matmul %679, %680, %cst_236 {dimension_numbers = #tpu.dot_dimension_numbers<[1], [0], [0], [1], [0, 0, 1, 1], [], []>} : vector<2x256xbf16>, vector<256x1024xbf16>, vector<2x1024xf32> -> vector<2x1024xf32>
    %c0_237 = arith.constant 0 : index
    %c0_238 = arith.constant 0 : index
    %682 = vector.load %arg4[%c0_237, %c0_238] : memref<2x1024xf32, #tpu.memory_space<vmem>>, vector<2x1024xf32>
    tpu.vector_store %arg4[%c0_237, %c0_238], %681 {strides = array<i32>} : memref<2x1024xf32, #tpu.memory_space<vmem>>, vector<2x1024xf32>,
    return
  }
}

</mosaic_0001>

<llo_original>
// kernel: medsam_forward.1
$region0: #{medsam_forward.1}
  #allocation0 [shape = 'u32[]', space=smem, size = 0x4, offset = 0x4, fixed_abs, tag = 'smem constant byte address 0x4 - core index']
  #allocation1 [shape = 'u32[144,128]{1,0:T(1,128)}', space=vmem, size = 0x12000, scoped, tag = 'internal scratch']
  %s0 = inlined_call_operand.vmem [shape: f32[32,192], index: 0, kind: input, shape index: {}]
  %s1 = inlined_call_operand.vmem [shape: f32[4,32], index: 1, kind: input, shape index: {}]
  %s2 = inlined_call_operand.vmem [shape: f32[1336,128], index: 2, kind: input, shape index: {}]
  %s3 = inlined_call_operand.vmem [shape: bf16[256,1024], index: 3, kind: input, shape index: {}]
  %s4 = inlined_call_operand.vmem [shape: f32[2,1024], index: 4, kind: output, shape index: {}]
  %s5 = sld [smem:[#allocation0]]
  $region26: #{medsam_forward.1} parent=0
    _
  %s7 = ssub.s32 1, %s5
  %s8 = scalar_select 0, %s7, %s5
  // Predicated region
  $region2: #{medsam_forward.1} parent=0 // pred_check
    _
  $region3: #{medsam_forward.1} parent=0 // pred_check_branch
    %10 = sbr.rel (0) target = $region5
  $region4: #{medsam_forward.1} parent=0 // pred_region
    _
  $region5: #{medsam_forward.1} parent=0 // pred_fallthru
    _
  // Predicated region
  $region6: #{medsam_forward.1} parent=0 // pred_check
    _
  $region7: #{medsam_forward.1} parent=0 // pred_check_branch
    %12 = sbr.rel (0) target = $region9
  $region8: #{medsam_forward.1} parent=0 // pred_region
    _
  $region9: #{medsam_forward.1} parent=0 // pred_fallthru
    _
  // Predicated region
  $region10: #{medsam_forward.1} parent=0 // pred_check
    _
  $region11: #{medsam_forward.1} parent=0 // pred_check_branch
    %14 = sbr.rel (0) target = $region13
  $region12: #{medsam_forward.1} parent=0 // pred_region
    _
  $region13: #{medsam_forward.1} parent=0 // pred_fallthru
    _
  // Predicated region
  $region14: #{medsam_forward.1} parent=0 // pred_check
    _
  $region15: #{medsam_forward.1} parent=0 // pred_check_branch
    %16 = sbr.rel (0) target = $region17
  $region16: #{medsam_forward.1} parent=0 // pred_region
    _
  $region17: #{medsam_forward.1} parent=0 // pred_fallthru
    _
  %v17 = vld [vmem:[%s0] sm:$0xff]
  %v18 = vld [vmem:[%s0 + $0x8] sm:$0xff]
  %v19 = vld [vmem:[%s0 + $0x10] sm:$0xff]
  %v20 = vld [vmem:[%s0 + $0x18] sm:$0xff]
  %v21 = vld [vmem:[%s0 + $0x20] sm:$0xff]
  %v22 = vld [vmem:[%s0 + $0x28] sm:$0xff]
  %v23 = vld [vmem:[%s0 + $0x30] sm:$0xff]
  %v24 = vld [vmem:[%s0 + $0x38] sm:$0xff]
  %v25 = vld [vmem:[%s2] sm:$0xff]
  %v26 = vld [vmem:[%s2 + $0x8] sm:$0xff]
  %v27 = vld [vmem:[%s2 + $0x10] sm:$0xff]
  %v28 = vld [vmem:[%s2 + $0x18] sm:$0xff]
  %v29 = vld [vmem:[%s2 + $0x20] sm:$0xff]
  %v30 = vld [vmem:[%s2 + $0x28] sm:$0xff]
  %v31 = vld [vmem:[%s2 + $0x30] sm:$0xff]
  %v32 = vld [vmem:[%s2 + $0x38] sm:$0xff]
  %v33 = vld [vmem:[%s2 + $0x40] sm:$0xff]
  %v34 = vld [vmem:[%s2 + $0x48] sm:$0xff]
  %v35 = vld [vmem:[%s2 + $0x50] sm:$0xff]
  %v36 = vld [vmem:[%s2 + $0x58] sm:$0xff]
  %v37 = vld [vmem:[%s2 + $0x60] sm:$0xff]
  %v38 = vld [vmem:[%s2 + $0x68] sm:$0xff]
  %v39 = vld [vmem:[%s2 + $0x70] sm:$0xff]
  %v40 = vld [vmem:[%s2 + $0x78] sm:$0xff]
  %v41 = vld [vmem:[%s2 + $0x80] sm:$0xff]
  %v42 = vld [vmem:[%s2 + $0x88] sm:$0xff]
  %v43 = vld [vmem:[%s2 + $0x90] sm:$0xff]
  %v44 = vld [vmem:[%s2 + $0x98] sm:$0xff]
  %v45 = vld [vmem:[%s2 + $0xa0] sm:$0xff]
  %v46 = vld [vmem:[%s2 + $0xa8] sm:$0xff]
  %v47 = vld [vmem:[%s2 + $0xb0] sm:$0xff]
  %v48 = vld [vmem:[%s2 + $0xb8] sm:$0xff]
  %v49 = vld [vmem:[%s2 + $0xc0] sm:$0x1]
  %v50 = vlaneseq
  %v51 = vshrl.u32 %v50, 7
  %v52 = vsub.s32 0, %v51
  %v53 = vrot.slane %v49, %v52
  %vm54 = vcmask 523264
  %v56 = vsel %vm54, %v18, 0
  %v59 = vsel %vm54, %v20, 0
  %v62 = vsel %vm54, %v22, 0
  %v65 = vsel %vm54, %v24, 0
  %67 = vmatprep.subr.mxu0 0.0
  %68 = vmatpush1.msra.mxu0 %v25
  %69 = vmatprep.subr.mxu0 0.0
  %70 = vmatpush1.msra.mxu0 %v26
  %71 = vmatprep.subr.mxu0 0.0
  %72 = vmatpush1.msra.mxu0 %v27
  %73 = vmatprep.subr.mxu0 0.0
  %74 = vmatpush1.msra.mxu0 %v28
  %75 = vmatprep.subr.mxu0 0.0
  %76 = vmatpush1.msra.mxu0 %v29
  %77 = vmatprep.subr.mxu0 0.0
  %78 = vmatpush1.msra.mxu0 %v30
  %79 = vmatprep.subr.mxu0 0.0
  %80 = vmatpush1.msra.mxu0 %v31
  %81 = vmatprep.subr.mxu0 0.0
  %82 = vmatpush1.msra.mxu0 %v32
  %83 = vmatprep.subr.mxu0 0.0
  %84 = vmatpush1.msra.mxu0 %v33
  %85 = vmatprep.subr.mxu0 0.0
  %86 = vmatpush1.msra.mxu0 %v34
  %87 = vmatprep.subr.mxu0 0.0
  %88 = vmatpush1.msra.mxu0 %v35
  %89 = vmatprep.subr.mxu0 0.0
  %90 = vmatpush1.msra.mxu0 %v36
  %91 = vmatprep.subr.mxu0 0.0
  %92 = vmatpush1.msra.mxu0 %v37
  %93 = vmatprep.subr.mxu0 0.0
  %94 = vmatpush1.msra.mxu0 %v38
  %95 = vmatprep.subr.mxu0 0.0
  %96 = vmatpush1.msra.mxu0 %v39
  %97 = vmatprep.subr.mxu0 0.0
  %98 = vmatpush1.msra.mxu0 %v40
  %99 = vmatprep.subr.mxu0 0.0
  %100 = vmatpush1.msra.mxu0 %v41
  %101 = vmatprep.subr.mxu0 0.0
  %102 = vmatpush1.msra.mxu0 %v42
  %103 = vmatprep.subr.mxu0 0.0
  %104 = vmatpush1.msra.mxu0 %v43
  %105 = vmatprep.subr.mxu0 0.0
  %106 = vmatpush1.msra.mxu0 %v44
  %107 = vmatprep.subr.mxu0 0.0
  %108 = vmatpush1.msra.mxu0 %v45
  %109 = vmatprep.subr.mxu0 0.0
  %110 = vmatpush1.msra.mxu0 %v46
  %111 = vmatprep.subr.mxu0 0.0
  %112 = vmatpush1.msra.mxu0 %v47
  %113 = vmatprep.subr.mxu0 0.0
  %114 = vmatpush1.msra.mxu0 %v48
  %115 = vmatprep.subr.mxu0 0.0
  %116 = vmatpush1.msra.mxu0 0.0
  %117 = vmatprep.subr.mxu0 0.0
  %118 = vmatpush1.msra.mxu0 0.0
  %119 = vmatprep.subr.mxu0 0.0
  %120 = vmatpush1.msra.mxu0 0.0
  %121 = vmatprep.subr.mxu0 0.0
  %122 = vmatpush1.msra.mxu0 0.0
  %123 = vmatprep.subr.mxu0 0.0
  %124 = vmatpush1.msra.mxu0 0.0
  %125 = vmatprep.subr.mxu0 0.0
  %126 = vmatpush1.msra.mxu0 0.0
  %127 = vmatprep.subr.mxu0 0.0
  %128 = vmatpush1.msra.mxu0 0.0
  %129 = vmatprep.subr.mxu0 0.0
  %130 = vmatpush1.msra.mxu0 0.0
  %131 = vmatprep.mubr.f32.mxu0 %v56
  %132 = vmatmul.mubr.f32.gmra.mrb[0].mxu0 %v17
  %v133 = vpop.f32.mrb[0].mxu0
  %v134 = vadd.f32 %v53, %v133
  %v135 = vpop.f32.mrb[0].mxu0
  %136 = vmatprep.mubr.f32.mxu0 %v59
  %137 = vmatmul.mubr.f32.gmra.mrb[0].mxu0 %v19
  %v138 = vpop.f32.mrb[0].mxu0
  %v139 = vadd.f32 %v53, %v138
  %v140 = vpop.f32.mrb[0].mxu0
  %141 = vmatprep.mubr.f32.mxu0 %v62
  %142 = vmatmul.mubr.f32.gmra.mrb[0].mxu0 %v21
  %v143 = vpop.f32.mrb[0].mxu0
  %v144 = vadd.f32 %v53, %v143
  %v145 = vpop.f32.mrb[0].mxu0
  %146 = vmatprep.mubr.f32.mxu0 %v65
  %147 = vmatmul.mubr.f32.gmra.mrb[0].mxu0 %v23
  %v148 = vpop.f32.mrb[0].mxu0
  %v149 = vadd.f32 %v53, %v148
  %v150 = vpop.f32.mrb[0].mxu0
  %151 = vdwg.mxu0
  %v152 = vld [vmem:[%s2 + $0xc8] sm:$0xff]
  %v153 = vld [vmem:[%s2 + $0xd0] sm:$0xff]
  %v154 = vld [vmem:[%s2 + $0xd8] sm:$0xff]
  %v155 = vld [vmem:[%s2 + $0xe0] sm:$0xff]
  %v156 = vadd.f32 %v134, %v152
  %v157 = vadd.f32 %v139, %v153
  %v158 = vadd.f32 %v144, %v154
  %v159 = vadd.f32 %v149, %v155
  %v160 = vld [vmem:[%s2 + $0xe8] sm:$0x1]
  %v161 = vld [vmem:[%s2 + $0xf0] sm:$0x1]
  %vm162 = vcmask 261120
  %v163 = vsel %vm162, %v156, 0.0
  %164 = vadd.xlane.f32.xlu0 %v163
  %v165 = vpop.xlane.xlu0 %164
  %v166 = vsel %vm162, %v157, 0.0
  %167 = vadd.xlane.f32.xlu0 %v166
  %v168 = vpop.xlane.xlu0 %167
  %v169 = vsel %vm162, %v158, 0.0
  %170 = vadd.xlane.f32.xlu0 %v169
  %v171 = vpop.xlane.xlu0 %170
  %v172 = vsel %vm162, %v159, 0.0
  %173 = vadd.xlane.f32.xlu0 %v172
  %v174 = vpop.xlane.xlu0 %173
  %v175 = vrcp.pop 32.0
  %v176 = vmul.f32 %v165, %v175
  %v177 = vmul.f32 %v168, %v175
  %v178 = vmul.f32 %v171, %v175
  %v179 = vmul.f32 %v174, %v175
  %v180 = vsub.f32 %v156, %v176
  %v181 = vsub.f32 %v157, %v177
  %v182 = vsub.f32 %v158, %v178
  %v183 = vsub.f32 %v159, %v179
  %v184 = vmul.f32 %v180, %v180
  %v185 = vmul.f32 %v181, %v181
  %v186 = vmul.f32 %v182, %v182
  %v187 = vmul.f32 %v183, %v183
  %v188 = vsel %vm162, %v184, 0.0
  %189 = vadd.xlane.f32.xlu0 %v188
  %v190 = vpop.xlane.xlu0 %189
  %v191 = vsel %vm162, %v185, 0.0
  %192 = vadd.xlane.f32.xlu0 %v191
  %v193 = vpop.xlane.xlu0 %192
  %v194 = vsel %vm162, %v186, 0.0
  %195 = vadd.xlane.f32.xlu0 %v194
  %v196 = vpop.xlane.xlu0 %195
  %v197 = vsel %vm162, %v187, 0.0
  %198 = vadd.xlane.f32.xlu0 %v197
  %v199 = vpop.xlane.xlu0 %198
  %v200 = vmul.f32 %v190, %v175
  %v201 = vmul.f32 %v193, %v175
  %v202 = vmul.f32 %v196, %v175
  %v203 = vmul.f32 %v199, %v175
  %v204 = vadd.f32 %v200, 1e-06
  %v205 = vadd.f32 %v201, 1e-06
  %v206 = vadd.f32 %v202, 1e-06
  %v207 = vadd.f32 %v203, 1e-06
  %v208 = vrsqrt.pop %v204
  %v209 = vrsqrt.pop %v205
  %v210 = vrsqrt.pop %v206
  %v211 = vrsqrt.pop %v207
  %v212 = vmul.f32 %v180, %v208
  %v213 = vmul.f32 %v181, %v209
  %v214 = vmul.f32 %v182, %v210
  %v215 = vmul.f32 %v183, %v211
  %v216 = vlaneseq
  %v217 = vshrl.u32 %v216, 7
  %v218 = vsub.s32 0, %v217
  %v219 = vrot.slane %v160, %v218
  %v220 = vmul.f32 %v212, %v219
  %v221 = vmul.f32 %v213, %v219
  %v222 = vmul.f32 %v214, %v219
  %v223 = vmul.f32 %v215, %v219
  %v224 = vlaneseq
  %v225 = vshrl.u32 %v224, 7
  %v226 = vsub.s32 0, %v225
  %v227 = vrot.slane %v161, %v226
  %v228 = vadd.f32 %v220, %v227
  %v229 = vadd.f32 %v221, %v227
  %v230 = vadd.f32 %v222, %v227
  %v231 = vadd.f32 %v223, %v227
  %v232 = vld [vmem:[%s2 + $0x248] sm:$0xff]
  %v233 = vld [vmem:[%s2 + $0x250] sm:$0xff]
  %v234 = vld [vmem:[%s2 + $0x258] sm:$0xff]
  %v235 = vld [vmem:[%s2 + $0x260] sm:$0xff]
  %v236 = vld [vmem:[%s2 + $0xf8] sm:$0xff]
  %v237 = vld [vmem:[%s2 + $0x100] sm:$0xff]
  %v238 = vld [vmem:[%s2 + $0x108] sm:$0xff]
  %v239 = vld [vmem:[%s2 + $0x110] sm:$0xff]
  %v240 = vld [vmem:[%s2 + $0x118] sm:$0x1]
  %v241 = vlaneseq
  %v242 = vshrl.u32 %v241, 7
  %v243 = vsub.s32 0, %v242
  %v244 = vrot.slane %v240, %v243
  %v246 = vsel %vm162, %v228, 0
  %v249 = vsel %vm162, %v229, 0
  %v252 = vsel %vm162, %v230, 0
  %v255 = vsel %vm162, %v231, 0
  %257 = vmatprep.subr.mxu0 0.0
  %258 = vmatpush1.msra.mxu0 %v236
  %259 = vmatprep.subr.mxu0 0.0
  %260 = vmatpush1.msra.mxu0 %v237
  %261 = vmatprep.subr.mxu0 0.0
  %262 = vmatpush1.msra.mxu0 %v238
  %263 = vmatprep.subr.mxu0 0.0
  %264 = vmatpush1.msra.mxu0 %v239
  %265 = vmatprep.subr.mxu0 0.0
  %266 = vmatpush1.msra.mxu0 0.0
  %267 = vmatprep.subr.mxu0 0.0
  %268 = vmatpush1.msra.mxu0 0.0
  %269 = vmatprep.subr.mxu0 0.0
  %270 = vmatpush1.msra.mxu0 0.0
  %271 = vmatprep.subr.mxu0 0.0
  %272 = vmatpush1.msra.mxu0 0.0
  %273 = vmatprep.subr.mxu0 0.0
  %274 = vmatpush1.msra.mxu0 0.0
  %275 = vmatprep.subr.mxu0 0.0
  %276 = vmatpush1.msra.mxu0 0.0
  %277 = vmatprep.subr.mxu0 0.0
  %278 = vmatpush1.msra.mxu0 0.0
  %279 = vmatprep.subr.mxu0 0.0
  %280 = vmatpush1.msra.mxu0 0.0
  %281 = vmatprep.subr.mxu0 0.0
  %282 = vmatpush1.msra.mxu0 0.0
  %283 = vmatprep.subr.mxu0 0.0
  %284 = vmatpush1.msra.mxu0 0.0
  %285 = vmatprep.subr.mxu0 0.0
  %286 = vmatpush1.msra.mxu0 0.0
  %287 = vmatprep.subr.mxu0 0.0
  %288 = vmatpush1.msra.mxu0 0.0
  %289 = vmatprep.subr.mxu0 0.0
  %290 = vmatpush1.msra.mxu0 0.0
  %291 = vmatprep.subr.mxu0 0.0
  %292 = vmatpush1.msra.mxu0 0.0
  %293 = vmatprep.subr.mxu0 0.0
  %294 = vmatpush1.msra.mxu0 0.0
  %295 = vmatprep.subr.mxu0 0.0
  %296 = vmatpush1.msra.mxu0 0.0
  %297 = vmatprep.subr.mxu0 0.0
  %298 = vmatpush1.msra.mxu0 0.0
  %299 = vmatprep.subr.mxu0 0.0
  %300 = vmatpush1.msra.mxu0 0.0
  %301 = vmatprep.subr.mxu0 0.0
  %302 = vmatpush1.msra.mxu0 0.0
  %303 = vmatprep.subr.mxu0 0.0
  %304 = vmatpush1.msra.mxu0 0.0
  %305 = vmatprep.subr.mxu0 0.0
  %306 = vmatpush1.msra.mxu0 0.0
  %307 = vmatprep.subr.mxu0 0.0
  %308 = vmatpush1.msra.mxu0 0.0
  %309 = vmatprep.subr.mxu0 0.0
  %310 = vmatpush1.msra.mxu0 0.0
  %311 = vmatprep.subr.mxu0 0.0
  %312 = vmatpush1.msra.mxu0 0.0
  %313 = vmatprep.subr.mxu0 0.0
  %314 = vmatpush1.msra.mxu0 0.0
  %315 = vmatprep.subr.mxu0 0.0
  %316 = vmatpush1.msra.mxu0 0.0
  %317 = vmatprep.subr.mxu0 0.0
  %318 = vmatpush1.msra.mxu0 0.0
  %319 = vmatprep.subr.mxu0 0.0
  %320 = vmatpush1.msra.mxu0 0.0
  %321 = vmatprep.mubr.f32.mxu0 0.0
  %322 = vmatmul.mubr.f32.gmra.mrb[0].mxu0 %v246
  %v323 = vpop.f32.mrb[0].mxu0
  %v324 = vadd.f32 %v244, %v323
  %v325 = vpop.f32.mrb[0].mxu0
  %326 = vmatprep.mubr.f32.mxu0 0.0
  %327 = vmatmul.mubr.f32.gmra.mrb[0].mxu0 %v249
  %v328 = vpop.f32.mrb[0].mxu0
  %v329 = vadd.f32 %v244, %v328
  %v330 = vpop.f32.mrb[0].mxu0
  %331 = vmatprep.mubr.f32.mxu0 0.0
  %332 = vmatmul.mubr.f32.gmra.mrb[0].mxu0 %v252
  %v333 = vpop.f32.mrb[0].mxu0
  %v334 = vadd.f32 %v244, %v333
  %v335 = vpop.f32.mrb[0].mxu0
  %336 = vmatprep.mubr.f32.mxu0 0.0
  %337 = vmatmul.mubr.f32.gmra.mrb[0].mxu0 %v255
  %v338 = vpop.f32.mrb[0].mxu0
  %v339 = vadd.f32 %v244, %v338
  %v340 = vpop.f32.mrb[0].mxu0
  %341 = vdwg.mxu0
  %v342 = vld [vmem:[%s2 + $0x120] sm:$0xff]
  %v343 = vld [vmem:[%s2 + $0x128] sm:$0xff]
  %v344 = vld [vmem:[%s2 + $0x130] sm:$0xff]
  %v345 = vld [vmem:[%s2 + $0x138] sm:$0xff]
  %350 = vrot.lane.b32.xlu0 %v324, 96
  %v351 = vpop.permute.xlu0 %350
  %352 = vrot.lane.b32.xlu0 %v329, 96
  %v353 = vpop.permute.xlu0 %352
  %354 = vrot.lane.b32.xlu0 %v334, 96
  %v355 = vpop.permute.xlu0 %354
  %356 = vrot.lane.b32.xlu0 %v339, 96
  %v357 = vpop.permute.xlu0 %356
  %vm358 = vcmask 130048
  %v359 = vsel %vm358, %v324, 0
  %v361 = vsel %vm358, %v329, 0
  %v363 = vsel %vm358, %v334, 0
  %v365 = vsel %vm358, %v339, 0
  %v367 = vsel %vm358, %v351, 0
  %v369 = vsel %vm358, %v353, 0
  %v371 = vsel %vm358, %v355, 0
  %v373 = vsel %vm358, %v357, 0
  %375 = vmatprep.subr.mxu0 0.0
  %376 = vmatpush1.xpose.msra.mxu0 %v367
  %377 = vmatprep.subr.mxu0 0.0
  %378 = vmatpush1.xpose.msra.mxu0 %v369
  %379 = vmatprep.subr.mxu0 0.0
  %380 = vmatpush1.xpose.msra.mxu0 %v371
  %381 = vmatprep.subr.mxu0 0.0
  %382 = vmatpush1.xpose.msra.mxu0 %v373
  %383 = vmatprep.subr.mxu0 0.0
  %384 = vmatpush1.xpose.msra.mxu0 0.0
  %385 = vmatprep.subr.mxu0 0.0
  %386 = vmatpush1.xpose.msra.mxu0 0.0
  %387 = vmatprep.subr.mxu0 0.0
  %388 = vmatpush1.xpose.msra.mxu0 0.0
  %389 = vmatprep.subr.mxu0 0.0
  %390 = vmatpush1.xpose.msra.mxu0 0.0
  %391 = vmatprep.subr.mxu0 0.0
  %392 = vmatpush1.xpose.msra.mxu0 0.0
  %393 = vmatprep.subr.mxu0 0.0
  %394 = vmatpush1.xpose.msra.mxu0 0.0
  %395 = vmatprep.subr.mxu0 0.0
  %396 = vmatpush1.xpose.msra.mxu0 0.0
  %397 = vmatprep.subr.mxu0 0.0
  %398 = vmatpush1.xpose.msra.mxu0 0.0
  %399 = vmatprep.subr.mxu0 0.0
  %400 = vmatpush1.xpose.msra.mxu0 0.0
  %401 = vmatprep.subr.mxu0 0.0
  %402 = vmatpush1.xpose.msra.mxu0 0.0
  %403 = vmatprep.subr.mxu0 0.0
  %404 = vmatpush1.xpose.msra.mxu0 0.0
  %405 = vmatprep.subr.mxu0 0.0
  %406 = vmatpush1.xpose.msra.mxu0 0.0
  %407 = vmatprep.subr.mxu0 0.0
  %408 = vmatpush1.xpose.msra.mxu0 0.0
  %409 = vmatprep.subr.mxu0 0.0
  %410 = vmatpush1.xpose.msra.mxu0 0.0
  %411 = vmatprep.subr.mxu0 0.0
  %412 = vmatpush1.xpose.msra.mxu0 0.0
  %413 = vmatprep.subr.mxu0 0.0
  %414 = vmatpush1.xpose.msra.mxu0 0.0
  %415 = vmatprep.subr.mxu0 0.0
  %416 = vmatpush1.xpose.msra.mxu0 0.0
  %417 = vmatprep.subr.mxu0 0.0
  %418 = vmatpush1.xpose.msra.mxu0 0.0
  %419 = vmatprep.subr.mxu0 0.0
  %420 = vmatpush1.xpose.msra.mxu0 0.0
  %421 = vmatprep.subr.mxu0 0.0
  %422 = vmatpush1.xpose.msra.mxu0 0.0
  %423 = vmatprep.subr.mxu0 0.0
  %424 = vmatpush1.xpose.msra.mxu0 0.0
  %425 = vmatprep.subr.mxu0 0.0
  %426 = vmatpush1.xpose.msra.mxu0 0.0
  %427 = vmatprep.subr.mxu0 0.0
  %428 = vmatpush1.xpose.msra.mxu0 0.0
  %429 = vmatprep.subr.mxu0 0.0
  %430 = vmatpush1.xpose.msra.mxu0 0.0
  %431 = vmatprep.subr.mxu0 0.0
  %432 = vmatpush1.xpose.msra.mxu0 0.0
  %433 = vmatprep.subr.mxu0 0.0
  %434 = vmatpush1.xpose.msra.mxu0 0.0
  %435 = vmatprep.subr.mxu0 0.0
  %436 = vmatpush1.xpose.msra.mxu0 0.0
  %437 = vmatprep.subr.mxu0 0.0
  %438 = vmatpush1.xpose.msra.mxu0 0.0
  %439 = vmatprep.mubr.f32.mxu0 0.0
  %440 = vmatmul.mubr.f32.gmra.mrb[0].mxu0 %v359
  %v441 = vpop.f32.mrb[0].mxu0
  %v442 = vadd.f32 0.0, %v441
  %v443 = vpop.f32.mrb[0].mxu0
  %444 = vmatprep.mubr.f32.mxu0 0.0
  %445 = vmatmul.mubr.f32.gmra.mrb[0].mxu0 %v361
  %v446 = vpop.f32.mrb[0].mxu0
  %v447 = vadd.f32 0.0, %v446
  %v448 = vpop.f32.mrb[0].mxu0
  %449 = vmatprep.mubr.f32.mxu0 0.0
  %450 = vmatmul.mubr.f32.gmra.mrb[0].mxu0 %v363
  %v451 = vpop.f32.mrb[0].mxu0
  %v452 = vadd.f32 0.0, %v451
  %v453 = vpop.f32.mrb[0].mxu0
  %454 = vmatprep.mubr.f32.mxu0 0.0
  %455 = vmatmul.mubr.f32.gmra.mrb[0].mxu0 %v365
  %v456 = vpop.f32.mrb[0].mxu0
  %v457 = vadd.f32 0.0, %v456
  %v458 = vpop.f32.mrb[0].mxu0
  %459 = vdwg.mxu0
  %v460 = vmul.f32 %v442, 0.25
  %v461 = vmul.f32 %v447, 0.25
  %v462 = vmul.f32 %v452, 0.25
  %v463 = vmul.f32 %v457, 0.25
  %v464 = vadd.f32 %v460, %v232
  %v465 = vadd.f32 %v461, %v233
  %v466 = vadd.f32 %v462, %v234
  %v467 = vadd.f32 %v463, %v235
  %v468 = vsel %vm162, %v464, -inf
  %469 = vmax.xlane.f32.xlu0 %v468
  %v470 = vpop.xlane.xlu0 %469
  %v471 = vsel %vm162, %v465, -inf
  %472 = vmax.xlane.f32.xlu0 %v471
  %v473 = vpop.xlane.xlu0 %472
  %v474 = vsel %vm162, %v466, -inf
  %475 = vmax.xlane.f32.xlu0 %v474
  %v476 = vpop.xlane.xlu0 %475
  %v477 = vsel %vm162, %v467, -inf
  %478 = vmax.xlane.f32.xlu0 %v477
  %v479 = vpop.xlane.xlu0 %478
  %v480 = vsub.f32 %v464, %v470
  %v481 = vsub.f32 %v465, %v473
  %v482 = vsub.f32 %v466, %v476
  %v483 = vsub.f32 %v467, %v479
  %v484 = vmul.f32 %v480, 1.442695
  %v485 = vpow.pop %v484
  %v486 = vmul.f32 %v481, 1.442695
  %v487 = vpow.pop %v486
  %v488 = vmul.f32 %v482, 1.442695
  %v489 = vpow.pop %v488
  %v490 = vmul.f32 %v483, 1.442695
  %v491 = vpow.pop %v490
  %v492 = vsel %vm162, %v485, 0.0
  %493 = vadd.xlane.f32.xlu0 %v492
  %v494 = vpop.xlane.xlu0 %493
  %v495 = vsel %vm162, %v487, 0.0
  %496 = vadd.xlane.f32.xlu0 %v495
  %v497 = vpop.xlane.xlu0 %496
  %v498 = vsel %vm162, %v489, 0.0
  %499 = vadd.xlane.f32.xlu0 %v498
  %v500 = vpop.xlane.xlu0 %499
  %v501 = vsel %vm162, %v491, 0.0
  %502 = vadd.xlane.f32.xlu0 %v501
  %v503 = vpop.xlane.xlu0 %502
  %v504 = vrcp.pop %v494
  %v505 = vrcp.pop %v497
  %v506 = vrcp.pop %v500
  %v507 = vrcp.pop %v503
  %v508 = vmul.f32 %v485, %v504
  %v509 = vmul.f32 %v487, %v505
  %v510 = vmul.f32 %v489, %v506
  %v511 = vmul.f32 %v491, %v507
  %512 = vrot.lane.b32.xlu0 %v324, 64
  %v513 = vpop.permute.xlu0 %512
  %514 = vrot.lane.b32.xlu0 %v329, 64
  %v515 = vpop.permute.xlu0 %514
  %516 = vrot.lane.b32.xlu0 %v334, 64
  %v517 = vpop.permute.xlu0 %516
  %518 = vrot.lane.b32.xlu0 %v339, 64
  %v519 = vpop.permute.xlu0 %518
  %v525 = vsel %vm162, %v508, 0
  %v528 = vsel %vm162, %v509, 0
  %v531 = vsel %vm162, %v510, 0
  %v534 = vsel %vm162, %v511, 0
  %536 = vmatprep.subr.mxu0 0.0
  %537 = vmatpush1.msra.mxu0 %v513
  %538 = vmatprep.subr.mxu0 0.0
  %539 = vmatpush1.msra.mxu0 %v515
  %540 = vmatprep.subr.mxu0 0.0
  %541 = vmatpush1.msra.mxu0 %v517
  %542 = vmatprep.subr.mxu0 0.0
  %543 = vmatpush1.msra.mxu0 %v519
  %544 = vmatprep.subr.mxu0 0.0
  %545 = vmatpush1.msra.mxu0 0.0
  %546 = vmatprep.subr.mxu0 0.0
  %547 = vmatpush1.msra.mxu0 0.0
  %548 = vmatprep.subr.mxu0 0.0
  %549 = vmatpush1.msra.mxu0 0.0
  %550 = vmatprep.subr.mxu0 0.0
  %551 = vmatpush1.msra.mxu0 0.0
  %552 = vmatprep.subr.mxu0 0.0
  %553 = vmatpush1.msra.mxu0 0.0
  %554 = vmatprep.subr.mxu0 0.0
  %555 = vmatpush1.msra.mxu0 0.0
  %556 = vmatprep.subr.mxu0 0.0
  %557 = vmatpush1.msra.mxu0 0.0
  %558 = vmatprep.subr.mxu0 0.0
  %559 = vmatpush1.msra.mxu0 0.0
  %560 = vmatprep.subr.mxu0 0.0
  %561 = vmatpush1.msra.mxu0 0.0
  %562 = vmatprep.subr.mxu0 0.0
  %563 = vmatpush1.msra.mxu0 0.0
  %564 = vmatprep.subr.mxu0 0.0
  %565 = vmatpush1.msra.mxu0 0.0
  %566 = vmatprep.subr.mxu0 0.0
  %567 = vmatpush1.msra.mxu0 0.0
  %568 = vmatprep.subr.mxu0 0.0
  %569 = vmatpush1.msra.mxu0 0.0
  %570 = vmatprep.subr.mxu0 0.0
  %571 = vmatpush1.msra.mxu0 0.0
  %572 = vmatprep.subr.mxu0 0.0
  %573 = vmatpush1.msra.mxu0 0.0
  %574 = vmatprep.subr.mxu0 0.0
  %575 = vmatpush1.msra.mxu0 0.0
  %576 = vmatprep.subr.mxu0 0.0
  %577 = vmatpush1.msra.mxu0 0.0
  %578 = vmatprep.subr.mxu0 0.0
  %579 = vmatpush1.msra.mxu0 0.0
  %580 = vmatprep.subr.mxu0 0.0
  %581 = vmatpush1.msra.mxu0 0.0
  %582 = vmatprep.subr.mxu0 0.0
  %583 = vmatpush1.msra.mxu0 0.0
  %584 = vmatprep.subr.mxu0 0.0
  %585 = vmatpush1.msra.mxu0 0.0
  %586 = vmatprep.subr.mxu0 0.0
  %587 = vmatpush1.msra.mxu0 0.0
  %588 = vmatprep.subr.mxu0 0.0
  %589 = vmatpush1.msra.mxu0 0.0
  %590 = vmatprep.subr.mxu0 0.0
  %591 = vmatpush1.msra.mxu0 0.0
  %592 = vmatprep.subr.mxu0 0.0
  %593 = vmatpush1.msra.mxu0 0.0
  %594 = vmatprep.subr.mxu0 0.0
  %595 = vmatpush1.msra.mxu0 0.0
  %596 = vmatprep.subr.mxu0 0.0
  %597 = vmatpush1.msra.mxu0 0.0
  %598 = vmatprep.subr.mxu0 0.0
  %599 = vmatpush1.msra.mxu0 0.0
  %600 = vmatprep.mubr.f32.mxu0 0.0
  %601 = vmatmul.mubr.f32.gmra.mrb[0].mxu0 %v525
  %v602 = vpop.f32.mrb[0].mxu0
  %v603 = vadd.f32 0.0, %v602
  %v604 = vpop.f32.mrb[0].mxu0
  %605 = vmatprep.mubr.f32.mxu0 0.0
  %606 = vmatmul.mubr.f32.gmra.mrb[0].mxu0 %v528
  %v607 = vpop.f32.mrb[0].mxu0
  %v608 = vadd.f32 0.0, %v607
  %v609 = vpop.f32.mrb[0].mxu0
  %610 = vmatprep.mubr.f32.mxu0 0.0
  %611 = vmatmul.mubr.f32.gmra.mrb[0].mxu0 %v531
  %v612 = vpop.f32.mrb[0].mxu0
  %v613 = vadd.f32 0.0, %v612
  %v614 = vpop.f32.mrb[0].mxu0
  %615 = vmatprep.mubr.f32.mxu0 0.0
  %616 = vmatmul.mubr.f32.gmra.mrb[0].mxu0 %v534
  %v617 = vpop.f32.mrb[0].mxu0
  %v618 = vadd.f32 0.0, %v617
  %v619 = vpop.f32.mrb[0].mxu0
  %620 = vdwg.mxu0
  %621 = vrot.lane.b32.xlu0 %v324, 112
  %v622 = vpop.permute.xlu0 %621
  %623 = vrot.lane.b32.xlu0 %v329, 112
  %v624 = vpop.permute.xlu0 %623
  %625 = vrot.lane.b32.xlu0 %v334, 112
  %v626 = vpop.permute.xlu0 %625
  %627 = vrot.lane.b32.xlu0 %v339, 112
  %v628 = vpop.permute.xlu0 %627
  %629 = vrot.lane.b32.xlu0 %v324, 80
  %v630 = vpop.permute.xlu0 %629
  %631 = vrot.lane.b32.xlu0 %v329, 80
  %v632 = vpop.permute.xlu0 %631
  %633 = vrot.lane.b32.xlu0 %v334, 80
  %v634 = vpop.permute.xlu0 %633
  %635 = vrot.lane.b32.xlu0 %v339, 80
  %v636 = vpop.permute.xlu0 %635
  %v637 = vsel %vm358, %v622, 0
  %v639 = vsel %vm358, %v624, 0
  %v641 = vsel %vm358, %v626, 0
  %v643 = vsel %vm358, %v628, 0
  %v645 = vsel %vm358, %v630, 0
  %v647 = vsel %vm358, %v632, 0
  %v649 = vsel %vm358, %v634, 0
  %v651 = vsel %vm358, %v636, 0
  %653 = vmatprep.subr.mxu0 0.0
  %654 = vmatpush1.xpose.msra.mxu0 %v645
  %655 = vmatprep.subr.mxu0 0.0
  %656 = vmatpush1.xpose.msra.mxu0 %v647
  %657 = vmatprep.subr.mxu0 0.0
  %658 = vmatpush1.xpose.msra.mxu0 %v649
  %659 = vmatprep.subr.mxu0 0.0
  %660 = vmatpush1.xpose.msra.mxu0 %v651
  %661 = vmatprep.subr.mxu0 0.0
  %662 = vmatpush1.xpose.msra.mxu0 0.0
  %663 = vmatprep.subr.mxu0 0.0
  %664 = vmatpush1.xpose.msra.mxu0 0.0
  %665 = vmatprep.subr.mxu0 0.0
  %666 = vmatpush1.xpose.msra.mxu0 0.0
  %667 = vmatprep.subr.mxu0 0.0
  %668 = vmatpush1.xpose.msra.mxu0 0.0
  %669 = vmatprep.subr.mxu0 0.0
  %670 = vmatpush1.xpose.msra.mxu0 0.0
  %671 = vmatprep.subr.mxu0 0.0
  %672 = vmatpush1.xpose.msra.mxu0 0.0
  %673 = vmatprep.subr.mxu0 0.0
  %674 = vmatpush1.xpose.msra.mxu0 0.0
  %675 = vmatprep.subr.mxu0 0.0
  %676 = vmatpush1.xpose.msra.mxu0 0.0
  %677 = vmatprep.subr.mxu0 0.0
  %678 = vmatpush1.xpose.msra.mxu0 0.0
  %679 = vmatprep.subr.mxu0 0.0
  %680 = vmatpush1.xpose.msra.mxu0 0.0
  %681 = vmatprep.subr.mxu0 0.0
  %682 = vmatpush1.xpose.msra.mxu0 0.0
  %683 = vmatprep.subr.mxu0 0.0
  %684 = vmatpush1.xpose.msra.mxu0 0.0
  %685 = vmatprep.subr.mxu0 0.0
  %686 = vmatpush1.xpose.msra.mxu0 0.0
  %687 = vmatprep.subr.mxu0 0.0
  %688 = vmatpush1.xpose.msra.mxu0 0.0
  %689 = vmatprep.subr.mxu0 0.0
  %690 = vmatpush1.xpose.msra.mxu0 0.0
  %691 = vmatprep.subr.mxu0 0.0
  %692 = vmatpush1.xpose.msra.mxu0 0.0
  %693 = vmatprep.subr.mxu0 0.0
  %694 = vmatpush1.xpose.msra.mxu0 0.0
  %695 = vmatprep.subr.mxu0 0.0
  %696 = vmatpush1.xpose.msra.mxu0 0.0
  %697 = vmatprep.subr.mxu0 0.0
  %698 = vmatpush1.xpose.msra.mxu0 0.0
  %699 = vmatprep.subr.mxu0 0.0
  %700 = vmatpush1.xpose.msra.mxu0 0.0
  %701 = vmatprep.subr.mxu0 0.0
  %702 = vmatpush1.xpose.msra.mxu0 0.0
  %703 = vmatprep.subr.mxu0 0.0
  %704 = vmatpush1.xpose.msra.mxu0 0.0
  %705 = vmatprep.subr.mxu0 0.0
  %706 = vmatpush1.xpose.msra.mxu0 0.0
  %707 = vmatprep.subr.mxu0 0.0
  %708 = vmatpush1.xpose.msra.mxu0 0.0
  %709 = vmatprep.subr.mxu0 0.0
  %710 = vmatpush1.xpose.msra.mxu0 0.0
  %711 = vmatprep.subr.mxu0 0.0
  %712 = vmatpush1.xpose.msra.mxu0 0.0
  %713 = vmatprep.subr.mxu0 0.0
  %714 = vmatpush1.xpose.msra.mxu0 0.0
  %715 = vmatprep.subr.mxu0 0.0
  %716 = vmatpush1.xpose.msra.mxu0 0.0
  %717 = vmatprep.mubr.f32.mxu0 0.0
  %718 = vmatmul.mubr.f32.gmra.mrb[0].mxu0 %v637
  %v719 = vpop.f32.mrb[0].mxu0
  %v720 = vadd.f32 0.0, %v719
  %v721 = vpop.f32.mrb[0].mxu0
  %722 = vmatprep.mubr.f32.mxu0 0.0
  %723 = vmatmul.mubr.f32.gmra.mrb[0].mxu0 %v639
  %v724 = vpop.f32.mrb[0].mxu0
  %v725 = vadd.f32 0.0, %v724
  %v726 = vpop.f32.mrb[0].mxu0
  %727 = vmatprep.mubr.f32.mxu0 0.0
  %728 = vmatmul.mubr.f32.gmra.mrb[0].mxu0 %v641
  %v729 = vpop.f32.mrb[0].mxu0
  %v730 = vadd.f32 0.0, %v729
  %v731 = vpop.f32.mrb[0].mxu0
  %732 = vmatprep.mubr.f32.mxu0 0.0
  %733 = vmatmul.mubr.f32.gmra.mrb[0].mxu0 %v643
  %v734 = vpop.f32.mrb[0].mxu0
  %v735 = vadd.f32 0.0, %v734
  %v736 = vpop.f32.mrb[0].mxu0
  %737 = vdwg.mxu0
  %v738 = vmul.f32 %v720, 0.25
  %v739 = vmul.f32 %v725, 0.25
  %v740 = vmul.f32 %v730, 0.25
  %v741 = vmul.f32 %v735, 0.25
  %v742 = vadd.f32 %v738, %v232
  %v743 = vadd.f32 %v739, %v233
  %v744 = vadd.f32 %v740, %v234
  %v745 = vadd.f32 %v741, %v235
  %v746 = vsel %vm162, %v742, -inf
  %747 = vmax.xlane.f32.xlu0 %v746
  %v748 = vpop.xlane.xlu0 %747
  %v749 = vsel %vm162, %v743, -inf
  %750 = vmax.xlane.f32.xlu0 %v749
  %v751 = vpop.xlane.xlu0 %750
  %v752 = vsel %vm162, %v744, -inf
  %753 = vmax.xlane.f32.xlu0 %v752
  %v754 = vpop.xlane.xlu0 %753
  %v755 = vsel %vm162, %v745, -inf
  %756 = vmax.xlane.f32.xlu0 %v755
  %v757 = vpop.xlane.xlu0 %756
  %v758 = vsub.f32 %v742, %v748
  %v759 = vsub.f32 %v743, %v751
  %v760 = vsub.f32 %v744, %v754
  %v761 = vsub.f32 %v745, %v757
  %v762 = vmul.f32 %v758, 1.442695
  %v763 = vpow.pop %v762
  %v764 = vmul.f32 %v759, 1.442695
  %v765 = vpow.pop %v764
  %v766 = vmul.f32 %v760, 1.442695
  %v767 = vpow.pop %v766
  %v768 = vmul.f32 %v761, 1.442695
  %v769 = vpow.pop %v768
  %v770 = vsel %vm162, %v763, 0.0
  %771 = vadd.xlane.f32.xlu0 %v770
  %v772 = vpop.xlane.xlu0 %771
  %v773 = vsel %vm162, %v765, 0.0
  %774 = vadd.xlane.f32.xlu0 %v773
  %v775 = vpop.xlane.xlu0 %774
  %v776 = vsel %vm162, %v767, 0.0
  %777 = vadd.xlane.f32.xlu0 %v776
  %v778 = vpop.xlane.xlu0 %777
  %v779 = vsel %vm162, %v769, 0.0
  %780 = vadd.xlane.f32.xlu0 %v779
  %v781 = vpop.xlane.xlu0 %780
  %v782 = vrcp.pop %v772
  %v783 = vrcp.pop %v775
  %v784 = vrcp.pop %v778
  %v785 = vrcp.pop %v781
  %v786 = vmul.f32 %v763, %v782
  %v787 = vmul.f32 %v765, %v783
  %v788 = vmul.f32 %v767, %v784
  %v789 = vmul.f32 %v769, %v785
  %790 = vrot.lane.b32.xlu0 %v324, 48
  %v791 = vpop.permute.xlu0 %790
  %792 = vrot.lane.b32.xlu0 %v329, 48
  %v793 = vpop.permute.xlu0 %792
  %794 = vrot.lane.b32.xlu0 %v334, 48
  %v795 = vpop.permute.xlu0 %794
  %796 = vrot.lane.b32.xlu0 %v339, 48
  %v797 = vpop.permute.xlu0 %796
  %v803 = vsel %vm162, %v786, 0
  %v806 = vsel %vm162, %v787, 0
  %v809 = vsel %vm162, %v788, 0
  %v812 = vsel %vm162, %v789, 0
  %814 = vmatprep.subr.mxu0 0.0
  %815 = vmatpush1.msra.mxu0 %v791
  %816 = vmatprep.subr.mxu0 0.0
  %817 = vmatpush1.msra.mxu0 %v793
  %818 = vmatprep.subr.mxu0 0.0
  %819 = vmatpush1.msra.mxu0 %v795
  %820 = vmatprep.subr.mxu0 0.0
  %821 = vmatpush1.msra.mxu0 %v797
  %822 = vmatprep.subr.mxu0 0.0
  %823 = vmatpush1.msra.mxu0 0.0
  %824 = vmatprep.subr.mxu0 0.0
  %825 = vmatpush1.msra.mxu0 0.0
  %826 = vmatprep.subr.mxu0 0.0
  %827 = vmatpush1.msra.mxu0 0.0
  %828 = vmatprep.subr.mxu0 0.0
  %829 = vmatpush1.msra.mxu0 0.0
  %830 = vmatprep.subr.mxu0 0.0
  %831 = vmatpush1.msra.mxu0 0.0
  %832 = vmatprep.subr.mxu0 0.0
  %833 = vmatpush1.msra.mxu0 0.0
  %834 = vmatprep.subr.mxu0 0.0
  %835 = vmatpush1.msra.mxu0 0.0
  %836 = vmatprep.subr.mxu0 0.0
  %837 = vmatpush1.msra.mxu0 0.0
  %838 = vmatprep.subr.mxu0 0.0
  %839 = vmatpush1.msra.mxu0 0.0
  %840 = vmatprep.subr.mxu0 0.0
  %841 = vmatpush1.msra.mxu0 0.0
  %842 = vmatprep.subr.mxu0 0.0
  %843 = vmatpush1.msra.mxu0 0.0
  %844 = vmatprep.subr.mxu0 0.0
  %845 = vmatpush1.msra.mxu0 0.0
  %846 = vmatprep.subr.mxu0 0.0
  %847 = vmatpush1.msra.mxu0 0.0
  %848 = vmatprep.subr.mxu0 0.0
  %849 = vmatpush1.msra.mxu0 0.0
  %850 = vmatprep.subr.mxu0 0.0
  %851 = vmatpush1.msra.mxu0 0.0
  %852 = vmatprep.subr.mxu0 0.0
  %853 = vmatpush1.msra.mxu0 0.0
  %854 = vmatprep.subr.mxu0 0.0
  %855 = vmatpush1.msra.mxu0 0.0
  %856 = vmatprep.subr.mxu0 0.0
  %857 = vmatpush1.msra.mxu0 0.0
  %858 = vmatprep.subr.mxu0 0.0
  %859 = vmatpush1.msra.mxu0 0.0
  %860 = vmatprep.subr.mxu0 0.0
  %861 = vmatpush1.msra.mxu0 0.0
  %862 = vmatprep.subr.mxu0 0.0
  %863 = vmatpush1.msra.mxu0 0.0
  %864 = vmatprep.subr.mxu0 0.0
  %865 = vmatpush1.msra.mxu0 0.0
  %866 = vmatprep.subr.mxu0 0.0
  %867 = vmatpush1.msra.mxu0 0.0
  %868 = vmatprep.subr.mxu0 0.0
  %869 = vmatpush1.msra.mxu0 0.0
  %870 = vmatprep.subr.mxu0 0.0
  %871 = vmatpush1.msra.mxu0 0.0
  %872 = vmatprep.subr.mxu0 0.0
  %873 = vmatpush1.msra.mxu0 0.0
  %874 = vmatprep.subr.mxu0 0.0
  %875 = vmatpush1.msra.mxu0 0.0
  %876 = vmatprep.subr.mxu0 0.0
  %877 = vmatpush1.msra.mxu0 0.0
  %878 = vmatprep.mubr.f32.mxu0 0.0
  %879 = vmatmul.mubr.f32.gmra.mrb[0].mxu0 %v803
  %v880 = vpop.f32.mrb[0].mxu0
  %v881 = vadd.f32 0.0, %v880
  %v882 = vpop.f32.mrb[0].mxu0
  %883 = vmatprep.mubr.f32.mxu0 0.0
  %884 = vmatmul.mubr.f32.gmra.mrb[0].mxu0 %v806
  %v885 = vpop.f32.mrb[0].mxu0
  %v886 = vadd.f32 0.0, %v885
  %v887 = vpop.f32.mrb[0].mxu0
  %888 = vmatprep.mubr.f32.mxu0 0.0
  %889 = vmatmul.mubr.f32.gmra.mrb[0].mxu0 %v809
  %v890 = vpop.f32.mrb[0].mxu0
  %v891 = vadd.f32 0.0, %v890
  %v892 = vpop.f32.mrb[0].mxu0
  %893 = vmatprep.mubr.f32.mxu0 0.0
  %894 = vmatmul.mubr.f32.gmra.mrb[0].mxu0 %v812
  %v895 = vpop.f32.mrb[0].mxu0
  %v896 = vadd.f32 0.0, %v895
  %v897 = vpop.f32.mrb[0].mxu0
  %898 = vdwg.mxu0
  %v900 = vsel %vm358, %v881, 0
  %v903 = vsel %vm358, %v886, 0
  %v906 = vsel %vm358, %v891, 0
  %v909 = vsel %vm358, %v896, 0
  %911 = vmatprep.subr.mxu0 0.0
  %912 = vmatpush1.msra.mxu0 %v344
  %913 = vmatprep.subr.mxu0 0.0
  %914 = vmatpush1.msra.mxu0 %v345
  %915 = vmatprep.subr.mxu0 0.0
  %916 = vmatpush1.msra.mxu0 0.0
  %917 = vmatprep.subr.mxu0 0.0
  %918 = vmatpush1.msra.mxu0 0.0
  %919 = vmatprep.subr.mxu0 0.0
  %920 = vmatpush1.msra.mxu0 0.0
  %921 = vmatprep.subr.mxu0 0.0
  %922 = vmatpush1.msra.mxu0 0.0
  %923 = vmatprep.subr.mxu0 0.0
  %924 = vmatpush1.msra.mxu0 0.0
  %925 = vmatprep.subr.mxu0 0.0
  %926 = vmatpush1.msra.mxu0 0.0
  %927 = vmatprep.subr.mxu0 0.0
  %928 = vmatpush1.msra.mxu0 0.0
  %929 = vmatprep.subr.mxu0 0.0
  %930 = vmatpush1.msra.mxu0 0.0
  %931 = vmatprep.subr.mxu0 0.0
  %932 = vmatpush1.msra.mxu0 0.0
  %933 = vmatprep.subr.mxu0 0.0
  %934 = vmatpush1.msra.mxu0 0.0
  %935 = vmatprep.subr.mxu0 0.0
  %936 = vmatpush1.msra.mxu0 0.0
  %937 = vmatprep.subr.mxu0 0.0
  %938 = vmatpush1.msra.mxu0 0.0
  %939 = vmatprep.subr.mxu0 0.0
  %940 = vmatpush1.msra.mxu0 0.0
  %941 = vmatprep.subr.mxu0 0.0
  %942 = vmatpush1.msra.mxu0 0.0
  %943 = vmatprep.subr.mxu0 0.0
  %944 = vmatpush1.msra.mxu0 0.0
  %945 = vmatprep.subr.mxu0 0.0
  %946 = vmatpush1.msra.mxu0 0.0
  %947 = vmatprep.subr.mxu0 0.0
  %948 = vmatpush1.msra.mxu0 0.0
  %949 = vmatprep.subr.mxu0 0.0
  %950 = vmatpush1.msra.mxu0 0.0
  %951 = vmatprep.subr.mxu0 0.0
  %952 = vmatpush1.msra.mxu0 0.0
  %953 = vmatprep.subr.mxu0 0.0
  %954 = vmatpush1.msra.mxu0 0.0
  %955 = vmatprep.subr.mxu0 0.0
  %956 = vmatpush1.msra.mxu0 0.0
  %957 = vmatprep.subr.mxu0 0.0
  %958 = vmatpush1.msra.mxu0 0.0
  %959 = vmatprep.subr.mxu0 0.0
  %960 = vmatpush1.msra.mxu0 0.0
  %961 = vmatprep.subr.mxu0 0.0
  %962 = vmatpush1.msra.mxu0 0.0
  %963 = vmatprep.subr.mxu0 0.0
  %964 = vmatpush1.msra.mxu0 0.0
  %965 = vmatprep.subr.mxu0 0.0
  %966 = vmatpush1.msra.mxu0 0.0
  %967 = vmatprep.subr.mxu0 0.0
  %968 = vmatpush1.msra.mxu0 0.0
  %969 = vmatprep.subr.mxu0 0.0
  %970 = vmatpush1.msra.mxu0 0.0
  %971 = vmatprep.subr.mxu0 0.0
  %972 = vmatpush1.msra.mxu0 0.0
  %973 = vmatprep.subr.mxu0 0.0
  %974 = vmatpush1.msra.mxu0 0.0
  %975 = vmatprep.mubr.f32.mxu0 0.0
  %976 = vmatmul.mubr.f32.gmra.mrb[0].mxu0 %v900
  %v977 = vpop.f32.mrb[0].mxu0
  %v978 = vadd.f32 0.0, %v977
  %v979 = vpop.f32.mrb[0].mxu0
  %980 = vmatprep.mubr.f32.mxu0 0.0
  %981 = vmatmul.mubr.f32.gmra.mrb[0].mxu0 %v903
  %v982 = vpop.f32.mrb[0].mxu0
  %v983 = vadd.f32 0.0, %v982
  %v984 = vpop.f32.mrb[0].mxu0
  %985 = vmatprep.mubr.f32.mxu0 0.0
  %986 = vmatmul.mubr.f32.gmra.mrb[0].mxu0 %v906
  %v987 = vpop.f32.mrb[0].mxu0
  %v988 = vadd.f32 0.0, %v987
  %v989 = vpop.f32.mrb[0].mxu0
  %990 = vmatprep.mubr.f32.mxu0 0.0
  %991 = vmatmul.mubr.f32.gmra.mrb[0].mxu0 %v909
  %v992 = vpop.f32.mrb[0].mxu0
  %v993 = vadd.f32 0.0, %v992
  %v994 = vpop.f32.mrb[0].mxu0
  %995 = vdwg.mxu0
  %v997 = vsel %vm358, %v603, 0
  %v1000 = vsel %vm358, %v608, 0
  %v1003 = vsel %vm358, %v613, 0
  %v1006 = vsel %vm358, %v618, 0
  %1008 = vmatprep.subr.mxu0 0.0
  %1009 = vmatpush1.msra.mxu0 %v342
  %1010 = vmatprep.subr.mxu0 0.0
  %1011 = vmatpush1.msra.mxu0 %v343
  %1012 = vmatprep.subr.mxu0 0.0
  %1013 = vmatpush1.msra.mxu0 0.0
  %1014 = vmatprep.subr.mxu0 0.0
  %1015 = vmatpush1.msra.mxu0 0.0
  %1016 = vmatprep.subr.mxu0 0.0
  %1017 = vmatpush1.msra.mxu0 0.0
  %1018 = vmatprep.subr.mxu0 0.0
  %1019 = vmatpush1.msra.mxu0 0.0
  %1020 = vmatprep.subr.mxu0 0.0
  %1021 = vmatpush1.msra.mxu0 0.0
  %1022 = vmatprep.subr.mxu0 0.0
  %1023 = vmatpush1.msra.mxu0 0.0
  %1024 = vmatprep.subr.mxu0 0.0
  %1025 = vmatpush1.msra.mxu0 0.0
  %1026 = vmatprep.subr.mxu0 0.0
  %1027 = vmatpush1.msra.mxu0 0.0
  %1028 = vmatprep.subr.mxu0 0.0
  %1029 = vmatpush1.msra.mxu0 0.0
  %1030 = vmatprep.subr.mxu0 0.0
  %1031 = vmatpush1.msra.mxu0 0.0
  %1032 = vmatprep.subr.mxu0 0.0
  %1033 = vmatpush1.msra.mxu0 0.0
  %1034 = vmatprep.subr.mxu0 0.0
  %1035 = vmatpush1.msra.mxu0 0.0
  %1036 = vmatprep.subr.mxu0 0.0
  %1037 = vmatpush1.msra.mxu0 0.0
  %1038 = vmatprep.subr.mxu0 0.0
  %1039 = vmatpush1.msra.mxu0 0.0
  %1040 = vmatprep.subr.mxu0 0.0
  %1041 = vmatpush1.msra.mxu0 0.0
  %1042 = vmatprep.subr.mxu0 0.0
  %1043 = vmatpush1.msra.mxu0 0.0
  %1044 = vmatprep.subr.mxu0 0.0
  %1045 = vmatpush1.msra.mxu0 0.0
  %1046 = vmatprep.subr.mxu0 0.0
  %1047 = vmatpush1.msra.mxu0 0.0
  %1048 = vmatprep.subr.mxu0 0.0
  %1049 = vmatpush1.msra.mxu0 0.0
  %1050 = vmatprep.subr.mxu0 0.0
  %1051 = vmatpush1.msra.mxu0 0.0
  %1052 = vmatprep.subr.mxu0 0.0
  %1053 = vmatpush1.msra.mxu0 0.0
  %1054 = vmatprep.subr.mxu0 0.0
  %1055 = vmatpush1.msra.mxu0 0.0
  %1056 = vmatprep.subr.mxu0 0.0
  %1057 = vmatpush1.msra.mxu0 0.0
  %1058 = vmatprep.subr.mxu0 0.0
  %1059 = vmatpush1.msra.mxu0 0.0
  %1060 = vmatprep.subr.mxu0 0.0
  %1061 = vmatpush1.msra.mxu0 0.0
  %1062 = vmatprep.subr.mxu0 0.0
  %1063 = vmatpush1.msra.mxu0 0.0
  %1064 = vmatprep.subr.mxu0 0.0
  %1065 = vmatpush1.msra.mxu0 0.0
  %1066 = vmatprep.subr.mxu0 0.0
  %1067 = vmatpush1.msra.mxu0 0.0
  %1068 = vmatprep.subr.mxu0 0.0
  %1069 = vmatpush1.msra.mxu0 0.0
  %1070 = vmatprep.subr.mxu0 0.0
  %1071 = vmatpush1.msra.mxu0 0.0
  %1072 = vmatprep.mubr.f32.mxu0 0.0
  %1073 = vmatmul.mubr.f32.gmra.mrb[0].mxu0 %v997
  %v1074 = vpop.f32.mrb[0].mxu0
  %v1075 = vadd.f32 %v978, %v1074
  %v1076 = vpop.f32.mrb[0].mxu0
  %1077 = vmatprep.mubr.f32.mxu0 0.0
  %1078 = vmatmul.mubr.f32.gmra.mrb[0].mxu0 %v1000
  %v1079 = vpop.f32.mrb[0].mxu0
  %v1080 = vadd.f32 %v983, %v1079
  %v1081 = vpop.f32.mrb[0].mxu0
  %1082 = vmatprep.mubr.f32.mxu0 0.0
  %1083 = vmatmul.mubr.f32.gmra.mrb[0].mxu0 %v1003
  %v1084 = vpop.f32.mrb[0].mxu0
  %v1085 = vadd.f32 %v988, %v1084
  %v1086 = vpop.f32.mrb[0].mxu0
  %1087 = vmatprep.mubr.f32.mxu0 0.0
  %1088 = vmatmul.mubr.f32.gmra.mrb[0].mxu0 %v1006
  %v1089 = vpop.f32.mrb[0].mxu0
  %v1090 = vadd.f32 %v993, %v1089
  %v1091 = vpop.f32.mrb[0].mxu0
  %1092 = vdwg.mxu0
  %v1093 = vld [vmem:[%s2 + $0x140] sm:$0x1]
  %v1094 = vlaneseq
  %v1095 = vshrl.u32 %v1094, 7
  %v1096 = vsub.s32 0, %v1095
  %v1097 = vrot.slane %v1093, %v1096
  %v1098 = vadd.f32 %v1075, %v1097
  %v1099 = vadd.f32 %v1080, %v1097
  %v1100 = vadd.f32 %v1085, %v1097
  %v1101 = vadd.f32 %v1090, %v1097
  %v1102 = vadd.f32 %v156, %v1098
  %v1103 = vadd.f32 %v157, %v1099
  %v1104 = vadd.f32 %v158, %v1100
  %v1105 = vadd.f32 %v159, %v1101
  %v1106 = vld [vmem:[%s2 + $0x148] sm:$0x1]
  %v1107 = vld [vmem:[%s2 + $0x150] sm:$0x1]
  %v1108 = vsel %vm162, %v1102, 0.0
  %1109 = vadd.xlane.f32.xlu0 %v1108
  %v1110 = vpop.xlane.xlu0 %1109
  %v1111 = vsel %vm162, %v1103, 0.0
  %1112 = vadd.xlane.f32.xlu0 %v1111
  %v1113 = vpop.xlane.xlu0 %1112
  %v1114 = vsel %vm162, %v1104, 0.0
  %1115 = vadd.xlane.f32.xlu0 %v1114
  %v1116 = vpop.xlane.xlu0 %1115
  %v1117 = vsel %vm162, %v1105, 0.0
  %1118 = vadd.xlane.f32.xlu0 %v1117
  %v1119 = vpop.xlane.xlu0 %1118
  %v1120 = vmul.f32 %v1110, %v175
  %v1121 = vmul.f32 %v1113, %v175
  %v1122 = vmul.f32 %v1116, %v175
  %v1123 = vmul.f32 %v1119, %v175
  %v1124 = vsub.f32 %v1102, %v1120
  %v1125 = vsub.f32 %v1103, %v1121
  %v1126 = vsub.f32 %v1104, %v1122
  %v1127 = vsub.f32 %v1105, %v1123
  %v1128 = vmul.f32 %v1124, %v1124
  %v1129 = vmul.f32 %v1125, %v1125
  %v1130 = vmul.f32 %v1126, %v1126
  %v1131 = vmul.f32 %v1127, %v1127
  %v1132 = vsel %vm162, %v1128, 0.0
  %1133 = vadd.xlane.f32.xlu0 %v1132
  %v1134 = vpop.xlane.xlu0 %1133
  %v1135 = vsel %vm162, %v1129, 0.0
  %1136 = vadd.xlane.f32.xlu0 %v1135
  %v1137 = vpop.xlane.xlu0 %1136
  %v1138 = vsel %vm162, %v1130, 0.0
  %1139 = vadd.xlane.f32.xlu0 %v1138
  %v1140 = vpop.xlane.xlu0 %1139
  %v1141 = vsel %vm162, %v1131, 0.0
  %1142 = vadd.xlane.f32.xlu0 %v1141
  %v1143 = vpop.xlane.xlu0 %1142
  %v1144 = vmul.f32 %v1134, %v175
  %v1145 = vmul.f32 %v1137, %v175
  %v1146 = vmul.f32 %v1140, %v175
  %v1147 = vmul.f32 %v1143, %v175
  %v1148 = vadd.f32 %v1144, 1e-06
  %v1149 = vadd.f32 %v1145, 1e-06
  %v1150 = vadd.f32 %v1146, 1e-06
  %v1151 = vadd.f32 %v1147, 1e-06
  %v1152 = vrsqrt.pop %v1148
  %v1153 = vrsqrt.pop %v1149
  %v1154 = vrsqrt.pop %v1150
  %v1155 = vrsqrt.pop %v1151
  %v1156 = vmul.f32 %v1124, %v1152
  %v1157 = vmul.f32 %v1125, %v1153
  %v1158 = vmul.f32 %v1126, %v1154
  %v1159 = vmul.f32 %v1127, %v1155
  %v1160 = vlaneseq
  %v1161 = vshrl.u32 %v1160, 7
  %v1162 = vsub.s32 0, %v1161
  %v1163 = vrot.slane %v1106, %v1162
  %v1164 = vmul.f32 %v1156, %v1163
  %v1165 = vmul.f32 %v1157, %v1163
  %v1166 = vmul.f32 %v1158, %v1163
  %v1167 = vmul.f32 %v1159, %v1163
  %v1168 = vlaneseq
  %v1169 = vshrl.u32 %v1168, 7
  %v1170 = vsub.s32 0, %v1169
  %v1171 = vrot.slane %v1107, %v1170
  %v1172 = vadd.f32 %v1164, %v1171
  %v1173 = vadd.f32 %v1165, %v1171
  %v1174 = vadd.f32 %v1166, %v1171
  %v1175 = vadd.f32 %v1167, %v1171
  %v1176 = vld [vmem:[%s2 + $0x158] sm:$0xff]
  %v1177 = vld [vmem:[%s2 + $0x160] sm:$0xff]
  %v1178 = vld [vmem:[%s2 + $0x168] sm:$0xff]
  %v1179 = vld [vmem:[%s2 + $0x170] sm:$0xff]
  %v1180 = vld [vmem:[%s2 + $0x178] sm:$0x1]
  %v1181 = vlaneseq
  %v1182 = vshrl.u32 %v1181, 7
  %v1183 = vsub.s32 0, %v1182
  %v1184 = vrot.slane %v1180, %v1183
  %v1186 = vsel %vm162, %v1172, 0
  %v1189 = vsel %vm162, %v1173, 0
  %v1192 = vsel %vm162, %v1174, 0
  %v1195 = vsel %vm162, %v1175, 0
  %1197 = vmatprep.subr.mxu0 0.0
  %1198 = vmatpush1.msra.mxu0 %v1176
  %1199 = vmatprep.subr.mxu0 0.0
  %1200 = vmatpush1.msra.mxu0 %v1177
  %1201 = vmatprep.subr.mxu0 0.0
  %1202 = vmatpush1.msra.mxu0 %v1178
  %1203 = vmatprep.subr.mxu0 0.0
  %1204 = vmatpush1.msra.mxu0 %v1179
  %1205 = vmatprep.subr.mxu0 0.0
  %1206 = vmatpush1.msra.mxu0 0.0
  %1207 = vmatprep.subr.mxu0 0.0
  %1208 = vmatpush1.msra.mxu0 0.0
  %1209 = vmatprep.subr.mxu0 0.0
  %1210 = vmatpush1.msra.mxu0 0.0
  %1211 = vmatprep.subr.mxu0 0.0
  %1212 = vmatpush1.msra.mxu0 0.0
  %1213 = vmatprep.subr.mxu0 0.0
  %1214 = vmatpush1.msra.mxu0 0.0
  %1215 = vmatprep.subr.mxu0 0.0
  %1216 = vmatpush1.msra.mxu0 0.0
  %1217 = vmatprep.subr.mxu0 0.0
  %1218 = vmatpush1.msra.mxu0 0.0
  %1219 = vmatprep.subr.mxu0 0.0
  %1220 = vmatpush1.msra.mxu0 0.0
  %1221 = vmatprep.subr.mxu0 0.0
  %1222 = vmatpush1.msra.mxu0 0.0
  %1223 = vmatprep.subr.mxu0 0.0
  %1224 = vmatpush1.msra.mxu0 0.0
  %1225 = vmatprep.subr.mxu0 0.0
  %1226 = vmatpush1.msra.mxu0 0.0
  %1227 = vmatprep.subr.mxu0 0.0
  %1228 = vmatpush1.msra.mxu0 0.0
  %1229 = vmatprep.subr.mxu0 0.0
  %1230 = vmatpush1.msra.mxu0 0.0
  %1231 = vmatprep.subr.mxu0 0.0
  %1232 = vmatpush1.msra.mxu0 0.0
  %1233 = vmatprep.subr.mxu0 0.0
  %1234 = vmatpush1.msra.mxu0 0.0
  %1235 = vmatprep.subr.mxu0 0.0
  %1236 = vmatpush1.msra.mxu0 0.0
  %1237 = vmatprep.subr.mxu0 0.0
  %1238 = vmatpush1.msra.mxu0 0.0
  %1239 = vmatprep.subr.mxu0 0.0
  %1240 = vmatpush1.msra.mxu0 0.0
  %1241 = vmatprep.subr.mxu0 0.0
  %1242 = vmatpush1.msra.mxu0 0.0
  %1243 = vmatprep.subr.mxu0 0.0
  %1244 = vmatpush1.msra.mxu0 0.0
  %1245 = vmatprep.subr.mxu0 0.0
  %1246 = vmatpush1.msra.mxu0 0.0
  %1247 = vmatprep.subr.mxu0 0.0
  %1248 = vmatpush1.msra.mxu0 0.0
  %1249 = vmatprep.subr.mxu0 0.0
  %1250 = vmatpush1.msra.mxu0 0.0
  %1251 = vmatprep.subr.mxu0 0.0
  %1252 = vmatpush1.msra.mxu0 0.0
  %1253 = vmatprep.subr.mxu0 0.0
  %1254 = vmatpush1.msra.mxu0 0.0
  %1255 = vmatprep.subr.mxu0 0.0
  %1256 = vmatpush1.msra.mxu0 0.0
  %1257 = vmatprep.subr.mxu0 0.0
  %1258 = vmatpush1.msra.mxu0 0.0
  %1259 = vmatprep.subr.mxu0 0.0
  %1260 = vmatpush1.msra.mxu0 0.0
  %1261 = vmatprep.mubr.f32.mxu0 0.0
  %1262 = vmatmul.mubr.f32.gmra.mrb[0].mxu0 %v1186
  %v1263 = vpop.f32.mrb[0].mxu0
  %v1264 = vadd.f32 %v1184, %v1263
  %v1265 = vpop.f32.mrb[0].mxu0
  %1266 = vmatprep.mubr.f32.mxu0 0.0
  %1267 = vmatmul.mubr.f32.gmra.mrb[0].mxu0 %v1189
  %v1268 = vpop.f32.mrb[0].mxu0
  %v1269 = vadd.f32 %v1184, %v1268
  %v1270 = vpop.f32.mrb[0].mxu0
  %1271 = vmatprep.mubr.f32.mxu0 0.0
  %1272 = vmatmul.mubr.f32.gmra.mrb[0].mxu0 %v1192
  %v1273 = vpop.f32.mrb[0].mxu0
  %v1274 = vadd.f32 %v1184, %v1273
  %v1275 = vpop.f32.mrb[0].mxu0
  %1276 = vmatprep.mubr.f32.mxu0 0.0
  %1277 = vmatmul.mubr.f32.gmra.mrb[0].mxu0 %v1195
  %v1278 = vpop.f32.mrb[0].mxu0
  %v1279 = vadd.f32 %v1184, %v1278
  %v1280 = vpop.f32.mrb[0].mxu0
  %1281 = vdwg.mxu0
  %v1282 = vmul.f32 %v1264, %v1264
  %v1283 = vmul.f32 %v1269, %v1269
  %v1284 = vmul.f32 %v1274, %v1274
  %v1285 = vmul.f32 %v1279, %v1279
  %v1286 = vmul.f32 %v1264, %v1282
  %v1287 = vmul.f32 %v1269, %v1283
  %v1288 = vmul.f32 %v1274, %v1284
  %v1289 = vmul.f32 %v1279, %v1285
  %v1290 = vmul.f32 %v1286, 0.044715
  %v1291 = vmul.f32 %v1287, 0.044715
  %v1292 = vmul.f32 %v1288, 0.044715
  %v1293 = vmul.f32 %v1289, 0.044715
  %v1294 = vadd.f32 %v1264, %v1290
  %v1295 = vadd.f32 %v1269, %v1291
  %v1296 = vadd.f32 %v1274, %v1292
  %v1297 = vadd.f32 %v1279, %v1293
  %v1298 = vmul.f32 %v1294, 0.7978846
  %v1299 = vmul.f32 %v1295, 0.7978846
  %v1300 = vmul.f32 %v1296, 0.7978846
  %v1301 = vmul.f32 %v1297, 0.7978846
  %v1302 = vtanh.pop %v1298
  %v1303 = vtanh.pop %v1299
  %v1304 = vtanh.pop %v1300
  %v1305 = vtanh.pop %v1301
  %v1306 = vadd.f32 %v1302, 1.0
  %v1307 = vadd.f32 %v1303, 1.0
  %v1308 = vadd.f32 %v1304, 1.0
  %v1309 = vadd.f32 %v1305, 1.0
  %v1310 = vmul.f32 %v1306, 0.5
  %v1311 = vmul.f32 %v1307, 0.5
  %v1312 = vmul.f32 %v1308, 0.5
  %v1313 = vmul.f32 %v1309, 0.5
  %v1314 = vmul.f32 %v1264, %v1310
  %v1315 = vmul.f32 %v1269, %v1311
  %v1316 = vmul.f32 %v1274, %v1312
  %v1317 = vmul.f32 %v1279, %v1313
  %v1318 = vld [vmem:[%s2 + $0x180] sm:$0xff]
  %v1319 = vld [vmem:[%s2 + $0x188] sm:$0xff]
  %v1320 = vld [vmem:[%s2 + $0x190] sm:$0xff]
  %v1321 = vld [vmem:[%s2 + $0x198] sm:$0xff]
  %v1322 = vld [vmem:[%s2 + $0x1a0] sm:$0xff]
  %v1323 = vld [vmem:[%s2 + $0x1a8] sm:$0xff]
  %v1324 = vld [vmem:[%s2 + $0x1b0] sm:$0xff]
  %v1325 = vld [vmem:[%s2 + $0x1b8] sm:$0xff]
  %v1327 = vsel %vm54, %v1314, 0
  %v1330 = vsel %vm54, %v1315, 0
  %v1333 = vsel %vm54, %v1316, 0
  %v1336 = vsel %vm54, %v1317, 0
  %1338 = vmatprep.subr.mxu0 0.0
  %1339 = vmatpush1.msra.mxu0 %v1318
  %1340 = vmatprep.subr.mxu0 0.0
  %1341 = vmatpush1.msra.mxu0 %v1319
  %1342 = vmatprep.subr.mxu0 0.0
  %1343 = vmatpush1.msra.mxu0 %v1320
  %1344 = vmatprep.subr.mxu0 0.0
  %1345 = vmatpush1.msra.mxu0 %v1321
  %1346 = vmatprep.subr.mxu0 0.0
  %1347 = vmatpush1.msra.mxu0 %v1322
  %1348 = vmatprep.subr.mxu0 0.0
  %1349 = vmatpush1.msra.mxu0 %v1323
  %1350 = vmatprep.subr.mxu0 0.0
  %1351 = vmatpush1.msra.mxu0 %v1324
  %1352 = vmatprep.subr.mxu0 0.0
  %1353 = vmatpush1.msra.mxu0 %v1325
  %1354 = vmatprep.subr.mxu0 0.0
  %1355 = vmatpush1.msra.mxu0 0.0
  %1356 = vmatprep.subr.mxu0 0.0
  %1357 = vmatpush1.msra.mxu0 0.0
  %1358 = vmatprep.subr.mxu0 0.0
  %1359 = vmatpush1.msra.mxu0 0.0
  %1360 = vmatprep.subr.mxu0 0.0
  %1361 = vmatpush1.msra.mxu0 0.0
  %1362 = vmatprep.subr.mxu0 0.0
  %1363 = vmatpush1.msra.mxu0 0.0
  %1364 = vmatprep.subr.mxu0 0.0
  %1365 = vmatpush1.msra.mxu0 0.0
  %1366 = vmatprep.subr.mxu0 0.0
  %1367 = vmatpush1.msra.mxu0 0.0
  %1368 = vmatprep.subr.mxu0 0.0
  %1369 = vmatpush1.msra.mxu0 0.0
  %1370 = vmatprep.subr.mxu0 0.0
  %1371 = vmatpush1.msra.mxu0 0.0
  %1372 = vmatprep.subr.mxu0 0.0
  %1373 = vmatpush1.msra.mxu0 0.0
  %1374 = vmatprep.subr.mxu0 0.0
  %1375 = vmatpush1.msra.mxu0 0.0
  %1376 = vmatprep.subr.mxu0 0.0
  %1377 = vmatpush1.msra.mxu0 0.0
  %1378 = vmatprep.subr.mxu0 0.0
  %1379 = vmatpush1.msra.mxu0 0.0
  %1380 = vmatprep.subr.mxu0 0.0
  %1381 = vmatpush1.msra.mxu0 0.0
  %1382 = vmatprep.subr.mxu0 0.0
  %1383 = vmatpush1.msra.mxu0 0.0
  %1384 = vmatprep.subr.mxu0 0.0
  %1385 = vmatpush1.msra.mxu0 0.0
  %1386 = vmatprep.subr.mxu0 0.0
  %1387 = vmatpush1.msra.mxu0 0.0
  %1388 = vmatprep.subr.mxu0 0.0
  %1389 = vmatpush1.msra.mxu0 0.0
  %1390 = vmatprep.subr.mxu0 0.0
  %1391 = vmatpush1.msra.mxu0 0.0
  %1392 = vmatprep.subr.mxu0 0.0
  %1393 = vmatpush1.msra.mxu0 0.0
  %1394 = vmatprep.subr.mxu0 0.0
  %1395 = vmatpush1.msra.mxu0 0.0
  %1396 = vmatprep.subr.mxu0 0.0
  %1397 = vmatpush1.msra.mxu0 0.0
  %1398 = vmatprep.subr.mxu0 0.0
  %1399 = vmatpush1.msra.mxu0 0.0
  %1400 = vmatprep.subr.mxu0 0.0
  %1401 = vmatpush1.msra.mxu0 0.0
  %1402 = vmatprep.mubr.f32.mxu0 0.0
  %1403 = vmatmul.mubr.f32.gmra.mrb[0].mxu0 %v1327
  %v1404 = vpop.f32.mrb[0].mxu0
  %v1405 = vadd.f32 0.0, %v1404
  %v1406 = vpop.f32.mrb[0].mxu0
  %1407 = vmatprep.mubr.f32.mxu0 0.0
  %1408 = vmatmul.mubr.f32.gmra.mrb[0].mxu0 %v1330
  %v1409 = vpop.f32.mrb[0].mxu0
  %v1410 = vadd.f32 0.0, %v1409
  %v1411 = vpop.f32.mrb[0].mxu0
  %1412 = vmatprep.mubr.f32.mxu0 0.0
  %1413 = vmatmul.mubr.f32.gmra.mrb[0].mxu0 %v1333
  %v1414 = vpop.f32.mrb[0].mxu0
  %v1415 = vadd.f32 0.0, %v1414
  %v1416 = vpop.f32.mrb[0].mxu0
  %1417 = vmatprep.mubr.f32.mxu0 0.0
  %1418 = vmatmul.mubr.f32.gmra.mrb[0].mxu0 %v1336
  %v1419 = vpop.f32.mrb[0].mxu0
  %v1420 = vadd.f32 0.0, %v1419
  %v1421 = vpop.f32.mrb[0].mxu0
  %1422 = vdwg.mxu0
  %v1423 = vadd.f32 %v1102, %v1405
  %v1424 = vadd.f32 %v1103, %v1410
  %v1425 = vadd.f32 %v1104, %v1415
  %v1426 = vadd.f32 %v1105, %v1420
  %v1427 = vld [vmem:[%s2 + $0x1c0] sm:$0x1]
  %v1428 = vlaneseq
  %v1429 = vshrl.u32 %v1428, 7
  %v1430 = vsub.s32 0, %v1429
  %v1431 = vrot.slane %v1427, %v1430
  %v1432 = vadd.f32 %v1423, %v1431
  %v1433 = vadd.f32 %v1424, %v1431
  %v1434 = vadd.f32 %v1425, %v1431
  %v1435 = vadd.f32 %v1426, %v1431
  %v1436 = vld [vmem:[%s2 + $0x1c8] sm:$0xff]
  %v1437 = vld [vmem:[%s2 + $0x1d0] sm:$0xff]
  %v1438 = vld [vmem:[%s2 + $0x1d8] sm:$0xff]
  %v1439 = vld [vmem:[%s2 + $0x1e0] sm:$0xff]
  %v1441 = vsel %vm162, %v1432, 0
  %v1444 = vsel %vm162, %v1433, 0
  %v1447 = vsel %vm162, %v1434, 0
  %v1450 = vsel %vm162, %v1435, 0
  %1452 = vmatprep.subr.mxu0 0.0
  %1453 = vmatpush1.msra.mxu0 %v1436
  %1454 = vmatprep.subr.mxu0 0.0
  %1455 = vmatpush1.msra.mxu0 %v1437
  %1456 = vmatprep.subr.mxu0 0.0
  %1457 = vmatpush1.msra.mxu0 %v1438
  %1458 = vmatprep.subr.mxu0 0.0
  %1459 = vmatpush1.msra.mxu0 %v1439
  %1460 = vmatprep.subr.mxu0 0.0
  %1461 = vmatpush1.msra.mxu0 0.0
  %1462 = vmatprep.subr.mxu0 0.0
  %1463 = vmatpush1.msra.mxu0 0.0
  %1464 = vmatprep.subr.mxu0 0.0
  %1465 = vmatpush1.msra.mxu0 0.0
  %1466 = vmatprep.subr.mxu0 0.0
  %1467 = vmatpush1.msra.mxu0 0.0
  %1468 = vmatprep.subr.mxu0 0.0
  %1469 = vmatpush1.msra.mxu0 0.0
  %1470 = vmatprep.subr.mxu0 0.0
  %1471 = vmatpush1.msra.mxu0 0.0
  %1472 = vmatprep.subr.mxu0 0.0
  %1473 = vmatpush1.msra.mxu0 0.0
  %1474 = vmatprep.subr.mxu0 0.0
  %1475 = vmatpush1.msra.mxu0 0.0
  %1476 = vmatprep.subr.mxu0 0.0
  %1477 = vmatpush1.msra.mxu0 0.0
  %1478 = vmatprep.subr.mxu0 0.0
  %1479 = vmatpush1.msra.mxu0 0.0
  %1480 = vmatprep.subr.mxu0 0.0
  %1481 = vmatpush1.msra.mxu0 0.0
  %1482 = vmatprep.subr.mxu0 0.0
  %1483 = vmatpush1.msra.mxu0 0.0
  %1484 = vmatprep.subr.mxu0 0.0
  %1485 = vmatpush1.msra.mxu0 0.0
  %1486 = vmatprep.subr.mxu0 0.0
  %1487 = vmatpush1.msra.mxu0 0.0
  %1488 = vmatprep.subr.mxu0 0.0
  %1489 = vmatpush1.msra.mxu0 0.0
  %1490 = vmatprep.subr.mxu0 0.0
  %1491 = vmatpush1.msra.mxu0 0.0
  %1492 = vmatprep.subr.mxu0 0.0
  %1493 = vmatpush1.msra.mxu0 0.0
  %1494 = vmatprep.subr.mxu0 0.0
  %1495 = vmatpush1.msra.mxu0 0.0
  %1496 = vmatprep.subr.mxu0 0.0
  %1497 = vmatpush1.msra.mxu0 0.0
  %1498 = vmatprep.subr.mxu0 0.0
  %1499 = vmatpush1.msra.mxu0 0.0
  %1500 = vmatprep.subr.mxu0 0.0
  %1501 = vmatpush1.msra.mxu0 0.0
  %1502 = vmatprep.subr.mxu0 0.0
  %1503 = vmatpush1.msra.mxu0 0.0
  %1504 = vmatprep.subr.mxu0 0.0
  %1505 = vmatpush1.msra.mxu0 0.0
  %1506 = vmatprep.subr.mxu0 0.0
  %1507 = vmatpush1.msra.mxu0 0.0
  %1508 = vmatprep.subr.mxu0 0.0
  %1509 = vmatpush1.msra.mxu0 0.0
  %1510 = vmatprep.subr.mxu0 0.0
  %1511 = vmatpush1.msra.mxu0 0.0
  %1512 = vmatprep.subr.mxu0 0.0
  %1513 = vmatpush1.msra.mxu0 0.0
  %1514 = vmatprep.subr.mxu0 0.0
  %1515 = vmatpush1.msra.mxu0 0.0
  %1516 = vmatprep.mubr.f32.mxu0 0.0
  %1517 = vmatmul.mubr.f32.gmra.mrb[0].mxu0 %v1441
  %v1518 = vpop.f32.mrb[0].mxu0
  %v1519 = vadd.f32 0.0, %v1518
  %v1520 = vpop.f32.mrb[0].mxu0
  %1521 = vmatprep.mubr.f32.mxu0 0.0
  %1522 = vmatmul.mubr.f32.gmra.mrb[0].mxu0 %v1444
  %v1523 = vpop.f32.mrb[0].mxu0
  %v1524 = vadd.f32 0.0, %v1523
  %v1525 = vpop.f32.mrb[0].mxu0
  %1526 = vmatprep.mubr.f32.mxu0 0.0
  %1527 = vmatmul.mubr.f32.gmra.mrb[0].mxu0 %v1447
  %v1528 = vpop.f32.mrb[0].mxu0
  %v1529 = vadd.f32 0.0, %v1528
  %v1530 = vpop.f32.mrb[0].mxu0
  %1531 = vmatprep.mubr.f32.mxu0 0.0
  %1532 = vmatmul.mubr.f32.gmra.mrb[0].mxu0 %v1450
  %v1533 = vpop.f32.mrb[0].mxu0
  %v1534 = vadd.f32 0.0, %v1533
  %v1535 = vpop.f32.mrb[0].mxu0
  %1536 = vdwg.mxu0
  %v1537 = vld [vmem:[%s2 + $0x1e8] sm:$0x1]
  %v1538 = vld [vmem:[%s2 + $0x1f0] sm:$0x1]
  %v1539 = vsel %vm162, %v1519, 0.0
  %1540 = vadd.xlane.f32.xlu0 %v1539
  %v1541 = vpop.xlane.xlu0 %1540
  %v1542 = vsel %vm162, %v1524, 0.0
  %1543 = vadd.xlane.f32.xlu0 %v1542
  %v1544 = vpop.xlane.xlu0 %1543
  %v1545 = vsel %vm162, %v1529, 0.0
  %1546 = vadd.xlane.f32.xlu0 %v1545
  %v1547 = vpop.xlane.xlu0 %1546
  %v1548 = vsel %vm162, %v1534, 0.0
  %1549 = vadd.xlane.f32.xlu0 %v1548
  %v1550 = vpop.xlane.xlu0 %1549
  %v1551 = vmul.f32 %v1541, %v175
  %v1552 = vmul.f32 %v1544, %v175
  %v1553 = vmul.f32 %v1547, %v175
  %v1554 = vmul.f32 %v1550, %v175
  %v1555 = vsub.f32 %v1519, %v1551
  %v1556 = vsub.f32 %v1524, %v1552
  %v1557 = vsub.f32 %v1529, %v1553
  %v1558 = vsub.f32 %v1534, %v1554
  %v1559 = vmul.f32 %v1555, %v1555
  %v1560 = vmul.f32 %v1556, %v1556
  %v1561 = vmul.f32 %v1557, %v1557
  %v1562 = vmul.f32 %v1558, %v1558
  %v1563 = vsel %vm162, %v1559, 0.0
  %1564 = vadd.xlane.f32.xlu0 %v1563
  %v1565 = vpop.xlane.xlu0 %1564
  %v1566 = vsel %vm162, %v1560, 0.0
  %1567 = vadd.xlane.f32.xlu0 %v1566
  %v1568 = vpop.xlane.xlu0 %1567
  %v1569 = vsel %vm162, %v1561, 0.0
  %1570 = vadd.xlane.f32.xlu0 %v1569
  %v1571 = vpop.xlane.xlu0 %1570
  %v1572 = vsel %vm162, %v1562, 0.0
  %1573 = vadd.xlane.f32.xlu0 %v1572
  %v1574 = vpop.xlane.xlu0 %1573
  %v1575 = vmul.f32 %v1565, %v175
  %v1576 = vmul.f32 %v1568, %v175
  %v1577 = vmul.f32 %v1571, %v175
  %v1578 = vmul.f32 %v1574, %v175
  %v1579 = vadd.f32 %v1575, 1e-06
  %v1580 = vadd.f32 %v1576, 1e-06
  %v1581 = vadd.f32 %v1577, 1e-06
  %v1582 = vadd.f32 %v1578, 1e-06
  %v1583 = vrsqrt.pop %v1579
  %v1584 = vrsqrt.pop %v1580
  %v1585 = vrsqrt.pop %v1581
  %v1586 = vrsqrt.pop %v1582
  %v1587 = vmul.f32 %v1555, %v1583
  %v1588 = vmul.f32 %v1556, %v1584
  %v1589 = vmul.f32 %v1557, %v1585
  %v1590 = vmul.f32 %v1558, %v1586
  %v1591 = vlaneseq
  %v1592 = vshrl.u32 %v1591, 7
  %v1593 = vsub.s32 0, %v1592
  %v1594 = vrot.slane %v1537, %v1593
  %v1595 = vmul.f32 %v1587, %v1594
  %v1596 = vmul.f32 %v1588, %v1594
  %v1597 = vmul.f32 %v1589, %v1594
  %v1598 = vmul.f32 %v1590, %v1594
  %v1599 = vlaneseq
  %v1600 = vshrl.u32 %v1599, 7
  %v1601 = vsub.s32 0, %v1600
  %v1602 = vrot.slane %v1538, %v1601
  %v1603 = vadd.f32 %v1595, %v1602
  %v1604 = vadd.f32 %v1596, %v1602
  %v1605 = vadd.f32 %v1597, %v1602
  %v1606 = vadd.f32 %v1598, %v1602
  %v1607 = vld [vmem:[%s1] sm:$0xf]
  %v1608 = vld [vmem:[%s2 + $0x1f8] sm:$0x1]
  %v1609 = vlaneseq
  %v1610 = vshrl.u32 %v1609, 7
  %v1611 = vsub.s32 0, %v1610
  %v1612 = vrot.slane %v1608, %v1611
  %v1613 = vadd.f32 %v1603, %v1612
  %v1614 = vadd.f32 %v1604, %v1612
  %v1615 = vadd.f32 %v1605, %v1612
  %v1616 = vadd.f32 %v1606, %v1612
  %v1617 = vld [vmem:[%s2 + $0x200] sm:$0xff]
  %v1618 = vld [vmem:[%s2 + $0x208] sm:$0xff]
  %v1619 = vld [vmem:[%s2 + $0x210] sm:$0xff]
  %v1620 = vld [vmem:[%s2 + $0x218] sm:$0xff]
  %v1621 = vld [vmem:[%s2 + $0x220] sm:$0xff]
  %v1622 = vld [vmem:[%s2 + $0x228] sm:$0x3f]
  %v1623 = vld [vmem:[%s2 + $0x230] sm:$0xff]
  %v1624 = vld [vmem:[%s2 + $0x238] sm:$0x3f]
  %vm1625 = vcmask 31744
  %v1627 = vsel %vm1625, %v1623, 0
  %v1630 = vsel %vm1625, %v1624, 0
  %vm1632 = vcmask 1043456
  %v1634 = vsel %vm1632, %v1607, 0
  %1636 = vmatprep.subr.mxu0 0.0
  %1637 = vmatpush1.msra.mxu0 %v1634
  %1638 = vmatprep.subr.mxu0 0.0
  %1639 = vmatpush1.msra.mxu0 0.0
  %1640 = vmatprep.subr.mxu0 0.0
  %1641 = vmatpush1.msra.mxu0 0.0
  %1642 = vmatprep.subr.mxu0 0.0
  %1643 = vmatpush1.msra.mxu0 0.0
  %1644 = vmatprep.subr.mxu0 0.0
  %1645 = vmatpush1.msra.mxu0 0.0
  %1646 = vmatprep.subr.mxu0 0.0
  %1647 = vmatpush1.msra.mxu0 0.0
  %1648 = vmatprep.subr.mxu0 0.0
  %1649 = vmatpush1.msra.mxu0 0.0
  %1650 = vmatprep.subr.mxu0 0.0
  %1651 = vmatpush1.msra.mxu0 0.0
  %1652 = vmatprep.subr.mxu0 0.0
  %1653 = vmatpush1.msra.mxu0 0.0
  %1654 = vmatprep.subr.mxu0 0.0
  %1655 = vmatpush1.msra.mxu0 0.0
  %1656 = vmatprep.subr.mxu0 0.0
  %1657 = vmatpush1.msra.mxu0 0.0
  %1658 = vmatprep.subr.mxu0 0.0
  %1659 = vmatpush1.msra.mxu0 0.0
  %1660 = vmatprep.subr.mxu0 0.0
  %1661 = vmatpush1.msra.mxu0 0.0
  %1662 = vmatprep.subr.mxu0 0.0
  %1663 = vmatpush1.msra.mxu0 0.0
  %1664 = vmatprep.subr.mxu0 0.0
  %1665 = vmatpush1.msra.mxu0 0.0
  %1666 = vmatprep.subr.mxu0 0.0
  %1667 = vmatpush1.msra.mxu0 0.0
  %1668 = vmatprep.subr.mxu0 0.0
  %1669 = vmatpush1.msra.mxu0 0.0
  %1670 = vmatprep.subr.mxu0 0.0
  %1671 = vmatpush1.msra.mxu0 0.0
  %1672 = vmatprep.subr.mxu0 0.0
  %1673 = vmatpush1.msra.mxu0 0.0
  %1674 = vmatprep.subr.mxu0 0.0
  %1675 = vmatpush1.msra.mxu0 0.0
  %1676 = vmatprep.subr.mxu0 0.0
  %1677 = vmatpush1.msra.mxu0 0.0
  %1678 = vmatprep.subr.mxu0 0.0
  %1679 = vmatpush1.msra.mxu0 0.0
  %1680 = vmatprep.subr.mxu0 0.0
  %1681 = vmatpush1.msra.mxu0 0.0
  %1682 = vmatprep.subr.mxu0 0.0
  %1683 = vmatpush1.msra.mxu0 0.0
  %1684 = vmatprep.subr.mxu0 0.0
  %1685 = vmatpush1.msra.mxu0 0.0
  %1686 = vmatprep.subr.mxu0 0.0
  %1687 = vmatpush1.msra.mxu0 0.0
  %1688 = vmatprep.subr.mxu0 0.0
  %1689 = vmatpush1.msra.mxu0 0.0
  %1690 = vmatprep.subr.mxu0 0.0
  %1691 = vmatpush1.msra.mxu0 0.0
  %1692 = vmatprep.subr.mxu0 0.0
  %1693 = vmatpush1.msra.mxu0 0.0
  %1694 = vmatprep.subr.mxu0 0.0
  %1695 = vmatpush1.msra.mxu0 0.0
  %1696 = vmatprep.subr.mxu0 0.0
  %1697 = vmatpush1.msra.mxu0 0.0
  %1698 = vmatprep.subr.mxu0 0.0
  %1699 = vmatpush1.msra.mxu0 0.0
  %1700 = vmatprep.mubr.f32.mxu0 0.0
  %1701 = vmatmul.mubr.f32.gmra.mrb[0].mxu0 %v1627
  %v1702 = vpop.f32.mrb[0].mxu0
  %v1703 = vadd.f32 0.0, %v1702
  %v1704 = vpop.f32.mrb[0].mxu0
  %1705 = vmatprep.mubr.f32.mxu0 0.0
  %1706 = vmatmul.mubr.f32.gmra.mrb[0].mxu0 %v1630
  %v1707 = vpop.f32.mrb[0].mxu0
  %v1708 = vadd.f32 0.0, %v1707
  %v1709 = vpop.f32.mrb[0].mxu0
  %1710 = vdwg.mxu0
  %v1711 = vadd.f32 %v1621, %v1703
  %v1712 = vadd.f32 %v1622, %v1708
  %v1713 = vld [vmem:[%s2 + $0x268] sm:$0xff]
  %v1714 = vld [vmem:[%s2 + $0x270] sm:$0x3f]
  %v1715 = vld [vmem:[%s2 + $0x2a8] sm:$0xff]
  %v1716 = vld [vmem:[%s2 + $0x2b0] sm:$0xff]
  %v1717 = vld [vmem:[%s2 + $0x2b8] sm:$0xff]
  %v1718 = vld [vmem:[%s2 + $0x2c0] sm:$0xff]
  %v1719 = vld [vmem:[%s2 + $0x2c8] sm:$0x1]
  %v1720 = vlaneseq
  %v1721 = vshrl.u32 %v1720, 7
  %v1722 = vsub.s32 0, %v1721
  %v1723 = vrot.slane %v1719, %v1722
  %v1725 = vsel %vm162, %v1711, 0
  %v1728 = vsel %vm162, %v1712, 0
  %1730 = vmatprep.subr.mxu0 0.0
  %1731 = vmatpush1.msra.mxu0 %v1715
  %1732 = vmatprep.subr.mxu0 0.0
  %1733 = vmatpush1.msra.mxu0 %v1716
  %1734 = vmatprep.subr.mxu0 0.0
  %1735 = vmatpush1.msra.mxu0 %v1717
  %1736 = vmatprep.subr.mxu0 0.0
  %1737 = vmatpush1.msra.mxu0 %v1718
  %1738 = vmatprep.subr.mxu0 0.0
  %1739 = vmatpush1.msra.mxu0 0.0
  %1740 = vmatprep.subr.mxu0 0.0
  %1741 = vmatpush1.msra.mxu0 0.0
  %1742 = vmatprep.subr.mxu0 0.0
  %1743 = vmatpush1.msra.mxu0 0.0
  %1744 = vmatprep.subr.mxu0 0.0
  %1745 = vmatpush1.msra.mxu0 0.0
  %1746 = vmatprep.subr.mxu0 0.0
  %1747 = vmatpush1.msra.mxu0 0.0
  %1748 = vmatprep.subr.mxu0 0.0
  %1749 = vmatpush1.msra.mxu0 0.0
  %1750 = vmatprep.subr.mxu0 0.0
  %1751 = vmatpush1.msra.mxu0 0.0
  %1752 = vmatprep.subr.mxu0 0.0
  %1753 = vmatpush1.msra.mxu0 0.0
  %1754 = vmatprep.subr.mxu0 0.0
  %1755 = vmatpush1.msra.mxu0 0.0
  %1756 = vmatprep.subr.mxu0 0.0
  %1757 = vmatpush1.msra.mxu0 0.0
  %1758 = vmatprep.subr.mxu0 0.0
  %1759 = vmatpush1.msra.mxu0 0.0
  %1760 = vmatprep.subr.mxu0 0.0
  %1761 = vmatpush1.msra.mxu0 0.0
  %1762 = vmatprep.subr.mxu0 0.0
  %1763 = vmatpush1.msra.mxu0 0.0
  %1764 = vmatprep.subr.mxu0 0.0
  %1765 = vmatpush1.msra.mxu0 0.0
  %1766 = vmatprep.subr.mxu0 0.0
  %1767 = vmatpush1.msra.mxu0 0.0
  %1768 = vmatprep.subr.mxu0 0.0
  %1769 = vmatpush1.msra.mxu0 0.0
  %1770 = vmatprep.subr.mxu0 0.0
  %1771 = vmatpush1.msra.mxu0 0.0
  %1772 = vmatprep.subr.mxu0 0.0
  %1773 = vmatpush1.msra.mxu0 0.0
  %1774 = vmatprep.subr.mxu0 0.0
  %1775 = vmatpush1.msra.mxu0 0.0
  %1776 = vmatprep.subr.mxu0 0.0
  %1777 = vmatpush1.msra.mxu0 0.0
  %1778 = vmatprep.subr.mxu0 0.0
  %1779 = vmatpush1.msra.mxu0 0.0
  %1780 = vmatprep.subr.mxu0 0.0
  %1781 = vmatpush1.msra.mxu0 0.0
  %1782 = vmatprep.subr.mxu0 0.0
  %1783 = vmatpush1.msra.mxu0 0.0
  %1784 = vmatprep.subr.mxu0 0.0
  %1785 = vmatpush1.msra.mxu0 0.0
  %1786 = vmatprep.subr.mxu0 0.0
  %1787 = vmatpush1.msra.mxu0 0.0
  %1788 = vmatprep.subr.mxu0 0.0
  %1789 = vmatpush1.msra.mxu0 0.0
  %1790 = vmatprep.subr.mxu0 0.0
  %1791 = vmatpush1.msra.mxu0 0.0
  %1792 = vmatprep.subr.mxu0 0.0
  %1793 = vmatpush1.msra.mxu0 0.0
  %1794 = vmatprep.mubr.f32.mxu0 0.0
  %1795 = vmatmul.mubr.f32.gmra.mrb[0].mxu0 %v1725
  %v1796 = vpop.f32.mrb[0].mxu0
  %v1797 = vadd.f32 %v1723, %v1796
  %v1798 = vpop.f32.mrb[0].mxu0
  %1799 = vmatprep.mubr.f32.mxu0 0.0
  %1800 = vmatmul.mubr.f32.gmra.mrb[0].mxu0 %v1728
  %v1801 = vpop.f32.mrb[0].mxu0
  %v1802 = vadd.f32 %v1723, %v1801
  %v1803 = vpop.f32.mrb[0].mxu0
  %1804 = vdwg.mxu0
  %v1805 = vld [vmem:[%s2 + $0x2d0] sm:$0xff]
  %v1806 = vld [vmem:[%s2 + $0x2d8] sm:$0xff]
  %v1807 = vld [vmem:[%s2 + $0x2e0] sm:$0xff]
  %v1808 = vld [vmem:[%s2 + $0x2e8] sm:$0xff]
  %1811 = vrot.lane.b32.xlu0 %v1797, 96
  %v1812 = vpop.permute.xlu0 %1811
  %1813 = vrot.lane.b32.xlu0 %v1802, 96
  %v1814 = vpop.permute.xlu0 %1813
  %v1815 = vsel %vm358, %v1797, 0
  %v1817 = vsel %vm358, %v1802, 0
  %v1819 = vsel %vm358, %v1812, 0
  %v1821 = vsel %vm358, %v1814, 0
  %1823 = vmatprep.subr.mxu0 0.0
  %1824 = vmatpush1.xpose.msra.mxu0 %v1819
  %1825 = vmatprep.subr.mxu0 0.0
  %1826 = vmatpush1.xpose.msra.mxu0 %v1821
  %1827 = vmatprep.subr.mxu0 0.0
  %1828 = vmatpush1.xpose.msra.mxu0 0.0
  %1829 = vmatprep.subr.mxu0 0.0
  %1830 = vmatpush1.xpose.msra.mxu0 0.0
  %1831 = vmatprep.subr.mxu0 0.0
  %1832 = vmatpush1.xpose.msra.mxu0 0.0
  %1833 = vmatprep.subr.mxu0 0.0
  %1834 = vmatpush1.xpose.msra.mxu0 0.0
  %1835 = vmatprep.subr.mxu0 0.0
  %1836 = vmatpush1.xpose.msra.mxu0 0.0
  %1837 = vmatprep.subr.mxu0 0.0
  %1838 = vmatpush1.xpose.msra.mxu0 0.0
  %1839 = vmatprep.subr.mxu0 0.0
  %1840 = vmatpush1.xpose.msra.mxu0 0.0
  %1841 = vmatprep.subr.mxu0 0.0
  %1842 = vmatpush1.xpose.msra.mxu0 0.0
  %1843 = vmatprep.subr.mxu0 0.0
  %1844 = vmatpush1.xpose.msra.mxu0 0.0
  %1845 = vmatprep.subr.mxu0 0.0
  %1846 = vmatpush1.xpose.msra.mxu0 0.0
  %1847 = vmatprep.subr.mxu0 0.0
  %1848 = vmatpush1.xpose.msra.mxu0 0.0
  %1849 = vmatprep.subr.mxu0 0.0
  %1850 = vmatpush1.xpose.msra.mxu0 0.0
  %1851 = vmatprep.subr.mxu0 0.0
  %1852 = vmatpush1.xpose.msra.mxu0 0.0
  %1853 = vmatprep.subr.mxu0 0.0
  %1854 = vmatpush1.xpose.msra.mxu0 0.0
  %1855 = vmatprep.subr.mxu0 0.0
  %1856 = vmatpush1.xpose.msra.mxu0 0.0
  %1857 = vmatprep.subr.mxu0 0.0
  %1858 = vmatpush1.xpose.msra.mxu0 0.0
  %1859 = vmatprep.subr.mxu0 0.0
  %1860 = vmatpush1.xpose.msra.mxu0 0.0
  %1861 = vmatprep.subr.mxu0 0.0
  %1862 = vmatpush1.xpose.msra.mxu0 0.0
  %1863 = vmatprep.subr.mxu0 0.0
  %1864 = vmatpush1.xpose.msra.mxu0 0.0
  %1865 = vmatprep.subr.mxu0 0.0
  %1866 = vmatpush1.xpose.msra.mxu0 0.0
  %1867 = vmatprep.subr.mxu0 0.0
  %1868 = vmatpush1.xpose.msra.mxu0 0.0
  %1869 = vmatprep.subr.mxu0 0.0
  %1870 = vmatpush1.xpose.msra.mxu0 0.0
  %1871 = vmatprep.subr.mxu0 0.0
  %1872 = vmatpush1.xpose.msra.mxu0 0.0
  %1873 = vmatprep.subr.mxu0 0.0
  %1874 = vmatpush1.xpose.msra.mxu0 0.0
  %1875 = vmatprep.subr.mxu0 0.0
  %1876 = vmatpush1.xpose.msra.mxu0 0.0
  %1877 = vmatprep.subr.mxu0 0.0
  %1878 = vmatpush1.xpose.msra.mxu0 0.0
  %1879 = vmatprep.subr.mxu0 0.0
  %1880 = vmatpush1.xpose.msra.mxu0 0.0
  %1881 = vmatprep.subr.mxu0 0.0
  %1882 = vmatpush1.xpose.msra.mxu0 0.0
  %1883 = vmatprep.subr.mxu0 0.0
  %1884 = vmatpush1.xpose.msra.mxu0 0.0
  %1885 = vmatprep.subr.mxu0 0.0
  %1886 = vmatpush1.xpose.msra.mxu0 0.0
  %1887 = vmatprep.mubr.f32.mxu0 0.0
  %1888 = vmatmul.mubr.f32.gmra.mrb[0].mxu0 %v1815
  %v1889 = vpop.f32.mrb[0].mxu0
  %v1890 = vadd.f32 0.0, %v1889
  %v1891 = vpop.f32.mrb[0].mxu0
  %1892 = vmatprep.mubr.f32.mxu0 0.0
  %1893 = vmatmul.mubr.f32.gmra.mrb[0].mxu0 %v1817
  %v1894 = vpop.f32.mrb[0].mxu0
  %v1895 = vadd.f32 0.0, %v1894
  %v1896 = vpop.f32.mrb[0].mxu0
  %1897 = vdwg.mxu0
  %v1898 = vmul.f32 %v1890, 0.25
  %v1899 = vmul.f32 %v1895, 0.25
  %v1900 = vadd.f32 %v1898, %v1713
  %v1901 = vadd.f32 %v1899, %v1714
  %vm1902 = vcmask 113664
  %v1903 = vsel %vm1902, %v1900, -inf
  %1904 = vmax.xlane.f32.xlu0 %v1903
  %v1905 = vpop.xlane.xlu0 %1904
  %vm1906 = vcmask 111616
  %v1907 = vsel %vm1906, %v1901, -inf
  %1908 = vmax.xlane.f32.xlu0 %v1907
  %v1909 = vpop.xlane.xlu0 %1908
  %v1910 = vsub.f32 %v1900, %v1905
  %v1911 = vsub.f32 %v1901, %v1909
  %v1912 = vmul.f32 %v1910, 1.442695
  %v1913 = vpow.pop %v1912
  %v1914 = vmul.f32 %v1911, 1.442695
  %v1915 = vpow.pop %v1914
  %v1916 = vsel %vm1902, %v1913, 0.0
  %1917 = vadd.xlane.f32.xlu0 %v1916
  %v1918 = vpop.xlane.xlu0 %1917
  %v1919 = vsel %vm1906, %v1915, 0.0
  %1920 = vadd.xlane.f32.xlu0 %v1919
  %v1921 = vpop.xlane.xlu0 %1920
  %v1922 = vrcp.pop %v1918
  %v1923 = vrcp.pop %v1921
  %v1924 = vmul.f32 %v1913, %v1922
  %v1925 = vmul.f32 %v1915, %v1923
  %1926 = vrot.lane.b32.xlu0 %v1797, 64
  %v1927 = vpop.permute.xlu0 %1926
  %1928 = vrot.lane.b32.xlu0 %v1802, 64
  %v1929 = vpop.permute.xlu0 %1928
  %v1932 = vsel %vm1902, %v1924, 0
  %v1935 = vsel %vm1902, %v1925, 0
  %vm1937 = vcmask 1045504
  %v1938 = vsel %vm1937, %v1929, 0
  %1940 = vmatprep.subr.mxu0 0.0
  %1941 = vmatpush1.msra.mxu0 %v1927
  %1942 = vmatprep.subr.mxu0 0.0
  %1943 = vmatpush1.msra.mxu0 %v1938
  %1944 = vmatprep.subr.mxu0 0.0
  %1945 = vmatpush1.msra.mxu0 0.0
  %1946 = vmatprep.subr.mxu0 0.0
  %1947 = vmatpush1.msra.mxu0 0.0
  %1948 = vmatprep.subr.mxu0 0.0
  %1949 = vmatpush1.msra.mxu0 0.0
  %1950 = vmatprep.subr.mxu0 0.0
  %1951 = vmatpush1.msra.mxu0 0.0
  %1952 = vmatprep.subr.mxu0 0.0
  %1953 = vmatpush1.msra.mxu0 0.0
  %1954 = vmatprep.subr.mxu0 0.0
  %1955 = vmatpush1.msra.mxu0 0.0
  %1956 = vmatprep.subr.mxu0 0.0
  %1957 = vmatpush1.msra.mxu0 0.0
  %1958 = vmatprep.subr.mxu0 0.0
  %1959 = vmatpush1.msra.mxu0 0.0
  %1960 = vmatprep.subr.mxu0 0.0
  %1961 = vmatpush1.msra.mxu0 0.0
  %1962 = vmatprep.subr.mxu0 0.0
  %1963 = vmatpush1.msra.mxu0 0.0
  %1964 = vmatprep.subr.mxu0 0.0
  %1965 = vmatpush1.msra.mxu0 0.0
  %1966 = vmatprep.subr.mxu0 0.0
  %1967 = vmatpush1.msra.mxu0 0.0
  %1968 = vmatprep.subr.mxu0 0.0
  %1969 = vmatpush1.msra.mxu0 0.0
  %1970 = vmatprep.subr.mxu0 0.0
  %1971 = vmatpush1.msra.mxu0 0.0
  %1972 = vmatprep.subr.mxu0 0.0
  %1973 = vmatpush1.msra.mxu0 0.0
  %1974 = vmatprep.subr.mxu0 0.0
  %1975 = vmatpush1.msra.mxu0 0.0
  %1976 = vmatprep.subr.mxu0 0.0
  %1977 = vmatpush1.msra.mxu0 0.0
  %1978 = vmatprep.subr.mxu0 0.0
  %1979 = vmatpush1.msra.mxu0 0.0
  %1980 = vmatprep.subr.mxu0 0.0
  %1981 = vmatpush1.msra.mxu0 0.0
  %1982 = vmatprep.subr.mxu0 0.0
  %1983 = vmatpush1.msra.mxu0 0.0
  %1984 = vmatprep.subr.mxu0 0.0
  %1985 = vmatpush1.msra.mxu0 0.0
  %1986 = vmatprep.subr.mxu0 0.0
  %1987 = vmatpush1.msra.mxu0 0.0
  %1988 = vmatprep.subr.mxu0 0.0
  %1989 = vmatpush1.msra.mxu0 0.0
  %1990 = vmatprep.subr.mxu0 0.0
  %1991 = vmatpush1.msra.mxu0 0.0
  %1992 = vmatprep.subr.mxu0 0.0
  %1993 = vmatpush1.msra.mxu0 0.0
  %1994 = vmatprep.subr.mxu0 0.0
  %1995 = vmatpush1.msra.mxu0 0.0
  %1996 = vmatprep.subr.mxu0 0.0
  %1997 = vmatpush1.msra.mxu0 0.0
  %1998 = vmatprep.subr.mxu0 0.0
  %1999 = vmatpush1.msra.mxu0 0.0
  %2000 = vmatprep.subr.mxu0 0.0
  %2001 = vmatpush1.msra.mxu0 0.0
  %2002 = vmatprep.subr.mxu0 0.0
  %2003 = vmatpush1.msra.mxu0 0.0
  %2004 = vmatprep.mubr.f32.mxu0 0.0
  %2005 = vmatmul.mubr.f32.gmra.mrb[0].mxu0 %v1932
  %v2006 = vpop.f32.mrb[0].mxu0
  %v2007 = vadd.f32 0.0, %v2006
  %v2008 = vpop.f32.mrb[0].mxu0
  %2009 = vmatprep.mubr.f32.mxu0 0.0
  %2010 = vmatmul.mubr.f32.gmra.mrb[0].mxu0 %v1935
  %v2011 = vpop.f32.mrb[0].mxu0
  %v2012 = vadd.f32 0.0, %v2011
  %v2013 = vpop.f32.mrb[0].mxu0
  %2014 = vdwg.mxu0
  %2015 = vrot.lane.b32.xlu0 %v1797, 112
  %v2016 = vpop.permute.xlu0 %2015
  %2017 = vrot.lane.b32.xlu0 %v1802, 112
  %v2018 = vpop.permute.xlu0 %2017
  %2019 = vrot.lane.b32.xlu0 %v1797, 80
  %v2020 = vpop.permute.xlu0 %2019
  %2021 = vrot.lane.b32.xlu0 %v1802, 80
  %v2022 = vpop.permute.xlu0 %2021
  %v2023 = vsel %vm358, %v2016, 0
  %v2025 = vsel %vm358, %v2018, 0
  %v2027 = vsel %vm358, %v2020, 0
  %v2029 = vsel %vm358, %v2022, 0
  %2031 = vmatprep.subr.mxu0 0.0
  %2032 = vmatpush1.xpose.msra.mxu0 %v2027
  %2033 = vmatprep.subr.mxu0 0.0
  %2034 = vmatpush1.xpose.msra.mxu0 %v2029
  %2035 = vmatprep.subr.mxu0 0.0
  %2036 = vmatpush1.xpose.msra.mxu0 0.0
  %2037 = vmatprep.subr.mxu0 0.0
  %2038 = vmatpush1.xpose.msra.mxu0 0.0
  %2039 = vmatprep.subr.mxu0 0.0
  %2040 = vmatpush1.xpose.msra.mxu0 0.0
  %2041 = vmatprep.subr.mxu0 0.0
  %2042 = vmatpush1.xpose.msra.mxu0 0.0
  %2043 = vmatprep.subr.mxu0 0.0
  %2044 = vmatpush1.xpose.msra.mxu0 0.0
  %2045 = vmatprep.subr.mxu0 0.0
  %2046 = vmatpush1.xpose.msra.mxu0 0.0
  %2047 = vmatprep.subr.mxu0 0.0
  %2048 = vmatpush1.xpose.msra.mxu0 0.0
  %2049 = vmatprep.subr.mxu0 0.0
  %2050 = vmatpush1.xpose.msra.mxu0 0.0
  %2051 = vmatprep.subr.mxu0 0.0
  %2052 = vmatpush1.xpose.msra.mxu0 0.0
  %2053 = vmatprep.subr.mxu0 0.0
  %2054 = vmatpush1.xpose.msra.mxu0 0.0
  %2055 = vmatprep.subr.mxu0 0.0
  %2056 = vmatpush1.xpose.msra.mxu0 0.0
  %2057 = vmatprep.subr.mxu0 0.0
  %2058 = vmatpush1.xpose.msra.mxu0 0.0
  %2059 = vmatprep.subr.mxu0 0.0
  %2060 = vmatpush1.xpose.msra.mxu0 0.0
  %2061 = vmatprep.subr.mxu0 0.0
  %2062 = vmatpush1.xpose.msra.mxu0 0.0
  %2063 = vmatprep.subr.mxu0 0.0
  %2064 = vmatpush1.xpose.msra.mxu0 0.0
  %2065 = vmatprep.subr.mxu0 0.0
  %2066 = vmatpush1.xpose.msra.mxu0 0.0
  %2067 = vmatprep.subr.mxu0 0.0
  %2068 = vmatpush1.xpose.msra.mxu0 0.0
  %2069 = vmatprep.subr.mxu0 0.0
  %2070 = vmatpush1.xpose.msra.mxu0 0.0
  %2071 = vmatprep.subr.mxu0 0.0
  %2072 = vmatpush1.xpose.msra.mxu0 0.0
  %2073 = vmatprep.subr.mxu0 0.0
  %2074 = vmatpush1.xpose.msra.mxu0 0.0
  %2075 = vmatprep.subr.mxu0 0.0
  %2076 = vmatpush1.xpose.msra.mxu0 0.0
  %2077 = vmatprep.subr.mxu0 0.0
  %2078 = vmatpush1.xpose.msra.mxu0 0.0
  %2079 = vmatprep.subr.mxu0 0.0
  %2080 = vmatpush1.xpose.msra.mxu0 0.0
  %2081 = vmatprep.subr.mxu0 0.0
  %2082 = vmatpush1.xpose.msra.mxu0 0.0
  %2083 = vmatprep.subr.mxu0 0.0
  %2084 = vmatpush1.xpose.msra.mxu0 0.0
  %2085 = vmatprep.subr.mxu0 0.0
  %2086 = vmatpush1.xpose.msra.mxu0 0.0
  %2087 = vmatprep.subr.mxu0 0.0
  %2088 = vmatpush1.xpose.msra.mxu0 0.0
  %2089 = vmatprep.subr.mxu0 0.0
  %2090 = vmatpush1.xpose.msra.mxu0 0.0
  %2091 = vmatprep.subr.mxu0 0.0
  %2092 = vmatpush1.xpose.msra.mxu0 0.0
  %2093 = vmatprep.subr.mxu0 0.0
  %2094 = vmatpush1.xpose.msra.mxu0 0.0
  %2095 = vmatprep.mubr.f32.mxu0 0.0
  %2096 = vmatmul.mubr.f32.gmra.mrb[0].mxu0 %v2023
  %v2097 = vpop.f32.mrb[0].mxu0
  %v2098 = vadd.f32 0.0, %v2097
  %v2099 = vpop.f32.mrb[0].mxu0
  %2100 = vmatprep.mubr.f32.mxu0 0.0
  %2101 = vmatmul.mubr.f32.gmra.mrb[0].mxu0 %v2025
  %v2102 = vpop.f32.mrb[0].mxu0
  %v2103 = vadd.f32 0.0, %v2102
  %v2104 = vpop.f32.mrb[0].mxu0
  %2105 = vdwg.mxu0
  %v2106 = vmul.f32 %v2098, 0.25
  %v2107 = vmul.f32 %v2103, 0.25
  %v2108 = vadd.f32 %v2106, %v1713
  %v2109 = vadd.f32 %v2107, %v1714
  %v2110 = vsel %vm1902, %v2108, -inf
  %2111 = vmax.xlane.f32.xlu0 %v2110
  %v2112 = vpop.xlane.xlu0 %2111
  %v2113 = vsel %vm1906, %v2109, -inf
  %2114 = vmax.xlane.f32.xlu0 %v2113
  %v2115 = vpop.xlane.xlu0 %2114
  %v2116 = vsub.f32 %v2108, %v2112
  %v2117 = vsub.f32 %v2109, %v2115
  %v2118 = vmul.f32 %v2116, 1.442695
  %v2119 = vpow.pop %v2118
  %v2120 = vmul.f32 %v2117, 1.442695
  %v2121 = vpow.pop %v2120
  %v2122 = vsel %vm1902, %v2119, 0.0
  %2123 = vadd.xlane.f32.xlu0 %v2122
  %v2124 = vpop.xlane.xlu0 %2123
  %v2125 = vsel %vm1906, %v2121, 0.0
  %2126 = vadd.xlane.f32.xlu0 %v2125
  %v2127 = vpop.xlane.xlu0 %2126
  %v2128 = vrcp.pop %v2124
  %v2129 = vrcp.pop %v2127
  %v2130 = vmul.f32 %v2119, %v2128
  %v2131 = vmul.f32 %v2121, %v2129
  %2132 = vrot.lane.b32.xlu0 %v1797, 48
  %v2133 = vpop.permute.xlu0 %2132
  %2134 = vrot.lane.b32.xlu0 %v1802, 48
  %v2135 = vpop.permute.xlu0 %2134
  %v2138 = vsel %vm1902, %v2130, 0
  %v2141 = vsel %vm1902, %v2131, 0
  %v2143 = vsel %vm1937, %v2135, 0
  %2145 = vmatprep.subr.mxu0 0.0
  %2146 = vmatpush1.msra.mxu0 %v2133
  %2147 = vmatprep.subr.mxu0 0.0
  %2148 = vmatpush1.msra.mxu0 %v2143
  %2149 = vmatprep.subr.mxu0 0.0
  %2150 = vmatpush1.msra.mxu0 0.0
  %2151 = vmatprep.subr.mxu0 0.0
  %2152 = vmatpush1.msra.mxu0 0.0
  %2153 = vmatprep.subr.mxu0 0.0
  %2154 = vmatpush1.msra.mxu0 0.0
  %2155 = vmatprep.subr.mxu0 0.0
  %2156 = vmatpush1.msra.mxu0 0.0
  %2157 = vmatprep.subr.mxu0 0.0
  %2158 = vmatpush1.msra.mxu0 0.0
  %2159 = vmatprep.subr.mxu0 0.0
  %2160 = vmatpush1.msra.mxu0 0.0
  %2161 = vmatprep.subr.mxu0 0.0
  %2162 = vmatpush1.msra.mxu0 0.0
  %2163 = vmatprep.subr.mxu0 0.0
  %2164 = vmatpush1.msra.mxu0 0.0
  %2165 = vmatprep.subr.mxu0 0.0
  %2166 = vmatpush1.msra.mxu0 0.0
  %2167 = vmatprep.subr.mxu0 0.0
  %2168 = vmatpush1.msra.mxu0 0.0
  %2169 = vmatprep.subr.mxu0 0.0
  %2170 = vmatpush1.msra.mxu0 0.0
  %2171 = vmatprep.subr.mxu0 0.0
  %2172 = vmatpush1.msra.mxu0 0.0
  %2173 = vmatprep.subr.mxu0 0.0
  %2174 = vmatpush1.msra.mxu0 0.0
  %2175 = vmatprep.subr.mxu0 0.0
  %2176 = vmatpush1.msra.mxu0 0.0
  %2177 = vmatprep.subr.mxu0 0.0
  %2178 = vmatpush1.msra.mxu0 0.0
  %2179 = vmatprep.subr.mxu0 0.0
  %2180 = vmatpush1.msra.mxu0 0.0
  %2181 = vmatprep.subr.mxu0 0.0
  %2182 = vmatpush1.msra.mxu0 0.0
  %2183 = vmatprep.subr.mxu0 0.0
  %2184 = vmatpush1.msra.mxu0 0.0
  %2185 = vmatprep.subr.mxu0 0.0
  %2186 = vmatpush1.msra.mxu0 0.0
  %2187 = vmatprep.subr.mxu0 0.0
  %2188 = vmatpush1.msra.mxu0 0.0
  %2189 = vmatprep.subr.mxu0 0.0
  %2190 = vmatpush1.msra.mxu0 0.0
  %2191 = vmatprep.subr.mxu0 0.0
  %2192 = vmatpush1.msra.mxu0 0.0
  %2193 = vmatprep.subr.mxu0 0.0
  %2194 = vmatpush1.msra.mxu0 0.0
  %2195 = vmatprep.subr.mxu0 0.0
  %2196 = vmatpush1.msra.mxu0 0.0
  %2197 = vmatprep.subr.mxu0 0.0
  %2198 = vmatpush1.msra.mxu0 0.0
  %2199 = vmatprep.subr.mxu0 0.0
  %2200 = vmatpush1.msra.mxu0 0.0
  %2201 = vmatprep.subr.mxu0 0.0
  %2202 = vmatpush1.msra.mxu0 0.0
  %2203 = vmatprep.subr.mxu0 0.0
  %2204 = vmatpush1.msra.mxu0 0.0
  %2205 = vmatprep.subr.mxu0 0.0
  %2206 = vmatpush1.msra.mxu0 0.0
  %2207 = vmatprep.subr.mxu0 0.0
  %2208 = vmatpush1.msra.mxu0 0.0
  %2209 = vmatprep.mubr.f32.mxu0 0.0
  %2210 = vmatmul.mubr.f32.gmra.mrb[0].mxu0 %v2138
  %v2211 = vpop.f32.mrb[0].mxu0
  %v2212 = vadd.f32 0.0, %v2211
  %v2213 = vpop.f32.mrb[0].mxu0
  %2214 = vmatprep.mubr.f32.mxu0 0.0
  %2215 = vmatmul.mubr.f32.gmra.mrb[0].mxu0 %v2141
  %v2216 = vpop.f32.mrb[0].mxu0
  %v2217 = vadd.f32 0.0, %v2216
  %v2218 = vpop.f32.mrb[0].mxu0
  %2219 = vdwg.mxu0
  %v2221 = vsel %vm358, %v2212, 0
  %v2224 = vsel %vm358, %v2217, 0
  %2226 = vmatprep.subr.mxu0 0.0
  %2227 = vmatpush1.msra.mxu0 %v1807
  %2228 = vmatprep.subr.mxu0 0.0
  %2229 = vmatpush1.msra.mxu0 %v1808
  %2230 = vmatprep.subr.mxu0 0.0
  %2231 = vmatpush1.msra.mxu0 0.0
  %2232 = vmatprep.subr.mxu0 0.0
  %2233 = vmatpush1.msra.mxu0 0.0
  %2234 = vmatprep.subr.mxu0 0.0
  %2235 = vmatpush1.msra.mxu0 0.0
  %2236 = vmatprep.subr.mxu0 0.0
  %2237 = vmatpush1.msra.mxu0 0.0
  %2238 = vmatprep.subr.mxu0 0.0
  %2239 = vmatpush1.msra.mxu0 0.0
  %2240 = vmatprep.subr.mxu0 0.0
  %2241 = vmatpush1.msra.mxu0 0.0
  %2242 = vmatprep.subr.mxu0 0.0
  %2243 = vmatpush1.msra.mxu0 0.0
  %2244 = vmatprep.subr.mxu0 0.0
  %2245 = vmatpush1.msra.mxu0 0.0
  %2246 = vmatprep.subr.mxu0 0.0
  %2247 = vmatpush1.msra.mxu0 0.0
  %2248 = vmatprep.subr.mxu0 0.0
  %2249 = vmatpush1.msra.mxu0 0.0
  %2250 = vmatprep.subr.mxu0 0.0
  %2251 = vmatpush1.msra.mxu0 0.0
  %2252 = vmatprep.subr.mxu0 0.0
  %2253 = vmatpush1.msra.mxu0 0.0
  %2254 = vmatprep.subr.mxu0 0.0
  %2255 = vmatpush1.msra.mxu0 0.0
  %2256 = vmatprep.subr.mxu0 0.0
  %2257 = vmatpush1.msra.mxu0 0.0
  %2258 = vmatprep.subr.mxu0 0.0
  %2259 = vmatpush1.msra.mxu0 0.0
  %2260 = vmatprep.subr.mxu0 0.0
  %2261 = vmatpush1.msra.mxu0 0.0
  %2262 = vmatprep.subr.mxu0 0.0
  %2263 = vmatpush1.msra.mxu0 0.0
  %2264 = vmatprep.subr.mxu0 0.0
  %2265 = vmatpush1.msra.mxu0 0.0
  %2266 = vmatprep.subr.mxu0 0.0
  %2267 = vmatpush1.msra.mxu0 0.0
  %2268 = vmatprep.subr.mxu0 0.0
  %2269 = vmatpush1.msra.mxu0 0.0
  %2270 = vmatprep.subr.mxu0 0.0
  %2271 = vmatpush1.msra.mxu0 0.0
  %2272 = vmatprep.subr.mxu0 0.0
  %2273 = vmatpush1.msra.mxu0 0.0
  %2274 = vmatprep.subr.mxu0 0.0
  %2275 = vmatpush1.msra.mxu0 0.0
  %2276 = vmatprep.subr.mxu0 0.0
  %2277 = vmatpush1.msra.mxu0 0.0
  %2278 = vmatprep.subr.mxu0 0.0
  %2279 = vmatpush1.msra.mxu0 0.0
  %2280 = vmatprep.subr.mxu0 0.0
  %2281 = vmatpush1.msra.mxu0 0.0
  %2282 = vmatprep.subr.mxu0 0.0
  %2283 = vmatpush1.msra.mxu0 0.0
  %2284 = vmatprep.subr.mxu0 0.0
  %2285 = vmatpush1.msra.mxu0 0.0
  %2286 = vmatprep.subr.mxu0 0.0
  %2287 = vmatpush1.msra.mxu0 0.0
  %2288 = vmatprep.subr.mxu0 0.0
  %2289 = vmatpush1.msra.mxu0 0.0
  %2290 = vmatprep.mubr.f32.mxu0 0.0
  %2291 = vmatmul.mubr.f32.gmra.mrb[0].mxu0 %v2221
  %v2292 = vpop.f32.mrb[0].mxu0
  %v2293 = vadd.f32 0.0, %v2292
  %v2294 = vpop.f32.mrb[0].mxu0
  %2295 = vmatprep.mubr.f32.mxu0 0.0
  %2296 = vmatmul.mubr.f32.gmra.mrb[0].mxu0 %v2224
  %v2297 = vpop.f32.mrb[0].mxu0
  %v2298 = vadd.f32 0.0, %v2297
  %v2299 = vpop.f32.mrb[0].mxu0
  %2300 = vdwg.mxu0
  %v2302 = vsel %vm358, %v2007, 0
  %v2305 = vsel %vm358, %v2012, 0
  %2307 = vmatprep.subr.mxu0 0.0
  %2308 = vmatpush1.msra.mxu0 %v1805
  %2309 = vmatprep.subr.mxu0 0.0
  %2310 = vmatpush1.msra.mxu0 %v1806
  %2311 = vmatprep.subr.mxu0 0.0
  %2312 = vmatpush1.msra.mxu0 0.0
  %2313 = vmatprep.subr.mxu0 0.0
  %2314 = vmatpush1.msra.mxu0 0.0
  %2315 = vmatprep.subr.mxu0 0.0
  %2316 = vmatpush1.msra.mxu0 0.0
  %2317 = vmatprep.subr.mxu0 0.0
  %2318 = vmatpush1.msra.mxu0 0.0
  %2319 = vmatprep.subr.mxu0 0.0
  %2320 = vmatpush1.msra.mxu0 0.0
  %2321 = vmatprep.subr.mxu0 0.0
  %2322 = vmatpush1.msra.mxu0 0.0
  %2323 = vmatprep.subr.mxu0 0.0
  %2324 = vmatpush1.msra.mxu0 0.0
  %2325 = vmatprep.subr.mxu0 0.0
  %2326 = vmatpush1.msra.mxu0 0.0
  %2327 = vmatprep.subr.mxu0 0.0
  %2328 = vmatpush1.msra.mxu0 0.0
  %2329 = vmatprep.subr.mxu0 0.0
  %2330 = vmatpush1.msra.mxu0 0.0
  %2331 = vmatprep.subr.mxu0 0.0
  %2332 = vmatpush1.msra.mxu0 0.0
  %2333 = vmatprep.subr.mxu0 0.0
  %2334 = vmatpush1.msra.mxu0 0.0
  %2335 = vmatprep.subr.mxu0 0.0
  %2336 = vmatpush1.msra.mxu0 0.0
  %2337 = vmatprep.subr.mxu0 0.0
  %2338 = vmatpush1.msra.mxu0 0.0
  %2339 = vmatprep.subr.mxu0 0.0
  %2340 = vmatpush1.msra.mxu0 0.0
  %2341 = vmatprep.subr.mxu0 0.0
  %2342 = vmatpush1.msra.mxu0 0.0
  %2343 = vmatprep.subr.mxu0 0.0
  %2344 = vmatpush1.msra.mxu0 0.0
  %2345 = vmatprep.subr.mxu0 0.0
  %2346 = vmatpush1.msra.mxu0 0.0
  %2347 = vmatprep.subr.mxu0 0.0
  %2348 = vmatpush1.msra.mxu0 0.0
  %2349 = vmatprep.subr.mxu0 0.0
  %2350 = vmatpush1.msra.mxu0 0.0
  %2351 = vmatprep.subr.mxu0 0.0
  %2352 = vmatpush1.msra.mxu0 0.0
  %2353 = vmatprep.subr.mxu0 0.0
  %2354 = vmatpush1.msra.mxu0 0.0
  %2355 = vmatprep.subr.mxu0 0.0
  %2356 = vmatpush1.msra.mxu0 0.0
  %2357 = vmatprep.subr.mxu0 0.0
  %2358 = vmatpush1.msra.mxu0 0.0
  %2359 = vmatprep.subr.mxu0 0.0
  %2360 = vmatpush1.msra.mxu0 0.0
  %2361 = vmatprep.subr.mxu0 0.0
  %2362 = vmatpush1.msra.mxu0 0.0
  %2363 = vmatprep.subr.mxu0 0.0
  %2364 = vmatpush1.msra.mxu0 0.0
  %2365 = vmatprep.subr.mxu0 0.0
  %2366 = vmatpush1.msra.mxu0 0.0
  %2367 = vmatprep.subr.mxu0 0.0
  %2368 = vmatpush1.msra.mxu0 0.0
  %2369 = vmatprep.subr.mxu0 0.0
  %2370 = vmatpush1.msra.mxu0 0.0
  %2371 = vmatprep.mubr.f32.mxu0 0.0
  %2372 = vmatmul.mubr.f32.gmra.mrb[0].mxu0 %v2302
  %v2373 = vpop.f32.mrb[0].mxu0
  %v2374 = vadd.f32 %v2293, %v2373
  %v2375 = vpop.f32.mrb[0].mxu0
  %2376 = vmatprep.mubr.f32.mxu0 0.0
  %2377 = vmatmul.mubr.f32.gmra.mrb[0].mxu0 %v2305
  %v2378 = vpop.f32.mrb[0].mxu0
  %v2379 = vadd.f32 %v2298, %v2378
  %v2380 = vpop.f32.mrb[0].mxu0
  %2381 = vdwg.mxu0
  %v2382 = vld [vmem:[%s2 + $0x2f0] sm:$0x1]
  %v2383 = vlaneseq
  %v2384 = vshrl.u32 %v2383, 7
  %v2385 = vsub.s32 0, %v2384
  %v2386 = vrot.slane %v2382, %v2385
  %v2387 = vadd.f32 %v2374, %v2386
  %v2388 = vadd.f32 %v2379, %v2386
  %v2389 = vld [vmem:[%s2 + $0x3b8] sm:$0x1]
  %v2390 = vld [vmem:[%s2 + $0x3c0] sm:$0x1]
  %v2391 = vsel %vm162, %v2387, 0.0
  %2392 = vadd.xlane.f32.xlu0 %v2391
  %v2393 = vpop.xlane.xlu0 %2392
  %vm2394 = vcmask 259072
  %v2395 = vsel %vm2394, %v2388, 0.0
  %2396 = vadd.xlane.f32.xlu0 %v2395
  %v2397 = vpop.xlane.xlu0 %2396
  %v2398 = vmul.f32 %v2393, %v175
  %v2399 = vmul.f32 %v2397, %v175
  %v2400 = vsub.f32 %v2387, %v2398
  %v2401 = vsub.f32 %v2388, %v2399
  %v2402 = vmul.f32 %v2400, %v2400
  %v2403 = vmul.f32 %v2401, %v2401
  %v2404 = vsel %vm162, %v2402, 0.0
  %2405 = vadd.xlane.f32.xlu0 %v2404
  %v2406 = vpop.xlane.xlu0 %2405
  %v2407 = vsel %vm2394, %v2403, 0.0
  %2408 = vadd.xlane.f32.xlu0 %v2407
  %v2409 = vpop.xlane.xlu0 %2408
  %v2410 = vmul.f32 %v2406, %v175
  %v2411 = vmul.f32 %v2409, %v175
  %v2412 = vadd.f32 %v2410, 1e-05
  %v2413 = vadd.f32 %v2411, 1e-05
  %v2414 = vrsqrt.pop %v2412
  %v2415 = vrsqrt.pop %v2413
  %v2416 = vmul.f32 %v2400, %v2414
  %v2417 = vmul.f32 %v2401, %v2415
  %v2418 = vlaneseq
  %v2419 = vshrl.u32 %v2418, 7
  %v2420 = vsub.s32 0, %v2419
  %v2421 = vrot.slane %v2389, %v2420
  %v2422 = vmul.f32 %v2416, %v2421
  %v2423 = vmul.f32 %v2417, %v2421
  %v2424 = vlaneseq
  %v2425 = vshrl.u32 %v2424, 7
  %v2426 = vsub.s32 0, %v2425
  %v2427 = vrot.slane %v2390, %v2426
  %v2428 = vadd.f32 %v2422, %v2427
  %v2429 = vadd.f32 %v2423, %v2427
  %v2430 = vadd.f32 %v2428, %v1711
  %v2431 = vadd.f32 %v2429, %v1712
  %v2432 = vadd.f32 %v1613, %v1617
  %v2433 = vadd.f32 %v1614, %v1618
  %v2434 = vadd.f32 %v1615, %v1619
  %v2435 = vadd.f32 %v1616, %v1620
  %v2436 = vld [vmem:[%s2 + $0x278] sm:$0xff]
  %v2437 = vld [vmem:[%s2 + $0x280] sm:$0x3f]
  %v2438 = vld [vmem:[%s2 + $0x2f8] sm:$0xff]
  %v2439 = vld [vmem:[%s2 + $0x300] sm:$0xff]
  %v2440 = vld [vmem:[%s2 + $0x308] sm:$0xff]
  %v2441 = vld [vmem:[%s2 + $0x310] sm:$0xff]
  %v2442 = vld [vmem:[%s2 + $0x318] sm:$0x1]
  %v2443 = vlaneseq
  %v2444 = vshrl.u32 %v2443, 7
  %v2445 = vsub.s32 0, %v2444
  %v2446 = vrot.slane %v2442, %v2445
  %v2448 = vsel %vm162, %v2430, 0
  %v2451 = vsel %vm162, %v2431, 0
  %2453 = vmatprep.subr.mxu0 0.0
  %2454 = vmatpush1.msra.mxu0 %v2438
  %2455 = vmatprep.subr.mxu0 0.0
  %2456 = vmatpush1.msra.mxu0 %v2439
  %2457 = vmatprep.subr.mxu0 0.0
  %2458 = vmatpush1.msra.mxu0 %v2440
  %2459 = vmatprep.subr.mxu0 0.0
  %2460 = vmatpush1.msra.mxu0 %v2441
  %2461 = vmatprep.subr.mxu0 0.0
  %2462 = vmatpush1.msra.mxu0 0.0
  %2463 = vmatprep.subr.mxu0 0.0
  %2464 = vmatpush1.msra.mxu0 0.0
  %2465 = vmatprep.subr.mxu0 0.0
  %2466 = vmatpush1.msra.mxu0 0.0
  %2467 = vmatprep.subr.mxu0 0.0
  %2468 = vmatpush1.msra.mxu0 0.0
  %2469 = vmatprep.subr.mxu0 0.0
  %2470 = vmatpush1.msra.mxu0 0.0
  %2471 = vmatprep.subr.mxu0 0.0
  %2472 = vmatpush1.msra.mxu0 0.0
  %2473 = vmatprep.subr.mxu0 0.0
  %2474 = vmatpush1.msra.mxu0 0.0
  %2475 = vmatprep.subr.mxu0 0.0
  %2476 = vmatpush1.msra.mxu0 0.0
  %2477 = vmatprep.subr.mxu0 0.0
  %2478 = vmatpush1.msra.mxu0 0.0
  %2479 = vmatprep.subr.mxu0 0.0
  %2480 = vmatpush1.msra.mxu0 0.0
  %2481 = vmatprep.subr.mxu0 0.0
  %2482 = vmatpush1.msra.mxu0 0.0
  %2483 = vmatprep.subr.mxu0 0.0
  %2484 = vmatpush1.msra.mxu0 0.0
  %2485 = vmatprep.subr.mxu0 0.0
  %2486 = vmatpush1.msra.mxu0 0.0
  %2487 = vmatprep.subr.mxu0 0.0
  %2488 = vmatpush1.msra.mxu0 0.0
  %2489 = vmatprep.subr.mxu0 0.0
  %2490 = vmatpush1.msra.mxu0 0.0
  %2491 = vmatprep.subr.mxu0 0.0
  %2492 = vmatpush1.msra.mxu0 0.0
  %2493 = vmatprep.subr.mxu0 0.0
  %2494 = vmatpush1.msra.mxu0 0.0
  %2495 = vmatprep.subr.mxu0 0.0
  %2496 = vmatpush1.msra.mxu0 0.0
  %2497 = vmatprep.subr.mxu0 0.0
  %2498 = vmatpush1.msra.mxu0 0.0
  %2499 = vmatprep.subr.mxu0 0.0
  %2500 = vmatpush1.msra.mxu0 0.0
  %2501 = vmatprep.subr.mxu0 0.0
  %2502 = vmatpush1.msra.mxu0 0.0
  %2503 = vmatprep.subr.mxu0 0.0
  %2504 = vmatpush1.msra.mxu0 0.0
  %2505 = vmatprep.subr.mxu0 0.0
  %2506 = vmatpush1.msra.mxu0 0.0
  %2507 = vmatprep.subr.mxu0 0.0
  %2508 = vmatpush1.msra.mxu0 0.0
  %2509 = vmatprep.subr.mxu0 0.0
  %2510 = vmatpush1.msra.mxu0 0.0
  %2511 = vmatprep.subr.mxu0 0.0
  %2512 = vmatpush1.msra.mxu0 0.0
  %2513 = vmatprep.subr.mxu0 0.0
  %2514 = vmatpush1.msra.mxu0 0.0
  %2515 = vmatprep.subr.mxu0 0.0
  %2516 = vmatpush1.msra.mxu0 0.0
  %2517 = vmatprep.mubr.f32.mxu0 0.0
  %2518 = vmatmul.mubr.f32.gmra.mrb[0].mxu0 %v2448
  %v2519 = vpop.f32.mrb[0].mxu0
  %v2520 = vadd.f32 %v2446, %v2519
  %v2521 = vpop.f32.mrb[0].mxu0
  %2522 = vmatprep.mubr.f32.mxu0 0.0
  %2523 = vmatmul.mubr.f32.gmra.mrb[0].mxu0 %v2451
  %v2524 = vpop.f32.mrb[0].mxu0
  %v2525 = vadd.f32 %v2446, %v2524
  %v2526 = vpop.f32.mrb[0].mxu0
  %2527 = vdwg.mxu0
  %2532 = vrot.lane.b32.xlu0 %v2438, 112
  %v2533 = vpop.permute.xlu0 %2532
  %2534 = vrot.lane.b32.xlu0 %v2439, 112
  %v2535 = vpop.permute.xlu0 %2534
  %2536 = vrot.lane.b32.xlu0 %v2440, 112
  %v2537 = vpop.permute.xlu0 %2536
  %2538 = vrot.lane.b32.xlu0 %v2441, 112
  %v2539 = vpop.permute.xlu0 %2538
  %2545 = vrot.lane.b32.xlu0 %v2446, 112
  %v2546 = vpop.permute.xlu0 %2545
  %v2549 = vsel %vm162, %v2432, 0
  %v2552 = vsel %vm162, %v2433, 0
  %v2555 = vsel %vm162, %v2434, 0
  %v2558 = vsel %vm162, %v2435, 0
  %2560 = vmatprep.subr.mxu0 0.0
  %2561 = vmatpush1.msra.mxu0 %v2533
  %2562 = vmatprep.subr.mxu0 0.0
  %2563 = vmatpush1.msra.mxu0 %v2535
  %2564 = vmatprep.subr.mxu0 0.0
  %2565 = vmatpush1.msra.mxu0 %v2537
  %2566 = vmatprep.subr.mxu0 0.0
  %2567 = vmatpush1.msra.mxu0 %v2539
  %2568 = vmatprep.subr.mxu0 0.0
  %2569 = vmatpush1.msra.mxu0 0.0
  %2570 = vmatprep.subr.mxu0 0.0
  %2571 = vmatpush1.msra.mxu0 0.0
  %2572 = vmatprep.subr.mxu0 0.0
  %2573 = vmatpush1.msra.mxu0 0.0
  %2574 = vmatprep.subr.mxu0 0.0
  %2575 = vmatpush1.msra.mxu0 0.0
  %2576 = vmatprep.subr.mxu0 0.0
  %2577 = vmatpush1.msra.mxu0 0.0
  %2578 = vmatprep.subr.mxu0 0.0
  %2579 = vmatpush1.msra.mxu0 0.0
  %2580 = vmatprep.subr.mxu0 0.0
  %2581 = vmatpush1.msra.mxu0 0.0
  %2582 = vmatprep.subr.mxu0 0.0
  %2583 = vmatpush1.msra.mxu0 0.0
  %2584 = vmatprep.subr.mxu0 0.0
  %2585 = vmatpush1.msra.mxu0 0.0
  %2586 = vmatprep.subr.mxu0 0.0
  %2587 = vmatpush1.msra.mxu0 0.0
  %2588 = vmatprep.subr.mxu0 0.0
  %2589 = vmatpush1.msra.mxu0 0.0
  %2590 = vmatprep.subr.mxu0 0.0
  %2591 = vmatpush1.msra.mxu0 0.0
  %2592 = vmatprep.subr.mxu0 0.0
  %2593 = vmatpush1.msra.mxu0 0.0
  %2594 = vmatprep.subr.mxu0 0.0
  %2595 = vmatpush1.msra.mxu0 0.0
  %2596 = vmatprep.subr.mxu0 0.0
  %2597 = vmatpush1.msra.mxu0 0.0
  %2598 = vmatprep.subr.mxu0 0.0
  %2599 = vmatpush1.msra.mxu0 0.0
  %2600 = vmatprep.subr.mxu0 0.0
  %2601 = vmatpush1.msra.mxu0 0.0
  %2602 = vmatprep.subr.mxu0 0.0
  %2603 = vmatpush1.msra.mxu0 0.0
  %2604 = vmatprep.subr.mxu0 0.0
  %2605 = vmatpush1.msra.mxu0 0.0
  %2606 = vmatprep.subr.mxu0 0.0
  %2607 = vmatpush1.msra.mxu0 0.0
  %2608 = vmatprep.subr.mxu0 0.0
  %2609 = vmatpush1.msra.mxu0 0.0
  %2610 = vmatprep.subr.mxu0 0.0
  %2611 = vmatpush1.msra.mxu0 0.0
  %2612 = vmatprep.subr.mxu0 0.0
  %2613 = vmatpush1.msra.mxu0 0.0
  %2614 = vmatprep.subr.mxu0 0.0
  %2615 = vmatpush1.msra.mxu0 0.0
  %2616 = vmatprep.subr.mxu0 0.0
  %2617 = vmatpush1.msra.mxu0 0.0
  %2618 = vmatprep.subr.mxu0 0.0
  %2619 = vmatpush1.msra.mxu0 0.0
  %2620 = vmatprep.subr.mxu0 0.0
  %2621 = vmatpush1.msra.mxu0 0.0
  %2622 = vmatprep.subr.mxu0 0.0
  %2623 = vmatpush1.msra.mxu0 0.0
  %2624 = vmatprep.mubr.f32.mxu0 0.0
  %2625 = vmatmul.mubr.f32.gmra.mrb[0].mxu0 %v2549
  %v2626 = vpop.f32.mrb[0].mxu0
  %v2627 = vadd.f32 %v2546, %v2626
  %v2628 = vpop.f32.mrb[0].mxu0
  %2629 = vmatprep.mubr.f32.mxu0 0.0
  %2630 = vmatmul.mubr.f32.gmra.mrb[0].mxu0 %v2552
  %v2631 = vpop.f32.mrb[0].mxu0
  %v2632 = vadd.f32 %v2546, %v2631
  %v2633 = vpop.f32.mrb[0].mxu0
  %2634 = vmatprep.mubr.f32.mxu0 0.0
  %2635 = vmatmul.mubr.f32.gmra.mrb[0].mxu0 %v2555
  %v2636 = vpop.f32.mrb[0].mxu0
  %v2637 = vadd.f32 %v2546, %v2636
  %v2638 = vpop.f32.mrb[0].mxu0
  %2639 = vmatprep.mubr.f32.mxu0 0.0
  %2640 = vmatmul.mubr.f32.gmra.mrb[0].mxu0 %v2558
  %v2641 = vpop.f32.mrb[0].mxu0
  %v2642 = vadd.f32 %v2546, %v2641
  %v2643 = vpop.f32.mrb[0].mxu0
  %2644 = vdwg.mxu0
  %2645 = vrot.lane.b32.xlu0 %v2438, 96
  %v2646 = vpop.permute.xlu0 %2645
  %2647 = vrot.lane.b32.xlu0 %v2439, 96
  %v2648 = vpop.permute.xlu0 %2647
  %2649 = vrot.lane.b32.xlu0 %v2440, 96
  %v2650 = vpop.permute.xlu0 %2649
  %2651 = vrot.lane.b32.xlu0 %v2441, 96
  %v2652 = vpop.permute.xlu0 %2651
  %2657 = vrot.lane.b32.xlu0 %v2446, 96
  %v2658 = vpop.permute.xlu0 %2657
  %v2661 = vsel %vm162, %v1613, 0
  %v2664 = vsel %vm162, %v1614, 0
  %v2667 = vsel %vm162, %v1615, 0
  %v2670 = vsel %vm162, %v1616, 0
  %2672 = vmatprep.subr.mxu0 0.0
  %2673 = vmatpush1.msra.mxu0 %v2646
  %2674 = vmatprep.subr.mxu0 0.0
  %2675 = vmatpush1.msra.mxu0 %v2648
  %2676 = vmatprep.subr.mxu0 0.0
  %2677 = vmatpush1.msra.mxu0 %v2650
  %2678 = vmatprep.subr.mxu0 0.0
  %2679 = vmatpush1.msra.mxu0 %v2652
  %2680 = vmatprep.subr.mxu0 0.0
  %2681 = vmatpush1.msra.mxu0 0.0
  %2682 = vmatprep.subr.mxu0 0.0
  %2683 = vmatpush1.msra.mxu0 0.0
  %2684 = vmatprep.subr.mxu0 0.0
  %2685 = vmatpush1.msra.mxu0 0.0
  %2686 = vmatprep.subr.mxu0 0.0
  %2687 = vmatpush1.msra.mxu0 0.0
  %2688 = vmatprep.subr.mxu0 0.0
  %2689 = vmatpush1.msra.mxu0 0.0
  %2690 = vmatprep.subr.mxu0 0.0
  %2691 = vmatpush1.msra.mxu0 0.0
  %2692 = vmatprep.subr.mxu0 0.0
  %2693 = vmatpush1.msra.mxu0 0.0
  %2694 = vmatprep.subr.mxu0 0.0
  %2695 = vmatpush1.msra.mxu0 0.0
  %2696 = vmatprep.subr.mxu0 0.0
  %2697 = vmatpush1.msra.mxu0 0.0
  %2698 = vmatprep.subr.mxu0 0.0
  %2699 = vmatpush1.msra.mxu0 0.0
  %2700 = vmatprep.subr.mxu0 0.0
  %2701 = vmatpush1.msra.mxu0 0.0
  %2702 = vmatprep.subr.mxu0 0.0
  %2703 = vmatpush1.msra.mxu0 0.0
  %2704 = vmatprep.subr.mxu0 0.0
  %2705 = vmatpush1.msra.mxu0 0.0
  %2706 = vmatprep.subr.mxu0 0.0
  %2707 = vmatpush1.msra.mxu0 0.0
  %2708 = vmatprep.subr.mxu0 0.0
  %2709 = vmatpush1.msra.mxu0 0.0
  %2710 = vmatprep.subr.mxu0 0.0
  %2711 = vmatpush1.msra.mxu0 0.0
  %2712 = vmatprep.subr.mxu0 0.0
  %2713 = vmatpush1.msra.mxu0 0.0
  %2714 = vmatprep.subr.mxu0 0.0
  %2715 = vmatpush1.msra.mxu0 0.0
  %2716 = vmatprep.subr.mxu0 0.0
  %2717 = vmatpush1.msra.mxu0 0.0
  %2718 = vmatprep.subr.mxu0 0.0
  %2719 = vmatpush1.msra.mxu0 0.0
  %2720 = vmatprep.subr.mxu0 0.0
  %2721 = vmatpush1.msra.mxu0 0.0
  %2722 = vmatprep.subr.mxu0 0.0
  %2723 = vmatpush1.msra.mxu0 0.0
  %2724 = vmatprep.subr.mxu0 0.0
  %2725 = vmatpush1.msra.mxu0 0.0
  %2726 = vmatprep.subr.mxu0 0.0
  %2727 = vmatpush1.msra.mxu0 0.0
  %2728 = vmatprep.subr.mxu0 0.0
  %2729 = vmatpush1.msra.mxu0 0.0
  %2730 = vmatprep.subr.mxu0 0.0
  %2731 = vmatpush1.msra.mxu0 0.0
  %2732 = vmatprep.subr.mxu0 0.0
  %2733 = vmatpush1.msra.mxu0 0.0
  %2734 = vmatprep.subr.mxu0 0.0
  %2735 = vmatpush1.msra.mxu0 0.0
  %2736 = vmatprep.mubr.f32.mxu0 0.0
  %2737 = vmatmul.mubr.f32.gmra.mrb[0].mxu0 %v2661
  %v2738 = vpop.f32.mrb[0].mxu0
  %v2739 = vadd.f32 %v2658, %v2738
  %v2740 = vpop.f32.mrb[0].mxu0
  %2741 = vmatprep.mubr.f32.mxu0 0.0
  %2742 = vmatmul.mubr.f32.gmra.mrb[0].mxu0 %v2664
  %v2743 = vpop.f32.mrb[0].mxu0
  %v2744 = vadd.f32 %v2658, %v2743
  %v2745 = vpop.f32.mrb[0].mxu0
  %2746 = vmatprep.mubr.f32.mxu0 0.0
  %2747 = vmatmul.mubr.f32.gmra.mrb[0].mxu0 %v2667
  %v2748 = vpop.f32.mrb[0].mxu0
  %v2749 = vadd.f32 %v2658, %v2748
  %v2750 = vpop.f32.mrb[0].mxu0
  %2751 = vmatprep.mubr.f32.mxu0 0.0
  %2752 = vmatmul.mubr.f32.gmra.mrb[0].mxu0 %v2670
  %v2753 = vpop.f32.mrb[0].mxu0
  %v2754 = vadd.f32 %v2658, %v2753
  %v2755 = vpop.f32.mrb[0].mxu0
  %2756 = vdwg.mxu0
  %v2757 = vld [vmem:[%s2 + $0x320] sm:$0xff]
  %v2758 = vld [vmem:[%s2 + $0x328] sm:$0xff]
  %vm2759 = vcmask 64512
  %v2761 = vsel %vm2759, %v2520, 0
  %v2764 = vsel %vm2759, %v2525, 0
  %v2767 = vsel %vm2759, %v2627, 0
  %v2770 = vsel %vm2759, %v2632, 0
  %v2773 = vsel %vm2759, %v2637, 0
  %v2776 = vsel %vm2759, %v2642, 0
  %2778 = vmatprep.subr.mxu0 0.0
  %2779 = vmatpush1.xpose.msra.mxu0 %v2767
  %2780 = vmatprep.subr.mxu0 0.0
  %2781 = vmatpush1.xpose.msra.mxu0 %v2770
  %2782 = vmatprep.subr.mxu0 0.0
  %2783 = vmatpush1.xpose.msra.mxu0 %v2773
  %2784 = vmatprep.subr.mxu0 0.0
  %2785 = vmatpush1.xpose.msra.mxu0 %v2776
  %2786 = vmatprep.subr.mxu0 0.0
  %2787 = vmatpush1.xpose.msra.mxu0 0.0
  %2788 = vmatprep.subr.mxu0 0.0
  %2789 = vmatpush1.xpose.msra.mxu0 0.0
  %2790 = vmatprep.subr.mxu0 0.0
  %2791 = vmatpush1.xpose.msra.mxu0 0.0
  %2792 = vmatprep.subr.mxu0 0.0
  %2793 = vmatpush1.xpose.msra.mxu0 0.0
  %2794 = vmatprep.subr.mxu0 0.0
  %2795 = vmatpush1.xpose.msra.mxu0 0.0
  %2796 = vmatprep.subr.mxu0 0.0
  %2797 = vmatpush1.xpose.msra.mxu0 0.0
  %2798 = vmatprep.subr.mxu0 0.0
  %2799 = vmatpush1.xpose.msra.mxu0 0.0
  %2800 = vmatprep.subr.mxu0 0.0
  %2801 = vmatpush1.xpose.msra.mxu0 0.0
  %2802 = vmatprep.subr.mxu0 0.0
  %2803 = vmatpush1.xpose.msra.mxu0 0.0
  %2804 = vmatprep.subr.mxu0 0.0
  %2805 = vmatpush1.xpose.msra.mxu0 0.0
  %2806 = vmatprep.subr.mxu0 0.0
  %2807 = vmatpush1.xpose.msra.mxu0 0.0
  %2808 = vmatprep.subr.mxu0 0.0
  %2809 = vmatpush1.xpose.msra.mxu0 0.0
  %2810 = vmatprep.subr.mxu0 0.0
  %2811 = vmatpush1.xpose.msra.mxu0 0.0
  %2812 = vmatprep.subr.mxu0 0.0
  %2813 = vmatpush1.xpose.msra.mxu0 0.0
  %2814 = vmatprep.subr.mxu0 0.0
  %2815 = vmatpush1.xpose.msra.mxu0 0.0
  %2816 = vmatprep.subr.mxu0 0.0
  %2817 = vmatpush1.xpose.msra.mxu0 0.0
  %2818 = vmatprep.subr.mxu0 0.0
  %2819 = vmatpush1.xpose.msra.mxu0 0.0
  %2820 = vmatprep.subr.mxu0 0.0
  %2821 = vmatpush1.xpose.msra.mxu0 0.0
  %2822 = vmatprep.subr.mxu0 0.0
  %2823 = vmatpush1.xpose.msra.mxu0 0.0
  %2824 = vmatprep.subr.mxu0 0.0
  %2825 = vmatpush1.xpose.msra.mxu0 0.0
  %2826 = vmatprep.subr.mxu0 0.0
  %2827 = vmatpush1.xpose.msra.mxu0 0.0
  %2828 = vmatprep.subr.mxu0 0.0
  %2829 = vmatpush1.xpose.msra.mxu0 0.0
  %2830 = vmatprep.subr.mxu0 0.0
  %2831 = vmatpush1.xpose.msra.mxu0 0.0
  %2832 = vmatprep.subr.mxu0 0.0
  %2833 = vmatpush1.xpose.msra.mxu0 0.0
  %2834 = vmatprep.subr.mxu0 0.0
  %2835 = vmatpush1.xpose.msra.mxu0 0.0
  %2836 = vmatprep.subr.mxu0 0.0
  %2837 = vmatpush1.xpose.msra.mxu0 0.0
  %2838 = vmatprep.subr.mxu0 0.0
  %2839 = vmatpush1.xpose.msra.mxu0 0.0
  %2840 = vmatprep.subr.mxu0 0.0
  %2841 = vmatpush1.xpose.msra.mxu0 0.0
  %2842 = vmatprep.mubr.f32.mxu0 0.0
  %2843 = vmatmul.mubr.f32.gmra.mrb[0].mxu0 %v2761
  %v2844 = vpop.f32.mrb[0].mxu0
  %v2845 = vadd.f32 0.0, %v2844
  %v2846 = vpop.f32.mrb[0].mxu0
  %2847 = vmatprep.mubr.f32.mxu0 0.0
  %2848 = vmatmul.mubr.f32.gmra.mrb[0].mxu0 %v2764
  %v2849 = vpop.f32.mrb[0].mxu0
  %v2850 = vadd.f32 0.0, %v2849
  %v2851 = vpop.f32.mrb[0].mxu0
  %2852 = vdwg.mxu0
  %v2853 = vmul.f32 %v2845, 0.35355338
  %v2854 = vmul.f32 %v2850, 0.35355338
  %v2855 = vadd.f32 %v2853, %v2436
  %v2856 = vadd.f32 %v2854, %v2437
  %v2857 = vsel %vm162, %v2855, -inf
  %2858 = vmax.xlane.f32.xlu0 %v2857
  %v2859 = vpop.xlane.xlu0 %2858
  %v2860 = vsel %vm2394, %v2856, -inf
  %2861 = vmax.xlane.f32.xlu0 %v2860
  %v2862 = vpop.xlane.xlu0 %2861
  %v2863 = vsub.f32 %v2855, %v2859
  %v2864 = vsub.f32 %v2856, %v2862
  %v2865 = vmul.f32 %v2863, 1.442695
  %v2866 = vpow.pop %v2865
  %v2867 = vmul.f32 %v2864, 1.442695
  %v2868 = vpow.pop %v2867
  %v2869 = vsel %vm162, %v2866, 0.0
  %2870 = vadd.xlane.f32.xlu0 %v2869
  %v2871 = vpop.xlane.xlu0 %2870
  %v2872 = vsel %vm2394, %v2868, 0.0
  %2873 = vadd.xlane.f32.xlu0 %v2872
  %v2874 = vpop.xlane.xlu0 %2873
  %v2875 = vrcp.pop %v2871
  %v2876 = vrcp.pop %v2874
  %v2877 = vmul.f32 %v2866, %v2875
  %v2878 = vmul.f32 %v2868, %v2876
  %v2880 = vsel %vm162, %v2877, 0
  %v2883 = vsel %vm162, %v2878, 0
  %2885 = vmatprep.subr.mxu0 0.0
  %2886 = vmatpush1.msra.mxu0 %v2739
  %2887 = vmatprep.subr.mxu0 0.0
  %2888 = vmatpush1.msra.mxu0 %v2744
  %2889 = vmatprep.subr.mxu0 0.0
  %2890 = vmatpush1.msra.mxu0 %v2749
  %2891 = vmatprep.subr.mxu0 0.0
  %2892 = vmatpush1.msra.mxu0 %v2754
  %2893 = vmatprep.subr.mxu0 0.0
  %2894 = vmatpush1.msra.mxu0 0.0
  %2895 = vmatprep.subr.mxu0 0.0
  %2896 = vmatpush1.msra.mxu0 0.0
  %2897 = vmatprep.subr.mxu0 0.0
  %2898 = vmatpush1.msra.mxu0 0.0
  %2899 = vmatprep.subr.mxu0 0.0
  %2900 = vmatpush1.msra.mxu0 0.0
  %2901 = vmatprep.subr.mxu0 0.0
  %2902 = vmatpush1.msra.mxu0 0.0
  %2903 = vmatprep.subr.mxu0 0.0
  %2904 = vmatpush1.msra.mxu0 0.0
  %2905 = vmatprep.subr.mxu0 0.0
  %2906 = vmatpush1.msra.mxu0 0.0
  %2907 = vmatprep.subr.mxu0 0.0
  %2908 = vmatpush1.msra.mxu0 0.0
  %2909 = vmatprep.subr.mxu0 0.0
  %2910 = vmatpush1.msra.mxu0 0.0
  %2911 = vmatprep.subr.mxu0 0.0
  %2912 = vmatpush1.msra.mxu0 0.0
  %2913 = vmatprep.subr.mxu0 0.0
  %2914 = vmatpush1.msra.mxu0 0.0
  %2915 = vmatprep.subr.mxu0 0.0
  %2916 = vmatpush1.msra.mxu0 0.0
  %2917 = vmatprep.subr.mxu0 0.0
  %2918 = vmatpush1.msra.mxu0 0.0
  %2919 = vmatprep.subr.mxu0 0.0
  %2920 = vmatpush1.msra.mxu0 0.0
  %2921 = vmatprep.subr.mxu0 0.0
  %2922 = vmatpush1.msra.mxu0 0.0
  %2923 = vmatprep.subr.mxu0 0.0
  %2924 = vmatpush1.msra.mxu0 0.0
  %2925 = vmatprep.subr.mxu0 0.0
  %2926 = vmatpush1.msra.mxu0 0.0
  %2927 = vmatprep.subr.mxu0 0.0
  %2928 = vmatpush1.msra.mxu0 0.0
  %2929 = vmatprep.subr.mxu0 0.0
  %2930 = vmatpush1.msra.mxu0 0.0
  %2931 = vmatprep.subr.mxu0 0.0
  %2932 = vmatpush1.msra.mxu0 0.0
  %2933 = vmatprep.subr.mxu0 0.0
  %2934 = vmatpush1.msra.mxu0 0.0
  %2935 = vmatprep.subr.mxu0 0.0
  %2936 = vmatpush1.msra.mxu0 0.0
  %2937 = vmatprep.subr.mxu0 0.0
  %2938 = vmatpush1.msra.mxu0 0.0
  %2939 = vmatprep.subr.mxu0 0.0
  %2940 = vmatpush1.msra.mxu0 0.0
  %2941 = vmatprep.subr.mxu0 0.0
  %2942 = vmatpush1.msra.mxu0 0.0
  %2943 = vmatprep.subr.mxu0 0.0
  %2944 = vmatpush1.msra.mxu0 0.0
  %2945 = vmatprep.subr.mxu0 0.0
  %2946 = vmatpush1.msra.mxu0 0.0
  %2947 = vmatprep.subr.mxu0 0.0
  %2948 = vmatpush1.msra.mxu0 0.0
  %2949 = vmatprep.mubr.f32.mxu0 0.0
  %2950 = vmatmul.mubr.f32.gmra.mrb[0].mxu0 %v2880
  %v2951 = vpop.f32.mrb[0].mxu0
  %v2952 = vadd.f32 0.0, %v2951
  %v2953 = vpop.f32.mrb[0].mxu0
  %2954 = vmatprep.mubr.f32.mxu0 0.0
  %2955 = vmatmul.mubr.f32.gmra.mrb[0].mxu0 %v2883
  %v2956 = vpop.f32.mrb[0].mxu0
  %v2957 = vadd.f32 0.0, %v2956
  %v2958 = vpop.f32.mrb[0].mxu0
  %2959 = vdwg.mxu0
  %2960 = vrot.lane.b32.xlu0 %v2520, 120
  %v2961 = vpop.permute.xlu0 %2960
  %2962 = vrot.lane.b32.xlu0 %v2525, 120
  %v2963 = vpop.permute.xlu0 %2962
  %2964 = vrot.lane.b32.xlu0 %v2627, 120
  %v2965 = vpop.permute.xlu0 %2964
  %2966 = vrot.lane.b32.xlu0 %v2632, 120
  %v2967 = vpop.permute.xlu0 %2966
  %2968 = vrot.lane.b32.xlu0 %v2637, 120
  %v2969 = vpop.permute.xlu0 %2968
  %2970 = vrot.lane.b32.xlu0 %v2642, 120
  %v2971 = vpop.permute.xlu0 %2970
  %v2972 = vsel %vm2759, %v2961, 0
  %v2974 = vsel %vm2759, %v2963, 0
  %v2976 = vsel %vm2759, %v2965, 0
  %v2978 = vsel %vm2759, %v2967, 0
  %v2980 = vsel %vm2759, %v2969, 0
  %v2982 = vsel %vm2759, %v2971, 0
  %2984 = vmatprep.subr.mxu0 0.0
  %2985 = vmatpush1.xpose.msra.mxu0 %v2976
  %2986 = vmatprep.subr.mxu0 0.0
  %2987 = vmatpush1.xpose.msra.mxu0 %v2978
  %2988 = vmatprep.subr.mxu0 0.0
  %2989 = vmatpush1.xpose.msra.mxu0 %v2980
  %2990 = vmatprep.subr.mxu0 0.0
  %2991 = vmatpush1.xpose.msra.mxu0 %v2982
  %2992 = vmatprep.subr.mxu0 0.0
  %2993 = vmatpush1.xpose.msra.mxu0 0.0
  %2994 = vmatprep.subr.mxu0 0.0
  %2995 = vmatpush1.xpose.msra.mxu0 0.0
  %2996 = vmatprep.subr.mxu0 0.0
  %2997 = vmatpush1.xpose.msra.mxu0 0.0
  %2998 = vmatprep.subr.mxu0 0.0
  %2999 = vmatpush1.xpose.msra.mxu0 0.0
  %3000 = vmatprep.subr.mxu0 0.0
  %3001 = vmatpush1.xpose.msra.mxu0 0.0
  %3002 = vmatprep.subr.mxu0 0.0
  %3003 = vmatpush1.xpose.msra.mxu0 0.0
  %3004 = vmatprep.subr.mxu0 0.0
  %3005 = vmatpush1.xpose.msra.mxu0 0.0
  %3006 = vmatprep.subr.mxu0 0.0
  %3007 = vmatpush1.xpose.msra.mxu0 0.0
  %3008 = vmatprep.subr.mxu0 0.0
  %3009 = vmatpush1.xpose.msra.mxu0 0.0
  %3010 = vmatprep.subr.mxu0 0.0
  %3011 = vmatpush1.xpose.msra.mxu0 0.0
  %3012 = vmatprep.subr.mxu0 0.0
  %3013 = vmatpush1.xpose.msra.mxu0 0.0
  %3014 = vmatprep.subr.mxu0 0.0
  %3015 = vmatpush1.xpose.msra.mxu0 0.0
  %3016 = vmatprep.subr.mxu0 0.0
  %3017 = vmatpush1.xpose.msra.mxu0 0.0
  %3018 = vmatprep.subr.mxu0 0.0
  %3019 = vmatpush1.xpose.msra.mxu0 0.0
  %3020 = vmatprep.subr.mxu0 0.0
  %3021 = vmatpush1.xpose.msra.mxu0 0.0
  %3022 = vmatprep.subr.mxu0 0.0
  %3023 = vmatpush1.xpose.msra.mxu0 0.0
  %3024 = vmatprep.subr.mxu0 0.0
  %3025 = vmatpush1.xpose.msra.mxu0 0.0
  %3026 = vmatprep.subr.mxu0 0.0
  %3027 = vmatpush1.xpose.msra.mxu0 0.0
  %3028 = vmatprep.subr.mxu0 0.0
  %3029 = vmatpush1.xpose.msra.mxu0 0.0
  %3030 = vmatprep.subr.mxu0 0.0
  %3031 = vmatpush1.xpose.msra.mxu0 0.0
  %3032 = vmatprep.subr.mxu0 0.0
  %3033 = vmatpush1.xpose.msra.mxu0 0.0
  %3034 = vmatprep.subr.mxu0 0.0
  %3035 = vmatpush1.xpose.msra.mxu0 0.0
  %3036 = vmatprep.subr.mxu0 0.0
  %3037 = vmatpush1.xpose.msra.mxu0 0.0
  %3038 = vmatprep.subr.mxu0 0.0
  %3039 = vmatpush1.xpose.msra.mxu0 0.0
  %3040 = vmatprep.subr.mxu0 0.0
  %3041 = vmatpush1.xpose.msra.mxu0 0.0
  %3042 = vmatprep.subr.mxu0 0.0
  %3043 = vmatpush1.xpose.msra.mxu0 0.0
  %3044 = vmatprep.subr.mxu0 0.0
  %3045 = vmatpush1.xpose.msra.mxu0 0.0
  %3046 = vmatprep.subr.mxu0 0.0
  %3047 = vmatpush1.xpose.msra.mxu0 0.0
  %3048 = vmatprep.mubr.f32.mxu0 0.0
  %3049 = vmatmul.mubr.f32.gmra.mrb[0].mxu0 %v2972
  %v3050 = vpop.f32.mrb[0].mxu0
  %v3051 = vadd.f32 0.0, %v3050
  %v3052 = vpop.f32.mrb[0].mxu0
  %3053 = vmatprep.mubr.f32.mxu0 0.0
  %3054 = vmatmul.mubr.f32.gmra.mrb[0].mxu0 %v2974
  %v3055 = vpop.f32.mrb[0].mxu0
  %v3056 = vadd.f32 0.0, %v3055
  %v3057 = vpop.f32.mrb[0].mxu0
  %3058 = vdwg.mxu0
  %v3059 = vmul.f32 %v3051, 0.35355338
  %v3060 = vmul.f32 %v3056, 0.35355338
  %v3061 = vadd.f32 %v3059, %v2436
  %v3062 = vadd.f32 %v3060, %v2437
  %v3063 = vsel %vm162, %v3061, -inf
  %3064 = vmax.xlane.f32.xlu0 %v3063
  %v3065 = vpop.xlane.xlu0 %3064
  %v3066 = vsel %vm2394, %v3062, -inf
  %3067 = vmax.xlane.f32.xlu0 %v3066
  %v3068 = vpop.xlane.xlu0 %3067
  %v3069 = vsub.f32 %v3061, %v3065
  %v3070 = vsub.f32 %v3062, %v3068
  %v3071 = vmul.f32 %v3069, 1.442695
  %v3072 = vpow.pop %v3071
  %v3073 = vmul.f32 %v3070, 1.442695
  %v3074 = vpow.pop %v3073
  %v3075 = vsel %vm162, %v3072, 0.0
  %3076 = vadd.xlane.f32.xlu0 %v3075
  %v3077 = vpop.xlane.xlu0 %3076
  %v3078 = vsel %vm2394, %v3074, 0.0
  %3079 = vadd.xlane.f32.xlu0 %v3078
  %v3080 = vpop.xlane.xlu0 %3079
  %v3081 = vrcp.pop %v3077
  %v3082 = vrcp.pop %v3080
  %v3083 = vmul.f32 %v3072, %v3081
  %v3084 = vmul.f32 %v3074, %v3082
  %3089 = vrot.lane.b32.xlu0 %v2739, 120
  %v3090 = vpop.permute.xlu0 %3089
  %3091 = vrot.lane.b32.xlu0 %v2744, 120
  %v3092 = vpop.permute.xlu0 %3091
  %3093 = vrot.lane.b32.xlu0 %v2749, 120
  %v3094 = vpop.permute.xlu0 %3093
  %3095 = vrot.lane.b32.xlu0 %v2754, 120
  %v3096 = vpop.permute.xlu0 %3095
  %v3102 = vsel %vm162, %v3083, 0
  %v3105 = vsel %vm162, %v3084, 0
  %3107 = vmatprep.subr.mxu0 0.0
  %3108 = vmatpush1.msra.mxu0 %v3090
  %3109 = vmatprep.subr.mxu0 0.0
  %3110 = vmatpush1.msra.mxu0 %v3092
  %3111 = vmatprep.subr.mxu0 0.0
  %3112 = vmatpush1.msra.mxu0 %v3094
  %3113 = vmatprep.subr.mxu0 0.0
  %3114 = vmatpush1.msra.mxu0 %v3096
  %3115 = vmatprep.subr.mxu0 0.0
  %3116 = vmatpush1.msra.mxu0 0.0
  %3117 = vmatprep.subr.mxu0 0.0
  %3118 = vmatpush1.msra.mxu0 0.0
  %3119 = vmatprep.subr.mxu0 0.0
  %3120 = vmatpush1.msra.mxu0 0.0
  %3121 = vmatprep.subr.mxu0 0.0
  %3122 = vmatpush1.msra.mxu0 0.0
  %3123 = vmatprep.subr.mxu0 0.0
  %3124 = vmatpush1.msra.mxu0 0.0
  %3125 = vmatprep.subr.mxu0 0.0
  %3126 = vmatpush1.msra.mxu0 0.0
  %3127 = vmatprep.subr.mxu0 0.0
  %3128 = vmatpush1.msra.mxu0 0.0
  %3129 = vmatprep.subr.mxu0 0.0
  %3130 = vmatpush1.msra.mxu0 0.0
  %3131 = vmatprep.subr.mxu0 0.0
  %3132 = vmatpush1.msra.mxu0 0.0
  %3133 = vmatprep.subr.mxu0 0.0
  %3134 = vmatpush1.msra.mxu0 0.0
  %3135 = vmatprep.subr.mxu0 0.0
  %3136 = vmatpush1.msra.mxu0 0.0
  %3137 = vmatprep.subr.mxu0 0.0
  %3138 = vmatpush1.msra.mxu0 0.0
  %3139 = vmatprep.subr.mxu0 0.0
  %3140 = vmatpush1.msra.mxu0 0.0
  %3141 = vmatprep.subr.mxu0 0.0
  %3142 = vmatpush1.msra.mxu0 0.0
  %3143 = vmatprep.subr.mxu0 0.0
  %3144 = vmatpush1.msra.mxu0 0.0
  %3145 = vmatprep.subr.mxu0 0.0
  %3146 = vmatpush1.msra.mxu0 0.0
  %3147 = vmatprep.subr.mxu0 0.0
  %3148 = vmatpush1.msra.mxu0 0.0
  %3149 = vmatprep.subr.mxu0 0.0
  %3150 = vmatpush1.msra.mxu0 0.0
  %3151 = vmatprep.subr.mxu0 0.0
  %3152 = vmatpush1.msra.mxu0 0.0
  %3153 = vmatprep.subr.mxu0 0.0
  %3154 = vmatpush1.msra.mxu0 0.0
  %3155 = vmatprep.subr.mxu0 0.0
  %3156 = vmatpush1.msra.mxu0 0.0
  %3157 = vmatprep.subr.mxu0 0.0
  %3158 = vmatpush1.msra.mxu0 0.0
  %3159 = vmatprep.subr.mxu0 0.0
  %3160 = vmatpush1.msra.mxu0 0.0
  %3161 = vmatprep.subr.mxu0 0.0
  %3162 = vmatpush1.msra.mxu0 0.0
  %3163 = vmatprep.subr.mxu0 0.0
  %3164 = vmatpush1.msra.mxu0 0.0
  %3165 = vmatprep.subr.mxu0 0.0
  %3166 = vmatpush1.msra.mxu0 0.0
  %3167 = vmatprep.subr.mxu0 0.0
  %3168 = vmatpush1.msra.mxu0 0.0
  %3169 = vmatprep.subr.mxu0 0.0
  %3170 = vmatpush1.msra.mxu0 0.0
  %3171 = vmatprep.mubr.f32.mxu0 0.0
  %3172 = vmatmul.mubr.f32.gmra.mrb[0].mxu0 %v3102
  %v3173 = vpop.f32.mrb[0].mxu0
  %v3174 = vadd.f32 0.0, %v3173
  %v3175 = vpop.f32.mrb[0].mxu0
  %3176 = vmatprep.mubr.f32.mxu0 0.0
  %3177 = vmatmul.mubr.f32.gmra.mrb[0].mxu0 %v3105
  %v3178 = vpop.f32.mrb[0].mxu0
  %v3179 = vadd.f32 0.0, %v3178
  %v3180 = vpop.f32.mrb[0].mxu0
  %3181 = vdwg.mxu0
  %v3183 = vsel %vm2759, %v3174, 0
  %v3186 = vsel %vm2759, %v3179, 0
  %3188 = vmatprep.subr.mxu0 0.0
  %3189 = vmatpush1.msra.mxu0 %v2758
  %3190 = vmatprep.subr.mxu0 0.0
  %3191 = vmatpush1.msra.mxu0 0.0
  %3192 = vmatprep.subr.mxu0 0.0
  %3193 = vmatpush1.msra.mxu0 0.0
  %3194 = vmatprep.subr.mxu0 0.0
  %3195 = vmatpush1.msra.mxu0 0.0
  %3196 = vmatprep.subr.mxu0 0.0
  %3197 = vmatpush1.msra.mxu0 0.0
  %3198 = vmatprep.subr.mxu0 0.0
  %3199 = vmatpush1.msra.mxu0 0.0
  %3200 = vmatprep.subr.mxu0 0.0
  %3201 = vmatpush1.msra.mxu0 0.0
  %3202 = vmatprep.subr.mxu0 0.0
  %3203 = vmatpush1.msra.mxu0 0.0
  %3204 = vmatprep.subr.mxu0 0.0
  %3205 = vmatpush1.msra.mxu0 0.0
  %3206 = vmatprep.subr.mxu0 0.0
  %3207 = vmatpush1.msra.mxu0 0.0
  %3208 = vmatprep.subr.mxu0 0.0
  %3209 = vmatpush1.msra.mxu0 0.0
  %3210 = vmatprep.subr.mxu0 0.0
  %3211 = vmatpush1.msra.mxu0 0.0
  %3212 = vmatprep.subr.mxu0 0.0
  %3213 = vmatpush1.msra.mxu0 0.0
  %3214 = vmatprep.subr.mxu0 0.0
  %3215 = vmatpush1.msra.mxu0 0.0
  %3216 = vmatprep.subr.mxu0 0.0
  %3217 = vmatpush1.msra.mxu0 0.0
  %3218 = vmatprep.subr.mxu0 0.0
  %3219 = vmatpush1.msra.mxu0 0.0
  %3220 = vmatprep.subr.mxu0 0.0
  %3221 = vmatpush1.msra.mxu0 0.0
  %3222 = vmatprep.subr.mxu0 0.0
  %3223 = vmatpush1.msra.mxu0 0.0
  %3224 = vmatprep.subr.mxu0 0.0
  %3225 = vmatpush1.msra.mxu0 0.0
  %3226 = vmatprep.subr.mxu0 0.0
  %3227 = vmatpush1.msra.mxu0 0.0
  %3228 = vmatprep.subr.mxu0 0.0
  %3229 = vmatpush1.msra.mxu0 0.0
  %3230 = vmatprep.subr.mxu0 0.0
  %3231 = vmatpush1.msra.mxu0 0.0
  %3232 = vmatprep.subr.mxu0 0.0
  %3233 = vmatpush1.msra.mxu0 0.0
  %3234 = vmatprep.subr.mxu0 0.0
  %3235 = vmatpush1.msra.mxu0 0.0
  %3236 = vmatprep.subr.mxu0 0.0
  %3237 = vmatpush1.msra.mxu0 0.0
  %3238 = vmatprep.subr.mxu0 0.0
  %3239 = vmatpush1.msra.mxu0 0.0
  %3240 = vmatprep.subr.mxu0 0.0
  %3241 = vmatpush1.msra.mxu0 0.0
  %3242 = vmatprep.subr.mxu0 0.0
  %3243 = vmatpush1.msra.mxu0 0.0
  %3244 = vmatprep.subr.mxu0 0.0
  %3245 = vmatpush1.msra.mxu0 0.0
  %3246 = vmatprep.subr.mxu0 0.0
  %3247 = vmatpush1.msra.mxu0 0.0
  %3248 = vmatprep.subr.mxu0 0.0
  %3249 = vmatpush1.msra.mxu0 0.0
  %3250 = vmatprep.subr.mxu0 0.0
  %3251 = vmatpush1.msra.mxu0 0.0
  %3252 = vmatprep.mubr.f32.mxu0 0.0
  %3253 = vmatmul.mubr.f32.gmra.mrb[0].mxu0 %v3183
  %v3254 = vpop.f32.mrb[0].mxu0
  %v3255 = vadd.f32 0.0, %v3254
  %v3256 = vpop.f32.mrb[0].mxu0
  %3257 = vmatprep.mubr.f32.mxu0 0.0
  %3258 = vmatmul.mubr.f32.gmra.mrb[0].mxu0 %v3186
  %v3259 = vpop.f32.mrb[0].mxu0
  %v3260 = vadd.f32 0.0, %v3259
  %v3261 = vpop.f32.mrb[0].mxu0
  %3262 = vdwg.mxu0
  %v3264 = vsel %vm2759, %v2952, 0
  %v3267 = vsel %vm2759, %v2957, 0
  %3269 = vmatprep.subr.mxu0 0.0
  %3270 = vmatpush1.msra.mxu0 %v2757
  %3271 = vmatprep.subr.mxu0 0.0
  %3272 = vmatpush1.msra.mxu0 0.0
  %3273 = vmatprep.subr.mxu0 0.0
  %3274 = vmatpush1.msra.mxu0 0.0
  %3275 = vmatprep.subr.mxu0 0.0
  %3276 = vmatpush1.msra.mxu0 0.0
  %3277 = vmatprep.subr.mxu0 0.0
  %3278 = vmatpush1.msra.mxu0 0.0
  %3279 = vmatprep.subr.mxu0 0.0
  %3280 = vmatpush1.msra.mxu0 0.0
  %3281 = vmatprep.subr.mxu0 0.0
  %3282 = vmatpush1.msra.mxu0 0.0
  %3283 = vmatprep.subr.mxu0 0.0
  %3284 = vmatpush1.msra.mxu0 0.0
  %3285 = vmatprep.subr.mxu0 0.0
  %3286 = vmatpush1.msra.mxu0 0.0
  %3287 = vmatprep.subr.mxu0 0.0
  %3288 = vmatpush1.msra.mxu0 0.0
  %3289 = vmatprep.subr.mxu0 0.0
  %3290 = vmatpush1.msra.mxu0 0.0
  %3291 = vmatprep.subr.mxu0 0.0
  %3292 = vmatpush1.msra.mxu0 0.0
  %3293 = vmatprep.subr.mxu0 0.0
  %3294 = vmatpush1.msra.mxu0 0.0
  %3295 = vmatprep.subr.mxu0 0.0
  %3296 = vmatpush1.msra.mxu0 0.0
  %3297 = vmatprep.subr.mxu0 0.0
  %3298 = vmatpush1.msra.mxu0 0.0
  %3299 = vmatprep.subr.mxu0 0.0
  %3300 = vmatpush1.msra.mxu0 0.0
  %3301 = vmatprep.subr.mxu0 0.0
  %3302 = vmatpush1.msra.mxu0 0.0
  %3303 = vmatprep.subr.mxu0 0.0
  %3304 = vmatpush1.msra.mxu0 0.0
  %3305 = vmatprep.subr.mxu0 0.0
  %3306 = vmatpush1.msra.mxu0 0.0
  %3307 = vmatprep.subr.mxu0 0.0
  %3308 = vmatpush1.msra.mxu0 0.0
  %3309 = vmatprep.subr.mxu0 0.0
  %3310 = vmatpush1.msra.mxu0 0.0
  %3311 = vmatprep.subr.mxu0 0.0
  %3312 = vmatpush1.msra.mxu0 0.0
  %3313 = vmatprep.subr.mxu0 0.0
  %3314 = vmatpush1.msra.mxu0 0.0
  %3315 = vmatprep.subr.mxu0 0.0
  %3316 = vmatpush1.msra.mxu0 0.0
  %3317 = vmatprep.subr.mxu0 0.0
  %3318 = vmatpush1.msra.mxu0 0.0
  %3319 = vmatprep.subr.mxu0 0.0
  %3320 = vmatpush1.msra.mxu0 0.0
  %3321 = vmatprep.subr.mxu0 0.0
  %3322 = vmatpush1.msra.mxu0 0.0
  %3323 = vmatprep.subr.mxu0 0.0
  %3324 = vmatpush1.msra.mxu0 0.0
  %3325 = vmatprep.subr.mxu0 0.0
  %3326 = vmatpush1.msra.mxu0 0.0
  %3327 = vmatprep.subr.mxu0 0.0
  %3328 = vmatpush1.msra.mxu0 0.0
  %3329 = vmatprep.subr.mxu0 0.0
  %3330 = vmatpush1.msra.mxu0 0.0
  %3331 = vmatprep.subr.mxu0 0.0
  %3332 = vmatpush1.msra.mxu0 0.0
  %3333 = vmatprep.mubr.f32.mxu0 0.0
  %3334 = vmatmul.mubr.f32.gmra.mrb[0].mxu0 %v3264
  %v3335 = vpop.f32.mrb[0].mxu0
  %v3336 = vadd.f32 %v3255, %v3335
  %v3337 = vpop.f32.mrb[0].mxu0
  %3338 = vmatprep.mubr.f32.mxu0 0.0
  %3339 = vmatmul.mubr.f32.gmra.mrb[0].mxu0 %v3267
  %v3340 = vpop.f32.mrb[0].mxu0
  %v3341 = vadd.f32 %v3260, %v3340
  %v3342 = vpop.f32.mrb[0].mxu0
  %3343 = vdwg.mxu0
  %v3344 = vld [vmem:[%s2 + $0x330] sm:$0x1]
  %v3345 = vlaneseq
  %v3346 = vshrl.u32 %v3345, 7
  %v3347 = vsub.s32 0, %v3346
  %v3348 = vrot.slane %v3344, %v3347
  %v3349 = vadd.f32 %v3336, %v3348
  %v3350 = vadd.f32 %v3341, %v3348
  %v3351 = vadd.f32 %v2428, %v3349
  %v3352 = vadd.f32 %v2429, %v3350
  %v3353 = vld [vmem:[%s2 + $0x3c8] sm:$0x1]
  %v3354 = vld [vmem:[%s2 + $0x3d0] sm:$0x1]
  %v3355 = vsel %vm162, %v3351, 0.0
  %3356 = vadd.xlane.f32.xlu0 %v3355
  %v3357 = vpop.xlane.xlu0 %3356
  %v3358 = vsel %vm2394, %v3352, 0.0
  %3359 = vadd.xlane.f32.xlu0 %v3358
  %v3360 = vpop.xlane.xlu0 %3359
  %v3361 = vmul.f32 %v3357, %v175
  %v3362 = vmul.f32 %v3360, %v175
  %v3363 = vsub.f32 %v3351, %v3361
  %v3364 = vsub.f32 %v3352, %v3362
  %v3365 = vmul.f32 %v3363, %v3363
  %v3366 = vmul.f32 %v3364, %v3364
  %v3367 = vsel %vm162, %v3365, 0.0
  %3368 = vadd.xlane.f32.xlu0 %v3367
  %v3369 = vpop.xlane.xlu0 %3368
  %v3370 = vsel %vm2394, %v3366, 0.0
  %3371 = vadd.xlane.f32.xlu0 %v3370
  %v3372 = vpop.xlane.xlu0 %3371
  %v3373 = vmul.f32 %v3369, %v175
  %v3374 = vmul.f32 %v3372, %v175
  %v3375 = vadd.f32 %v3373, 1e-05
  %v3376 = vadd.f32 %v3374, 1e-05
  %v3377 = vrsqrt.pop %v3375
  %v3378 = vrsqrt.pop %v3376
  %v3379 = vmul.f32 %v3363, %v3377
  %v3380 = vmul.f32 %v3364, %v3378
  %v3381 = vlaneseq
  %v3382 = vshrl.u32 %v3381, 7
  %v3383 = vsub.s32 0, %v3382
  %v3384 = vrot.slane %v3353, %v3383
  %v3385 = vmul.f32 %v3379, %v3384
  %v3386 = vmul.f32 %v3380, %v3384
  %v3387 = vlaneseq
  %v3388 = vshrl.u32 %v3387, 7
  %v3389 = vsub.s32 0, %v3388
  %v3390 = vrot.slane %v3354, %v3389
  %v3391 = vadd.f32 %v3385, %v3390
  %v3392 = vadd.f32 %v3386, %v3390
  %v3393 = vld [vmem:[%s2 + $0x408] sm:$0xff]
  %v3394 = vld [vmem:[%s2 + $0x410] sm:$0xff]
  %v3395 = vld [vmem:[%s2 + $0x418] sm:$0xff]
  %v3396 = vld [vmem:[%s2 + $0x420] sm:$0xff]
  %v3397 = vld [vmem:[%s2 + $0x428] sm:$0x1]
  %v3398 = vlaneseq
  %v3399 = vshrl.u32 %v3398, 7
  %v3400 = vsub.s32 0, %v3399
  %v3401 = vrot.slane %v3397, %v3400
  %v3403 = vsel %vm162, %v3391, 0
  %v3406 = vsel %vm162, %v3392, 0
  %3408 = vmatprep.subr.mxu0 0.0
  %3409 = vmatpush1.msra.mxu0 %v3393
  %3410 = vmatprep.subr.mxu0 0.0
  %3411 = vmatpush1.msra.mxu0 %v3394
  %3412 = vmatprep.subr.mxu0 0.0
  %3413 = vmatpush1.msra.mxu0 %v3395
  %3414 = vmatprep.subr.mxu0 0.0
  %3415 = vmatpush1.msra.mxu0 %v3396
  %3416 = vmatprep.subr.mxu0 0.0
  %3417 = vmatpush1.msra.mxu0 0.0
  %3418 = vmatprep.subr.mxu0 0.0
  %3419 = vmatpush1.msra.mxu0 0.0
  %3420 = vmatprep.subr.mxu0 0.0
  %3421 = vmatpush1.msra.mxu0 0.0
  %3422 = vmatprep.subr.mxu0 0.0
  %3423 = vmatpush1.msra.mxu0 0.0
  %3424 = vmatprep.subr.mxu0 0.0
  %3425 = vmatpush1.msra.mxu0 0.0
  %3426 = vmatprep.subr.mxu0 0.0
  %3427 = vmatpush1.msra.mxu0 0.0
  %3428 = vmatprep.subr.mxu0 0.0
  %3429 = vmatpush1.msra.mxu0 0.0
  %3430 = vmatprep.subr.mxu0 0.0
  %3431 = vmatpush1.msra.mxu0 0.0
  %3432 = vmatprep.subr.mxu0 0.0
  %3433 = vmatpush1.msra.mxu0 0.0
  %3434 = vmatprep.subr.mxu0 0.0
  %3435 = vmatpush1.msra.mxu0 0.0
  %3436 = vmatprep.subr.mxu0 0.0
  %3437 = vmatpush1.msra.mxu0 0.0
  %3438 = vmatprep.subr.mxu0 0.0
  %3439 = vmatpush1.msra.mxu0 0.0
  %3440 = vmatprep.subr.mxu0 0.0
  %3441 = vmatpush1.msra.mxu0 0.0
  %3442 = vmatprep.subr.mxu0 0.0
  %3443 = vmatpush1.msra.mxu0 0.0
  %3444 = vmatprep.subr.mxu0 0.0
  %3445 = vmatpush1.msra.mxu0 0.0
  %3446 = vmatprep.subr.mxu0 0.0
  %3447 = vmatpush1.msra.mxu0 0.0
  %3448 = vmatprep.subr.mxu0 0.0
  %3449 = vmatpush1.msra.mxu0 0.0
  %3450 = vmatprep.subr.mxu0 0.0
  %3451 = vmatpush1.msra.mxu0 0.0
  %3452 = vmatprep.subr.mxu0 0.0
  %3453 = vmatpush1.msra.mxu0 0.0
  %3454 = vmatprep.subr.mxu0 0.0
  %3455 = vmatpush1.msra.mxu0 0.0
  %3456 = vmatprep.subr.mxu0 0.0
  %3457 = vmatpush1.msra.mxu0 0.0
  %3458 = vmatprep.subr.mxu0 0.0
  %3459 = vmatpush1.msra.mxu0 0.0
  %3460 = vmatprep.subr.mxu0 0.0
  %3461 = vmatpush1.msra.mxu0 0.0
  %3462 = vmatprep.subr.mxu0 0.0
  %3463 = vmatpush1.msra.mxu0 0.0
  %3464 = vmatprep.subr.mxu0 0.0
  %3465 = vmatpush1.msra.mxu0 0.0
  %3466 = vmatprep.subr.mxu0 0.0
  %3467 = vmatpush1.msra.mxu0 0.0
  %3468 = vmatprep.subr.mxu0 0.0
  %3469 = vmatpush1.msra.mxu0 0.0
  %3470 = vmatprep.subr.mxu0 0.0
  %3471 = vmatpush1.msra.mxu0 0.0
  %3472 = vmatprep.mubr.f32.mxu0 0.0
  %3473 = vmatmul.mubr.f32.gmra.mrb[0].mxu0 %v3403
  %v3474 = vpop.f32.mrb[0].mxu0
  %v3475 = vadd.f32 %v3401, %v3474
  %v3476 = vpop.f32.mrb[0].mxu0
  %3477 = vmatprep.mubr.f32.mxu0 0.0
  %3478 = vmatmul.mubr.f32.gmra.mrb[0].mxu0 %v3406
  %v3479 = vpop.f32.mrb[0].mxu0
  %v3480 = vadd.f32 %v3401, %v3479
  %v3481 = vpop.f32.mrb[0].mxu0
  %3482 = vdwg.mxu0
  %v3483 = vmax.f32 %v3475, 0.0
  %v3484 = vmax.f32 %v3480, 0.0
  %v3485 = vld [vmem:[%s2 + $0x430] sm:$0xff]
  %v3486 = vld [vmem:[%s2 + $0x438] sm:$0xff]
  %v3487 = vld [vmem:[%s2 + $0x440] sm:$0xff]
  %v3488 = vld [vmem:[%s2 + $0x448] sm:$0xff]
  %v3489 = vld [vmem:[%s2 + $0x450] sm:$0xff]
  %v3490 = vld [vmem:[%s2 + $0x458] sm:$0xff]
  %v3491 = vld [vmem:[%s2 + $0x460] sm:$0xff]
  %v3492 = vld [vmem:[%s2 + $0x468] sm:$0xff]
  %v3494 = vsel %vm54, %v3483, 0
  %v3497 = vsel %vm54, %v3484, 0
  %3499 = vmatprep.subr.mxu0 0.0
  %3500 = vmatpush1.msra.mxu0 %v3485
  %3501 = vmatprep.subr.mxu0 0.0
  %3502 = vmatpush1.msra.mxu0 %v3486
  %3503 = vmatprep.subr.mxu0 0.0
  %3504 = vmatpush1.msra.mxu0 %v3487
  %3505 = vmatprep.subr.mxu0 0.0
  %3506 = vmatpush1.msra.mxu0 %v3488
  %3507 = vmatprep.subr.mxu0 0.0
  %3508 = vmatpush1.msra.mxu0 %v3489
  %3509 = vmatprep.subr.mxu0 0.0
  %3510 = vmatpush1.msra.mxu0 %v3490
  %3511 = vmatprep.subr.mxu0 0.0
  %3512 = vmatpush1.msra.mxu0 %v3491
  %3513 = vmatprep.subr.mxu0 0.0
  %3514 = vmatpush1.msra.mxu0 %v3492
  %3515 = vmatprep.subr.mxu0 0.0
  %3516 = vmatpush1.msra.mxu0 0.0
  %3517 = vmatprep.subr.mxu0 0.0
  %3518 = vmatpush1.msra.mxu0 0.0
  %3519 = vmatprep.subr.mxu0 0.0
  %3520 = vmatpush1.msra.mxu0 0.0
  %3521 = vmatprep.subr.mxu0 0.0
  %3522 = vmatpush1.msra.mxu0 0.0
  %3523 = vmatprep.subr.mxu0 0.0
  %3524 = vmatpush1.msra.mxu0 0.0
  %3525 = vmatprep.subr.mxu0 0.0
  %3526 = vmatpush1.msra.mxu0 0.0
  %3527 = vmatprep.subr.mxu0 0.0
  %3528 = vmatpush1.msra.mxu0 0.0
  %3529 = vmatprep.subr.mxu0 0.0
  %3530 = vmatpush1.msra.mxu0 0.0
  %3531 = vmatprep.subr.mxu0 0.0
  %3532 = vmatpush1.msra.mxu0 0.0
  %3533 = vmatprep.subr.mxu0 0.0
  %3534 = vmatpush1.msra.mxu0 0.0
  %3535 = vmatprep.subr.mxu0 0.0
  %3536 = vmatpush1.msra.mxu0 0.0
  %3537 = vmatprep.subr.mxu0 0.0
  %3538 = vmatpush1.msra.mxu0 0.0
  %3539 = vmatprep.subr.mxu0 0.0
  %3540 = vmatpush1.msra.mxu0 0.0
  %3541 = vmatprep.subr.mxu0 0.0
  %3542 = vmatpush1.msra.mxu0 0.0
  %3543 = vmatprep.subr.mxu0 0.0
  %3544 = vmatpush1.msra.mxu0 0.0
  %3545 = vmatprep.subr.mxu0 0.0
  %3546 = vmatpush1.msra.mxu0 0.0
  %3547 = vmatprep.subr.mxu0 0.0
  %3548 = vmatpush1.msra.mxu0 0.0
  %3549 = vmatprep.subr.mxu0 0.0
  %3550 = vmatpush1.msra.mxu0 0.0
  %3551 = vmatprep.subr.mxu0 0.0
  %3552 = vmatpush1.msra.mxu0 0.0
  %3553 = vmatprep.subr.mxu0 0.0
  %3554 = vmatpush1.msra.mxu0 0.0
  %3555 = vmatprep.subr.mxu0 0.0
  %3556 = vmatpush1.msra.mxu0 0.0
  %3557 = vmatprep.subr.mxu0 0.0
  %3558 = vmatpush1.msra.mxu0 0.0
  %3559 = vmatprep.subr.mxu0 0.0
  %3560 = vmatpush1.msra.mxu0 0.0
  %3561 = vmatprep.subr.mxu0 0.0
  %3562 = vmatpush1.msra.mxu0 0.0
  %3563 = vmatprep.mubr.f32.mxu0 0.0
  %3564 = vmatmul.mubr.f32.gmra.mrb[0].mxu0 %v3494
  %v3565 = vpop.f32.mrb[0].mxu0
  %v3566 = vadd.f32 0.0, %v3565
  %v3567 = vpop.f32.mrb[0].mxu0
  %3568 = vmatprep.mubr.f32.mxu0 0.0
  %3569 = vmatmul.mubr.f32.gmra.mrb[0].mxu0 %v3497
  %v3570 = vpop.f32.mrb[0].mxu0
  %v3571 = vadd.f32 0.0, %v3570
  %v3572 = vpop.f32.mrb[0].mxu0
  %3573 = vdwg.mxu0
  %v3574 = vadd.f32 %v3391, %v3566
  %v3575 = vadd.f32 %v3392, %v3571
  %v3576 = vld [vmem:[%s2 + $0x470] sm:$0x1]
  %v3577 = vlaneseq
  %v3578 = vshrl.u32 %v3577, 7
  %v3579 = vsub.s32 0, %v3578
  %v3580 = vrot.slane %v3576, %v3579
  %v3581 = vadd.f32 %v3574, %v3580
  %v3582 = vadd.f32 %v3575, %v3580
  %v3583 = vld [vmem:[%s2 + $0x3d8] sm:$0x1]
  %v3584 = vld [vmem:[%s2 + $0x3e0] sm:$0x1]
  %v3585 = vsel %vm162, %v3581, 0.0
  %3586 = vadd.xlane.f32.xlu0 %v3585
  %v3587 = vpop.xlane.xlu0 %3586
  %v3588 = vsel %vm2394, %v3582, 0.0
  %3589 = vadd.xlane.f32.xlu0 %v3588
  %v3590 = vpop.xlane.xlu0 %3589
  %v3591 = vmul.f32 %v3587, %v175
  %v3592 = vmul.f32 %v3590, %v175
  %v3593 = vsub.f32 %v3581, %v3591
  %v3594 = vsub.f32 %v3582, %v3592
  %v3595 = vmul.f32 %v3593, %v3593
  %v3596 = vmul.f32 %v3594, %v3594
  %v3597 = vsel %vm162, %v3595, 0.0
  %3598 = vadd.xlane.f32.xlu0 %v3597
  %v3599 = vpop.xlane.xlu0 %3598
  %v3600 = vsel %vm2394, %v3596, 0.0
  %3601 = vadd.xlane.f32.xlu0 %v3600
  %v3602 = vpop.xlane.xlu0 %3601
  %v3603 = vmul.f32 %v3599, %v175
  %v3604 = vmul.f32 %v3602, %v175
  %v3605 = vadd.f32 %v3603, 1e-05
  %v3606 = vadd.f32 %v3604, 1e-05
  %v3607 = vrsqrt.pop %v3605
  %v3608 = vrsqrt.pop %v3606
  %v3609 = vmul.f32 %v3593, %v3607
  %v3610 = vmul.f32 %v3594, %v3608
  %v3611 = vlaneseq
  %v3612 = vshrl.u32 %v3611, 7
  %v3613 = vsub.s32 0, %v3612
  %v3614 = vrot.slane %v3583, %v3613
  %v3615 = vmul.f32 %v3609, %v3614
  %v3616 = vmul.f32 %v3610, %v3614
  %v3617 = vlaneseq
  %v3618 = vshrl.u32 %v3617, 7
  %v3619 = vsub.s32 0, %v3618
  %v3620 = vrot.slane %v3584, %v3619
  %v3621 = vadd.f32 %v3615, %v3620
  %v3622 = vadd.f32 %v3616, %v3620
  %v3623 = vadd.f32 %v3621, %v1711
  %v3624 = vadd.f32 %v3622, %v1712
  %v3625 = vld [vmem:[%s2 + $0x288] sm:$0xff]
  %v3626 = vld [vmem:[%s2 + $0x290] sm:$0xff]
  %v3627 = vld [vmem:[%s2 + $0x298] sm:$0xff]
  %v3628 = vld [vmem:[%s2 + $0x2a0] sm:$0xff]
  %v3629 = vld [vmem:[%s2 + $0x338] sm:$0xff]
  %v3630 = vld [vmem:[%s2 + $0x340] sm:$0xff]
  %v3631 = vld [vmem:[%s2 + $0x348] sm:$0xff]
  %v3632 = vld [vmem:[%s2 + $0x350] sm:$0xff]
  %v3633 = vld [vmem:[%s2 + $0x358] sm:$0x1]
  %v3634 = vlaneseq
  %v3635 = vshrl.u32 %v3634, 7
  %v3636 = vsub.s32 0, %v3635
  %v3637 = vrot.slane %v3633, %v3636
  %3638 = vmatprep.subr.mxu0 0.0
  %3639 = vmatpush1.msra.mxu0 %v3629
  %3640 = vmatprep.subr.mxu0 0.0
  %3641 = vmatpush1.msra.mxu0 %v3630
  %3642 = vmatprep.subr.mxu0 0.0
  %3643 = vmatpush1.msra.mxu0 %v3631
  %3644 = vmatprep.subr.mxu0 0.0
  %3645 = vmatpush1.msra.mxu0 %v3632
  %3646 = vmatprep.subr.mxu0 0.0
  %3647 = vmatpush1.msra.mxu0 0.0
  %3648 = vmatprep.subr.mxu0 0.0
  %3649 = vmatpush1.msra.mxu0 0.0
  %3650 = vmatprep.subr.mxu0 0.0
  %3651 = vmatpush1.msra.mxu0 0.0
  %3652 = vmatprep.subr.mxu0 0.0
  %3653 = vmatpush1.msra.mxu0 0.0
  %3654 = vmatprep.subr.mxu0 0.0
  %3655 = vmatpush1.msra.mxu0 0.0
  %3656 = vmatprep.subr.mxu0 0.0
  %3657 = vmatpush1.msra.mxu0 0.0
  %3658 = vmatprep.subr.mxu0 0.0
  %3659 = vmatpush1.msra.mxu0 0.0
  %3660 = vmatprep.subr.mxu0 0.0
  %3661 = vmatpush1.msra.mxu0 0.0
  %3662 = vmatprep.subr.mxu0 0.0
  %3663 = vmatpush1.msra.mxu0 0.0
  %3664 = vmatprep.subr.mxu0 0.0
  %3665 = vmatpush1.msra.mxu0 0.0
  %3666 = vmatprep.subr.mxu0 0.0
  %3667 = vmatpush1.msra.mxu0 0.0
  %3668 = vmatprep.subr.mxu0 0.0
  %3669 = vmatpush1.msra.mxu0 0.0
  %3670 = vmatprep.subr.mxu0 0.0
  %3671 = vmatpush1.msra.mxu0 0.0
  %3672 = vmatprep.subr.mxu0 0.0
  %3673 = vmatpush1.msra.mxu0 0.0
  %3674 = vmatprep.subr.mxu0 0.0
  %3675 = vmatpush1.msra.mxu0 0.0
  %3676 = vmatprep.subr.mxu0 0.0
  %3677 = vmatpush1.msra.mxu0 0.0
  %3678 = vmatprep.subr.mxu0 0.0
  %3679 = vmatpush1.msra.mxu0 0.0
  %3680 = vmatprep.subr.mxu0 0.0
  %3681 = vmatpush1.msra.mxu0 0.0
  %3682 = vmatprep.subr.mxu0 0.0
  %3683 = vmatpush1.msra.mxu0 0.0
  %3684 = vmatprep.subr.mxu0 0.0
  %3685 = vmatpush1.msra.mxu0 0.0
  %3686 = vmatprep.subr.mxu0 0.0
  %3687 = vmatpush1.msra.mxu0 0.0
  %3688 = vmatprep.subr.mxu0 0.0
  %3689 = vmatpush1.msra.mxu0 0.0
  %3690 = vmatprep.subr.mxu0 0.0
  %3691 = vmatpush1.msra.mxu0 0.0
  %3692 = vmatprep.subr.mxu0 0.0
  %3693 = vmatpush1.msra.mxu0 0.0
  %3694 = vmatprep.subr.mxu0 0.0
  %3695 = vmatpush1.msra.mxu0 0.0
  %3696 = vmatprep.subr.mxu0 0.0
  %3697 = vmatpush1.msra.mxu0 0.0
  %3698 = vmatprep.subr.mxu0 0.0
  %3699 = vmatpush1.msra.mxu0 0.0
  %3700 = vmatprep.subr.mxu0 0.0
  %3701 = vmatpush1.msra.mxu0 0.0
  %3702 = vmatprep.mubr.f32.mxu0 0.0
  %3703 = vmatmul.mubr.f32.gmra.mrb[0].mxu0 %v2549
  %v3704 = vpop.f32.mrb[0].mxu0
  %v3705 = vadd.f32 %v3637, %v3704
  %v3706 = vpop.f32.mrb[0].mxu0
  %3707 = vmatprep.mubr.f32.mxu0 0.0
  %3708 = vmatmul.mubr.f32.gmra.mrb[0].mxu0 %v2552
  %v3709 = vpop.f32.mrb[0].mxu0
  %v3710 = vadd.f32 %v3637, %v3709
  %v3711 = vpop.f32.mrb[0].mxu0
  %3712 = vmatprep.mubr.f32.mxu0 0.0
  %3713 = vmatmul.mubr.f32.gmra.mrb[0].mxu0 %v2555
  %v3714 = vpop.f32.mrb[0].mxu0
  %v3715 = vadd.f32 %v3637, %v3714
  %v3716 = vpop.f32.mrb[0].mxu0
  %3717 = vmatprep.mubr.f32.mxu0 0.0
  %3718 = vmatmul.mubr.f32.gmra.mrb[0].mxu0 %v2558
  %v3719 = vpop.f32.mrb[0].mxu0
  %v3720 = vadd.f32 %v3637, %v3719
  %v3721 = vpop.f32.mrb[0].mxu0
  %3722 = vdwg.mxu0
  %3727 = vrot.lane.b32.xlu0 %v3629, 112
  %v3728 = vpop.permute.xlu0 %3727
  %3729 = vrot.lane.b32.xlu0 %v3630, 112
  %v3730 = vpop.permute.xlu0 %3729
  %3731 = vrot.lane.b32.xlu0 %v3631, 112
  %v3732 = vpop.permute.xlu0 %3731
  %3733 = vrot.lane.b32.xlu0 %v3632, 112
  %v3734 = vpop.permute.xlu0 %3733
  %3740 = vrot.lane.b32.xlu0 %v3637, 112
  %v3741 = vpop.permute.xlu0 %3740
  %v3744 = vsel %vm162, %v3623, 0
  %v3747 = vsel %vm162, %v3624, 0
  %3749 = vmatprep.subr.mxu0 0.0
  %3750 = vmatpush1.msra.mxu0 %v3728
  %3751 = vmatprep.subr.mxu0 0.0
  %3752 = vmatpush1.msra.mxu0 %v3730
  %3753 = vmatprep.subr.mxu0 0.0
  %3754 = vmatpush1.msra.mxu0 %v3732
  %3755 = vmatprep.subr.mxu0 0.0
  %3756 = vmatpush1.msra.mxu0 %v3734
  %3757 = vmatprep.subr.mxu0 0.0
  %3758 = vmatpush1.msra.mxu0 0.0
  %3759 = vmatprep.subr.mxu0 0.0
  %3760 = vmatpush1.msra.mxu0 0.0
  %3761 = vmatprep.subr.mxu0 0.0
  %3762 = vmatpush1.msra.mxu0 0.0
  %3763 = vmatprep.subr.mxu0 0.0
  %3764 = vmatpush1.msra.mxu0 0.0
  %3765 = vmatprep.subr.mxu0 0.0
  %3766 = vmatpush1.msra.mxu0 0.0
  %3767 = vmatprep.subr.mxu0 0.0
  %3768 = vmatpush1.msra.mxu0 0.0
  %3769 = vmatprep.subr.mxu0 0.0
  %3770 = vmatpush1.msra.mxu0 0.0
  %3771 = vmatprep.subr.mxu0 0.0
  %3772 = vmatpush1.msra.mxu0 0.0
  %3773 = vmatprep.subr.mxu0 0.0
  %3774 = vmatpush1.msra.mxu0 0.0
  %3775 = vmatprep.subr.mxu0 0.0
  %3776 = vmatpush1.msra.mxu0 0.0
  %3777 = vmatprep.subr.mxu0 0.0
  %3778 = vmatpush1.msra.mxu0 0.0
  %3779 = vmatprep.subr.mxu0 0.0
  %3780 = vmatpush1.msra.mxu0 0.0
  %3781 = vmatprep.subr.mxu0 0.0
  %3782 = vmatpush1.msra.mxu0 0.0
  %3783 = vmatprep.subr.mxu0 0.0
  %3784 = vmatpush1.msra.mxu0 0.0
  %3785 = vmatprep.subr.mxu0 0.0
  %3786 = vmatpush1.msra.mxu0 0.0
  %3787 = vmatprep.subr.mxu0 0.0
  %3788 = vmatpush1.msra.mxu0 0.0
  %3789 = vmatprep.subr.mxu0 0.0
  %3790 = vmatpush1.msra.mxu0 0.0
  %3791 = vmatprep.subr.mxu0 0.0
  %3792 = vmatpush1.msra.mxu0 0.0
  %3793 = vmatprep.subr.mxu0 0.0
  %3794 = vmatpush1.msra.mxu0 0.0
  %3795 = vmatprep.subr.mxu0 0.0
  %3796 = vmatpush1.msra.mxu0 0.0
  %3797 = vmatprep.subr.mxu0 0.0
  %3798 = vmatpush1.msra.mxu0 0.0
  %3799 = vmatprep.subr.mxu0 0.0
  %3800 = vmatpush1.msra.mxu0 0.0
  %3801 = vmatprep.subr.mxu0 0.0
  %3802 = vmatpush1.msra.mxu0 0.0
  %3803 = vmatprep.subr.mxu0 0.0
  %3804 = vmatpush1.msra.mxu0 0.0
  %3805 = vmatprep.subr.mxu0 0.0
  %3806 = vmatpush1.msra.mxu0 0.0
  %3807 = vmatprep.subr.mxu0 0.0
  %3808 = vmatpush1.msra.mxu0 0.0
  %3809 = vmatprep.subr.mxu0 0.0
  %3810 = vmatpush1.msra.mxu0 0.0
  %3811 = vmatprep.subr.mxu0 0.0
  %3812 = vmatpush1.msra.mxu0 0.0
  %3813 = vmatprep.mubr.f32.mxu0 0.0
  %3814 = vmatmul.mubr.f32.gmra.mrb[0].mxu0 %v3744
  %v3815 = vpop.f32.mrb[0].mxu0
  %v3816 = vadd.f32 %v3741, %v3815
  %v3817 = vpop.f32.mrb[0].mxu0
  %3818 = vmatprep.mubr.f32.mxu0 0.0
  %3819 = vmatmul.mubr.f32.gmra.mrb[0].mxu0 %v3747
  %v3820 = vpop.f32.mrb[0].mxu0
  %v3821 = vadd.f32 %v3741, %v3820
  %v3822 = vpop.f32.mrb[0].mxu0
  %3823 = vdwg.mxu0
  %3824 = vrot.lane.b32.xlu0 %v3629, 96
  %v3825 = vpop.permute.xlu0 %3824
  %3826 = vrot.lane.b32.xlu0 %v3630, 96
  %v3827 = vpop.permute.xlu0 %3826
  %3828 = vrot.lane.b32.xlu0 %v3631, 96
  %v3829 = vpop.permute.xlu0 %3828
  %3830 = vrot.lane.b32.xlu0 %v3632, 96
  %v3831 = vpop.permute.xlu0 %3830
  %3836 = vrot.lane.b32.xlu0 %v3637, 96
  %v3837 = vpop.permute.xlu0 %3836
  %v3840 = vsel %vm162, %v3621, 0
  %v3843 = vsel %vm162, %v3622, 0
  %3845 = vmatprep.subr.mxu0 0.0
  %3846 = vmatpush1.msra.mxu0 %v3825
  %3847 = vmatprep.subr.mxu0 0.0
  %3848 = vmatpush1.msra.mxu0 %v3827
  %3849 = vmatprep.subr.mxu0 0.0
  %3850 = vmatpush1.msra.mxu0 %v3829
  %3851 = vmatprep.subr.mxu0 0.0
  %3852 = vmatpush1.msra.mxu0 %v3831
  %3853 = vmatprep.subr.mxu0 0.0
  %3854 = vmatpush1.msra.mxu0 0.0
  %3855 = vmatprep.subr.mxu0 0.0
  %3856 = vmatpush1.msra.mxu0 0.0
  %3857 = vmatprep.subr.mxu0 0.0
  %3858 = vmatpush1.msra.mxu0 0.0
  %3859 = vmatprep.subr.mxu0 0.0
  %3860 = vmatpush1.msra.mxu0 0.0
  %3861 = vmatprep.subr.mxu0 0.0
  %3862 = vmatpush1.msra.mxu0 0.0
  %3863 = vmatprep.subr.mxu0 0.0
  %3864 = vmatpush1.msra.mxu0 0.0
  %3865 = vmatprep.subr.mxu0 0.0
  %3866 = vmatpush1.msra.mxu0 0.0
  %3867 = vmatprep.subr.mxu0 0.0
  %3868 = vmatpush1.msra.mxu0 0.0
  %3869 = vmatprep.subr.mxu0 0.0
  %3870 = vmatpush1.msra.mxu0 0.0
  %3871 = vmatprep.subr.mxu0 0.0
  %3872 = vmatpush1.msra.mxu0 0.0
  %3873 = vmatprep.subr.mxu0 0.0
  %3874 = vmatpush1.msra.mxu0 0.0
  %3875 = vmatprep.subr.mxu0 0.0
  %3876 = vmatpush1.msra.mxu0 0.0
  %3877 = vmatprep.subr.mxu0 0.0
  %3878 = vmatpush1.msra.mxu0 0.0
  %3879 = vmatprep.subr.mxu0 0.0
  %3880 = vmatpush1.msra.mxu0 0.0
  %3881 = vmatprep.subr.mxu0 0.0
  %3882 = vmatpush1.msra.mxu0 0.0
  %3883 = vmatprep.subr.mxu0 0.0
  %3884 = vmatpush1.msra.mxu0 0.0
  %3885 = vmatprep.subr.mxu0 0.0
  %3886 = vmatpush1.msra.mxu0 0.0
  %3887 = vmatprep.subr.mxu0 0.0
  %3888 = vmatpush1.msra.mxu0 0.0
  %3889 = vmatprep.subr.mxu0 0.0
  %3890 = vmatpush1.msra.mxu0 0.0
  %3891 = vmatprep.subr.mxu0 0.0
  %3892 = vmatpush1.msra.mxu0 0.0
  %3893 = vmatprep.subr.mxu0 0.0
  %3894 = vmatpush1.msra.mxu0 0.0
  %3895 = vmatprep.subr.mxu0 0.0
  %3896 = vmatpush1.msra.mxu0 0.0
  %3897 = vmatprep.subr.mxu0 0.0
  %3898 = vmatpush1.msra.mxu0 0.0
  %3899 = vmatprep.subr.mxu0 0.0
  %3900 = vmatpush1.msra.mxu0 0.0
  %3901 = vmatprep.subr.mxu0 0.0
  %3902 = vmatpush1.msra.mxu0 0.0
  %3903 = vmatprep.subr.mxu0 0.0
  %3904 = vmatpush1.msra.mxu0 0.0
  %3905 = vmatprep.subr.mxu0 0.0
  %3906 = vmatpush1.msra.mxu0 0.0
  %3907 = vmatprep.subr.mxu0 0.0
  %3908 = vmatpush1.msra.mxu0 0.0
  %3909 = vmatprep.mubr.f32.mxu0 0.0
  %3910 = vmatmul.mubr.f32.gmra.mrb[0].mxu0 %v3840
  %v3911 = vpop.f32.mrb[0].mxu0
  %v3912 = vadd.f32 %v3837, %v3911
  %v3913 = vpop.f32.mrb[0].mxu0
  %3914 = vmatprep.mubr.f32.mxu0 0.0
  %3915 = vmatmul.mubr.f32.gmra.mrb[0].mxu0 %v3843
  %v3916 = vpop.f32.mrb[0].mxu0
  %v3917 = vadd.f32 %v3837, %v3916
  %v3918 = vpop.f32.mrb[0].mxu0
  %3919 = vdwg.mxu0
  %v3920 = vld [vmem:[%s2 + $0x360] sm:$0xff]
  %v3921 = vld [vmem:[%s2 + $0x368] sm:$0xff]
  %v3923 = vsel %vm2759, %v3705, 0
  %v3926 = vsel %vm2759, %v3710, 0
  %v3929 = vsel %vm2759, %v3715, 0
  %v3932 = vsel %vm2759, %v3720, 0
  %v3935 = vsel %vm2759, %v3816, 0
  %v3938 = vsel %vm2759, %v3821, 0
  %3940 = vmatprep.subr.mxu0 0.0
  %3941 = vmatpush1.xpose.msra.mxu0 %v3935
  %3942 = vmatprep.subr.mxu0 0.0
  %3943 = vmatpush1.xpose.msra.mxu0 %v3938
  %3944 = vmatprep.subr.mxu0 0.0
  %3945 = vmatpush1.xpose.msra.mxu0 0.0
  %3946 = vmatprep.subr.mxu0 0.0
  %3947 = vmatpush1.xpose.msra.mxu0 0.0
  %3948 = vmatprep.subr.mxu0 0.0
  %3949 = vmatpush1.xpose.msra.mxu0 0.0
  %3950 = vmatprep.subr.mxu0 0.0
  %3951 = vmatpush1.xpose.msra.mxu0 0.0
  %3952 = vmatprep.subr.mxu0 0.0
  %3953 = vmatpush1.xpose.msra.mxu0 0.0
  %3954 = vmatprep.subr.mxu0 0.0
  %3955 = vmatpush1.xpose.msra.mxu0 0.0
  %3956 = vmatprep.subr.mxu0 0.0
  %3957 = vmatpush1.xpose.msra.mxu0 0.0
  %3958 = vmatprep.subr.mxu0 0.0
  %3959 = vmatpush1.xpose.msra.mxu0 0.0
  %3960 = vmatprep.subr.mxu0 0.0
  %3961 = vmatpush1.xpose.msra.mxu0 0.0
  %3962 = vmatprep.subr.mxu0 0.0
  %3963 = vmatpush1.xpose.msra.mxu0 0.0
  %3964 = vmatprep.subr.mxu0 0.0
  %3965 = vmatpush1.xpose.msra.mxu0 0.0
  %3966 = vmatprep.subr.mxu0 0.0
  %3967 = vmatpush1.xpose.msra.mxu0 0.0
  %3968 = vmatprep.subr.mxu0 0.0
  %3969 = vmatpush1.xpose.msra.mxu0 0.0
  %3970 = vmatprep.subr.mxu0 0.0
  %3971 = vmatpush1.xpose.msra.mxu0 0.0
  %3972 = vmatprep.subr.mxu0 0.0
  %3973 = vmatpush1.xpose.msra.mxu0 0.0
  %3974 = vmatprep.subr.mxu0 0.0
  %3975 = vmatpush1.xpose.msra.mxu0 0.0
  %3976 = vmatprep.subr.mxu0 0.0
  %3977 = vmatpush1.xpose.msra.mxu0 0.0
  %3978 = vmatprep.subr.mxu0 0.0
  %3979 = vmatpush1.xpose.msra.mxu0 0.0
  %3980 = vmatprep.subr.mxu0 0.0
  %3981 = vmatpush1.xpose.msra.mxu0 0.0
  %3982 = vmatprep.subr.mxu0 0.0
  %3983 = vmatpush1.xpose.msra.mxu0 0.0
  %3984 = vmatprep.subr.mxu0 0.0
  %3985 = vmatpush1.xpose.msra.mxu0 0.0
  %3986 = vmatprep.subr.mxu0 0.0
  %3987 = vmatpush1.xpose.msra.mxu0 0.0
  %3988 = vmatprep.subr.mxu0 0.0
  %3989 = vmatpush1.xpose.msra.mxu0 0.0
  %3990 = vmatprep.subr.mxu0 0.0
  %3991 = vmatpush1.xpose.msra.mxu0 0.0
  %3992 = vmatprep.subr.mxu0 0.0
  %3993 = vmatpush1.xpose.msra.mxu0 0.0
  %3994 = vmatprep.subr.mxu0 0.0
  %3995 = vmatpush1.xpose.msra.mxu0 0.0
  %3996 = vmatprep.subr.mxu0 0.0
  %3997 = vmatpush1.xpose.msra.mxu0 0.0
  %3998 = vmatprep.subr.mxu0 0.0
  %3999 = vmatpush1.xpose.msra.mxu0 0.0
  %4000 = vmatprep.subr.mxu0 0.0
  %4001 = vmatpush1.xpose.msra.mxu0 0.0
  %4002 = vmatprep.subr.mxu0 0.0
  %4003 = vmatpush1.xpose.msra.mxu0 0.0
  %4004 = vmatprep.mubr.f32.mxu0 0.0
  %4005 = vmatmul.mubr.f32.gmra.mrb[0].mxu0 %v3923
  %v4006 = vpop.f32.mrb[0].mxu0
  %v4007 = vadd.f32 0.0, %v4006
  %v4008 = vpop.f32.mrb[0].mxu0
  %4009 = vmatprep.mubr.f32.mxu0 0.0
  %4010 = vmatmul.mubr.f32.gmra.mrb[0].mxu0 %v3926
  %v4011 = vpop.f32.mrb[0].mxu0
  %v4012 = vadd.f32 0.0, %v4011
  %v4013 = vpop.f32.mrb[0].mxu0
  %4014 = vmatprep.mubr.f32.mxu0 0.0
  %4015 = vmatmul.mubr.f32.gmra.mrb[0].mxu0 %v3929
  %v4016 = vpop.f32.mrb[0].mxu0
  %v4017 = vadd.f32 0.0, %v4016
  %v4018 = vpop.f32.mrb[0].mxu0
  %4019 = vmatprep.mubr.f32.mxu0 0.0
  %4020 = vmatmul.mubr.f32.gmra.mrb[0].mxu0 %v3932
  %v4021 = vpop.f32.mrb[0].mxu0
  %v4022 = vadd.f32 0.0, %v4021
  %v4023 = vpop.f32.mrb[0].mxu0
  %4024 = vdwg.mxu0
  %v4025 = vmul.f32 %v4007, 0.35355338
  %v4026 = vmul.f32 %v4012, 0.35355338
  %v4027 = vmul.f32 %v4017, 0.35355338
  %v4028 = vmul.f32 %v4022, 0.35355338
  %v4029 = vadd.f32 %v4025, %v3625
  %v4030 = vadd.f32 %v4026, %v3626
  %v4031 = vadd.f32 %v4027, %v3627
  %v4032 = vadd.f32 %v4028, %v3628
  %v4033 = vsel %vm1902, %v4029, -inf
  %4034 = vmax.xlane.f32.xlu0 %v4033
  %v4035 = vpop.xlane.xlu0 %4034
  %v4036 = vsel %vm1902, %v4030, -inf
  %4037 = vmax.xlane.f32.xlu0 %v4036
  %v4038 = vpop.xlane.xlu0 %4037
  %v4039 = vsel %vm1902, %v4031, -inf
  %4040 = vmax.xlane.f32.xlu0 %v4039
  %v4041 = vpop.xlane.xlu0 %4040
  %v4042 = vsel %vm1902, %v4032, -inf
  %4043 = vmax.xlane.f32.xlu0 %v4042
  %v4044 = vpop.xlane.xlu0 %4043
  %v4045 = vsub.f32 %v4029, %v4035
  %v4046 = vsub.f32 %v4030, %v4038
  %v4047 = vsub.f32 %v4031, %v4041
  %v4048 = vsub.f32 %v4032, %v4044
  %v4049 = vmul.f32 %v4045, 1.442695
  %v4050 = vpow.pop %v4049
  %v4051 = vmul.f32 %v4046, 1.442695
  %v4052 = vpow.pop %v4051
  %v4053 = vmul.f32 %v4047, 1.442695
  %v4054 = vpow.pop %v4053
  %v4055 = vmul.f32 %v4048, 1.442695
  %v4056 = vpow.pop %v4055
  %v4057 = vsel %vm1902, %v4050, 0.0
  %4058 = vadd.xlane.f32.xlu0 %v4057
  %v4059 = vpop.xlane.xlu0 %4058
  %v4060 = vsel %vm1902, %v4052, 0.0
  %4061 = vadd.xlane.f32.xlu0 %v4060
  %v4062 = vpop.xlane.xlu0 %4061
  %v4063 = vsel %vm1902, %v4054, 0.0
  %4064 = vadd.xlane.f32.xlu0 %v4063
  %v4065 = vpop.xlane.xlu0 %4064
  %v4066 = vsel %vm1902, %v4056, 0.0
  %4067 = vadd.xlane.f32.xlu0 %v4066
  %v4068 = vpop.xlane.xlu0 %4067
  %v4069 = vrcp.pop %v4059
  %v4070 = vrcp.pop %v4062
  %v4071 = vrcp.pop %v4065
  %v4072 = vrcp.pop %v4068
  %v4073 = vmul.f32 %v4050, %v4069
  %v4074 = vmul.f32 %v4052, %v4070
  %v4075 = vmul.f32 %v4054, %v4071
  %v4076 = vmul.f32 %v4056, %v4072
  %v4078 = vsel %vm1902, %v4073, 0
  %v4081 = vsel %vm1902, %v4074, 0
  %v4084 = vsel %vm1902, %v4075, 0
  %v4087 = vsel %vm1902, %v4076, 0
  %v4090 = vsel %vm1937, %v3917, 0
  %4092 = vmatprep.subr.mxu0 0.0
  %4093 = vmatpush1.msra.mxu0 %v3912
  %4094 = vmatprep.subr.mxu0 0.0
  %4095 = vmatpush1.msra.mxu0 %v4090
  %4096 = vmatprep.subr.mxu0 0.0
  %4097 = vmatpush1.msra.mxu0 0.0
  %4098 = vmatprep.subr.mxu0 0.0
  %4099 = vmatpush1.msra.mxu0 0.0
  %4100 = vmatprep.subr.mxu0 0.0
  %4101 = vmatpush1.msra.mxu0 0.0
  %4102 = vmatprep.subr.mxu0 0.0
  %4103 = vmatpush1.msra.mxu0 0.0
  %4104 = vmatprep.subr.mxu0 0.0
  %4105 = vmatpush1.msra.mxu0 0.0
  %4106 = vmatprep.subr.mxu0 0.0
  %4107 = vmatpush1.msra.mxu0 0.0
  %4108 = vmatprep.subr.mxu0 0.0
  %4109 = vmatpush1.msra.mxu0 0.0
  %4110 = vmatprep.subr.mxu0 0.0
  %4111 = vmatpush1.msra.mxu0 0.0
  %4112 = vmatprep.subr.mxu0 0.0
  %4113 = vmatpush1.msra.mxu0 0.0
  %4114 = vmatprep.subr.mxu0 0.0
  %4115 = vmatpush1.msra.mxu0 0.0
  %4116 = vmatprep.subr.mxu0 0.0
  %4117 = vmatpush1.msra.mxu0 0.0
  %4118 = vmatprep.subr.mxu0 0.0
  %4119 = vmatpush1.msra.mxu0 0.0
  %4120 = vmatprep.subr.mxu0 0.0
  %4121 = vmatpush1.msra.mxu0 0.0
  %4122 = vmatprep.subr.mxu0 0.0
  %4123 = vmatpush1.msra.mxu0 0.0
  %4124 = vmatprep.subr.mxu0 0.0
  %4125 = vmatpush1.msra.mxu0 0.0
  %4126 = vmatprep.subr.mxu0 0.0
  %4127 = vmatpush1.msra.mxu0 0.0
  %4128 = vmatprep.subr.mxu0 0.0
  %4129 = vmatpush1.msra.mxu0 0.0
  %4130 = vmatprep.subr.mxu0 0.0
  %4131 = vmatpush1.msra.mxu0 0.0
  %4132 = vmatprep.subr.mxu0 0.0
  %4133 = vmatpush1.msra.mxu0 0.0
  %4134 = vmatprep.subr.mxu0 0.0
  %4135 = vmatpush1.msra.mxu0 0.0
  %4136 = vmatprep.subr.mxu0 0.0
  %4137 = vmatpush1.msra.mxu0 0.0
  %4138 = vmatprep.subr.mxu0 0.0
  %4139 = vmatpush1.msra.mxu0 0.0
  %4140 = vmatprep.subr.mxu0 0.0
  %4141 = vmatpush1.msra.mxu0 0.0
  %4142 = vmatprep.subr.mxu0 0.0
  %4143 = vmatpush1.msra.mxu0 0.0
  %4144 = vmatprep.subr.mxu0 0.0
  %4145 = vmatpush1.msra.mxu0 0.0
  %4146 = vmatprep.subr.mxu0 0.0
  %4147 = vmatpush1.msra.mxu0 0.0
  %4148 = vmatprep.subr.mxu0 0.0
  %4149 = vmatpush1.msra.mxu0 0.0
  %4150 = vmatprep.subr.mxu0 0.0
  %4151 = vmatpush1.msra.mxu0 0.0
  %4152 = vmatprep.subr.mxu0 0.0
  %4153 = vmatpush1.msra.mxu0 0.0
  %4154 = vmatprep.subr.mxu0 0.0
  %4155 = vmatpush1.msra.mxu0 0.0
  %4156 = vmatprep.mubr.f32.mxu0 0.0
  %4157 = vmatmul.mubr.f32.gmra.mrb[0].mxu0 %v4078
  %v4158 = vpop.f32.mrb[0].mxu0
  %v4159 = vadd.f32 0.0, %v4158
  %v4160 = vpop.f32.mrb[0].mxu0
  %4161 = vmatprep.mubr.f32.mxu0 0.0
  %4162 = vmatmul.mubr.f32.gmra.mrb[0].mxu0 %v4081
  %v4163 = vpop.f32.mrb[0].mxu0
  %v4164 = vadd.f32 0.0, %v4163
  %v4165 = vpop.f32.mrb[0].mxu0
  %4166 = vmatprep.mubr.f32.mxu0 0.0
  %4167 = vmatmul.mubr.f32.gmra.mrb[0].mxu0 %v4084
  %v4168 = vpop.f32.mrb[0].mxu0
  %v4169 = vadd.f32 0.0, %v4168
  %v4170 = vpop.f32.mrb[0].mxu0
  %4171 = vmatprep.mubr.f32.mxu0 0.0
  %4172 = vmatmul.mubr.f32.gmra.mrb[0].mxu0 %v4087
  %v4173 = vpop.f32.mrb[0].mxu0
  %v4174 = vadd.f32 0.0, %v4173
  %v4175 = vpop.f32.mrb[0].mxu0
  %4176 = vdwg.mxu0
  %4177 = vrot.lane.b32.xlu0 %v3705, 120
  %v4178 = vpop.permute.xlu0 %4177
  %4179 = vrot.lane.b32.xlu0 %v3710, 120
  %v4180 = vpop.permute.xlu0 %4179
  %4181 = vrot.lane.b32.xlu0 %v3715, 120
  %v4182 = vpop.permute.xlu0 %4181
  %4183 = vrot.lane.b32.xlu0 %v3720, 120
  %v4184 = vpop.permute.xlu0 %4183
  %4185 = vrot.lane.b32.xlu0 %v3816, 120
  %v4186 = vpop.permute.xlu0 %4185
  %4187 = vrot.lane.b32.xlu0 %v3821, 120
  %v4188 = vpop.permute.xlu0 %4187
  %v4189 = vsel %vm2759, %v4178, 0
  %v4191 = vsel %vm2759, %v4180, 0
  %v4193 = vsel %vm2759, %v4182, 0
  %v4195 = vsel %vm2759, %v4184, 0
  %v4197 = vsel %vm2759, %v4186, 0
  %v4199 = vsel %vm2759, %v4188, 0
  %4201 = vmatprep.subr.mxu0 0.0
  %4202 = vmatpush1.xpose.msra.mxu0 %v4197
  %4203 = vmatprep.subr.mxu0 0.0
  %4204 = vmatpush1.xpose.msra.mxu0 %v4199
  %4205 = vmatprep.subr.mxu0 0.0
  %4206 = vmatpush1.xpose.msra.mxu0 0.0
  %4207 = vmatprep.subr.mxu0 0.0
  %4208 = vmatpush1.xpose.msra.mxu0 0.0
  %4209 = vmatprep.subr.mxu0 0.0
  %4210 = vmatpush1.xpose.msra.mxu0 0.0
  %4211 = vmatprep.subr.mxu0 0.0
  %4212 = vmatpush1.xpose.msra.mxu0 0.0
  %4213 = vmatprep.subr.mxu0 0.0
  %4214 = vmatpush1.xpose.msra.mxu0 0.0
  %4215 = vmatprep.subr.mxu0 0.0
  %4216 = vmatpush1.xpose.msra.mxu0 0.0
  %4217 = vmatprep.subr.mxu0 0.0
  %4218 = vmatpush1.xpose.msra.mxu0 0.0
  %4219 = vmatprep.subr.mxu0 0.0
  %4220 = vmatpush1.xpose.msra.mxu0 0.0
  %4221 = vmatprep.subr.mxu0 0.0
  %4222 = vmatpush1.xpose.msra.mxu0 0.0
  %4223 = vmatprep.subr.mxu0 0.0
  %4224 = vmatpush1.xpose.msra.mxu0 0.0
  %4225 = vmatprep.subr.mxu0 0.0
  %4226 = vmatpush1.xpose.msra.mxu0 0.0
  %4227 = vmatprep.subr.mxu0 0.0
  %4228 = vmatpush1.xpose.msra.mxu0 0.0
  %4229 = vmatprep.subr.mxu0 0.0
  %4230 = vmatpush1.xpose.msra.mxu0 0.0
  %4231 = vmatprep.subr.mxu0 0.0
  %4232 = vmatpush1.xpose.msra.mxu0 0.0
  %4233 = vmatprep.subr.mxu0 0.0
  %4234 = vmatpush1.xpose.msra.mxu0 0.0
  %4235 = vmatprep.subr.mxu0 0.0
  %4236 = vmatpush1.xpose.msra.mxu0 0.0
  %4237 = vmatprep.subr.mxu0 0.0
  %4238 = vmatpush1.xpose.msra.mxu0 0.0
  %4239 = vmatprep.subr.mxu0 0.0
  %4240 = vmatpush1.xpose.msra.mxu0 0.0
  %4241 = vmatprep.subr.mxu0 0.0
  %4242 = vmatpush1.xpose.msra.mxu0 0.0
  %4243 = vmatprep.subr.mxu0 0.0
  %4244 = vmatpush1.xpose.msra.mxu0 0.0
  %4245 = vmatprep.subr.mxu0 0.0
  %4246 = vmatpush1.xpose.msra.mxu0 0.0
  %4247 = vmatprep.subr.mxu0 0.0
  %4248 = vmatpush1.xpose.msra.mxu0 0.0
  %4249 = vmatprep.subr.mxu0 0.0
  %4250 = vmatpush1.xpose.msra.mxu0 0.0
  %4251 = vmatprep.subr.mxu0 0.0
  %4252 = vmatpush1.xpose.msra.mxu0 0.0
  %4253 = vmatprep.subr.mxu0 0.0
  %4254 = vmatpush1.xpose.msra.mxu0 0.0
  %4255 = vmatprep.subr.mxu0 0.0
  %4256 = vmatpush1.xpose.msra.mxu0 0.0
  %4257 = vmatprep.subr.mxu0 0.0
  %4258 = vmatpush1.xpose.msra.mxu0 0.0
  %4259 = vmatprep.subr.mxu0 0.0
  %4260 = vmatpush1.xpose.msra.mxu0 0.0
  %4261 = vmatprep.subr.mxu0 0.0
  %4262 = vmatpush1.xpose.msra.mxu0 0.0
  %4263 = vmatprep.subr.mxu0 0.0
  %4264 = vmatpush1.xpose.msra.mxu0 0.0
  %4265 = vmatprep.mubr.f32.mxu0 0.0
  %4266 = vmatmul.mubr.f32.gmra.mrb[0].mxu0 %v4189
  %v4267 = vpop.f32.mrb[0].mxu0
  %v4268 = vadd.f32 0.0, %v4267
  %v4269 = vpop.f32.mrb[0].mxu0
  %4270 = vmatprep.mubr.f32.mxu0 0.0
  %4271 = vmatmul.mubr.f32.gmra.mrb[0].mxu0 %v4191
  %v4272 = vpop.f32.mrb[0].mxu0
  %v4273 = vadd.f32 0.0, %v4272
  %v4274 = vpop.f32.mrb[0].mxu0
  %4275 = vmatprep.mubr.f32.mxu0 0.0
  %4276 = vmatmul.mubr.f32.gmra.mrb[0].mxu0 %v4193
  %v4277 = vpop.f32.mrb[0].mxu0
  %v4278 = vadd.f32 0.0, %v4277
  %v4279 = vpop.f32.mrb[0].mxu0
  %4280 = vmatprep.mubr.f32.mxu0 0.0
  %4281 = vmatmul.mubr.f32.gmra.mrb[0].mxu0 %v4195
  %v4282 = vpop.f32.mrb[0].mxu0
  %v4283 = vadd.f32 0.0, %v4282
  %v4284 = vpop.f32.mrb[0].mxu0
  %4285 = vdwg.mxu0
  %v4286 = vmul.f32 %v4268, 0.35355338
  %v4287 = vmul.f32 %v4273, 0.35355338
  %v4288 = vmul.f32 %v4278, 0.35355338
  %v4289 = vmul.f32 %v4283, 0.35355338
  %v4290 = vadd.f32 %v4286, %v3625
  %v4291 = vadd.f32 %v4287, %v3626
  %v4292 = vadd.f32 %v4288, %v3627
  %v4293 = vadd.f32 %v4289, %v3628
  %v4294 = vsel %vm1902, %v4290, -inf
  %4295 = vmax.xlane.f32.xlu0 %v4294
  %v4296 = vpop.xlane.xlu0 %4295
  %v4297 = vsel %vm1902, %v4291, -inf
  %4298 = vmax.xlane.f32.xlu0 %v4297
  %v4299 = vpop.xlane.xlu0 %4298
  %v4300 = vsel %vm1902, %v4292, -inf
  %4301 = vmax.xlane.f32.xlu0 %v4300
  %v4302 = vpop.xlane.xlu0 %4301
  %v4303 = vsel %vm1902, %v4293, -inf
  %4304 = vmax.xlane.f32.xlu0 %v4303
  %v4305 = vpop.xlane.xlu0 %4304
  %v4306 = vsub.f32 %v4290, %v4296
  %v4307 = vsub.f32 %v4291, %v4299
  %v4308 = vsub.f32 %v4292, %v4302
  %v4309 = vsub.f32 %v4293, %v4305
  %v4310 = vmul.f32 %v4306, 1.442695
  %v4311 = vpow.pop %v4310
  %v4312 = vmul.f32 %v4307, 1.442695
  %v4313 = vpow.pop %v4312
  %v4314 = vmul.f32 %v4308, 1.442695
  %v4315 = vpow.pop %v4314
  %v4316 = vmul.f32 %v4309, 1.442695
  %v4317 = vpow.pop %v4316
  %v4318 = vsel %vm1902, %v4311, 0.0
  %4319 = vadd.xlane.f32.xlu0 %v4318
  %v4320 = vpop.xlane.xlu0 %4319
  %v4321 = vsel %vm1902, %v4313, 0.0
  %4322 = vadd.xlane.f32.xlu0 %v4321
  %v4323 = vpop.xlane.xlu0 %4322
  %v4324 = vsel %vm1902, %v4315, 0.0
  %4325 = vadd.xlane.f32.xlu0 %v4324
  %v4326 = vpop.xlane.xlu0 %4325
  %v4327 = vsel %vm1902, %v4317, 0.0
  %4328 = vadd.xlane.f32.xlu0 %v4327
  %v4329 = vpop.xlane.xlu0 %4328
  %v4330 = vrcp.pop %v4320
  %v4331 = vrcp.pop %v4323
  %v4332 = vrcp.pop %v4326
  %v4333 = vrcp.pop %v4329
  %v4334 = vmul.f32 %v4311, %v4330
  %v4335 = vmul.f32 %v4313, %v4331
  %v4336 = vmul.f32 %v4315, %v4332
  %v4337 = vmul.f32 %v4317, %v4333
  %4339 = vrot.lane.b32.xlu0 %v3912, 120
  %v4340 = vpop.permute.xlu0 %4339
  %4341 = vrot.lane.b32.xlu0 %v3917, 120
  %v4342 = vpop.permute.xlu0 %4341
  %v4345 = vsel %vm1902, %v4334, 0
  %v4348 = vsel %vm1902, %v4335, 0
  %v4351 = vsel %vm1902, %v4336, 0
  %v4354 = vsel %vm1902, %v4337, 0
  %v4356 = vsel %vm1937, %v4342, 0
  %4358 = vmatprep.subr.mxu0 0.0
  %4359 = vmatpush1.msra.mxu0 %v4340
  %4360 = vmatprep.subr.mxu0 0.0
  %4361 = vmatpush1.msra.mxu0 %v4356
  %4362 = vmatprep.subr.mxu0 0.0
  %4363 = vmatpush1.msra.mxu0 0.0
  %4364 = vmatprep.subr.mxu0 0.0
  %4365 = vmatpush1.msra.mxu0 0.0
  %4366 = vmatprep.subr.mxu0 0.0
  %4367 = vmatpush1.msra.mxu0 0.0
  %4368 = vmatprep.subr.mxu0 0.0
  %4369 = vmatpush1.msra.mxu0 0.0
  %4370 = vmatprep.subr.mxu0 0.0
  %4371 = vmatpush1.msra.mxu0 0.0
  %4372 = vmatprep.subr.mxu0 0.0
  %4373 = vmatpush1.msra.mxu0 0.0
  %4374 = vmatprep.subr.mxu0 0.0
  %4375 = vmatpush1.msra.mxu0 0.0
  %4376 = vmatprep.subr.mxu0 0.0
  %4377 = vmatpush1.msra.mxu0 0.0
  %4378 = vmatprep.subr.mxu0 0.0
  %4379 = vmatpush1.msra.mxu0 0.0
  %4380 = vmatprep.subr.mxu0 0.0
  %4381 = vmatpush1.msra.mxu0 0.0
  %4382 = vmatprep.subr.mxu0 0.0
  %4383 = vmatpush1.msra.mxu0 0.0
  %4384 = vmatprep.subr.mxu0 0.0
  %4385 = vmatpush1.msra.mxu0 0.0
  %4386 = vmatprep.subr.mxu0 0.0
  %4387 = vmatpush1.msra.mxu0 0.0
  %4388 = vmatprep.subr.mxu0 0.0
  %4389 = vmatpush1.msra.mxu0 0.0
  %4390 = vmatprep.subr.mxu0 0.0
  %4391 = vmatpush1.msra.mxu0 0.0
  %4392 = vmatprep.subr.mxu0 0.0
  %4393 = vmatpush1.msra.mxu0 0.0
  %4394 = vmatprep.subr.mxu0 0.0
  %4395 = vmatpush1.msra.mxu0 0.0
  %4396 = vmatprep.subr.mxu0 0.0
  %4397 = vmatpush1.msra.mxu0 0.0
  %4398 = vmatprep.subr.mxu0 0.0
  %4399 = vmatpush1.msra.mxu0 0.0
  %4400 = vmatprep.subr.mxu0 0.0
  %4401 = vmatpush1.msra.mxu0 0.0
  %4402 = vmatprep.subr.mxu0 0.0
  %4403 = vmatpush1.msra.mxu0 0.0
  %4404 = vmatprep.subr.mxu0 0.0
  %4405 = vmatpush1.msra.mxu0 0.0
  %4406 = vmatprep.subr.mxu0 0.0
  %4407 = vmatpush1.msra.mxu0 0.0
  %4408 = vmatprep.subr.mxu0 0.0
  %4409 = vmatpush1.msra.mxu0 0.0
  %4410 = vmatprep.subr.mxu0 0.0
  %4411 = vmatpush1.msra.mxu0 0.0
  %4412 = vmatprep.subr.mxu0 0.0
  %4413 = vmatpush1.msra.mxu0 0.0
  %4414 = vmatprep.subr.mxu0 0.0
  %4415 = vmatpush1.msra.mxu0 0.0
  %4416 = vmatprep.subr.mxu0 0.0
  %4417 = vmatpush1.msra.mxu0 0.0
  %4418 = vmatprep.subr.mxu0 0.0
  %4419 = vmatpush1.msra.mxu0 0.0
  %4420 = vmatprep.subr.mxu0 0.0
  %4421 = vmatpush1.msra.mxu0 0.0
  %4422 = vmatprep.mubr.f32.mxu0 0.0
  %4423 = vmatmul.mubr.f32.gmra.mrb[0].mxu0 %v4345
  %v4424 = vpop.f32.mrb[0].mxu0
  %v4425 = vadd.f32 0.0, %v4424
  %v4426 = vpop.f32.mrb[0].mxu0
  %4427 = vmatprep.mubr.f32.mxu0 0.0
  %4428 = vmatmul.mubr.f32.gmra.mrb[0].mxu0 %v4348
  %v4429 = vpop.f32.mrb[0].mxu0
  %v4430 = vadd.f32 0.0, %v4429
  %v4431 = vpop.f32.mrb[0].mxu0
  %4432 = vmatprep.mubr.f32.mxu0 0.0
  %4433 = vmatmul.mubr.f32.gmra.mrb[0].mxu0 %v4351
  %v4434 = vpop.f32.mrb[0].mxu0
  %v4435 = vadd.f32 0.0, %v4434
  %v4436 = vpop.f32.mrb[0].mxu0
  %4437 = vmatprep.mubr.f32.mxu0 0.0
  %4438 = vmatmul.mubr.f32.gmra.mrb[0].mxu0 %v4354
  %v4439 = vpop.f32.mrb[0].mxu0
  %v4440 = vadd.f32 0.0, %v4439
  %v4441 = vpop.f32.mrb[0].mxu0
  %4442 = vdwg.mxu0
  %v4444 = vsel %vm2759, %v4425, 0
  %v4447 = vsel %vm2759, %v4430, 0
  %v4450 = vsel %vm2759, %v4435, 0
  %v4453 = vsel %vm2759, %v4440, 0
  %4455 = vmatprep.subr.mxu0 0.0
  %4456 = vmatpush1.msra.mxu0 %v3921
  %4457 = vmatprep.subr.mxu0 0.0
  %4458 = vmatpush1.msra.mxu0 0.0
  %4459 = vmatprep.subr.mxu0 0.0
  %4460 = vmatpush1.msra.mxu0 0.0
  %4461 = vmatprep.subr.mxu0 0.0
  %4462 = vmatpush1.msra.mxu0 0.0
  %4463 = vmatprep.subr.mxu0 0.0
  %4464 = vmatpush1.msra.mxu0 0.0
  %4465 = vmatprep.subr.mxu0 0.0
  %4466 = vmatpush1.msra.mxu0 0.0
  %4467 = vmatprep.subr.mxu0 0.0
  %4468 = vmatpush1.msra.mxu0 0.0
  %4469 = vmatprep.subr.mxu0 0.0
  %4470 = vmatpush1.msra.mxu0 0.0
  %4471 = vmatprep.subr.mxu0 0.0
  %4472 = vmatpush1.msra.mxu0 0.0
  %4473 = vmatprep.subr.mxu0 0.0
  %4474 = vmatpush1.msra.mxu0 0.0
  %4475 = vmatprep.subr.mxu0 0.0
  %4476 = vmatpush1.msra.mxu0 0.0
  %4477 = vmatprep.subr.mxu0 0.0
  %4478 = vmatpush1.msra.mxu0 0.0
  %4479 = vmatprep.subr.mxu0 0.0
  %4480 = vmatpush1.msra.mxu0 0.0
  %4481 = vmatprep.subr.mxu0 0.0
  %4482 = vmatpush1.msra.mxu0 0.0
  %4483 = vmatprep.subr.mxu0 0.0
  %4484 = vmatpush1.msra.mxu0 0.0
  %4485 = vmatprep.subr.mxu0 0.0
  %4486 = vmatpush1.msra.mxu0 0.0
  %4487 = vmatprep.subr.mxu0 0.0
  %4488 = vmatpush1.msra.mxu0 0.0
  %4489 = vmatprep.subr.mxu0 0.0
  %4490 = vmatpush1.msra.mxu0 0.0
  %4491 = vmatprep.subr.mxu0 0.0
  %4492 = vmatpush1.msra.mxu0 0.0
  %4493 = vmatprep.subr.mxu0 0.0
  %4494 = vmatpush1.msra.mxu0 0.0
  %4495 = vmatprep.subr.mxu0 0.0
  %4496 = vmatpush1.msra.mxu0 0.0
  %4497 = vmatprep.subr.mxu0 0.0
  %4498 = vmatpush1.msra.mxu0 0.0
  %4499 = vmatprep.subr.mxu0 0.0
  %4500 = vmatpush1.msra.mxu0 0.0
  %4501 = vmatprep.subr.mxu0 0.0
  %4502 = vmatpush1.msra.mxu0 0.0
  %4503 = vmatprep.subr.mxu0 0.0
  %4504 = vmatpush1.msra.mxu0 0.0
  %4505 = vmatprep.subr.mxu0 0.0
  %4506 = vmatpush1.msra.mxu0 0.0
  %4507 = vmatprep.subr.mxu0 0.0
  %4508 = vmatpush1.msra.mxu0 0.0
  %4509 = vmatprep.subr.mxu0 0.0
  %4510 = vmatpush1.msra.mxu0 0.0
  %4511 = vmatprep.subr.mxu0 0.0
  %4512 = vmatpush1.msra.mxu0 0.0
  %4513 = vmatprep.subr.mxu0 0.0
  %4514 = vmatpush1.msra.mxu0 0.0
  %4515 = vmatprep.subr.mxu0 0.0
  %4516 = vmatpush1.msra.mxu0 0.0
  %4517 = vmatprep.subr.mxu0 0.0
  %4518 = vmatpush1.msra.mxu0 0.0
  %4519 = vmatprep.mubr.f32.mxu0 0.0
  %4520 = vmatmul.mubr.f32.gmra.mrb[0].mxu0 %v4444
  %v4521 = vpop.f32.mrb[0].mxu0
  %v4522 = vadd.f32 0.0, %v4521
  %v4523 = vpop.f32.mrb[0].mxu0
  %4524 = vmatprep.mubr.f32.mxu0 0.0
  %4525 = vmatmul.mubr.f32.gmra.mrb[0].mxu0 %v4447
  %v4526 = vpop.f32.mrb[0].mxu0
  %v4527 = vadd.f32 0.0, %v4526
  %v4528 = vpop.f32.mrb[0].mxu0
  %4529 = vmatprep.mubr.f32.mxu0 0.0
  %4530 = vmatmul.mubr.f32.gmra.mrb[0].mxu0 %v4450
  %v4531 = vpop.f32.mrb[0].mxu0
  %v4532 = vadd.f32 0.0, %v4531
  %v4533 = vpop.f32.mrb[0].mxu0
  %4534 = vmatprep.mubr.f32.mxu0 0.0
  %4535 = vmatmul.mubr.f32.gmra.mrb[0].mxu0 %v4453
  %v4536 = vpop.f32.mrb[0].mxu0
  %v4537 = vadd.f32 0.0, %v4536
  %v4538 = vpop.f32.mrb[0].mxu0
  %4539 = vdwg.mxu0
  %v4541 = vsel %vm2759, %v4159, 0
  %v4544 = vsel %vm2759, %v4164, 0
  %v4547 = vsel %vm2759, %v4169, 0
  %v4550 = vsel %vm2759, %v4174, 0
  %4552 = vmatprep.subr.mxu0 0.0
  %4553 = vmatpush1.msra.mxu0 %v3920
  %4554 = vmatprep.subr.mxu0 0.0
  %4555 = vmatpush1.msra.mxu0 0.0
  %4556 = vmatprep.subr.mxu0 0.0
  %4557 = vmatpush1.msra.mxu0 0.0
  %4558 = vmatprep.subr.mxu0 0.0
  %4559 = vmatpush1.msra.mxu0 0.0
  %4560 = vmatprep.subr.mxu0 0.0
  %4561 = vmatpush1.msra.mxu0 0.0
  %4562 = vmatprep.subr.mxu0 0.0
  %4563 = vmatpush1.msra.mxu0 0.0
  %4564 = vmatprep.subr.mxu0 0.0
  %4565 = vmatpush1.msra.mxu0 0.0
  %4566 = vmatprep.subr.mxu0 0.0
  %4567 = vmatpush1.msra.mxu0 0.0
  %4568 = vmatprep.subr.mxu0 0.0
  %4569 = vmatpush1.msra.mxu0 0.0
  %4570 = vmatprep.subr.mxu0 0.0
  %4571 = vmatpush1.msra.mxu0 0.0
  %4572 = vmatprep.subr.mxu0 0.0
  %4573 = vmatpush1.msra.mxu0 0.0
  %4574 = vmatprep.subr.mxu0 0.0
  %4575 = vmatpush1.msra.mxu0 0.0
  %4576 = vmatprep.subr.mxu0 0.0
  %4577 = vmatpush1.msra.mxu0 0.0
  %4578 = vmatprep.subr.mxu0 0.0
  %4579 = vmatpush1.msra.mxu0 0.0
  %4580 = vmatprep.subr.mxu0 0.0
  %4581 = vmatpush1.msra.mxu0 0.0
  %4582 = vmatprep.subr.mxu0 0.0
  %4583 = vmatpush1.msra.mxu0 0.0
  %4584 = vmatprep.subr.mxu0 0.0
  %4585 = vmatpush1.msra.mxu0 0.0
  %4586 = vmatprep.subr.mxu0 0.0
  %4587 = vmatpush1.msra.mxu0 0.0
  %4588 = vmatprep.subr.mxu0 0.0
  %4589 = vmatpush1.msra.mxu0 0.0
  %4590 = vmatprep.subr.mxu0 0.0
  %4591 = vmatpush1.msra.mxu0 0.0
  %4592 = vmatprep.subr.mxu0 0.0
  %4593 = vmatpush1.msra.mxu0 0.0
  %4594 = vmatprep.subr.mxu0 0.0
  %4595 = vmatpush1.msra.mxu0 0.0
  %4596 = vmatprep.subr.mxu0 0.0
  %4597 = vmatpush1.msra.mxu0 0.0
  %4598 = vmatprep.subr.mxu0 0.0
  %4599 = vmatpush1.msra.mxu0 0.0
  %4600 = vmatprep.subr.mxu0 0.0
  %4601 = vmatpush1.msra.mxu0 0.0
  %4602 = vmatprep.subr.mxu0 0.0
  %4603 = vmatpush1.msra.mxu0 0.0
  %4604 = vmatprep.subr.mxu0 0.0
  %4605 = vmatpush1.msra.mxu0 0.0
  %4606 = vmatprep.subr.mxu0 0.0
  %4607 = vmatpush1.msra.mxu0 0.0
  %4608 = vmatprep.subr.mxu0 0.0
  %4609 = vmatpush1.msra.mxu0 0.0
  %4610 = vmatprep.subr.mxu0 0.0
  %4611 = vmatpush1.msra.mxu0 0.0
  %4612 = vmatprep.subr.mxu0 0.0
  %4613 = vmatpush1.msra.mxu0 0.0
  %4614 = vmatprep.subr.mxu0 0.0
  %4615 = vmatpush1.msra.mxu0 0.0
  %4616 = vmatprep.mubr.f32.mxu0 0.0
  %4617 = vmatmul.mubr.f32.gmra.mrb[0].mxu0 %v4541
  %v4618 = vpop.f32.mrb[0].mxu0
  %v4619 = vadd.f32 %v4522, %v4618
  %v4620 = vpop.f32.mrb[0].mxu0
  %4621 = vmatprep.mubr.f32.mxu0 0.0
  %4622 = vmatmul.mubr.f32.gmra.mrb[0].mxu0 %v4544
  %v4623 = vpop.f32.mrb[0].mxu0
  %v4624 = vadd.f32 %v4527, %v4623
  %v4625 = vpop.f32.mrb[0].mxu0
  %4626 = vmatprep.mubr.f32.mxu0 0.0
  %4627 = vmatmul.mubr.f32.gmra.mrb[0].mxu0 %v4547
  %v4628 = vpop.f32.mrb[0].mxu0
  %v4629 = vadd.f32 %v4532, %v4628
  %v4630 = vpop.f32.mrb[0].mxu0
  %4631 = vmatprep.mubr.f32.mxu0 0.0
  %4632 = vmatmul.mubr.f32.gmra.mrb[0].mxu0 %v4550
  %v4633 = vpop.f32.mrb[0].mxu0
  %v4634 = vadd.f32 %v4537, %v4633
  %v4635 = vpop.f32.mrb[0].mxu0
  %4636 = vdwg.mxu0
  %v4637 = vld [vmem:[%s2 + $0x370] sm:$0x1]
  %v4638 = vlaneseq
  %v4639 = vshrl.u32 %v4638, 7
  %v4640 = vsub.s32 0, %v4639
  %v4641 = vrot.slane %v4637, %v4640
  %v4642 = vadd.f32 %v4619, %v4641
  %v4643 = vadd.f32 %v4624, %v4641
  %v4644 = vadd.f32 %v4629, %v4641
  %v4645 = vadd.f32 %v4634, %v4641
  %v4646 = vadd.f32 %v1613, %v4642
  %v4647 = vadd.f32 %v1614, %v4643
  %v4648 = vadd.f32 %v1615, %v4644
  %v4649 = vadd.f32 %v1616, %v4645
  %v4650 = vld [vmem:[%s2 + $0x3e8] sm:$0x1]
  %v4651 = vld [vmem:[%s2 + $0x3f0] sm:$0x1]
  %v4652 = vsel %vm162, %v4646, 0.0
  %4653 = vadd.xlane.f32.xlu0 %v4652
  %v4654 = vpop.xlane.xlu0 %4653
  %v4655 = vsel %vm162, %v4647, 0.0
  %4656 = vadd.xlane.f32.xlu0 %v4655
  %v4657 = vpop.xlane.xlu0 %4656
  %v4658 = vsel %vm162, %v4648, 0.0
  %4659 = vadd.xlane.f32.xlu0 %v4658
  %v4660 = vpop.xlane.xlu0 %4659
  %v4661 = vsel %vm162, %v4649, 0.0
  %4662 = vadd.xlane.f32.xlu0 %v4661
  %v4663 = vpop.xlane.xlu0 %4662
  %v4664 = vmul.f32 %v4654, %v175
  %v4665 = vmul.f32 %v4657, %v175
  %v4666 = vmul.f32 %v4660, %v175
  %v4667 = vmul.f32 %v4663, %v175
  %v4668 = vsub.f32 %v4646, %v4664
  %v4669 = vsub.f32 %v4647, %v4665
  %v4670 = vsub.f32 %v4648, %v4666
  %v4671 = vsub.f32 %v4649, %v4667
  %v4672 = vmul.f32 %v4668, %v4668
  %v4673 = vmul.f32 %v4669, %v4669
  %v4674 = vmul.f32 %v4670, %v4670
  %v4675 = vmul.f32 %v4671, %v4671
  %v4676 = vsel %vm162, %v4672, 0.0
  %4677 = vadd.xlane.f32.xlu0 %v4676
  %v4678 = vpop.xlane.xlu0 %4677
  %v4679 = vsel %vm162, %v4673, 0.0
  %4680 = vadd.xlane.f32.xlu0 %v4679
  %v4681 = vpop.xlane.xlu0 %4680
  %v4682 = vsel %vm162, %v4674, 0.0
  %4683 = vadd.xlane.f32.xlu0 %v4682
  %v4684 = vpop.xlane.xlu0 %4683
  %v4685 = vsel %vm162, %v4675, 0.0
  %4686 = vadd.xlane.f32.xlu0 %v4685
  %v4687 = vpop.xlane.xlu0 %4686
  %v4688 = vmul.f32 %v4678, %v175
  %v4689 = vmul.f32 %v4681, %v175
  %v4690 = vmul.f32 %v4684, %v175
  %v4691 = vmul.f32 %v4687, %v175
  %v4692 = vadd.f32 %v4688, 1e-05
  %v4693 = vadd.f32 %v4689, 1e-05
  %v4694 = vadd.f32 %v4690, 1e-05
  %v4695 = vadd.f32 %v4691, 1e-05
  %v4696 = vrsqrt.pop %v4692
  %v4697 = vrsqrt.pop %v4693
  %v4698 = vrsqrt.pop %v4694
  %v4699 = vrsqrt.pop %v4695
  %v4700 = vmul.f32 %v4668, %v4696
  %v4701 = vmul.f32 %v4669, %v4697
  %v4702 = vmul.f32 %v4670, %v4698
  %v4703 = vmul.f32 %v4671, %v4699
  %v4704 = vlaneseq
  %v4705 = vshrl.u32 %v4704, 7
  %v4706 = vsub.s32 0, %v4705
  %v4707 = vrot.slane %v4650, %v4706
  %v4708 = vmul.f32 %v4700, %v4707
  %v4709 = vmul.f32 %v4701, %v4707
  %v4710 = vmul.f32 %v4702, %v4707
  %v4711 = vmul.f32 %v4703, %v4707
  %v4712 = vlaneseq
  %v4713 = vshrl.u32 %v4712, 7
  %v4714 = vsub.s32 0, %v4713
  %v4715 = vrot.slane %v4651, %v4714
  %v4716 = vadd.f32 %v4708, %v4715
  %v4717 = vadd.f32 %v4709, %v4715
  %v4718 = vadd.f32 %v4710, %v4715
  %v4719 = vadd.f32 %v4711, %v4715
  %v4720 = vadd.f32 %v4716, %v1617
  %v4721 = vadd.f32 %v4717, %v1618
  %v4722 = vadd.f32 %v4718, %v1619
  %v4723 = vadd.f32 %v4719, %v1620
  %v4724 = vld [vmem:[%s2 + $0x378] sm:$0xff]
  %v4725 = vld [vmem:[%s2 + $0x380] sm:$0xff]
  %v4726 = vld [vmem:[%s2 + $0x388] sm:$0xff]
  %v4727 = vld [vmem:[%s2 + $0x390] sm:$0xff]
  %v4728 = vld [vmem:[%s2 + $0x398] sm:$0x1]
  %v4729 = vlaneseq
  %v4730 = vshrl.u32 %v4729, 7
  %v4731 = vsub.s32 0, %v4730
  %v4732 = vrot.slane %v4728, %v4731
  %4733 = vmatprep.subr.mxu0 0.0
  %4734 = vmatpush1.msra.mxu0 %v4724
  %4735 = vmatprep.subr.mxu0 0.0
  %4736 = vmatpush1.msra.mxu0 %v4725
  %4737 = vmatprep.subr.mxu0 0.0
  %4738 = vmatpush1.msra.mxu0 %v4726
  %4739 = vmatprep.subr.mxu0 0.0
  %4740 = vmatpush1.msra.mxu0 %v4727
  %4741 = vmatprep.subr.mxu0 0.0
  %4742 = vmatpush1.msra.mxu0 0.0
  %4743 = vmatprep.subr.mxu0 0.0
  %4744 = vmatpush1.msra.mxu0 0.0
  %4745 = vmatprep.subr.mxu0 0.0
  %4746 = vmatpush1.msra.mxu0 0.0
  %4747 = vmatprep.subr.mxu0 0.0
  %4748 = vmatpush1.msra.mxu0 0.0
  %4749 = vmatprep.subr.mxu0 0.0
  %4750 = vmatpush1.msra.mxu0 0.0
  %4751 = vmatprep.subr.mxu0 0.0
  %4752 = vmatpush1.msra.mxu0 0.0
  %4753 = vmatprep.subr.mxu0 0.0
  %4754 = vmatpush1.msra.mxu0 0.0
  %4755 = vmatprep.subr.mxu0 0.0
  %4756 = vmatpush1.msra.mxu0 0.0
  %4757 = vmatprep.subr.mxu0 0.0
  %4758 = vmatpush1.msra.mxu0 0.0
  %4759 = vmatprep.subr.mxu0 0.0
  %4760 = vmatpush1.msra.mxu0 0.0
  %4761 = vmatprep.subr.mxu0 0.0
  %4762 = vmatpush1.msra.mxu0 0.0
  %4763 = vmatprep.subr.mxu0 0.0
  %4764 = vmatpush1.msra.mxu0 0.0
  %4765 = vmatprep.subr.mxu0 0.0
  %4766 = vmatpush1.msra.mxu0 0.0
  %4767 = vmatprep.subr.mxu0 0.0
  %4768 = vmatpush1.msra.mxu0 0.0
  %4769 = vmatprep.subr.mxu0 0.0
  %4770 = vmatpush1.msra.mxu0 0.0
  %4771 = vmatprep.subr.mxu0 0.0
  %4772 = vmatpush1.msra.mxu0 0.0
  %4773 = vmatprep.subr.mxu0 0.0
  %4774 = vmatpush1.msra.mxu0 0.0
  %4775 = vmatprep.subr.mxu0 0.0
  %4776 = vmatpush1.msra.mxu0 0.0
  %4777 = vmatprep.subr.mxu0 0.0
  %4778 = vmatpush1.msra.mxu0 0.0
  %4779 = vmatprep.subr.mxu0 0.0
  %4780 = vmatpush1.msra.mxu0 0.0
  %4781 = vmatprep.subr.mxu0 0.0
  %4782 = vmatpush1.msra.mxu0 0.0
  %4783 = vmatprep.subr.mxu0 0.0
  %4784 = vmatpush1.msra.mxu0 0.0
  %4785 = vmatprep.subr.mxu0 0.0
  %4786 = vmatpush1.msra.mxu0 0.0
  %4787 = vmatprep.subr.mxu0 0.0
  %4788 = vmatpush1.msra.mxu0 0.0
  %4789 = vmatprep.subr.mxu0 0.0
  %4790 = vmatpush1.msra.mxu0 0.0
  %4791 = vmatprep.subr.mxu0 0.0
  %4792 = vmatpush1.msra.mxu0 0.0
  %4793 = vmatprep.subr.mxu0 0.0
  %4794 = vmatpush1.msra.mxu0 0.0
  %4795 = vmatprep.subr.mxu0 0.0
  %4796 = vmatpush1.msra.mxu0 0.0
  %4797 = vmatprep.mubr.f32.mxu0 0.0
  %4798 = vmatmul.mubr.f32.gmra.mrb[0].mxu0 %v3744
  %v4799 = vpop.f32.mrb[0].mxu0
  %v4800 = vadd.f32 %v4732, %v4799
  %v4801 = vpop.f32.mrb[0].mxu0
  %4802 = vmatprep.mubr.f32.mxu0 0.0
  %4803 = vmatmul.mubr.f32.gmra.mrb[0].mxu0 %v3747
  %v4804 = vpop.f32.mrb[0].mxu0
  %v4805 = vadd.f32 %v4732, %v4804
  %v4806 = vpop.f32.mrb[0].mxu0
  %4807 = vdwg.mxu0
  %4812 = vrot.lane.b32.xlu0 %v4724, 112
  %v4813 = vpop.permute.xlu0 %4812
  %4814 = vrot.lane.b32.xlu0 %v4725, 112
  %v4815 = vpop.permute.xlu0 %4814
  %4816 = vrot.lane.b32.xlu0 %v4726, 112
  %v4817 = vpop.permute.xlu0 %4816
  %4818 = vrot.lane.b32.xlu0 %v4727, 112
  %v4819 = vpop.permute.xlu0 %4818
  %4825 = vrot.lane.b32.xlu0 %v4732, 112
  %v4826 = vpop.permute.xlu0 %4825
  %v4829 = vsel %vm162, %v4720, 0
  %v4832 = vsel %vm162, %v4721, 0
  %v4835 = vsel %vm162, %v4722, 0
  %v4838 = vsel %vm162, %v4723, 0
  %4840 = vmatprep.subr.mxu0 0.0
  %4841 = vmatpush1.msra.mxu0 %v4813
  %4842 = vmatprep.subr.mxu0 0.0
  %4843 = vmatpush1.msra.mxu0 %v4815
  %4844 = vmatprep.subr.mxu0 0.0
  %4845 = vmatpush1.msra.mxu0 %v4817
  %4846 = vmatprep.subr.mxu0 0.0
  %4847 = vmatpush1.msra.mxu0 %v4819
  %4848 = vmatprep.subr.mxu0 0.0
  %4849 = vmatpush1.msra.mxu0 0.0
  %4850 = vmatprep.subr.mxu0 0.0
  %4851 = vmatpush1.msra.mxu0 0.0
  %4852 = vmatprep.subr.mxu0 0.0
  %4853 = vmatpush1.msra.mxu0 0.0
  %4854 = vmatprep.subr.mxu0 0.0
  %4855 = vmatpush1.msra.mxu0 0.0
  %4856 = vmatprep.subr.mxu0 0.0
  %4857 = vmatpush1.msra.mxu0 0.0
  %4858 = vmatprep.subr.mxu0 0.0
  %4859 = vmatpush1.msra.mxu0 0.0
  %4860 = vmatprep.subr.mxu0 0.0
  %4861 = vmatpush1.msra.mxu0 0.0
  %4862 = vmatprep.subr.mxu0 0.0
  %4863 = vmatpush1.msra.mxu0 0.0
  %4864 = vmatprep.subr.mxu0 0.0
  %4865 = vmatpush1.msra.mxu0 0.0
  %4866 = vmatprep.subr.mxu0 0.0
  %4867 = vmatpush1.msra.mxu0 0.0
  %4868 = vmatprep.subr.mxu0 0.0
  %4869 = vmatpush1.msra.mxu0 0.0
  %4870 = vmatprep.subr.mxu0 0.0
  %4871 = vmatpush1.msra.mxu0 0.0
  %4872 = vmatprep.subr.mxu0 0.0
  %4873 = vmatpush1.msra.mxu0 0.0
  %4874 = vmatprep.subr.mxu0 0.0
  %4875 = vmatpush1.msra.mxu0 0.0
  %4876 = vmatprep.subr.mxu0 0.0
  %4877 = vmatpush1.msra.mxu0 0.0
  %4878 = vmatprep.subr.mxu0 0.0
  %4879 = vmatpush1.msra.mxu0 0.0
  %4880 = vmatprep.subr.mxu0 0.0
  %4881 = vmatpush1.msra.mxu0 0.0
  %4882 = vmatprep.subr.mxu0 0.0
  %4883 = vmatpush1.msra.mxu0 0.0
  %4884 = vmatprep.subr.mxu0 0.0
  %4885 = vmatpush1.msra.mxu0 0.0
  %4886 = vmatprep.subr.mxu0 0.0
  %4887 = vmatpush1.msra.mxu0 0.0
  %4888 = vmatprep.subr.mxu0 0.0
  %4889 = vmatpush1.msra.mxu0 0.0
  %4890 = vmatprep.subr.mxu0 0.0
  %4891 = vmatpush1.msra.mxu0 0.0
  %4892 = vmatprep.subr.mxu0 0.0
  %4893 = vmatpush1.msra.mxu0 0.0
  %4894 = vmatprep.subr.mxu0 0.0
  %4895 = vmatpush1.msra.mxu0 0.0
  %4896 = vmatprep.subr.mxu0 0.0
  %4897 = vmatpush1.msra.mxu0 0.0
  %4898 = vmatprep.subr.mxu0 0.0
  %4899 = vmatpush1.msra.mxu0 0.0
  %4900 = vmatprep.subr.mxu0 0.0
  %4901 = vmatpush1.msra.mxu0 0.0
  %4902 = vmatprep.subr.mxu0 0.0
  %4903 = vmatpush1.msra.mxu0 0.0
  %4904 = vmatprep.mubr.f32.mxu0 0.0
  %4905 = vmatmul.mubr.f32.gmra.mrb[0].mxu0 %v4829
  %v4906 = vpop.f32.mrb[0].mxu0
  %v4907 = vadd.f32 %v4826, %v4906
  %v4908 = vpop.f32.mrb[0].mxu0
  %4909 = vmatprep.mubr.f32.mxu0 0.0
  %4910 = vmatmul.mubr.f32.gmra.mrb[0].mxu0 %v4832
  %v4911 = vpop.f32.mrb[0].mxu0
  %v4912 = vadd.f32 %v4826, %v4911
  %v4913 = vpop.f32.mrb[0].mxu0
  %4914 = vmatprep.mubr.f32.mxu0 0.0
  %4915 = vmatmul.mubr.f32.gmra.mrb[0].mxu0 %v4835
  %v4916 = vpop.f32.mrb[0].mxu0
  %v4917 = vadd.f32 %v4826, %v4916
  %v4918 = vpop.f32.mrb[0].mxu0
  %4919 = vmatprep.mubr.f32.mxu0 0.0
  %4920 = vmatmul.mubr.f32.gmra.mrb[0].mxu0 %v4838
  %v4921 = vpop.f32.mrb[0].mxu0
  %v4922 = vadd.f32 %v4826, %v4921
  %v4923 = vpop.f32.mrb[0].mxu0
  %4924 = vdwg.mxu0
  %4925 = vrot.lane.b32.xlu0 %v4724, 96
  %v4926 = vpop.permute.xlu0 %4925
  %4927 = vrot.lane.b32.xlu0 %v4725, 96
  %v4928 = vpop.permute.xlu0 %4927
  %4929 = vrot.lane.b32.xlu0 %v4726, 96
  %v4930 = vpop.permute.xlu0 %4929
  %4931 = vrot.lane.b32.xlu0 %v4727, 96
  %v4932 = vpop.permute.xlu0 %4931
  %4937 = vrot.lane.b32.xlu0 %v4732, 96
  %v4938 = vpop.permute.xlu0 %4937
  %v4941 = vsel %vm162, %v4716, 0
  %v4944 = vsel %vm162, %v4717, 0
  %v4947 = vsel %vm162, %v4718, 0
  %v4950 = vsel %vm162, %v4719, 0
  %4952 = vmatprep.subr.mxu0 0.0
  %4953 = vmatpush1.msra.mxu0 %v4926
  %4954 = vmatprep.subr.mxu0 0.0
  %4955 = vmatpush1.msra.mxu0 %v4928
  %4956 = vmatprep.subr.mxu0 0.0
  %4957 = vmatpush1.msra.mxu0 %v4930
  %4958 = vmatprep.subr.mxu0 0.0
  %4959 = vmatpush1.msra.mxu0 %v4932
  %4960 = vmatprep.subr.mxu0 0.0
  %4961 = vmatpush1.msra.mxu0 0.0
  %4962 = vmatprep.subr.mxu0 0.0
  %4963 = vmatpush1.msra.mxu0 0.0
  %4964 = vmatprep.subr.mxu0 0.0
  %4965 = vmatpush1.msra.mxu0 0.0
  %4966 = vmatprep.subr.mxu0 0.0
  %4967 = vmatpush1.msra.mxu0 0.0
  %4968 = vmatprep.subr.mxu0 0.0
  %4969 = vmatpush1.msra.mxu0 0.0
  %4970 = vmatprep.subr.mxu0 0.0
  %4971 = vmatpush1.msra.mxu0 0.0
  %4972 = vmatprep.subr.mxu0 0.0
  %4973 = vmatpush1.msra.mxu0 0.0
  %4974 = vmatprep.subr.mxu0 0.0
  %4975 = vmatpush1.msra.mxu0 0.0
  %4976 = vmatprep.subr.mxu0 0.0
  %4977 = vmatpush1.msra.mxu0 0.0
  %4978 = vmatprep.subr.mxu0 0.0
  %4979 = vmatpush1.msra.mxu0 0.0
  %4980 = vmatprep.subr.mxu0 0.0
  %4981 = vmatpush1.msra.mxu0 0.0
  %4982 = vmatprep.subr.mxu0 0.0
  %4983 = vmatpush1.msra.mxu0 0.0
  %4984 = vmatprep.subr.mxu0 0.0
  %4985 = vmatpush1.msra.mxu0 0.0
  %4986 = vmatprep.subr.mxu0 0.0
  %4987 = vmatpush1.msra.mxu0 0.0
  %4988 = vmatprep.subr.mxu0 0.0
  %4989 = vmatpush1.msra.mxu0 0.0
  %4990 = vmatprep.subr.mxu0 0.0
  %4991 = vmatpush1.msra.mxu0 0.0
  %4992 = vmatprep.subr.mxu0 0.0
  %4993 = vmatpush1.msra.mxu0 0.0
  %4994 = vmatprep.subr.mxu0 0.0
  %4995 = vmatpush1.msra.mxu0 0.0
  %4996 = vmatprep.subr.mxu0 0.0
  %4997 = vmatpush1.msra.mxu0 0.0
  %4998 = vmatprep.subr.mxu0 0.0
  %4999 = vmatpush1.msra.mxu0 0.0
  %5000 = vmatprep.subr.mxu0 0.0
  %5001 = vmatpush1.msra.mxu0 0.0
  %5002 = vmatprep.subr.mxu0 0.0
  %5003 = vmatpush1.msra.mxu0 0.0
  %5004 = vmatprep.subr.mxu0 0.0
  %5005 = vmatpush1.msra.mxu0 0.0
  %5006 = vmatprep.subr.mxu0 0.0
  %5007 = vmatpush1.msra.mxu0 0.0
  %5008 = vmatprep.subr.mxu0 0.0
  %5009 = vmatpush1.msra.mxu0 0.0
  %5010 = vmatprep.subr.mxu0 0.0
  %5011 = vmatpush1.msra.mxu0 0.0
  %5012 = vmatprep.subr.mxu0 0.0
  %5013 = vmatpush1.msra.mxu0 0.0
  %5014 = vmatprep.subr.mxu0 0.0
  %5015 = vmatpush1.msra.mxu0 0.0
  %5016 = vmatprep.mubr.f32.mxu0 0.0
  %5017 = vmatmul.mubr.f32.gmra.mrb[0].mxu0 %v4941
  %v5018 = vpop.f32.mrb[0].mxu0
  %v5019 = vadd.f32 %v4938, %v5018
  %v5020 = vpop.f32.mrb[0].mxu0
  %5021 = vmatprep.mubr.f32.mxu0 0.0
  %5022 = vmatmul.mubr.f32.gmra.mrb[0].mxu0 %v4944
  %v5023 = vpop.f32.mrb[0].mxu0
  %v5024 = vadd.f32 %v4938, %v5023
  %v5025 = vpop.f32.mrb[0].mxu0
  %5026 = vmatprep.mubr.f32.mxu0 0.0
  %5027 = vmatmul.mubr.f32.gmra.mrb[0].mxu0 %v4947
  %v5028 = vpop.f32.mrb[0].mxu0
  %v5029 = vadd.f32 %v4938, %v5028
  %v5030 = vpop.f32.mrb[0].mxu0
  %5031 = vmatprep.mubr.f32.mxu0 0.0
  %5032 = vmatmul.mubr.f32.gmra.mrb[0].mxu0 %v4950
  %v5033 = vpop.f32.mrb[0].mxu0
  %v5034 = vadd.f32 %v4938, %v5033
  %v5035 = vpop.f32.mrb[0].mxu0
  %5036 = vdwg.mxu0
  %v5037 = vld [vmem:[%s2 + $0x3a0] sm:$0xff]
  %v5038 = vld [vmem:[%s2 + $0x3a8] sm:$0xff]
  %v5040 = vsel %vm2759, %v4800, 0
  %v5043 = vsel %vm2759, %v4805, 0
  %v5046 = vsel %vm2759, %v4907, 0
  %v5049 = vsel %vm2759, %v4912, 0
  %v5052 = vsel %vm2759, %v4917, 0
  %v5055 = vsel %vm2759, %v4922, 0
  %5057 = vmatprep.subr.mxu0 0.0
  %5058 = vmatpush1.xpose.msra.mxu0 %v5046
  %5059 = vmatprep.subr.mxu0 0.0
  %5060 = vmatpush1.xpose.msra.mxu0 %v5049
  %5061 = vmatprep.subr.mxu0 0.0
  %5062 = vmatpush1.xpose.msra.mxu0 %v5052
  %5063 = vmatprep.subr.mxu0 0.0
  %5064 = vmatpush1.xpose.msra.mxu0 %v5055
  %5065 = vmatprep.subr.mxu0 0.0
  %5066 = vmatpush1.xpose.msra.mxu0 0.0
  %5067 = vmatprep.subr.mxu0 0.0
  %5068 = vmatpush1.xpose.msra.mxu0 0.0
  %5069 = vmatprep.subr.mxu0 0.0
  %5070 = vmatpush1.xpose.msra.mxu0 0.0
  %5071 = vmatprep.subr.mxu0 0.0
  %5072 = vmatpush1.xpose.msra.mxu0 0.0
  %5073 = vmatprep.subr.mxu0 0.0
  %5074 = vmatpush1.xpose.msra.mxu0 0.0
  %5075 = vmatprep.subr.mxu0 0.0
  %5076 = vmatpush1.xpose.msra.mxu0 0.0
  %5077 = vmatprep.subr.mxu0 0.0
  %5078 = vmatpush1.xpose.msra.mxu0 0.0
  %5079 = vmatprep.subr.mxu0 0.0
  %5080 = vmatpush1.xpose.msra.mxu0 0.0
  %5081 = vmatprep.subr.mxu0 0.0
  %5082 = vmatpush1.xpose.msra.mxu0 0.0
  %5083 = vmatprep.subr.mxu0 0.0
  %5084 = vmatpush1.xpose.msra.mxu0 0.0
  %5085 = vmatprep.subr.mxu0 0.0
  %5086 = vmatpush1.xpose.msra.mxu0 0.0
  %5087 = vmatprep.subr.mxu0 0.0
  %5088 = vmatpush1.xpose.msra.mxu0 0.0
  %5089 = vmatprep.subr.mxu0 0.0
  %5090 = vmatpush1.xpose.msra.mxu0 0.0
  %5091 = vmatprep.subr.mxu0 0.0
  %5092 = vmatpush1.xpose.msra.mxu0 0.0
  %5093 = vmatprep.subr.mxu0 0.0
  %5094 = vmatpush1.xpose.msra.mxu0 0.0
  %5095 = vmatprep.subr.mxu0 0.0
  %5096 = vmatpush1.xpose.msra.mxu0 0.0
  %5097 = vmatprep.subr.mxu0 0.0
  %5098 = vmatpush1.xpose.msra.mxu0 0.0
  %5099 = vmatprep.subr.mxu0 0.0
  %5100 = vmatpush1.xpose.msra.mxu0 0.0
  %5101 = vmatprep.subr.mxu0 0.0
  %5102 = vmatpush1.xpose.msra.mxu0 0.0
  %5103 = vmatprep.subr.mxu0 0.0
  %5104 = vmatpush1.xpose.msra.mxu0 0.0
  %5105 = vmatprep.subr.mxu0 0.0
  %5106 = vmatpush1.xpose.msra.mxu0 0.0
  %5107 = vmatprep.subr.mxu0 0.0
  %5108 = vmatpush1.xpose.msra.mxu0 0.0
  %5109 = vmatprep.subr.mxu0 0.0
  %5110 = vmatpush1.xpose.msra.mxu0 0.0
  %5111 = vmatprep.subr.mxu0 0.0
  %5112 = vmatpush1.xpose.msra.mxu0 0.0
  %5113 = vmatprep.subr.mxu0 0.0
  %5114 = vmatpush1.xpose.msra.mxu0 0.0
  %5115 = vmatprep.subr.mxu0 0.0
  %5116 = vmatpush1.xpose.msra.mxu0 0.0
  %5117 = vmatprep.subr.mxu0 0.0
  %5118 = vmatpush1.xpose.msra.mxu0 0.0
  %5119 = vmatprep.subr.mxu0 0.0
  %5120 = vmatpush1.xpose.msra.mxu0 0.0
  %5121 = vmatprep.mubr.f32.mxu0 0.0
  %5122 = vmatmul.mubr.f32.gmra.mrb[0].mxu0 %v5040
  %v5123 = vpop.f32.mrb[0].mxu0
  %v5124 = vadd.f32 0.0, %v5123
  %v5125 = vpop.f32.mrb[0].mxu0
  %5126 = vmatprep.mubr.f32.mxu0 0.0
  %5127 = vmatmul.mubr.f32.gmra.mrb[0].mxu0 %v5043
  %v5128 = vpop.f32.mrb[0].mxu0
  %v5129 = vadd.f32 0.0, %v5128
  %v5130 = vpop.f32.mrb[0].mxu0
  %5131 = vdwg.mxu0
  %v5132 = vmul.f32 %v5124, 0.35355338
  %v5133 = vmul.f32 %v5129, 0.35355338
  %v5134 = vadd.f32 %v5132, %v2436
  %v5135 = vadd.f32 %v5133, %v2437
  %v5136 = vsel %vm162, %v5134, -inf
  %5137 = vmax.xlane.f32.xlu0 %v5136
  %v5138 = vpop.xlane.xlu0 %5137
  %v5139 = vsel %vm2394, %v5135, -inf
  %5140 = vmax.xlane.f32.xlu0 %v5139
  %v5141 = vpop.xlane.xlu0 %5140
  %v5142 = vsub.f32 %v5134, %v5138
  %v5143 = vsub.f32 %v5135, %v5141
  %v5144 = vmul.f32 %v5142, 1.442695
  %v5145 = vpow.pop %v5144
  %v5146 = vmul.f32 %v5143, 1.442695
  %v5147 = vpow.pop %v5146
  %v5148 = vsel %vm162, %v5145, 0.0
  %5149 = vadd.xlane.f32.xlu0 %v5148
  %v5150 = vpop.xlane.xlu0 %5149
  %v5151 = vsel %vm2394, %v5147, 0.0
  %5152 = vadd.xlane.f32.xlu0 %v5151
  %v5153 = vpop.xlane.xlu0 %5152
  %v5154 = vrcp.pop %v5150
  %v5155 = vrcp.pop %v5153
  %v5156 = vmul.f32 %v5145, %v5154
  %v5157 = vmul.f32 %v5147, %v5155
  %v5159 = vsel %vm162, %v5156, 0
  %v5162 = vsel %vm162, %v5157, 0
  %5164 = vmatprep.subr.mxu0 0.0
  %5165 = vmatpush1.msra.mxu0 %v5019
  %5166 = vmatprep.subr.mxu0 0.0
  %5167 = vmatpush1.msra.mxu0 %v5024
  %5168 = vmatprep.subr.mxu0 0.0
  %5169 = vmatpush1.msra.mxu0 %v5029
  %5170 = vmatprep.subr.mxu0 0.0
  %5171 = vmatpush1.msra.mxu0 %v5034
  %5172 = vmatprep.subr.mxu0 0.0
  %5173 = vmatpush1.msra.mxu0 0.0
  %5174 = vmatprep.subr.mxu0 0.0
  %5175 = vmatpush1.msra.mxu0 0.0
  %5176 = vmatprep.subr.mxu0 0.0
  %5177 = vmatpush1.msra.mxu0 0.0
  %5178 = vmatprep.subr.mxu0 0.0
  %5179 = vmatpush1.msra.mxu0 0.0
  %5180 = vmatprep.subr.mxu0 0.0
  %5181 = vmatpush1.msra.mxu0 0.0
  %5182 = vmatprep.subr.mxu0 0.0
  %5183 = vmatpush1.msra.mxu0 0.0
  %5184 = vmatprep.subr.mxu0 0.0
  %5185 = vmatpush1.msra.mxu0 0.0
  %5186 = vmatprep.subr.mxu0 0.0
  %5187 = vmatpush1.msra.mxu0 0.0
  %5188 = vmatprep.subr.mxu0 0.0
  %5189 = vmatpush1.msra.mxu0 0.0
  %5190 = vmatprep.subr.mxu0 0.0
  %5191 = vmatpush1.msra.mxu0 0.0
  %5192 = vmatprep.subr.mxu0 0.0
  %5193 = vmatpush1.msra.mxu0 0.0
  %5194 = vmatprep.subr.mxu0 0.0
  %5195 = vmatpush1.msra.mxu0 0.0
  %5196 = vmatprep.subr.mxu0 0.0
  %5197 = vmatpush1.msra.mxu0 0.0
  %5198 = vmatprep.subr.mxu0 0.0
  %5199 = vmatpush1.msra.mxu0 0.0
  %5200 = vmatprep.subr.mxu0 0.0
  %5201 = vmatpush1.msra.mxu0 0.0
  %5202 = vmatprep.subr.mxu0 0.0
  %5203 = vmatpush1.msra.mxu0 0.0
  %5204 = vmatprep.subr.mxu0 0.0
  %5205 = vmatpush1.msra.mxu0 0.0
  %5206 = vmatprep.subr.mxu0 0.0
  %5207 = vmatpush1.msra.mxu0 0.0
  %5208 = vmatprep.subr.mxu0 0.0
  %5209 = vmatpush1.msra.mxu0 0.0
  %5210 = vmatprep.subr.mxu0 0.0
  %5211 = vmatpush1.msra.mxu0 0.0
  %5212 = vmatprep.subr.mxu0 0.0
  %5213 = vmatpush1.msra.mxu0 0.0
  %5214 = vmatprep.subr.mxu0 0.0
  %5215 = vmatpush1.msra.mxu0 0.0
  %5216 = vmatprep.subr.mxu0 0.0
  %5217 = vmatpush1.msra.mxu0 0.0
  %5218 = vmatprep.subr.mxu0 0.0
  %5219 = vmatpush1.msra.mxu0 0.0
  %5220 = vmatprep.subr.mxu0 0.0
  %5221 = vmatpush1.msra.mxu0 0.0
  %5222 = vmatprep.subr.mxu0 0.0
  %5223 = vmatpush1.msra.mxu0 0.0
  %5224 = vmatprep.subr.mxu0 0.0
  %5225 = vmatpush1.msra.mxu0 0.0
  %5226 = vmatprep.subr.mxu0 0.0
  %5227 = vmatpush1.msra.mxu0 0.0
  %5228 = vmatprep.mubr.f32.mxu0 0.0
  %5229 = vmatmul.mubr.f32.gmra.mrb[0].mxu0 %v5159
  %v5230 = vpop.f32.mrb[0].mxu0
  %v5231 = vadd.f32 0.0, %v5230
  %v5232 = vpop.f32.mrb[0].mxu0
  %5233 = vmatprep.mubr.f32.mxu0 0.0
  %5234 = vmatmul.mubr.f32.gmra.mrb[0].mxu0 %v5162
  %v5235 = vpop.f32.mrb[0].mxu0
  %v5236 = vadd.f32 0.0, %v5235
  %v5237 = vpop.f32.mrb[0].mxu0
  %5238 = vdwg.mxu0
  %5239 = vrot.lane.b32.xlu0 %v4800, 120
  %v5240 = vpop.permute.xlu0 %5239
  %5241 = vrot.lane.b32.xlu0 %v4805, 120
  %v5242 = vpop.permute.xlu0 %5241
  %5243 = vrot.lane.b32.xlu0 %v4907, 120
  %v5244 = vpop.permute.xlu0 %5243
  %5245 = vrot.lane.b32.xlu0 %v4912, 120
  %v5246 = vpop.permute.xlu0 %5245
  %5247 = vrot.lane.b32.xlu0 %v4917, 120
  %v5248 = vpop.permute.xlu0 %5247
  %5249 = vrot.lane.b32.xlu0 %v4922, 120
  %v5250 = vpop.permute.xlu0 %5249
  %v5251 = vsel %vm2759, %v5240, 0
  %v5253 = vsel %vm2759, %v5242, 0
  %v5255 = vsel %vm2759, %v5244, 0
  %v5257 = vsel %vm2759, %v5246, 0
  %v5259 = vsel %vm2759, %v5248, 0
  %v5261 = vsel %vm2759, %v5250, 0
  %5263 = vmatprep.subr.mxu0 0.0
  %5264 = vmatpush1.xpose.msra.mxu0 %v5255
  %5265 = vmatprep.subr.mxu0 0.0
  %5266 = vmatpush1.xpose.msra.mxu0 %v5257
  %5267 = vmatprep.subr.mxu0 0.0
  %5268 = vmatpush1.xpose.msra.mxu0 %v5259
  %5269 = vmatprep.subr.mxu0 0.0
  %5270 = vmatpush1.xpose.msra.mxu0 %v5261
  %5271 = vmatprep.subr.mxu0 0.0
  %5272 = vmatpush1.xpose.msra.mxu0 0.0
  %5273 = vmatprep.subr.mxu0 0.0
  %5274 = vmatpush1.xpose.msra.mxu0 0.0
  %5275 = vmatprep.subr.mxu0 0.0
  %5276 = vmatpush1.xpose.msra.mxu0 0.0
  %5277 = vmatprep.subr.mxu0 0.0
  %5278 = vmatpush1.xpose.msra.mxu0 0.0
  %5279 = vmatprep.subr.mxu0 0.0
  %5280 = vmatpush1.xpose.msra.mxu0 0.0
  %5281 = vmatprep.subr.mxu0 0.0
  %5282 = vmatpush1.xpose.msra.mxu0 0.0
  %5283 = vmatprep.subr.mxu0 0.0
  %5284 = vmatpush1.xpose.msra.mxu0 0.0
  %5285 = vmatprep.subr.mxu0 0.0
  %5286 = vmatpush1.xpose.msra.mxu0 0.0
  %5287 = vmatprep.subr.mxu0 0.0
  %5288 = vmatpush1.xpose.msra.mxu0 0.0
  %5289 = vmatprep.subr.mxu0 0.0
  %5290 = vmatpush1.xpose.msra.mxu0 0.0
  %5291 = vmatprep.subr.mxu0 0.0
  %5292 = vmatpush1.xpose.msra.mxu0 0.0
  %5293 = vmatprep.subr.mxu0 0.0
  %5294 = vmatpush1.xpose.msra.mxu0 0.0
  %5295 = vmatprep.subr.mxu0 0.0
  %5296 = vmatpush1.xpose.msra.mxu0 0.0
  %5297 = vmatprep.subr.mxu0 0.0
  %5298 = vmatpush1.xpose.msra.mxu0 0.0
  %5299 = vmatprep.subr.mxu0 0.0
  %5300 = vmatpush1.xpose.msra.mxu0 0.0
  %5301 = vmatprep.subr.mxu0 0.0
  %5302 = vmatpush1.xpose.msra.mxu0 0.0
  %5303 = vmatprep.subr.mxu0 0.0
  %5304 = vmatpush1.xpose.msra.mxu0 0.0
  %5305 = vmatprep.subr.mxu0 0.0
  %5306 = vmatpush1.xpose.msra.mxu0 0.0
  %5307 = vmatprep.subr.mxu0 0.0
  %5308 = vmatpush1.xpose.msra.mxu0 0.0
  %5309 = vmatprep.subr.mxu0 0.0
  %5310 = vmatpush1.xpose.msra.mxu0 0.0
  %5311 = vmatprep.subr.mxu0 0.0
  %5312 = vmatpush1.xpose.msra.mxu0 0.0
  %5313 = vmatprep.subr.mxu0 0.0
  %5314 = vmatpush1.xpose.msra.mxu0 0.0
  %5315 = vmatprep.subr.mxu0 0.0
  %5316 = vmatpush1.xpose.msra.mxu0 0.0
  %5317 = vmatprep.subr.mxu0 0.0
  %5318 = vmatpush1.xpose.msra.mxu0 0.0
  %5319 = vmatprep.subr.mxu0 0.0
  %5320 = vmatpush1.xpose.msra.mxu0 0.0
  %5321 = vmatprep.subr.mxu0 0.0
  %5322 = vmatpush1.xpose.msra.mxu0 0.0
  %5323 = vmatprep.subr.mxu0 0.0
  %5324 = vmatpush1.xpose.msra.mxu0 0.0
  %5325 = vmatprep.subr.mxu0 0.0
  %5326 = vmatpush1.xpose.msra.mxu0 0.0
  %5327 = vmatprep.mubr.f32.mxu0 0.0
  %5328 = vmatmul.mubr.f32.gmra.mrb[0].mxu0 %v5251
  %v5329 = vpop.f32.mrb[0].mxu0
  %v5330 = vadd.f32 0.0, %v5329
  %v5331 = vpop.f32.mrb[0].mxu0
  %5332 = vmatprep.mubr.f32.mxu0 0.0
  %5333 = vmatmul.mubr.f32.gmra.mrb[0].mxu0 %v5253
  %v5334 = vpop.f32.mrb[0].mxu0
  %v5335 = vadd.f32 0.0, %v5334
  %v5336 = vpop.f32.mrb[0].mxu0
  %5337 = vdwg.mxu0
  %v5338 = vmul.f32 %v5330, 0.35355338
  %v5339 = vmul.f32 %v5335, 0.35355338
  %v5340 = vadd.f32 %v5338, %v2436
  %v5341 = vadd.f32 %v5339, %v2437
  %v5342 = vsel %vm162, %v5340, -inf
  %5343 = vmax.xlane.f32.xlu0 %v5342
  %v5344 = vpop.xlane.xlu0 %5343
  %v5345 = vsel %vm2394, %v5341, -inf
  %5346 = vmax.xlane.f32.xlu0 %v5345
  %v5347 = vpop.xlane.xlu0 %5346
  %v5348 = vsub.f32 %v5340, %v5344
  %v5349 = vsub.f32 %v5341, %v5347
  %v5350 = vmul.f32 %v5348, 1.442695
  %v5351 = vpow.pop %v5350
  %v5352 = vmul.f32 %v5349, 1.442695
  %v5353 = vpow.pop %v5352
  %v5354 = vsel %vm162, %v5351, 0.0
  %5355 = vadd.xlane.f32.xlu0 %v5354
  %v5356 = vpop.xlane.xlu0 %5355
  %v5357 = vsel %vm2394, %v5353, 0.0
  %5358 = vadd.xlane.f32.xlu0 %v5357
  %v5359 = vpop.xlane.xlu0 %5358
  %v5360 = vrcp.pop %v5356
  %v5361 = vrcp.pop %v5359
  %v5362 = vmul.f32 %v5351, %v5360
  %v5363 = vmul.f32 %v5353, %v5361
  %5368 = vrot.lane.b32.xlu0 %v5019, 120
  %v5369 = vpop.permute.xlu0 %5368
  %5370 = vrot.lane.b32.xlu0 %v5024, 120
  %v5371 = vpop.permute.xlu0 %5370
  %5372 = vrot.lane.b32.xlu0 %v5029, 120
  %v5373 = vpop.permute.xlu0 %5372
  %5374 = vrot.lane.b32.xlu0 %v5034, 120
  %v5375 = vpop.permute.xlu0 %5374
  %v5381 = vsel %vm162, %v5362, 0
  %v5384 = vsel %vm162, %v5363, 0
  %5386 = vmatprep.subr.mxu0 0.0
  %5387 = vmatpush1.msra.mxu0 %v5369
  %5388 = vmatprep.subr.mxu0 0.0
  %5389 = vmatpush1.msra.mxu0 %v5371
  %5390 = vmatprep.subr.mxu0 0.0
  %5391 = vmatpush1.msra.mxu0 %v5373
  %5392 = vmatprep.subr.mxu0 0.0
  %5393 = vmatpush1.msra.mxu0 %v5375
  %5394 = vmatprep.subr.mxu0 0.0
  %5395 = vmatpush1.msra.mxu0 0.0
  %5396 = vmatprep.subr.mxu0 0.0
  %5397 = vmatpush1.msra.mxu0 0.0
  %5398 = vmatprep.subr.mxu0 0.0
  %5399 = vmatpush1.msra.mxu0 0.0
  %5400 = vmatprep.subr.mxu0 0.0
  %5401 = vmatpush1.msra.mxu0 0.0
  %5402 = vmatprep.subr.mxu0 0.0
  %5403 = vmatpush1.msra.mxu0 0.0
  %5404 = vmatprep.subr.mxu0 0.0
  %5405 = vmatpush1.msra.mxu0 0.0
  %5406 = vmatprep.subr.mxu0 0.0
  %5407 = vmatpush1.msra.mxu0 0.0
  %5408 = vmatprep.subr.mxu0 0.0
  %5409 = vmatpush1.msra.mxu0 0.0
  %5410 = vmatprep.subr.mxu0 0.0
  %5411 = vmatpush1.msra.mxu0 0.0
  %5412 = vmatprep.subr.mxu0 0.0
  %5413 = vmatpush1.msra.mxu0 0.0
  %5414 = vmatprep.subr.mxu0 0.0
  %5415 = vmatpush1.msra.mxu0 0.0
  %5416 = vmatprep.subr.mxu0 0.0
  %5417 = vmatpush1.msra.mxu0 0.0
  %5418 = vmatprep.subr.mxu0 0.0
  %5419 = vmatpush1.msra.mxu0 0.0
  %5420 = vmatprep.subr.mxu0 0.0
  %5421 = vmatpush1.msra.mxu0 0.0
  %5422 = vmatprep.subr.mxu0 0.0
  %5423 = vmatpush1.msra.mxu0 0.0
  %5424 = vmatprep.subr.mxu0 0.0
  %5425 = vmatpush1.msra.mxu0 0.0
  %5426 = vmatprep.subr.mxu0 0.0
  %5427 = vmatpush1.msra.mxu0 0.0
  %5428 = vmatprep.subr.mxu0 0.0
  %5429 = vmatpush1.msra.mxu0 0.0
  %5430 = vmatprep.subr.mxu0 0.0
  %5431 = vmatpush1.msra.mxu0 0.0
  %5432 = vmatprep.subr.mxu0 0.0
  %5433 = vmatpush1.msra.mxu0 0.0
  %5434 = vmatprep.subr.mxu0 0.0
  %5435 = vmatpush1.msra.mxu0 0.0
  %5436 = vmatprep.subr.mxu0 0.0
  %5437 = vmatpush1.msra.mxu0 0.0
  %5438 = vmatprep.subr.mxu0 0.0
  %5439 = vmatpush1.msra.mxu0 0.0
  %5440 = vmatprep.subr.mxu0 0.0
  %5441 = vmatpush1.msra.mxu0 0.0
  %5442 = vmatprep.subr.mxu0 0.0
  %5443 = vmatpush1.msra.mxu0 0.0
  %5444 = vmatprep.subr.mxu0 0.0
  %5445 = vmatpush1.msra.mxu0 0.0
  %5446 = vmatprep.subr.mxu0 0.0
  %5447 = vmatpush1.msra.mxu0 0.0
  %5448 = vmatprep.subr.mxu0 0.0
  %5449 = vmatpush1.msra.mxu0 0.0
  %5450 = vmatprep.mubr.f32.mxu0 0.0
  %5451 = vmatmul.mubr.f32.gmra.mrb[0].mxu0 %v5381
  %v5452 = vpop.f32.mrb[0].mxu0
  %v5453 = vadd.f32 0.0, %v5452
  %v5454 = vpop.f32.mrb[0].mxu0
  %5455 = vmatprep.mubr.f32.mxu0 0.0
  %5456 = vmatmul.mubr.f32.gmra.mrb[0].mxu0 %v5384
  %v5457 = vpop.f32.mrb[0].mxu0
  %v5458 = vadd.f32 0.0, %v5457
  %v5459 = vpop.f32.mrb[0].mxu0
  %5460 = vdwg.mxu0
  %v5462 = vsel %vm2759, %v5453, 0
  %v5465 = vsel %vm2759, %v5458, 0
  %5467 = vmatprep.subr.mxu0 0.0
  %5468 = vmatpush1.msra.mxu0 %v5038
  %5469 = vmatprep.subr.mxu0 0.0
  %5470 = vmatpush1.msra.mxu0 0.0
  %5471 = vmatprep.subr.mxu0 0.0
  %5472 = vmatpush1.msra.mxu0 0.0
  %5473 = vmatprep.subr.mxu0 0.0
  %5474 = vmatpush1.msra.mxu0 0.0
  %5475 = vmatprep.subr.mxu0 0.0
  %5476 = vmatpush1.msra.mxu0 0.0
  %5477 = vmatprep.subr.mxu0 0.0
  %5478 = vmatpush1.msra.mxu0 0.0
  %5479 = vmatprep.subr.mxu0 0.0
  %5480 = vmatpush1.msra.mxu0 0.0
  %5481 = vmatprep.subr.mxu0 0.0
  %5482 = vmatpush1.msra.mxu0 0.0
  %5483 = vmatprep.subr.mxu0 0.0
  %5484 = vmatpush1.msra.mxu0 0.0
  %5485 = vmatprep.subr.mxu0 0.0
  %5486 = vmatpush1.msra.mxu0 0.0
  %5487 = vmatprep.subr.mxu0 0.0
  %5488 = vmatpush1.msra.mxu0 0.0
  %5489 = vmatprep.subr.mxu0 0.0
  %5490 = vmatpush1.msra.mxu0 0.0
  %5491 = vmatprep.subr.mxu0 0.0
  %5492 = vmatpush1.msra.mxu0 0.0
  %5493 = vmatprep.subr.mxu0 0.0
  %5494 = vmatpush1.msra.mxu0 0.0
  %5495 = vmatprep.subr.mxu0 0.0
  %5496 = vmatpush1.msra.mxu0 0.0
  %5497 = vmatprep.subr.mxu0 0.0
  %5498 = vmatpush1.msra.mxu0 0.0
  %5499 = vmatprep.subr.mxu0 0.0
  %5500 = vmatpush1.msra.mxu0 0.0
  %5501 = vmatprep.subr.mxu0 0.0
  %5502 = vmatpush1.msra.mxu0 0.0
  %5503 = vmatprep.subr.mxu0 0.0
  %5504 = vmatpush1.msra.mxu0 0.0
  %5505 = vmatprep.subr.mxu0 0.0
  %5506 = vmatpush1.msra.mxu0 0.0
  %5507 = vmatprep.subr.mxu0 0.0
  %5508 = vmatpush1.msra.mxu0 0.0
  %5509 = vmatprep.subr.mxu0 0.0
  %5510 = vmatpush1.msra.mxu0 0.0
  %5511 = vmatprep.subr.mxu0 0.0
  %5512 = vmatpush1.msra.mxu0 0.0
  %5513 = vmatprep.subr.mxu0 0.0
  %5514 = vmatpush1.msra.mxu0 0.0
  %5515 = vmatprep.subr.mxu0 0.0
  %5516 = vmatpush1.msra.mxu0 0.0
  %5517 = vmatprep.subr.mxu0 0.0
  %5518 = vmatpush1.msra.mxu0 0.0
  %5519 = vmatprep.subr.mxu0 0.0
  %5520 = vmatpush1.msra.mxu0 0.0
  %5521 = vmatprep.subr.mxu0 0.0
  %5522 = vmatpush1.msra.mxu0 0.0
  %5523 = vmatprep.subr.mxu0 0.0
  %5524 = vmatpush1.msra.mxu0 0.0
  %5525 = vmatprep.subr.mxu0 0.0
  %5526 = vmatpush1.msra.mxu0 0.0
  %5527 = vmatprep.subr.mxu0 0.0
  %5528 = vmatpush1.msra.mxu0 0.0
  %5529 = vmatprep.subr.mxu0 0.0
  %5530 = vmatpush1.msra.mxu0 0.0
  %5531 = vmatprep.mubr.f32.mxu0 0.0
  %5532 = vmatmul.mubr.f32.gmra.mrb[0].mxu0 %v5462
  %v5533 = vpop.f32.mrb[0].mxu0
  %v5534 = vadd.f32 0.0, %v5533
  %v5535 = vpop.f32.mrb[0].mxu0
  %5536 = vmatprep.mubr.f32.mxu0 0.0
  %5537 = vmatmul.mubr.f32.gmra.mrb[0].mxu0 %v5465
  %v5538 = vpop.f32.mrb[0].mxu0
  %v5539 = vadd.f32 0.0, %v5538
  %v5540 = vpop.f32.mrb[0].mxu0
  %5541 = vdwg.mxu0
  %v5543 = vsel %vm2759, %v5231, 0
  %v5546 = vsel %vm2759, %v5236, 0
  %5548 = vmatprep.subr.mxu0 0.0
  %5549 = vmatpush1.msra.mxu0 %v5037
  %5550 = vmatprep.subr.mxu0 0.0
  %5551 = vmatpush1.msra.mxu0 0.0
  %5552 = vmatprep.subr.mxu0 0.0
  %5553 = vmatpush1.msra.mxu0 0.0
  %5554 = vmatprep.subr.mxu0 0.0
  %5555 = vmatpush1.msra.mxu0 0.0
  %5556 = vmatprep.subr.mxu0 0.0
  %5557 = vmatpush1.msra.mxu0 0.0
  %5558 = vmatprep.subr.mxu0 0.0
  %5559 = vmatpush1.msra.mxu0 0.0
  %5560 = vmatprep.subr.mxu0 0.0
  %5561 = vmatpush1.msra.mxu0 0.0
  %5562 = vmatprep.subr.mxu0 0.0
  %5563 = vmatpush1.msra.mxu0 0.0
  %5564 = vmatprep.subr.mxu0 0.0
  %5565 = vmatpush1.msra.mxu0 0.0
  %5566 = vmatprep.subr.mxu0 0.0
  %5567 = vmatpush1.msra.mxu0 0.0
  %5568 = vmatprep.subr.mxu0 0.0
  %5569 = vmatpush1.msra.mxu0 0.0
  %5570 = vmatprep.subr.mxu0 0.0
  %5571 = vmatpush1.msra.mxu0 0.0
  %5572 = vmatprep.subr.mxu0 0.0
  %5573 = vmatpush1.msra.mxu0 0.0
  %5574 = vmatprep.subr.mxu0 0.0
  %5575 = vmatpush1.msra.mxu0 0.0
  %5576 = vmatprep.subr.mxu0 0.0
  %5577 = vmatpush1.msra.mxu0 0.0
  %5578 = vmatprep.subr.mxu0 0.0
  %5579 = vmatpush1.msra.mxu0 0.0
  %5580 = vmatprep.subr.mxu0 0.0
  %5581 = vmatpush1.msra.mxu0 0.0
  %5582 = vmatprep.subr.mxu0 0.0
  %5583 = vmatpush1.msra.mxu0 0.0
  %5584 = vmatprep.subr.mxu0 0.0
  %5585 = vmatpush1.msra.mxu0 0.0
  %5586 = vmatprep.subr.mxu0 0.0
  %5587 = vmatpush1.msra.mxu0 0.0
  %5588 = vmatprep.subr.mxu0 0.0
  %5589 = vmatpush1.msra.mxu0 0.0
  %5590 = vmatprep.subr.mxu0 0.0
  %5591 = vmatpush1.msra.mxu0 0.0
  %5592 = vmatprep.subr.mxu0 0.0
  %5593 = vmatpush1.msra.mxu0 0.0
  %5594 = vmatprep.subr.mxu0 0.0
  %5595 = vmatpush1.msra.mxu0 0.0
  %5596 = vmatprep.subr.mxu0 0.0
  %5597 = vmatpush1.msra.mxu0 0.0
  %5598 = vmatprep.subr.mxu0 0.0
  %5599 = vmatpush1.msra.mxu0 0.0
  %5600 = vmatprep.subr.mxu0 0.0
  %5601 = vmatpush1.msra.mxu0 0.0
  %5602 = vmatprep.subr.mxu0 0.0
  %5603 = vmatpush1.msra.mxu0 0.0
  %5604 = vmatprep.subr.mxu0 0.0
  %5605 = vmatpush1.msra.mxu0 0.0
  %5606 = vmatprep.subr.mxu0 0.0
  %5607 = vmatpush1.msra.mxu0 0.0
  %5608 = vmatprep.subr.mxu0 0.0
  %5609 = vmatpush1.msra.mxu0 0.0
  %5610 = vmatprep.subr.mxu0 0.0
  %5611 = vmatpush1.msra.mxu0 0.0
  %5612 = vmatprep.mubr.f32.mxu0 0.0
  %5613 = vmatmul.mubr.f32.gmra.mrb[0].mxu0 %v5543
  %v5614 = vpop.f32.mrb[0].mxu0
  %v5615 = vadd.f32 %v5534, %v5614
  %v5616 = vpop.f32.mrb[0].mxu0
  %5617 = vmatprep.mubr.f32.mxu0 0.0
  %5618 = vmatmul.mubr.f32.gmra.mrb[0].mxu0 %v5546
  %v5619 = vpop.f32.mrb[0].mxu0
  %v5620 = vadd.f32 %v5539, %v5619
  %v5621 = vpop.f32.mrb[0].mxu0
  %5622 = vdwg.mxu0
  %v5623 = vld [vmem:[%s2 + $0x3b0] sm:$0x1]
  %v5624 = vlaneseq
  %v5625 = vshrl.u32 %v5624, 7
  %v5626 = vsub.s32 0, %v5625
  %v5627 = vrot.slane %v5623, %v5626
  %v5628 = vadd.f32 %v5615, %v5627
  %v5629 = vadd.f32 %v5620, %v5627
  %v5630 = vadd.f32 %v3621, %v5628
  %v5631 = vadd.f32 %v3622, %v5629
  %v5632 = vld [vmem:[%s2 + $0x3f8] sm:$0x1]
  %v5633 = vld [vmem:[%s2 + $0x400] sm:$0x1]
  %v5634 = vsel %vm162, %v5630, 0.0
  %5635 = vadd.xlane.f32.xlu0 %v5634
  %v5636 = vpop.xlane.xlu0 %5635
  %v5637 = vsel %vm2394, %v5631, 0.0
  %5638 = vadd.xlane.f32.xlu0 %v5637
  %v5639 = vpop.xlane.xlu0 %5638
  %v5640 = vmul.f32 %v5636, %v175
  %v5641 = vmul.f32 %v5639, %v175
  %v5642 = vsub.f32 %v5630, %v5640
  %v5643 = vsub.f32 %v5631, %v5641
  %v5644 = vmul.f32 %v5642, %v5642
  %v5645 = vmul.f32 %v5643, %v5643
  %v5646 = vsel %vm162, %v5644, 0.0
  %5647 = vadd.xlane.f32.xlu0 %v5646
  %v5648 = vpop.xlane.xlu0 %5647
  %v5649 = vsel %vm2394, %v5645, 0.0
  %5650 = vadd.xlane.f32.xlu0 %v5649
  %v5651 = vpop.xlane.xlu0 %5650
  %v5652 = vmul.f32 %v5648, %v175
  %v5653 = vmul.f32 %v5651, %v175
  %v5654 = vadd.f32 %v5652, 1e-05
  %v5655 = vadd.f32 %v5653, 1e-05
  %v5656 = vrsqrt.pop %v5654
  %v5657 = vrsqrt.pop %v5655
  %v5658 = vmul.f32 %v5642, %v5656
  %v5659 = vmul.f32 %v5643, %v5657
  %v5660 = vlaneseq
  %v5661 = vshrl.u32 %v5660, 7
  %v5662 = vsub.s32 0, %v5661
  %v5663 = vrot.slane %v5632, %v5662
  %v5664 = vmul.f32 %v5658, %v5663
  %v5665 = vmul.f32 %v5659, %v5663
  %v5666 = vlaneseq
  %v5667 = vshrl.u32 %v5666, 7
  %v5668 = vsub.s32 0, %v5667
  %v5669 = vrot.slane %v5633, %v5668
  %v5670 = vadd.f32 %v5664, %v5669
  %v5671 = vadd.f32 %v5665, %v5669
  %v5672 = vld [vmem:[%s2 + $0x240] sm:$0x3]
  %v5674 = vsel %vm1902, %v5672, 0
  %v5677 = vsel %vm1937, %v5671, 0
  %5679 = vmatprep.subr.mxu0 0.0
  %5680 = vmatpush1.msra.mxu0 %v5670
  %5681 = vmatprep.subr.mxu0 0.0
  %5682 = vmatpush1.msra.mxu0 %v5677
  %5683 = vmatprep.subr.mxu0 0.0
  %5684 = vmatpush1.msra.mxu0 0.0
  %5685 = vmatprep.subr.mxu0 0.0
  %5686 = vmatpush1.msra.mxu0 0.0
  %5687 = vmatprep.subr.mxu0 0.0
  %5688 = vmatpush1.msra.mxu0 0.0
  %5689 = vmatprep.subr.mxu0 0.0
  %5690 = vmatpush1.msra.mxu0 0.0
  %5691 = vmatprep.subr.mxu0 0.0
  %5692 = vmatpush1.msra.mxu0 0.0
  %5693 = vmatprep.subr.mxu0 0.0
  %5694 = vmatpush1.msra.mxu0 0.0
  %5695 = vmatprep.subr.mxu0 0.0
  %5696 = vmatpush1.msra.mxu0 0.0
  %5697 = vmatprep.subr.mxu0 0.0
  %5698 = vmatpush1.msra.mxu0 0.0
  %5699 = vmatprep.subr.mxu0 0.0
  %5700 = vmatpush1.msra.mxu0 0.0
  %5701 = vmatprep.subr.mxu0 0.0
  %5702 = vmatpush1.msra.mxu0 0.0
  %5703 = vmatprep.subr.mxu0 0.0
  %5704 = vmatpush1.msra.mxu0 0.0
  %5705 = vmatprep.subr.mxu0 0.0
  %5706 = vmatpush1.msra.mxu0 0.0
  %5707 = vmatprep.subr.mxu0 0.0
  %5708 = vmatpush1.msra.mxu0 0.0
  %5709 = vmatprep.subr.mxu0 0.0
  %5710 = vmatpush1.msra.mxu0 0.0
  %5711 = vmatprep.subr.mxu0 0.0
  %5712 = vmatpush1.msra.mxu0 0.0
  %5713 = vmatprep.subr.mxu0 0.0
  %5714 = vmatpush1.msra.mxu0 0.0
  %5715 = vmatprep.subr.mxu0 0.0
  %5716 = vmatpush1.msra.mxu0 0.0
  %5717 = vmatprep.subr.mxu0 0.0
  %5718 = vmatpush1.msra.mxu0 0.0
  %5719 = vmatprep.subr.mxu0 0.0
  %5720 = vmatpush1.msra.mxu0 0.0
  %5721 = vmatprep.subr.mxu0 0.0
  %5722 = vmatpush1.msra.mxu0 0.0
  %5723 = vmatprep.subr.mxu0 0.0
  %5724 = vmatpush1.msra.mxu0 0.0
  %5725 = vmatprep.subr.mxu0 0.0
  %5726 = vmatpush1.msra.mxu0 0.0
  %5727 = vmatprep.subr.mxu0 0.0
  %5728 = vmatpush1.msra.mxu0 0.0
  %5729 = vmatprep.subr.mxu0 0.0
  %5730 = vmatpush1.msra.mxu0 0.0
  %5731 = vmatprep.subr.mxu0 0.0
  %5732 = vmatpush1.msra.mxu0 0.0
  %5733 = vmatprep.subr.mxu0 0.0
  %5734 = vmatpush1.msra.mxu0 0.0
  %5735 = vmatprep.subr.mxu0 0.0
  %5736 = vmatpush1.msra.mxu0 0.0
  %5737 = vmatprep.subr.mxu0 0.0
  %5738 = vmatpush1.msra.mxu0 0.0
  %5739 = vmatprep.subr.mxu0 0.0
  %5740 = vmatpush1.msra.mxu0 0.0
  %5741 = vmatprep.subr.mxu0 0.0
  %5742 = vmatpush1.msra.mxu0 0.0
  %5743 = vmatprep.mubr.f32.mxu0 0.0
  %5744 = vmatmul.mubr.f32.gmra.mrb[0].mxu0 %v5674
  %v5745 = vpop.f32.mrb[0].mxu0
  %v5746 = vadd.f32 0.0, %v5745
  %v5747 = vpop.f32.mrb[0].mxu0
  %5748 = vdwg.mxu0
  %v5749 = vld [vmem:[%s2 + $0x4c0] sm:$0xff]
  %v5750 = vld [vmem:[%s2 + $0x4c8] sm:$0xff]
  %v5751 = vld [vmem:[%s2 + $0x4d0] sm:$0xff]
  %v5752 = vld [vmem:[%s2 + $0x4d8] sm:$0xff]
  %v5753 = vld [vmem:[%s2 + $0x4e0] sm:$0x1]
  %v5754 = vlaneseq
  %v5755 = vshrl.u32 %v5754, 7
  %v5756 = vsub.s32 0, %v5755
  %v5757 = vrot.slane %v5753, %v5756
  %v5759 = vsel %vm162, %v5746, 0
  %5761 = vmatprep.subr.mxu0 0.0
  %5762 = vmatpush1.msra.mxu0 %v5749
  %5763 = vmatprep.subr.mxu0 0.0
  %5764 = vmatpush1.msra.mxu0 %v5750
  %5765 = vmatprep.subr.mxu0 0.0
  %5766 = vmatpush1.msra.mxu0 %v5751
  %5767 = vmatprep.subr.mxu0 0.0
  %5768 = vmatpush1.msra.mxu0 %v5752
  %5769 = vmatprep.subr.mxu0 0.0
  %5770 = vmatpush1.msra.mxu0 0.0
  %5771 = vmatprep.subr.mxu0 0.0
  %5772 = vmatpush1.msra.mxu0 0.0
  %5773 = vmatprep.subr.mxu0 0.0
  %5774 = vmatpush1.msra.mxu0 0.0
  %5775 = vmatprep.subr.mxu0 0.0
  %5776 = vmatpush1.msra.mxu0 0.0
  %5777 = vmatprep.subr.mxu0 0.0
  %5778 = vmatpush1.msra.mxu0 0.0
  %5779 = vmatprep.subr.mxu0 0.0
  %5780 = vmatpush1.msra.mxu0 0.0
  %5781 = vmatprep.subr.mxu0 0.0
  %5782 = vmatpush1.msra.mxu0 0.0
  %5783 = vmatprep.subr.mxu0 0.0
  %5784 = vmatpush1.msra.mxu0 0.0
  %5785 = vmatprep.subr.mxu0 0.0
  %5786 = vmatpush1.msra.mxu0 0.0
  %5787 = vmatprep.subr.mxu0 0.0
  %5788 = vmatpush1.msra.mxu0 0.0
  %5789 = vmatprep.subr.mxu0 0.0
  %5790 = vmatpush1.msra.mxu0 0.0
  %5791 = vmatprep.subr.mxu0 0.0
  %5792 = vmatpush1.msra.mxu0 0.0
  %5793 = vmatprep.subr.mxu0 0.0
  %5794 = vmatpush1.msra.mxu0 0.0
  %5795 = vmatprep.subr.mxu0 0.0
  %5796 = vmatpush1.msra.mxu0 0.0
  %5797 = vmatprep.subr.mxu0 0.0
  %5798 = vmatpush1.msra.mxu0 0.0
  %5799 = vmatprep.subr.mxu0 0.0
  %5800 = vmatpush1.msra.mxu0 0.0
  %5801 = vmatprep.subr.mxu0 0.0
  %5802 = vmatpush1.msra.mxu0 0.0
  %5803 = vmatprep.subr.mxu0 0.0
  %5804 = vmatpush1.msra.mxu0 0.0
  %5805 = vmatprep.subr.mxu0 0.0
  %5806 = vmatpush1.msra.mxu0 0.0
  %5807 = vmatprep.subr.mxu0 0.0
  %5808 = vmatpush1.msra.mxu0 0.0
  %5809 = vmatprep.subr.mxu0 0.0
  %5810 = vmatpush1.msra.mxu0 0.0
  %5811 = vmatprep.subr.mxu0 0.0
  %5812 = vmatpush1.msra.mxu0 0.0
  %5813 = vmatprep.subr.mxu0 0.0
  %5814 = vmatpush1.msra.mxu0 0.0
  %5815 = vmatprep.subr.mxu0 0.0
  %5816 = vmatpush1.msra.mxu0 0.0
  %5817 = vmatprep.subr.mxu0 0.0
  %5818 = vmatpush1.msra.mxu0 0.0
  %5819 = vmatprep.subr.mxu0 0.0
  %5820 = vmatpush1.msra.mxu0 0.0
  %5821 = vmatprep.subr.mxu0 0.0
  %5822 = vmatpush1.msra.mxu0 0.0
  %5823 = vmatprep.subr.mxu0 0.0
  %5824 = vmatpush1.msra.mxu0 0.0
  %5825 = vmatprep.mubr.f32.mxu0 0.0
  %5826 = vmatmul.mubr.f32.gmra.mrb[0].mxu0 %v5759
  %v5827 = vpop.f32.mrb[0].mxu0
  %v5828 = vadd.f32 %v5757, %v5827
  %v5829 = vpop.f32.mrb[0].mxu0
  %5830 = vdwg.mxu0
  %v5831 = vmax.f32 %v5828, 0.0
  %v5832 = vld [vmem:[%s2 + $0x4e8] sm:$0xff]
  %v5833 = vld [vmem:[%s2 + $0x4f0] sm:$0xff]
  %v5834 = vld [vmem:[%s2 + $0x4f8] sm:$0xff]
  %v5835 = vld [vmem:[%s2 + $0x500] sm:$0xff]
  %v5836 = vld [vmem:[%s2 + $0x508] sm:$0x1]
  %v5837 = vlaneseq
  %v5838 = vshrl.u32 %v5837, 7
  %v5839 = vsub.s32 0, %v5838
  %v5840 = vrot.slane %v5836, %v5839
  %v5842 = vsel %vm162, %v5831, 0
  %5844 = vmatprep.subr.mxu0 0.0
  %5845 = vmatpush1.msra.mxu0 %v5832
  %5846 = vmatprep.subr.mxu0 0.0
  %5847 = vmatpush1.msra.mxu0 %v5833
  %5848 = vmatprep.subr.mxu0 0.0
  %5849 = vmatpush1.msra.mxu0 %v5834
  %5850 = vmatprep.subr.mxu0 0.0
  %5851 = vmatpush1.msra.mxu0 %v5835
  %5852 = vmatprep.subr.mxu0 0.0
  %5853 = vmatpush1.msra.mxu0 0.0
  %5854 = vmatprep.subr.mxu0 0.0
  %5855 = vmatpush1.msra.mxu0 0.0
  %5856 = vmatprep.subr.mxu0 0.0
  %5857 = vmatpush1.msra.mxu0 0.0
  %5858 = vmatprep.subr.mxu0 0.0
  %5859 = vmatpush1.msra.mxu0 0.0
  %5860 = vmatprep.subr.mxu0 0.0
  %5861 = vmatpush1.msra.mxu0 0.0
  %5862 = vmatprep.subr.mxu0 0.0
  %5863 = vmatpush1.msra.mxu0 0.0
  %5864 = vmatprep.subr.mxu0 0.0
  %5865 = vmatpush1.msra.mxu0 0.0
  %5866 = vmatprep.subr.mxu0 0.0
  %5867 = vmatpush1.msra.mxu0 0.0
  %5868 = vmatprep.subr.mxu0 0.0
  %5869 = vmatpush1.msra.mxu0 0.0
  %5870 = vmatprep.subr.mxu0 0.0
  %5871 = vmatpush1.msra.mxu0 0.0
  %5872 = vmatprep.subr.mxu0 0.0
  %5873 = vmatpush1.msra.mxu0 0.0
  %5874 = vmatprep.subr.mxu0 0.0
  %5875 = vmatpush1.msra.mxu0 0.0
  %5876 = vmatprep.subr.mxu0 0.0
  %5877 = vmatpush1.msra.mxu0 0.0
  %5878 = vmatprep.subr.mxu0 0.0
  %5879 = vmatpush1.msra.mxu0 0.0
  %5880 = vmatprep.subr.mxu0 0.0
  %5881 = vmatpush1.msra.mxu0 0.0
  %5882 = vmatprep.subr.mxu0 0.0
  %5883 = vmatpush1.msra.mxu0 0.0
  %5884 = vmatprep.subr.mxu0 0.0
  %5885 = vmatpush1.msra.mxu0 0.0
  %5886 = vmatprep.subr.mxu0 0.0
  %5887 = vmatpush1.msra.mxu0 0.0
  %5888 = vmatprep.subr.mxu0 0.0
  %5889 = vmatpush1.msra.mxu0 0.0
  %5890 = vmatprep.subr.mxu0 0.0
  %5891 = vmatpush1.msra.mxu0 0.0
  %5892 = vmatprep.subr.mxu0 0.0
  %5893 = vmatpush1.msra.mxu0 0.0
  %5894 = vmatprep.subr.mxu0 0.0
  %5895 = vmatpush1.msra.mxu0 0.0
  %5896 = vmatprep.subr.mxu0 0.0
  %5897 = vmatpush1.msra.mxu0 0.0
  %5898 = vmatprep.subr.mxu0 0.0
  %5899 = vmatpush1.msra.mxu0 0.0
  %5900 = vmatprep.subr.mxu0 0.0
  %5901 = vmatpush1.msra.mxu0 0.0
  %5902 = vmatprep.subr.mxu0 0.0
  %5903 = vmatpush1.msra.mxu0 0.0
  %5904 = vmatprep.subr.mxu0 0.0
  %5905 = vmatpush1.msra.mxu0 0.0
  %5906 = vmatprep.subr.mxu0 0.0
  %5907 = vmatpush1.msra.mxu0 0.0
  %5908 = vmatprep.mubr.f32.mxu0 0.0
  %5909 = vmatmul.mubr.f32.gmra.mrb[0].mxu0 %v5842
  %v5910 = vpop.f32.mrb[0].mxu0
  %v5911 = vadd.f32 %v5840, %v5910
  %v5912 = vpop.f32.mrb[0].mxu0
  %5913 = vdwg.mxu0
  %v5914 = vmax.f32 %v5911, 0.0
  %v5915 = vld [vmem:[%s2 + $0x510] sm:$0xff]
  %v5916 = vld [vmem:[%s2 + $0x518] sm:$0xff]
  %v5917 = vld [vmem:[%s2 + $0x520] sm:$0xff]
  %v5918 = vld [vmem:[%s2 + $0x528] sm:$0xff]
  %v5919 = vld [vmem:[%s2 + $0x530] sm:$0x1]
  %v5920 = vlaneseq
  %v5921 = vshrl.u32 %v5920, 7
  %v5922 = vsub.s32 0, %v5921
  %v5923 = vrot.slane %v5919, %v5922
  %v5925 = vsel %vm162, %v5914, 0
  %5927 = vmatprep.subr.mxu0 0.0
  %5928 = vmatpush1.msra.mxu0 %v5915
  %5929 = vmatprep.subr.mxu0 0.0
  %5930 = vmatpush1.msra.mxu0 %v5916
  %5931 = vmatprep.subr.mxu0 0.0
  %5932 = vmatpush1.msra.mxu0 %v5917
  %5933 = vmatprep.subr.mxu0 0.0
  %5934 = vmatpush1.msra.mxu0 %v5918
  %5935 = vmatprep.subr.mxu0 0.0
  %5936 = vmatpush1.msra.mxu0 0.0
  %5937 = vmatprep.subr.mxu0 0.0
  %5938 = vmatpush1.msra.mxu0 0.0
  %5939 = vmatprep.subr.mxu0 0.0
  %5940 = vmatpush1.msra.mxu0 0.0
  %5941 = vmatprep.subr.mxu0 0.0
  %5942 = vmatpush1.msra.mxu0 0.0
  %5943 = vmatprep.subr.mxu0 0.0
  %5944 = vmatpush1.msra.mxu0 0.0
  %5945 = vmatprep.subr.mxu0 0.0
  %5946 = vmatpush1.msra.mxu0 0.0
  %5947 = vmatprep.subr.mxu0 0.0
  %5948 = vmatpush1.msra.mxu0 0.0
  %5949 = vmatprep.subr.mxu0 0.0
  %5950 = vmatpush1.msra.mxu0 0.0
  %5951 = vmatprep.subr.mxu0 0.0
  %5952 = vmatpush1.msra.mxu0 0.0
  %5953 = vmatprep.subr.mxu0 0.0
  %5954 = vmatpush1.msra.mxu0 0.0
  %5955 = vmatprep.subr.mxu0 0.0
  %5956 = vmatpush1.msra.mxu0 0.0
  %5957 = vmatprep.subr.mxu0 0.0
  %5958 = vmatpush1.msra.mxu0 0.0
  %5959 = vmatprep.subr.mxu0 0.0
  %5960 = vmatpush1.msra.mxu0 0.0
  %5961 = vmatprep.subr.mxu0 0.0
  %5962 = vmatpush1.msra.mxu0 0.0
  %5963 = vmatprep.subr.mxu0 0.0
  %5964 = vmatpush1.msra.mxu0 0.0
  %5965 = vmatprep.subr.mxu0 0.0
  %5966 = vmatpush1.msra.mxu0 0.0
  %5967 = vmatprep.subr.mxu0 0.0
  %5968 = vmatpush1.msra.mxu0 0.0
  %5969 = vmatprep.subr.mxu0 0.0
  %5970 = vmatpush1.msra.mxu0 0.0
  %5971 = vmatprep.subr.mxu0 0.0
  %5972 = vmatpush1.msra.mxu0 0.0
  %5973 = vmatprep.subr.mxu0 0.0
  %5974 = vmatpush1.msra.mxu0 0.0
  %5975 = vmatprep.subr.mxu0 0.0
  %5976 = vmatpush1.msra.mxu0 0.0
  %5977 = vmatprep.subr.mxu0 0.0
  %5978 = vmatpush1.msra.mxu0 0.0
  %5979 = vmatprep.subr.mxu0 0.0
  %5980 = vmatpush1.msra.mxu0 0.0
  %5981 = vmatprep.subr.mxu0 0.0
  %5982 = vmatpush1.msra.mxu0 0.0
  %5983 = vmatprep.subr.mxu0 0.0
  %5984 = vmatpush1.msra.mxu0 0.0
  %5985 = vmatprep.subr.mxu0 0.0
  %5986 = vmatpush1.msra.mxu0 0.0
  %5987 = vmatprep.subr.mxu0 0.0
  %5988 = vmatpush1.msra.mxu0 0.0
  %5989 = vmatprep.subr.mxu0 0.0
  %5990 = vmatpush1.msra.mxu0 0.0
  %5991 = vmatprep.mubr.f32.mxu0 0.0
  %5992 = vmatmul.mubr.f32.gmra.mrb[0].mxu0 %v5925
  %v5993 = vpop.f32.mrb[0].mxu0
  %v5994 = vadd.f32 %v5923, %v5993
  %v5995 = vpop.f32.mrb[0].mxu0
  %5996 = vdwg.mxu0
  %v5997 = vld [vmem:[%s2 + $0x478] sm:$0xff]
  %v5998 = vld [vmem:[%s2 + $0x480] sm:$0xff]
  %v5999 = vld [vmem:[%s2 + $0x488] sm:$0xff]
  %v6000 = vld [vmem:[%s2 + $0x490] sm:$0xff]
  %v6001 = vld [vmem:[%s2 + $0x4b0] sm:$0xff]
  %6002 = vmatprep.subr.mxu0 0.0
  %6003 = vmatpush1.msra.mxu0 %v5997
  %6004 = vmatprep.subr.mxu0 0.0
  %6005 = vmatpush1.msra.mxu0 %v5998
  %6006 = vmatprep.subr.mxu0 0.0
  %6007 = vmatpush1.msra.mxu0 %v5999
  %6008 = vmatprep.subr.mxu0 0.0
  %6009 = vmatpush1.msra.mxu0 %v6000
  %6010 = vmatprep.subr.mxu0 0.0
  %6011 = vmatpush1.msra.mxu0 0.0
  %6012 = vmatprep.subr.mxu0 0.0
  %6013 = vmatpush1.msra.mxu0 0.0
  %6014 = vmatprep.subr.mxu0 0.0
  %6015 = vmatpush1.msra.mxu0 0.0
  %6016 = vmatprep.subr.mxu0 0.0
  %6017 = vmatpush1.msra.mxu0 0.0
  %6018 = vmatprep.subr.mxu0 0.0
  %6019 = vmatpush1.msra.mxu0 0.0
  %6020 = vmatprep.subr.mxu0 0.0
  %6021 = vmatpush1.msra.mxu0 0.0
  %6022 = vmatprep.subr.mxu0 0.0
  %6023 = vmatpush1.msra.mxu0 0.0
  %6024 = vmatprep.subr.mxu0 0.0
  %6025 = vmatpush1.msra.mxu0 0.0
  %6026 = vmatprep.subr.mxu0 0.0
  %6027 = vmatpush1.msra.mxu0 0.0
  %6028 = vmatprep.subr.mxu0 0.0
  %6029 = vmatpush1.msra.mxu0 0.0
  %6030 = vmatprep.subr.mxu0 0.0
  %6031 = vmatpush1.msra.mxu0 0.0
  %6032 = vmatprep.subr.mxu0 0.0
  %6033 = vmatpush1.msra.mxu0 0.0
  %6034 = vmatprep.subr.mxu0 0.0
  %6035 = vmatpush1.msra.mxu0 0.0
  %6036 = vmatprep.subr.mxu0 0.0
  %6037 = vmatpush1.msra.mxu0 0.0
  %6038 = vmatprep.subr.mxu0 0.0
  %6039 = vmatpush1.msra.mxu0 0.0
  %6040 = vmatprep.subr.mxu0 0.0
  %6041 = vmatpush1.msra.mxu0 0.0
  %6042 = vmatprep.subr.mxu0 0.0
  %6043 = vmatpush1.msra.mxu0 0.0
  %6044 = vmatprep.subr.mxu0 0.0
  %6045 = vmatpush1.msra.mxu0 0.0
  %6046 = vmatprep.subr.mxu0 0.0
  %6047 = vmatpush1.msra.mxu0 0.0
  %6048 = vmatprep.subr.mxu0 0.0
  %6049 = vmatpush1.msra.mxu0 0.0
  %6050 = vmatprep.subr.mxu0 0.0
  %6051 = vmatpush1.msra.mxu0 0.0
  %6052 = vmatprep.subr.mxu0 0.0
  %6053 = vmatpush1.msra.mxu0 0.0
  %6054 = vmatprep.subr.mxu0 0.0
  %6055 = vmatpush1.msra.mxu0 0.0
  %6056 = vmatprep.subr.mxu0 0.0
  %6057 = vmatpush1.msra.mxu0 0.0
  %6058 = vmatprep.subr.mxu0 0.0
  %6059 = vmatpush1.msra.mxu0 0.0
  %6060 = vmatprep.subr.mxu0 0.0
  %6061 = vmatpush1.msra.mxu0 0.0
  %6062 = vmatprep.subr.mxu0 0.0
  %6063 = vmatpush1.msra.mxu0 0.0
  %6064 = vmatprep.subr.mxu0 0.0
  %6065 = vmatpush1.msra.mxu0 0.0
  %6066 = vmatprep.mubr.f32.mxu0 0.0
  %6067 = vmatmul.mubr.f32.gmra.mrb[0].mxu0 %v4941
  %v6068 = vpop.f32.mrb[0].mxu0
  %v6069 = vadd.f32 0.0, %v6068
  %v6070 = vpop.f32.mrb[0].mxu0
  %6071 = vmatprep.mubr.f32.mxu0 0.0
  %6072 = vmatmul.mubr.f32.gmra.mrb[0].mxu0 %v4944
  %v6073 = vpop.f32.mrb[0].mxu0
  %v6074 = vadd.f32 0.0, %v6073
  %v6075 = vpop.f32.mrb[0].mxu0
  %6076 = vdwg.mxu0
  %6081 = vrot.lane.b32.xlu0 %v5997, 120
  %v6082 = vpop.permute.xlu0 %6081
  %6083 = vrot.lane.b32.xlu0 %v5998, 120
  %v6084 = vpop.permute.xlu0 %6083
  %6085 = vrot.lane.b32.xlu0 %v5999, 120
  %v6086 = vpop.permute.xlu0 %6085
  %6087 = vrot.lane.b32.xlu0 %v6000, 120
  %v6088 = vpop.permute.xlu0 %6087
  %6093 = vmatprep.subr.mxu0 0.0
  %6094 = vmatpush1.msra.mxu0 %v6082
  %6095 = vmatprep.subr.mxu0 0.0
  %6096 = vmatpush1.msra.mxu0 %v6084
  %6097 = vmatprep.subr.mxu0 0.0
  %6098 = vmatpush1.msra.mxu0 %v6086
  %6099 = vmatprep.subr.mxu0 0.0
  %6100 = vmatpush1.msra.mxu0 %v6088
  %6101 = vmatprep.subr.mxu0 0.0
  %6102 = vmatpush1.msra.mxu0 0.0
  %6103 = vmatprep.subr.mxu0 0.0
  %6104 = vmatpush1.msra.mxu0 0.0
  %6105 = vmatprep.subr.mxu0 0.0
  %6106 = vmatpush1.msra.mxu0 0.0
  %6107 = vmatprep.subr.mxu0 0.0
  %6108 = vmatpush1.msra.mxu0 0.0
  %6109 = vmatprep.subr.mxu0 0.0
  %6110 = vmatpush1.msra.mxu0 0.0
  %6111 = vmatprep.subr.mxu0 0.0
  %6112 = vmatpush1.msra.mxu0 0.0
  %6113 = vmatprep.subr.mxu0 0.0
  %6114 = vmatpush1.msra.mxu0 0.0
  %6115 = vmatprep.subr.mxu0 0.0
  %6116 = vmatpush1.msra.mxu0 0.0
  %6117 = vmatprep.subr.mxu0 0.0
  %6118 = vmatpush1.msra.mxu0 0.0
  %6119 = vmatprep.subr.mxu0 0.0
  %6120 = vmatpush1.msra.mxu0 0.0
  %6121 = vmatprep.subr.mxu0 0.0
  %6122 = vmatpush1.msra.mxu0 0.0
  %6123 = vmatprep.subr.mxu0 0.0
  %6124 = vmatpush1.msra.mxu0 0.0
  %6125 = vmatprep.subr.mxu0 0.0
  %6126 = vmatpush1.msra.mxu0 0.0
  %6127 = vmatprep.subr.mxu0 0.0
  %6128 = vmatpush1.msra.mxu0 0.0
  %6129 = vmatprep.subr.mxu0 0.0
  %6130 = vmatpush1.msra.mxu0 0.0
  %6131 = vmatprep.subr.mxu0 0.0
  %6132 = vmatpush1.msra.mxu0 0.0
  %6133 = vmatprep.subr.mxu0 0.0
  %6134 = vmatpush1.msra.mxu0 0.0
  %6135 = vmatprep.subr.mxu0 0.0
  %6136 = vmatpush1.msra.mxu0 0.0
  %6137 = vmatprep.subr.mxu0 0.0
  %6138 = vmatpush1.msra.mxu0 0.0
  %6139 = vmatprep.subr.mxu0 0.0
  %6140 = vmatpush1.msra.mxu0 0.0
  %6141 = vmatprep.subr.mxu0 0.0
  %6142 = vmatpush1.msra.mxu0 0.0
  %6143 = vmatprep.subr.mxu0 0.0
  %6144 = vmatpush1.msra.mxu0 0.0
  %6145 = vmatprep.subr.mxu0 0.0
  %6146 = vmatpush1.msra.mxu0 0.0
  %6147 = vmatprep.subr.mxu0 0.0
  %6148 = vmatpush1.msra.mxu0 0.0
  %6149 = vmatprep.subr.mxu0 0.0
  %6150 = vmatpush1.msra.mxu0 0.0
  %6151 = vmatprep.subr.mxu0 0.0
  %6152 = vmatpush1.msra.mxu0 0.0
  %6153 = vmatprep.subr.mxu0 0.0
  %6154 = vmatpush1.msra.mxu0 0.0
  %6155 = vmatprep.subr.mxu0 0.0
  %6156 = vmatpush1.msra.mxu0 0.0
  %6157 = vmatprep.mubr.f32.mxu0 0.0
  %6158 = vmatmul.mubr.f32.gmra.mrb[0].mxu0 %v4941
  %v6159 = vpop.f32.mrb[0].mxu0
  %v6160 = vadd.f32 0.0, %v6159
  %v6161 = vpop.f32.mrb[0].mxu0
  %6162 = vmatprep.mubr.f32.mxu0 0.0
  %6163 = vmatmul.mubr.f32.gmra.mrb[0].mxu0 %v4944
  %v6164 = vpop.f32.mrb[0].mxu0
  %v6165 = vadd.f32 0.0, %v6164
  %v6166 = vpop.f32.mrb[0].mxu0
  %6167 = vdwg.mxu0
  %6168 = vrot.lane.b32.xlu0 %v5997, 112
  %v6169 = vpop.permute.xlu0 %6168
  %6170 = vrot.lane.b32.xlu0 %v5998, 112
  %v6171 = vpop.permute.xlu0 %6170
  %6172 = vrot.lane.b32.xlu0 %v5999, 112
  %v6173 = vpop.permute.xlu0 %6172
  %6174 = vrot.lane.b32.xlu0 %v6000, 112
  %v6175 = vpop.permute.xlu0 %6174
  %6180 = vmatprep.subr.mxu0 0.0
  %6181 = vmatpush1.msra.mxu0 %v6169
  %6182 = vmatprep.subr.mxu0 0.0
  %6183 = vmatpush1.msra.mxu0 %v6171
  %6184 = vmatprep.subr.mxu0 0.0
  %6185 = vmatpush1.msra.mxu0 %v6173
  %6186 = vmatprep.subr.mxu0 0.0
  %6187 = vmatpush1.msra.mxu0 %v6175
  %6188 = vmatprep.subr.mxu0 0.0
  %6189 = vmatpush1.msra.mxu0 0.0
  %6190 = vmatprep.subr.mxu0 0.0
  %6191 = vmatpush1.msra.mxu0 0.0
  %6192 = vmatprep.subr.mxu0 0.0
  %6193 = vmatpush1.msra.mxu0 0.0
  %6194 = vmatprep.subr.mxu0 0.0
  %6195 = vmatpush1.msra.mxu0 0.0
  %6196 = vmatprep.subr.mxu0 0.0
  %6197 = vmatpush1.msra.mxu0 0.0
  %6198 = vmatprep.subr.mxu0 0.0
  %6199 = vmatpush1.msra.mxu0 0.0
  %6200 = vmatprep.subr.mxu0 0.0
  %6201 = vmatpush1.msra.mxu0 0.0
  %6202 = vmatprep.subr.mxu0 0.0
  %6203 = vmatpush1.msra.mxu0 0.0
  %6204 = vmatprep.subr.mxu0 0.0
  %6205 = vmatpush1.msra.mxu0 0.0
  %6206 = vmatprep.subr.mxu0 0.0
  %6207 = vmatpush1.msra.mxu0 0.0
  %6208 = vmatprep.subr.mxu0 0.0
  %6209 = vmatpush1.msra.mxu0 0.0
  %6210 = vmatprep.subr.mxu0 0.0
  %6211 = vmatpush1.msra.mxu0 0.0
  %6212 = vmatprep.subr.mxu0 0.0
  %6213 = vmatpush1.msra.mxu0 0.0
  %6214 = vmatprep.subr.mxu0 0.0
  %6215 = vmatpush1.msra.mxu0 0.0
  %6216 = vmatprep.subr.mxu0 0.0
  %6217 = vmatpush1.msra.mxu0 0.0
  %6218 = vmatprep.subr.mxu0 0.0
  %6219 = vmatpush1.msra.mxu0 0.0
  %6220 = vmatprep.subr.mxu0 0.0
  %6221 = vmatpush1.msra.mxu0 0.0
  %6222 = vmatprep.subr.mxu0 0.0
  %6223 = vmatpush1.msra.mxu0 0.0
  %6224 = vmatprep.subr.mxu0 0.0
  %6225 = vmatpush1.msra.mxu0 0.0
  %6226 = vmatprep.subr.mxu0 0.0
  %6227 = vmatpush1.msra.mxu0 0.0
  %6228 = vmatprep.subr.mxu0 0.0
  %6229 = vmatpush1.msra.mxu0 0.0
  %6230 = vmatprep.subr.mxu0 0.0
  %6231 = vmatpush1.msra.mxu0 0.0
  %6232 = vmatprep.subr.mxu0 0.0
  %6233 = vmatpush1.msra.mxu0 0.0
  %6234 = vmatprep.subr.mxu0 0.0
  %6235 = vmatpush1.msra.mxu0 0.0
  %6236 = vmatprep.subr.mxu0 0.0
  %6237 = vmatpush1.msra.mxu0 0.0
  %6238 = vmatprep.subr.mxu0 0.0
  %6239 = vmatpush1.msra.mxu0 0.0
  %6240 = vmatprep.subr.mxu0 0.0
  %6241 = vmatpush1.msra.mxu0 0.0
  %6242 = vmatprep.subr.mxu0 0.0
  %6243 = vmatpush1.msra.mxu0 0.0
  %6244 = vmatprep.mubr.f32.mxu0 0.0
  %6245 = vmatmul.mubr.f32.gmra.mrb[0].mxu0 %v4941
  %v6246 = vpop.f32.mrb[0].mxu0
  %v6247 = vadd.f32 0.0, %v6246
  %v6248 = vpop.f32.mrb[0].mxu0
  %6249 = vmatprep.mubr.f32.mxu0 0.0
  %6250 = vmatmul.mubr.f32.gmra.mrb[0].mxu0 %v4944
  %v6251 = vpop.f32.mrb[0].mxu0
  %v6252 = vadd.f32 0.0, %v6251
  %v6253 = vpop.f32.mrb[0].mxu0
  %6254 = vdwg.mxu0
  %6255 = vrot.lane.b32.xlu0 %v5997, 104
  %v6256 = vpop.permute.xlu0 %6255
  %6257 = vrot.lane.b32.xlu0 %v5998, 104
  %v6258 = vpop.permute.xlu0 %6257
  %6259 = vrot.lane.b32.xlu0 %v5999, 104
  %v6260 = vpop.permute.xlu0 %6259
  %6261 = vrot.lane.b32.xlu0 %v6000, 104
  %v6262 = vpop.permute.xlu0 %6261
  %6267 = vmatprep.subr.mxu0 0.0
  %6268 = vmatpush1.msra.mxu0 %v6256
  %6269 = vmatprep.subr.mxu0 0.0
  %6270 = vmatpush1.msra.mxu0 %v6258
  %6271 = vmatprep.subr.mxu0 0.0
  %6272 = vmatpush1.msra.mxu0 %v6260
  %6273 = vmatprep.subr.mxu0 0.0
  %6274 = vmatpush1.msra.mxu0 %v6262
  %6275 = vmatprep.subr.mxu0 0.0
  %6276 = vmatpush1.msra.mxu0 0.0
  %6277 = vmatprep.subr.mxu0 0.0
  %6278 = vmatpush1.msra.mxu0 0.0
  %6279 = vmatprep.subr.mxu0 0.0
  %6280 = vmatpush1.msra.mxu0 0.0
  %6281 = vmatprep.subr.mxu0 0.0
  %6282 = vmatpush1.msra.mxu0 0.0
  %6283 = vmatprep.subr.mxu0 0.0
  %6284 = vmatpush1.msra.mxu0 0.0
  %6285 = vmatprep.subr.mxu0 0.0
  %6286 = vmatpush1.msra.mxu0 0.0
  %6287 = vmatprep.subr.mxu0 0.0
  %6288 = vmatpush1.msra.mxu0 0.0
  %6289 = vmatprep.subr.mxu0 0.0
  %6290 = vmatpush1.msra.mxu0 0.0
  %6291 = vmatprep.subr.mxu0 0.0
  %6292 = vmatpush1.msra.mxu0 0.0
  %6293 = vmatprep.subr.mxu0 0.0
  %6294 = vmatpush1.msra.mxu0 0.0
  %6295 = vmatprep.subr.mxu0 0.0
  %6296 = vmatpush1.msra.mxu0 0.0
  %6297 = vmatprep.subr.mxu0 0.0
  %6298 = vmatpush1.msra.mxu0 0.0
  %6299 = vmatprep.subr.mxu0 0.0
  %6300 = vmatpush1.msra.mxu0 0.0
  %6301 = vmatprep.subr.mxu0 0.0
  %6302 = vmatpush1.msra.mxu0 0.0
  %6303 = vmatprep.subr.mxu0 0.0
  %6304 = vmatpush1.msra.mxu0 0.0
  %6305 = vmatprep.subr.mxu0 0.0
  %6306 = vmatpush1.msra.mxu0 0.0
  %6307 = vmatprep.subr.mxu0 0.0
  %6308 = vmatpush1.msra.mxu0 0.0
  %6309 = vmatprep.subr.mxu0 0.0
  %6310 = vmatpush1.msra.mxu0 0.0
  %6311 = vmatprep.subr.mxu0 0.0
  %6312 = vmatpush1.msra.mxu0 0.0
  %6313 = vmatprep.subr.mxu0 0.0
  %6314 = vmatpush1.msra.mxu0 0.0
  %6315 = vmatprep.subr.mxu0 0.0
  %6316 = vmatpush1.msra.mxu0 0.0
  %6317 = vmatprep.subr.mxu0 0.0
  %6318 = vmatpush1.msra.mxu0 0.0
  %6319 = vmatprep.subr.mxu0 0.0
  %6320 = vmatpush1.msra.mxu0 0.0
  %6321 = vmatprep.subr.mxu0 0.0
  %6322 = vmatpush1.msra.mxu0 0.0
  %6323 = vmatprep.subr.mxu0 0.0
  %6324 = vmatpush1.msra.mxu0 0.0
  %6325 = vmatprep.subr.mxu0 0.0
  %6326 = vmatpush1.msra.mxu0 0.0
  %6327 = vmatprep.subr.mxu0 0.0
  %6328 = vmatpush1.msra.mxu0 0.0
  %6329 = vmatprep.subr.mxu0 0.0
  %6330 = vmatpush1.msra.mxu0 0.0
  %6331 = vmatprep.mubr.f32.mxu0 0.0
  %6332 = vmatmul.mubr.f32.gmra.mrb[0].mxu0 %v4941
  %v6333 = vpop.f32.mrb[0].mxu0
  %v6334 = vadd.f32 0.0, %v6333
  %v6335 = vpop.f32.mrb[0].mxu0
  %6336 = vmatprep.mubr.f32.mxu0 0.0
  %6337 = vmatmul.mubr.f32.gmra.mrb[0].mxu0 %v4944
  %v6338 = vpop.f32.mrb[0].mxu0
  %v6339 = vadd.f32 0.0, %v6338
  %v6340 = vpop.f32.mrb[0].mxu0
  %6341 = vdwg.mxu0
  %6342 = vmatprep.subr.mxu0 0.0
  %6343 = vmatpush1.msra.mxu0 %v5997
  %6344 = vmatprep.subr.mxu0 0.0
  %6345 = vmatpush1.msra.mxu0 %v5998
  %6346 = vmatprep.subr.mxu0 0.0
  %6347 = vmatpush1.msra.mxu0 %v5999
  %6348 = vmatprep.subr.mxu0 0.0
  %6349 = vmatpush1.msra.mxu0 %v6000
  %6350 = vmatprep.subr.mxu0 0.0
  %6351 = vmatpush1.msra.mxu0 0.0
  %6352 = vmatprep.subr.mxu0 0.0
  %6353 = vmatpush1.msra.mxu0 0.0
  %6354 = vmatprep.subr.mxu0 0.0
  %6355 = vmatpush1.msra.mxu0 0.0
  %6356 = vmatprep.subr.mxu0 0.0
  %6357 = vmatpush1.msra.mxu0 0.0
  %6358 = vmatprep.subr.mxu0 0.0
  %6359 = vmatpush1.msra.mxu0 0.0
  %6360 = vmatprep.subr.mxu0 0.0
  %6361 = vmatpush1.msra.mxu0 0.0
  %6362 = vmatprep.subr.mxu0 0.0
  %6363 = vmatpush1.msra.mxu0 0.0
  %6364 = vmatprep.subr.mxu0 0.0
  %6365 = vmatpush1.msra.mxu0 0.0
  %6366 = vmatprep.subr.mxu0 0.0
  %6367 = vmatpush1.msra.mxu0 0.0
  %6368 = vmatprep.subr.mxu0 0.0
  %6369 = vmatpush1.msra.mxu0 0.0
  %6370 = vmatprep.subr.mxu0 0.0
  %6371 = vmatpush1.msra.mxu0 0.0
  %6372 = vmatprep.subr.mxu0 0.0
  %6373 = vmatpush1.msra.mxu0 0.0
  %6374 = vmatprep.subr.mxu0 0.0
  %6375 = vmatpush1.msra.mxu0 0.0
  %6376 = vmatprep.subr.mxu0 0.0
  %6377 = vmatpush1.msra.mxu0 0.0
  %6378 = vmatprep.subr.mxu0 0.0
  %6379 = vmatpush1.msra.mxu0 0.0
  %6380 = vmatprep.subr.mxu0 0.0
  %6381 = vmatpush1.msra.mxu0 0.0
  %6382 = vmatprep.subr.mxu0 0.0
  %6383 = vmatpush1.msra.mxu0 0.0
  %6384 = vmatprep.subr.mxu0 0.0
  %6385 = vmatpush1.msra.mxu0 0.0
  %6386 = vmatprep.subr.mxu0 0.0
  %6387 = vmatpush1.msra.mxu0 0.0
  %6388 = vmatprep.subr.mxu0 0.0
  %6389 = vmatpush1.msra.mxu0 0.0
  %6390 = vmatprep.subr.mxu0 0.0
  %6391 = vmatpush1.msra.mxu0 0.0
  %6392 = vmatprep.subr.mxu0 0.0
  %6393 = vmatpush1.msra.mxu0 0.0
  %6394 = vmatprep.subr.mxu0 0.0
  %6395 = vmatpush1.msra.mxu0 0.0
  %6396 = vmatprep.subr.mxu0 0.0
  %6397 = vmatpush1.msra.mxu0 0.0
  %6398 = vmatprep.subr.mxu0 0.0
  %6399 = vmatpush1.msra.mxu0 0.0
  %6400 = vmatprep.subr.mxu0 0.0
  %6401 = vmatpush1.msra.mxu0 0.0
  %6402 = vmatprep.subr.mxu0 0.0
  %6403 = vmatpush1.msra.mxu0 0.0
  %6404 = vmatprep.subr.mxu0 0.0
  %6405 = vmatpush1.msra.mxu0 0.0
  %6406 = vmatprep.mubr.f32.mxu0 0.0
  %6407 = vmatmul.mubr.f32.gmra.mrb[0].mxu0 %v4947
  %v6408 = vpop.f32.mrb[0].mxu0
  %v6409 = vadd.f32 0.0, %v6408
  %v6410 = vpop.f32.mrb[0].mxu0
  %6411 = vmatprep.mubr.f32.mxu0 0.0
  %6412 = vmatmul.mubr.f32.gmra.mrb[0].mxu0 %v4950
  %v6413 = vpop.f32.mrb[0].mxu0
  %v6414 = vadd.f32 0.0, %v6413
  %v6415 = vpop.f32.mrb[0].mxu0
  %6416 = vdwg.mxu0
  %6417 = vmatprep.subr.mxu0 0.0
  %6418 = vmatpush1.msra.mxu0 %v6082
  %6419 = vmatprep.subr.mxu0 0.0
  %6420 = vmatpush1.msra.mxu0 %v6084
  %6421 = vmatprep.subr.mxu0 0.0
  %6422 = vmatpush1.msra.mxu0 %v6086
  %6423 = vmatprep.subr.mxu0 0.0
  %6424 = vmatpush1.msra.mxu0 %v6088
  %6425 = vmatprep.subr.mxu0 0.0
  %6426 = vmatpush1.msra.mxu0 0.0
  %6427 = vmatprep.subr.mxu0 0.0
  %6428 = vmatpush1.msra.mxu0 0.0
  %6429 = vmatprep.subr.mxu0 0.0
  %6430 = vmatpush1.msra.mxu0 0.0
  %6431 = vmatprep.subr.mxu0 0.0
  %6432 = vmatpush1.msra.mxu0 0.0
  %6433 = vmatprep.subr.mxu0 0.0
  %6434 = vmatpush1.msra.mxu0 0.0
  %6435 = vmatprep.subr.mxu0 0.0
  %6436 = vmatpush1.msra.mxu0 0.0
  %6437 = vmatprep.subr.mxu0 0.0
  %6438 = vmatpush1.msra.mxu0 0.0
  %6439 = vmatprep.subr.mxu0 0.0
  %6440 = vmatpush1.msra.mxu0 0.0
  %6441 = vmatprep.subr.mxu0 0.0
  %6442 = vmatpush1.msra.mxu0 0.0
  %6443 = vmatprep.subr.mxu0 0.0
  %6444 = vmatpush1.msra.mxu0 0.0
  %6445 = vmatprep.subr.mxu0 0.0
  %6446 = vmatpush1.msra.mxu0 0.0
  %6447 = vmatprep.subr.mxu0 0.0
  %6448 = vmatpush1.msra.mxu0 0.0
  %6449 = vmatprep.subr.mxu0 0.0
  %6450 = vmatpush1.msra.mxu0 0.0
  %6451 = vmatprep.subr.mxu0 0.0
  %6452 = vmatpush1.msra.mxu0 0.0
  %6453 = vmatprep.subr.mxu0 0.0
  %6454 = vmatpush1.msra.mxu0 0.0
  %6455 = vmatprep.subr.mxu0 0.0
  %6456 = vmatpush1.msra.mxu0 0.0
  %6457 = vmatprep.subr.mxu0 0.0
  %6458 = vmatpush1.msra.mxu0 0.0
  %6459 = vmatprep.subr.mxu0 0.0
  %6460 = vmatpush1.msra.mxu0 0.0
  %6461 = vmatprep.subr.mxu0 0.0
  %6462 = vmatpush1.msra.mxu0 0.0
  %6463 = vmatprep.subr.mxu0 0.0
  %6464 = vmatpush1.msra.mxu0 0.0
  %6465 = vmatprep.subr.mxu0 0.0
  %6466 = vmatpush1.msra.mxu0 0.0
  %6467 = vmatprep.subr.mxu0 0.0
  %6468 = vmatpush1.msra.mxu0 0.0
  %6469 = vmatprep.subr.mxu0 0.0
  %6470 = vmatpush1.msra.mxu0 0.0
  %6471 = vmatprep.subr.mxu0 0.0
  %6472 = vmatpush1.msra.mxu0 0.0
  %6473 = vmatprep.subr.mxu0 0.0
  %6474 = vmatpush1.msra.mxu0 0.0
  %6475 = vmatprep.subr.mxu0 0.0
  %6476 = vmatpush1.msra.mxu0 0.0
  %6477 = vmatprep.subr.mxu0 0.0
  %6478 = vmatpush1.msra.mxu0 0.0
  %6479 = vmatprep.subr.mxu0 0.0
  %6480 = vmatpush1.msra.mxu0 0.0
  %6481 = vmatprep.mubr.f32.mxu0 0.0
  %6482 = vmatmul.mubr.f32.gmra.mrb[0].mxu0 %v4947
  %v6483 = vpop.f32.mrb[0].mxu0
  %v6484 = vadd.f32 0.0, %v6483
  %v6485 = vpop.f32.mrb[0].mxu0
  %6486 = vmatprep.mubr.f32.mxu0 0.0
  %6487 = vmatmul.mubr.f32.gmra.mrb[0].mxu0 %v4950
  %v6488 = vpop.f32.mrb[0].mxu0
  %v6489 = vadd.f32 0.0, %v6488
  %v6490 = vpop.f32.mrb[0].mxu0
  %6491 = vdwg.mxu0
  %6492 = vmatprep.subr.mxu0 0.0
  %6493 = vmatpush1.msra.mxu0 %v6169
  %6494 = vmatprep.subr.mxu0 0.0
  %6495 = vmatpush1.msra.mxu0 %v6171
  %6496 = vmatprep.subr.mxu0 0.0
  %6497 = vmatpush1.msra.mxu0 %v6173
  %6498 = vmatprep.subr.mxu0 0.0
  %6499 = vmatpush1.msra.mxu0 %v6175
  %6500 = vmatprep.subr.mxu0 0.0
  %6501 = vmatpush1.msra.mxu0 0.0
  %6502 = vmatprep.subr.mxu0 0.0
  %6503 = vmatpush1.msra.mxu0 0.0
  %6504 = vmatprep.subr.mxu0 0.0
  %6505 = vmatpush1.msra.mxu0 0.0
  %6506 = vmatprep.subr.mxu0 0.0
  %6507 = vmatpush1.msra.mxu0 0.0
  %6508 = vmatprep.subr.mxu0 0.0
  %6509 = vmatpush1.msra.mxu0 0.0
  %6510 = vmatprep.subr.mxu0 0.0
  %6511 = vmatpush1.msra.mxu0 0.0
  %6512 = vmatprep.subr.mxu0 0.0
  %6513 = vmatpush1.msra.mxu0 0.0
  %6514 = vmatprep.subr.mxu0 0.0
  %6515 = vmatpush1.msra.mxu0 0.0
  %6516 = vmatprep.subr.mxu0 0.0
  %6517 = vmatpush1.msra.mxu0 0.0
  %6518 = vmatprep.subr.mxu0 0.0
  %6519 = vmatpush1.msra.mxu0 0.0
  %6520 = vmatprep.subr.mxu0 0.0
  %6521 = vmatpush1.msra.mxu0 0.0
  %6522 = vmatprep.subr.mxu0 0.0
  %6523 = vmatpush1.msra.mxu0 0.0
  %6524 = vmatprep.subr.mxu0 0.0
  %6525 = vmatpush1.msra.mxu0 0.0
  %6526 = vmatprep.subr.mxu0 0.0
  %6527 = vmatpush1.msra.mxu0 0.0
  %6528 = vmatprep.subr.mxu0 0.0
  %6529 = vmatpush1.msra.mxu0 0.0
  %6530 = vmatprep.subr.mxu0 0.0
  %6531 = vmatpush1.msra.mxu0 0.0
  %6532 = vmatprep.subr.mxu0 0.0
  %6533 = vmatpush1.msra.mxu0 0.0
  %6534 = vmatprep.subr.mxu0 0.0
  %6535 = vmatpush1.msra.mxu0 0.0
  %6536 = vmatprep.subr.mxu0 0.0
  %6537 = vmatpush1.msra.mxu0 0.0
  %6538 = vmatprep.subr.mxu0 0.0
  %6539 = vmatpush1.msra.mxu0 0.0
  %6540 = vmatprep.subr.mxu0 0.0
  %6541 = vmatpush1.msra.mxu0 0.0
  %6542 = vmatprep.subr.mxu0 0.0
  %6543 = vmatpush1.msra.mxu0 0.0
  %6544 = vmatprep.subr.mxu0 0.0
  %6545 = vmatpush1.msra.mxu0 0.0
  %6546 = vmatprep.subr.mxu0 0.0
  %6547 = vmatpush1.msra.mxu0 0.0
  %6548 = vmatprep.subr.mxu0 0.0
  %6549 = vmatpush1.msra.mxu0 0.0
  %6550 = vmatprep.subr.mxu0 0.0
  %6551 = vmatpush1.msra.mxu0 0.0
  %6552 = vmatprep.subr.mxu0 0.0
  %6553 = vmatpush1.msra.mxu0 0.0
  %6554 = vmatprep.subr.mxu0 0.0
  %6555 = vmatpush1.msra.mxu0 0.0
  %6556 = vmatprep.mubr.f32.mxu0 0.0
  %6557 = vmatmul.mubr.f32.gmra.mrb[0].mxu0 %v4947
  %v6558 = vpop.f32.mrb[0].mxu0
  %v6559 = vadd.f32 0.0, %v6558
  %v6560 = vpop.f32.mrb[0].mxu0
  %6561 = vmatprep.mubr.f32.mxu0 0.0
  %6562 = vmatmul.mubr.f32.gmra.mrb[0].mxu0 %v4950
  %v6563 = vpop.f32.mrb[0].mxu0
  %v6564 = vadd.f32 0.0, %v6563
  %v6565 = vpop.f32.mrb[0].mxu0
  %6566 = vdwg.mxu0
  %6567 = vmatprep.subr.mxu0 0.0
  %6568 = vmatpush1.msra.mxu0 %v6256
  %6569 = vmatprep.subr.mxu0 0.0
  %6570 = vmatpush1.msra.mxu0 %v6258
  %6571 = vmatprep.subr.mxu0 0.0
  %6572 = vmatpush1.msra.mxu0 %v6260
  %6573 = vmatprep.subr.mxu0 0.0
  %6574 = vmatpush1.msra.mxu0 %v6262
  %6575 = vmatprep.subr.mxu0 0.0
  %6576 = vmatpush1.msra.mxu0 0.0
  %6577 = vmatprep.subr.mxu0 0.0
  %6578 = vmatpush1.msra.mxu0 0.0
  %6579 = vmatprep.subr.mxu0 0.0
  %6580 = vmatpush1.msra.mxu0 0.0
  %6581 = vmatprep.subr.mxu0 0.0
  %6582 = vmatpush1.msra.mxu0 0.0
  %6583 = vmatprep.subr.mxu0 0.0
  %6584 = vmatpush1.msra.mxu0 0.0
  %6585 = vmatprep.subr.mxu0 0.0
  %6586 = vmatpush1.msra.mxu0 0.0
  %6587 = vmatprep.subr.mxu0 0.0
  %6588 = vmatpush1.msra.mxu0 0.0
  %6589 = vmatprep.subr.mxu0 0.0
  %6590 = vmatpush1.msra.mxu0 0.0
  %6591 = vmatprep.subr.mxu0 0.0
  %6592 = vmatpush1.msra.mxu0 0.0
  %6593 = vmatprep.subr.mxu0 0.0
  %6594 = vmatpush1.msra.mxu0 0.0
  %6595 = vmatprep.subr.mxu0 0.0
  %6596 = vmatpush1.msra.mxu0 0.0
  %6597 = vmatprep.subr.mxu0 0.0
  %6598 = vmatpush1.msra.mxu0 0.0
  %6599 = vmatprep.subr.mxu0 0.0
  %6600 = vmatpush1.msra.mxu0 0.0
  %6601 = vmatprep.subr.mxu0 0.0
  %6602 = vmatpush1.msra.mxu0 0.0
  %6603 = vmatprep.subr.mxu0 0.0
  %6604 = vmatpush1.msra.mxu0 0.0
  %6605 = vmatprep.subr.mxu0 0.0
  %6606 = vmatpush1.msra.mxu0 0.0
  %6607 = vmatprep.subr.mxu0 0.0
  %6608 = vmatpush1.msra.mxu0 0.0
  %6609 = vmatprep.subr.mxu0 0.0
  %6610 = vmatpush1.msra.mxu0 0.0
  %6611 = vmatprep.subr.mxu0 0.0
  %6612 = vmatpush1.msra.mxu0 0.0
  %6613 = vmatprep.subr.mxu0 0.0
  %6614 = vmatpush1.msra.mxu0 0.0
  %6615 = vmatprep.subr.mxu0 0.0
  %6616 = vmatpush1.msra.mxu0 0.0
  %6617 = vmatprep.subr.mxu0 0.0
  %6618 = vmatpush1.msra.mxu0 0.0
  %6619 = vmatprep.subr.mxu0 0.0
  %6620 = vmatpush1.msra.mxu0 0.0
  %6621 = vmatprep.subr.mxu0 0.0
  %6622 = vmatpush1.msra.mxu0 0.0
  %6623 = vmatprep.subr.mxu0 0.0
  %6624 = vmatpush1.msra.mxu0 0.0
  %6625 = vmatprep.subr.mxu0 0.0
  %6626 = vmatpush1.msra.mxu0 0.0
  %6627 = vmatprep.subr.mxu0 0.0
  %6628 = vmatpush1.msra.mxu0 0.0
  %6629 = vmatprep.subr.mxu0 0.0
  %6630 = vmatpush1.msra.mxu0 0.0
  %6631 = vmatprep.mubr.f32.mxu0 0.0
  %6632 = vmatmul.mubr.f32.gmra.mrb[0].mxu0 %v4947
  %v6633 = vpop.f32.mrb[0].mxu0
  %v6634 = vadd.f32 0.0, %v6633
  %v6635 = vpop.f32.mrb[0].mxu0
  %6636 = vmatprep.mubr.f32.mxu0 0.0
  %6637 = vmatmul.mubr.f32.gmra.mrb[0].mxu0 %v4950
  %v6638 = vpop.f32.mrb[0].mxu0
  %v6639 = vadd.f32 0.0, %v6638
  %v6640 = vpop.f32.mrb[0].mxu0
  %6641 = vdwg.mxu0
  %v6642 = vld [vmem:[%s2 + $0x498] sm:$0x1]
  %v6643 = vlaneseq
  %v6644 = vshrl.u32 %v6643, 7
  %v6645 = vsub.s32 0, %v6644
  %v6646 = vrot.slane %v6642, %v6645
  %v6647 = vadd.f32 %v6069, %v6646
  %v6648 = vadd.f32 %v6074, %v6646
  %v6649 = vadd.f32 %v6160, %v6646
  %v6650 = vadd.f32 %v6165, %v6646
  %v6651 = vadd.f32 %v6247, %v6646
  %v6652 = vadd.f32 %v6252, %v6646
  %v6653 = vadd.f32 %v6334, %v6646
  %v6654 = vadd.f32 %v6339, %v6646
  %v6655 = vadd.f32 %v6409, %v6646
  %v6656 = vadd.f32 %v6414, %v6646
  %v6657 = vadd.f32 %v6484, %v6646
  %v6658 = vadd.f32 %v6489, %v6646
  %v6659 = vadd.f32 %v6559, %v6646
  %v6660 = vadd.f32 %v6564, %v6646
  %v6661 = vadd.f32 %v6634, %v6646
  %v6662 = vadd.f32 %v6639, %v6646
  %v6663 = vld [vmem:[%s2 + $0x4a0] sm:$0x1]
  %v6664 = vld [vmem:[%s2 + $0x4a8] sm:$0x1]
  %v6665 = vsel %vm2759, %v6647, 0.0
  %6666 = vadd.xlane.f32.xlu0 %v6665
  %v6667 = vpop.xlane.xlu0 %6666
  %v6668 = vsel %vm2759, %v6648, 0.0
  %6669 = vadd.xlane.f32.xlu0 %v6668
  %v6670 = vpop.xlane.xlu0 %6669
  %v6671 = vsel %vm2759, %v6649, 0.0
  %6672 = vadd.xlane.f32.xlu0 %v6671
  %v6673 = vpop.xlane.xlu0 %6672
  %v6674 = vsel %vm2759, %v6650, 0.0
  %6675 = vadd.xlane.f32.xlu0 %v6674
  %v6676 = vpop.xlane.xlu0 %6675
  %v6677 = vsel %vm2759, %v6651, 0.0
  %6678 = vadd.xlane.f32.xlu0 %v6677
  %v6679 = vpop.xlane.xlu0 %6678
  %v6680 = vsel %vm2759, %v6652, 0.0
  %6681 = vadd.xlane.f32.xlu0 %v6680
  %v6682 = vpop.xlane.xlu0 %6681
  %v6683 = vsel %vm2759, %v6653, 0.0
  %6684 = vadd.xlane.f32.xlu0 %v6683
  %v6685 = vpop.xlane.xlu0 %6684
  %v6686 = vsel %vm2759, %v6654, 0.0
  %6687 = vadd.xlane.f32.xlu0 %v6686
  %v6688 = vpop.xlane.xlu0 %6687
  %v6689 = vsel %vm2759, %v6655, 0.0
  %6690 = vadd.xlane.f32.xlu0 %v6689
  %v6691 = vpop.xlane.xlu0 %6690
  %v6692 = vsel %vm2759, %v6656, 0.0
  %6693 = vadd.xlane.f32.xlu0 %v6692
  %v6694 = vpop.xlane.xlu0 %6693
  %v6695 = vsel %vm2759, %v6657, 0.0
  %6696 = vadd.xlane.f32.xlu0 %v6695
  %v6697 = vpop.xlane.xlu0 %6696
  %v6698 = vsel %vm2759, %v6658, 0.0
  %6699 = vadd.xlane.f32.xlu0 %v6698
  %v6700 = vpop.xlane.xlu0 %6699
  %v6701 = vsel %vm2759, %v6659, 0.0
  %6702 = vadd.xlane.f32.xlu0 %v6701
  %v6703 = vpop.xlane.xlu0 %6702
  %v6704 = vsel %vm2759, %v6660, 0.0
  %6705 = vadd.xlane.f32.xlu0 %v6704
  %v6706 = vpop.xlane.xlu0 %6705
  %v6707 = vsel %vm2759, %v6661, 0.0
  %6708 = vadd.xlane.f32.xlu0 %v6707
  %v6709 = vpop.xlane.xlu0 %6708
  %v6710 = vsel %vm2759, %v6662, 0.0
  %6711 = vadd.xlane.f32.xlu0 %v6710
  %v6712 = vpop.xlane.xlu0 %6711
  %v6713 = vrcp.pop 8.0
  %v6714 = vmul.f32 %v6667, %v6713
  %v6715 = vmul.f32 %v6670, %v6713
  %v6716 = vmul.f32 %v6673, %v6713
  %v6717 = vmul.f32 %v6676, %v6713
  %v6718 = vmul.f32 %v6679, %v6713
  %v6719 = vmul.f32 %v6682, %v6713
  %v6720 = vmul.f32 %v6685, %v6713
  %v6721 = vmul.f32 %v6688, %v6713
  %v6722 = vmul.f32 %v6691, %v6713
  %v6723 = vmul.f32 %v6694, %v6713
  %v6724 = vmul.f32 %v6697, %v6713
  %v6725 = vmul.f32 %v6700, %v6713
  %v6726 = vmul.f32 %v6703, %v6713
  %v6727 = vmul.f32 %v6706, %v6713
  %v6728 = vmul.f32 %v6709, %v6713
  %v6729 = vmul.f32 %v6712, %v6713
  %v6730 = vsub.f32 %v6647, %v6714
  %v6731 = vsub.f32 %v6648, %v6715
  %v6732 = vsub.f32 %v6649, %v6716
  %v6733 = vsub.f32 %v6650, %v6717
  %v6734 = vsub.f32 %v6651, %v6718
  %v6735 = vsub.f32 %v6652, %v6719
  %v6736 = vsub.f32 %v6653, %v6720
  %v6737 = vsub.f32 %v6654, %v6721
  %v6738 = vsub.f32 %v6655, %v6722
  %v6739 = vsub.f32 %v6656, %v6723
  %v6740 = vsub.f32 %v6657, %v6724
  %v6741 = vsub.f32 %v6658, %v6725
  %v6742 = vsub.f32 %v6659, %v6726
  %v6743 = vsub.f32 %v6660, %v6727
  %v6744 = vsub.f32 %v6661, %v6728
  %v6745 = vsub.f32 %v6662, %v6729
  %v6746 = vmul.f32 %v6730, %v6730
  %v6747 = vmul.f32 %v6731, %v6731
  %v6748 = vmul.f32 %v6732, %v6732
  %v6749 = vmul.f32 %v6733, %v6733
  %v6750 = vmul.f32 %v6734, %v6734
  %v6751 = vmul.f32 %v6735, %v6735
  %v6752 = vmul.f32 %v6736, %v6736
  %v6753 = vmul.f32 %v6737, %v6737
  %v6754 = vmul.f32 %v6738, %v6738
  %v6755 = vmul.f32 %v6739, %v6739
  %v6756 = vmul.f32 %v6740, %v6740
  %v6757 = vmul.f32 %v6741, %v6741
  %v6758 = vmul.f32 %v6742, %v6742
  %v6759 = vmul.f32 %v6743, %v6743
  %v6760 = vmul.f32 %v6744, %v6744
  %v6761 = vmul.f32 %v6745, %v6745
  %v6762 = vsel %vm2759, %v6746, 0.0
  %6763 = vadd.xlane.f32.xlu0 %v6762
  %v6764 = vpop.xlane.xlu0 %6763
  %v6765 = vsel %vm2759, %v6747, 0.0
  %6766 = vadd.xlane.f32.xlu0 %v6765
  %v6767 = vpop.xlane.xlu0 %6766
  %v6768 = vsel %vm2759, %v6748, 0.0
  %6769 = vadd.xlane.f32.xlu0 %v6768
  %v6770 = vpop.xlane.xlu0 %6769
  %v6771 = vsel %vm2759, %v6749, 0.0
  %6772 = vadd.xlane.f32.xlu0 %v6771
  %v6773 = vpop.xlane.xlu0 %6772
  %v6774 = vsel %vm2759, %v6750, 0.0
  %6775 = vadd.xlane.f32.xlu0 %v6774
  %v6776 = vpop.xlane.xlu0 %6775
  %v6777 = vsel %vm2759, %v6751, 0.0
  %6778 = vadd.xlane.f32.xlu0 %v6777
  %v6779 = vpop.xlane.xlu0 %6778
  %v6780 = vsel %vm2759, %v6752, 0.0
  %6781 = vadd.xlane.f32.xlu0 %v6780
  %v6782 = vpop.xlane.xlu0 %6781
  %v6783 = vsel %vm2759, %v6753, 0.0
  %6784 = vadd.xlane.f32.xlu0 %v6783
  %v6785 = vpop.xlane.xlu0 %6784
  %v6786 = vsel %vm2759, %v6754, 0.0
  %6787 = vadd.xlane.f32.xlu0 %v6786
  %v6788 = vpop.xlane.xlu0 %6787
  %v6789 = vsel %vm2759, %v6755, 0.0
  %6790 = vadd.xlane.f32.xlu0 %v6789
  %v6791 = vpop.xlane.xlu0 %6790
  %v6792 = vsel %vm2759, %v6756, 0.0
  %6793 = vadd.xlane.f32.xlu0 %v6792
  %v6794 = vpop.xlane.xlu0 %6793
  %v6795 = vsel %vm2759, %v6757, 0.0
  %6796 = vadd.xlane.f32.xlu0 %v6795
  %v6797 = vpop.xlane.xlu0 %6796
  %v6798 = vsel %vm2759, %v6758, 0.0
  %6799 = vadd.xlane.f32.xlu0 %v6798
  %v6800 = vpop.xlane.xlu0 %6799
  %v6801 = vsel %vm2759, %v6759, 0.0
  %6802 = vadd.xlane.f32.xlu0 %v6801
  %v6803 = vpop.xlane.xlu0 %6802
  %v6804 = vsel %vm2759, %v6760, 0.0
  %6805 = vadd.xlane.f32.xlu0 %v6804
  %v6806 = vpop.xlane.xlu0 %6805
  %v6807 = vsel %vm2759, %v6761, 0.0
  %6808 = vadd.xlane.f32.xlu0 %v6807
  %v6809 = vpop.xlane.xlu0 %6808
  %v6810 = vmul.f32 %v6764, %v6713
  %v6811 = vmul.f32 %v6767, %v6713
  %v6812 = vmul.f32 %v6770, %v6713
  %v6813 = vmul.f32 %v6773, %v6713
  %v6814 = vmul.f32 %v6776, %v6713
  %v6815 = vmul.f32 %v6779, %v6713
  %v6816 = vmul.f32 %v6782, %v6713
  %v6817 = vmul.f32 %v6785, %v6713
  %v6818 = vmul.f32 %v6788, %v6713
  %v6819 = vmul.f32 %v6791, %v6713
  %v6820 = vmul.f32 %v6794, %v6713
  %v6821 = vmul.f32 %v6797, %v6713
  %v6822 = vmul.f32 %v6800, %v6713
  %v6823 = vmul.f32 %v6803, %v6713
  %v6824 = vmul.f32 %v6806, %v6713
  %v6825 = vmul.f32 %v6809, %v6713
  %v6826 = vadd.f32 %v6810, 1e-06
  %v6827 = vadd.f32 %v6811, 1e-06
  %v6828 = vadd.f32 %v6812, 1e-06
  %v6829 = vadd.f32 %v6813, 1e-06
  %v6830 = vadd.f32 %v6814, 1e-06
  %v6831 = vadd.f32 %v6815, 1e-06
  %v6832 = vadd.f32 %v6816, 1e-06
  %v6833 = vadd.f32 %v6817, 1e-06
  %v6834 = vadd.f32 %v6818, 1e-06
  %v6835 = vadd.f32 %v6819, 1e-06
  %v6836 = vadd.f32 %v6820, 1e-06
  %v6837 = vadd.f32 %v6821, 1e-06
  %v6838 = vadd.f32 %v6822, 1e-06
  %v6839 = vadd.f32 %v6823, 1e-06
  %v6840 = vadd.f32 %v6824, 1e-06
  %v6841 = vadd.f32 %v6825, 1e-06
  %v6842 = vrsqrt.pop %v6826
  %v6843 = vrsqrt.pop %v6827
  %v6844 = vrsqrt.pop %v6828
  %v6845 = vrsqrt.pop %v6829
  %v6846 = vrsqrt.pop %v6830
  %v6847 = vrsqrt.pop %v6831
  %v6848 = vrsqrt.pop %v6832
  %v6849 = vrsqrt.pop %v6833
  %v6850 = vrsqrt.pop %v6834
  %v6851 = vrsqrt.pop %v6835
  %v6852 = vrsqrt.pop %v6836
  %v6853 = vrsqrt.pop %v6837
  %v6854 = vrsqrt.pop %v6838
  %v6855 = vrsqrt.pop %v6839
  %v6856 = vrsqrt.pop %v6840
  %v6857 = vrsqrt.pop %v6841
  %v6858 = vmul.f32 %v6730, %v6842
  %v6859 = vmul.f32 %v6731, %v6843
  %v6860 = vmul.f32 %v6732, %v6844
  %v6861 = vmul.f32 %v6733, %v6845
  %v6862 = vmul.f32 %v6734, %v6846
  %v6863 = vmul.f32 %v6735, %v6847
  %v6864 = vmul.f32 %v6736, %v6848
  %v6865 = vmul.f32 %v6737, %v6849
  %v6866 = vmul.f32 %v6738, %v6850
  %v6867 = vmul.f32 %v6739, %v6851
  %v6868 = vmul.f32 %v6740, %v6852
  %v6869 = vmul.f32 %v6741, %v6853
  %v6870 = vmul.f32 %v6742, %v6854
  %v6871 = vmul.f32 %v6743, %v6855
  %v6872 = vmul.f32 %v6744, %v6856
  %v6873 = vmul.f32 %v6745, %v6857
  %v6874 = vlaneseq
  %v6875 = vshrl.u32 %v6874, 7
  %v6876 = vsub.s32 0, %v6875
  %v6877 = vrot.slane %v6663, %v6876
  %v6878 = vmul.f32 %v6858, %v6877
  %v6879 = vmul.f32 %v6859, %v6877
  %v6880 = vmul.f32 %v6860, %v6877
  %v6881 = vmul.f32 %v6861, %v6877
  %v6882 = vmul.f32 %v6862, %v6877
  %v6883 = vmul.f32 %v6863, %v6877
  %v6884 = vmul.f32 %v6864, %v6877
  %v6885 = vmul.f32 %v6865, %v6877
  %v6886 = vmul.f32 %v6866, %v6877
  %v6887 = vmul.f32 %v6867, %v6877
  %v6888 = vmul.f32 %v6868, %v6877
  %v6889 = vmul.f32 %v6869, %v6877
  %v6890 = vmul.f32 %v6870, %v6877
  %v6891 = vmul.f32 %v6871, %v6877
  %v6892 = vmul.f32 %v6872, %v6877
  %v6893 = vmul.f32 %v6873, %v6877
  %v6894 = vlaneseq
  %v6895 = vshrl.u32 %v6894, 7
  %v6896 = vsub.s32 0, %v6895
  %v6897 = vrot.slane %v6664, %v6896
  %v6898 = vadd.f32 %v6878, %v6897
  %v6899 = vadd.f32 %v6879, %v6897
  %v6900 = vadd.f32 %v6880, %v6897
  %v6901 = vadd.f32 %v6881, %v6897
  %v6902 = vadd.f32 %v6882, %v6897
  %v6903 = vadd.f32 %v6883, %v6897
  %v6904 = vadd.f32 %v6884, %v6897
  %v6905 = vadd.f32 %v6885, %v6897
  %v6906 = vadd.f32 %v6886, %v6897
  %v6907 = vadd.f32 %v6887, %v6897
  %v6908 = vadd.f32 %v6888, %v6897
  %v6909 = vadd.f32 %v6889, %v6897
  %v6910 = vadd.f32 %v6890, %v6897
  %v6911 = vadd.f32 %v6891, %v6897
  %v6912 = vadd.f32 %v6892, %v6897
  %v6913 = vadd.f32 %v6893, %v6897
  %v6914 = vmul.f32 %v6898, %v6898
  %v6915 = vmul.f32 %v6899, %v6899
  %v6916 = vmul.f32 %v6900, %v6900
  %v6917 = vmul.f32 %v6901, %v6901
  %v6918 = vmul.f32 %v6902, %v6902
  %v6919 = vmul.f32 %v6903, %v6903
  %v6920 = vmul.f32 %v6904, %v6904
  %v6921 = vmul.f32 %v6905, %v6905
  %v6922 = vmul.f32 %v6906, %v6906
  %v6923 = vmul.f32 %v6907, %v6907
  %v6924 = vmul.f32 %v6908, %v6908
  %v6925 = vmul.f32 %v6909, %v6909
  %v6926 = vmul.f32 %v6910, %v6910
  %v6927 = vmul.f32 %v6911, %v6911
  %v6928 = vmul.f32 %v6912, %v6912
  %v6929 = vmul.f32 %v6913, %v6913
  %v6930 = vmul.f32 %v6898, %v6914
  %v6931 = vmul.f32 %v6899, %v6915
  %v6932 = vmul.f32 %v6900, %v6916
  %v6933 = vmul.f32 %v6901, %v6917
  %v6934 = vmul.f32 %v6902, %v6918
  %v6935 = vmul.f32 %v6903, %v6919
  %v6936 = vmul.f32 %v6904, %v6920
  %v6937 = vmul.f32 %v6905, %v6921
  %v6938 = vmul.f32 %v6906, %v6922
  %v6939 = vmul.f32 %v6907, %v6923
  %v6940 = vmul.f32 %v6908, %v6924
  %v6941 = vmul.f32 %v6909, %v6925
  %v6942 = vmul.f32 %v6910, %v6926
  %v6943 = vmul.f32 %v6911, %v6927
  %v6944 = vmul.f32 %v6912, %v6928
  %v6945 = vmul.f32 %v6913, %v6929
  %v6946 = vmul.f32 %v6930, 0.044715
  %v6947 = vmul.f32 %v6931, 0.044715
  %v6948 = vmul.f32 %v6932, 0.044715
  %v6949 = vmul.f32 %v6933, 0.044715
  %v6950 = vmul.f32 %v6934, 0.044715
  %v6951 = vmul.f32 %v6935, 0.044715
  %v6952 = vmul.f32 %v6936, 0.044715
  %v6953 = vmul.f32 %v6937, 0.044715
  %v6954 = vmul.f32 %v6938, 0.044715
  %v6955 = vmul.f32 %v6939, 0.044715
  %v6956 = vmul.f32 %v6940, 0.044715
  %v6957 = vmul.f32 %v6941, 0.044715
  %v6958 = vmul.f32 %v6942, 0.044715
  %v6959 = vmul.f32 %v6943, 0.044715
  %v6960 = vmul.f32 %v6944, 0.044715
  %v6961 = vmul.f32 %v6945, 0.044715
  %v6962 = vadd.f32 %v6898, %v6946
  %v6963 = vadd.f32 %v6899, %v6947
  %v6964 = vadd.f32 %v6900, %v6948
  %v6965 = vadd.f32 %v6901, %v6949
  %v6966 = vadd.f32 %v6902, %v6950
  %v6967 = vadd.f32 %v6903, %v6951
  %v6968 = vadd.f32 %v6904, %v6952
  %v6969 = vadd.f32 %v6905, %v6953
  %v6970 = vadd.f32 %v6906, %v6954
  %v6971 = vadd.f32 %v6907, %v6955
  %v6972 = vadd.f32 %v6908, %v6956
  %v6973 = vadd.f32 %v6909, %v6957
  %v6974 = vadd.f32 %v6910, %v6958
  %v6975 = vadd.f32 %v6911, %v6959
  %v6976 = vadd.f32 %v6912, %v6960
  %v6977 = vadd.f32 %v6913, %v6961
  %v6978 = vmul.f32 %v6962, 0.7978846
  %v6979 = vmul.f32 %v6963, 0.7978846
  %v6980 = vmul.f32 %v6964, 0.7978846
  %v6981 = vmul.f32 %v6965, 0.7978846
  %v6982 = vmul.f32 %v6966, 0.7978846
  %v6983 = vmul.f32 %v6967, 0.7978846
  %v6984 = vmul.f32 %v6968, 0.7978846
  %v6985 = vmul.f32 %v6969, 0.7978846
  %v6986 = vmul.f32 %v6970, 0.7978846
  %v6987 = vmul.f32 %v6971, 0.7978846
  %v6988 = vmul.f32 %v6972, 0.7978846
  %v6989 = vmul.f32 %v6973, 0.7978846
  %v6990 = vmul.f32 %v6974, 0.7978846
  %v6991 = vmul.f32 %v6975, 0.7978846
  %v6992 = vmul.f32 %v6976, 0.7978846
  %v6993 = vmul.f32 %v6977, 0.7978846
  %v6994 = vtanh.pop %v6978
  %v6995 = vtanh.pop %v6979
  %v6996 = vtanh.pop %v6980
  %v6997 = vtanh.pop %v6981
  %v6998 = vtanh.pop %v6982
  %v6999 = vtanh.pop %v6983
  %v7000 = vtanh.pop %v6984
  %v7001 = vtanh.pop %v6985
  %v7002 = vtanh.pop %v6986
  %v7003 = vtanh.pop %v6987
  %v7004 = vtanh.pop %v6988
  %v7005 = vtanh.pop %v6989
  %v7006 = vtanh.pop %v6990
  %v7007 = vtanh.pop %v6991
  %v7008 = vtanh.pop %v6992
  %v7009 = vtanh.pop %v6993
  %v7010 = vadd.f32 %v6994, 1.0
  %v7011 = vadd.f32 %v6995, 1.0
  %v7012 = vadd.f32 %v6996, 1.0
  %v7013 = vadd.f32 %v6997, 1.0
  %v7014 = vadd.f32 %v6998, 1.0
  %v7015 = vadd.f32 %v6999, 1.0
  %v7016 = vadd.f32 %v7000, 1.0
  %v7017 = vadd.f32 %v7001, 1.0
  %v7018 = vadd.f32 %v7002, 1.0
  %v7019 = vadd.f32 %v7003, 1.0
  %v7020 = vadd.f32 %v7004, 1.0
  %v7021 = vadd.f32 %v7005, 1.0
  %v7022 = vadd.f32 %v7006, 1.0
  %v7023 = vadd.f32 %v7007, 1.0
  %v7024 = vadd.f32 %v7008, 1.0
  %v7025 = vadd.f32 %v7009, 1.0
  %v7026 = vmul.f32 %v7010, 0.5
  %v7027 = vmul.f32 %v7011, 0.5
  %v7028 = vmul.f32 %v7012, 0.5
  %v7029 = vmul.f32 %v7013, 0.5
  %v7030 = vmul.f32 %v7014, 0.5
  %v7031 = vmul.f32 %v7015, 0.5
  %v7032 = vmul.f32 %v7016, 0.5
  %v7033 = vmul.f32 %v7017, 0.5
  %v7034 = vmul.f32 %v7018, 0.5
  %v7035 = vmul.f32 %v7019, 0.5
  %v7036 = vmul.f32 %v7020, 0.5
  %v7037 = vmul.f32 %v7021, 0.5
  %v7038 = vmul.f32 %v7022, 0.5
  %v7039 = vmul.f32 %v7023, 0.5
  %v7040 = vmul.f32 %v7024, 0.5
  %v7041 = vmul.f32 %v7025, 0.5
  %v7042 = vmul.f32 %v6898, %v7026
  %v7043 = vmul.f32 %v6899, %v7027
  %v7044 = vmul.f32 %v6900, %v7028
  %v7045 = vmul.f32 %v6901, %v7029
  %v7046 = vmul.f32 %v6902, %v7030
  %v7047 = vmul.f32 %v6903, %v7031
  %v7048 = vmul.f32 %v6904, %v7032
  %v7049 = vmul.f32 %v6905, %v7033
  %v7050 = vmul.f32 %v6906, %v7034
  %v7051 = vmul.f32 %v6907, %v7035
  %v7052 = vmul.f32 %v6908, %v7036
  %v7053 = vmul.f32 %v6909, %v7037
  %v7054 = vmul.f32 %v6910, %v7038
  %v7055 = vmul.f32 %v6911, %v7039
  %v7056 = vmul.f32 %v6912, %v7040
  %v7057 = vmul.f32 %v6913, %v7041
  %v7059 = vsel %vm2759, %v7042, 0
  %v7062 = vsel %vm2759, %v7043, 0
  %v7065 = vsel %vm2759, %v7044, 0
  %v7068 = vsel %vm2759, %v7045, 0
  %v7071 = vsel %vm2759, %v7046, 0
  %v7074 = vsel %vm2759, %v7047, 0
  %v7077 = vsel %vm2759, %v7048, 0
  %v7080 = vsel %vm2759, %v7049, 0
  %7082 = vmatprep.subr.mxu0 0.0
  %7083 = vmatpush1.msra.mxu0 %v6001
  %7084 = vmatprep.subr.mxu0 0.0
  %7085 = vmatpush1.msra.mxu0 0.0
  %7086 = vmatprep.subr.mxu0 0.0
  %7087 = vmatpush1.msra.mxu0 0.0
  %7088 = vmatprep.subr.mxu0 0.0
  %7089 = vmatpush1.msra.mxu0 0.0
  %7090 = vmatprep.subr.mxu0 0.0
  %7091 = vmatpush1.msra.mxu0 0.0
  %7092 = vmatprep.subr.mxu0 0.0
  %7093 = vmatpush1.msra.mxu0 0.0
  %7094 = vmatprep.subr.mxu0 0.0
  %7095 = vmatpush1.msra.mxu0 0.0
  %7096 = vmatprep.subr.mxu0 0.0
  %7097 = vmatpush1.msra.mxu0 0.0
  %7098 = vmatprep.subr.mxu0 0.0
  %7099 = vmatpush1.msra.mxu0 0.0
  %7100 = vmatprep.subr.mxu0 0.0
  %7101 = vmatpush1.msra.mxu0 0.0
  %7102 = vmatprep.subr.mxu0 0.0
  %7103 = vmatpush1.msra.mxu0 0.0
  %7104 = vmatprep.subr.mxu0 0.0
  %7105 = vmatpush1.msra.mxu0 0.0
  %7106 = vmatprep.subr.mxu0 0.0
  %7107 = vmatpush1.msra.mxu0 0.0
  %7108 = vmatprep.subr.mxu0 0.0
  %7109 = vmatpush1.msra.mxu0 0.0
  %7110 = vmatprep.subr.mxu0 0.0
  %7111 = vmatpush1.msra.mxu0 0.0
  %7112 = vmatprep.subr.mxu0 0.0
  %7113 = vmatpush1.msra.mxu0 0.0
  %7114 = vmatprep.subr.mxu0 0.0
  %7115 = vmatpush1.msra.mxu0 0.0
  %7116 = vmatprep.subr.mxu0 0.0
  %7117 = vmatpush1.msra.mxu0 0.0
  %7118 = vmatprep.subr.mxu0 0.0
  %7119 = vmatpush1.msra.mxu0 0.0
  %7120 = vmatprep.subr.mxu0 0.0
  %7121 = vmatpush1.msra.mxu0 0.0
  %7122 = vmatprep.subr.mxu0 0.0
  %7123 = vmatpush1.msra.mxu0 0.0
  %7124 = vmatprep.subr.mxu0 0.0
  %7125 = vmatpush1.msra.mxu0 0.0
  %7126 = vmatprep.subr.mxu0 0.0
  %7127 = vmatpush1.msra.mxu0 0.0
  %7128 = vmatprep.subr.mxu0 0.0
  %7129 = vmatpush1.msra.mxu0 0.0
  %7130 = vmatprep.subr.mxu0 0.0
  %7131 = vmatpush1.msra.mxu0 0.0
  %7132 = vmatprep.subr.mxu0 0.0
  %7133 = vmatpush1.msra.mxu0 0.0
  %7134 = vmatprep.subr.mxu0 0.0
  %7135 = vmatpush1.msra.mxu0 0.0
  %7136 = vmatprep.subr.mxu0 0.0
  %7137 = vmatpush1.msra.mxu0 0.0
  %7138 = vmatprep.subr.mxu0 0.0
  %7139 = vmatpush1.msra.mxu0 0.0
  %7140 = vmatprep.subr.mxu0 0.0
  %7141 = vmatpush1.msra.mxu0 0.0
  %7142 = vmatprep.subr.mxu0 0.0
  %7143 = vmatpush1.msra.mxu0 0.0
  %7144 = vmatprep.subr.mxu0 0.0
  %7145 = vmatpush1.msra.mxu0 0.0
  %7146 = vmatprep.mubr.f32.mxu0 0.0
  %7147 = vmatmul.mubr.f32.gmra.mrb[0].mxu0 %v7059
  %v7148 = vpop.f32.mrb[0].mxu0
  %v7149 = vadd.f32 0.0, %v7148
  %v7150 = vpop.f32.mrb[0].mxu0
  %7151 = vmatprep.mubr.f32.mxu0 0.0
  %7152 = vmatmul.mubr.f32.gmra.mrb[0].mxu0 %v7062
  %v7153 = vpop.f32.mrb[0].mxu0
  %v7154 = vadd.f32 0.0, %v7153
  %v7155 = vpop.f32.mrb[0].mxu0
  %7156 = vmatprep.mubr.f32.mxu0 0.0
  %7157 = vmatmul.mubr.f32.gmra.mrb[0].mxu0 %v7065
  %v7158 = vpop.f32.mrb[0].mxu0
  %v7159 = vadd.f32 0.0, %v7158
  %v7160 = vpop.f32.mrb[0].mxu0
  %7161 = vmatprep.mubr.f32.mxu0 0.0
  %7162 = vmatmul.mubr.f32.gmra.mrb[0].mxu0 %v7068
  %v7163 = vpop.f32.mrb[0].mxu0
  %v7164 = vadd.f32 0.0, %v7163
  %v7165 = vpop.f32.mrb[0].mxu0
  %7166 = vmatprep.mubr.f32.mxu0 0.0
  %7167 = vmatmul.mubr.f32.gmra.mrb[0].mxu0 %v7071
  %v7168 = vpop.f32.mrb[0].mxu0
  %v7169 = vadd.f32 0.0, %v7168
  %v7170 = vpop.f32.mrb[0].mxu0
  %7171 = vmatprep.mubr.f32.mxu0 0.0
  %7172 = vmatmul.mubr.f32.gmra.mrb[0].mxu0 %v7074
  %v7173 = vpop.f32.mrb[0].mxu0
  %v7174 = vadd.f32 0.0, %v7173
  %v7175 = vpop.f32.mrb[0].mxu0
  %7176 = vmatprep.mubr.f32.mxu0 0.0
  %7177 = vmatmul.mubr.f32.gmra.mrb[0].mxu0 %v7077
  %v7178 = vpop.f32.mrb[0].mxu0
  %v7179 = vadd.f32 0.0, %v7178
  %v7180 = vpop.f32.mrb[0].mxu0
  %7181 = vmatprep.mubr.f32.mxu0 0.0
  %7182 = vmatmul.mubr.f32.gmra.mrb[0].mxu0 %v7080
  %v7183 = vpop.f32.mrb[0].mxu0
  %v7184 = vadd.f32 0.0, %v7183
  %v7185 = vpop.f32.mrb[0].mxu0
  %7186 = vdwg.mxu0
  %7188 = vrot.lane.b32.xlu0 %v6001, 124
  %v7189 = vpop.permute.xlu0 %7188
  %7191 = vmatprep.subr.mxu0 0.0
  %7192 = vmatpush1.msra.mxu0 %v7189
  %7193 = vmatprep.subr.mxu0 0.0
  %7194 = vmatpush1.msra.mxu0 0.0
  %7195 = vmatprep.subr.mxu0 0.0
  %7196 = vmatpush1.msra.mxu0 0.0
  %7197 = vmatprep.subr.mxu0 0.0
  %7198 = vmatpush1.msra.mxu0 0.0
  %7199 = vmatprep.subr.mxu0 0.0
  %7200 = vmatpush1.msra.mxu0 0.0
  %7201 = vmatprep.subr.mxu0 0.0
  %7202 = vmatpush1.msra.mxu0 0.0
  %7203 = vmatprep.subr.mxu0 0.0
  %7204 = vmatpush1.msra.mxu0 0.0
  %7205 = vmatprep.subr.mxu0 0.0
  %7206 = vmatpush1.msra.mxu0 0.0
  %7207 = vmatprep.subr.mxu0 0.0
  %7208 = vmatpush1.msra.mxu0 0.0
  %7209 = vmatprep.subr.mxu0 0.0
  %7210 = vmatpush1.msra.mxu0 0.0
  %7211 = vmatprep.subr.mxu0 0.0
  %7212 = vmatpush1.msra.mxu0 0.0
  %7213 = vmatprep.subr.mxu0 0.0
  %7214 = vmatpush1.msra.mxu0 0.0
  %7215 = vmatprep.subr.mxu0 0.0
  %7216 = vmatpush1.msra.mxu0 0.0
  %7217 = vmatprep.subr.mxu0 0.0
  %7218 = vmatpush1.msra.mxu0 0.0
  %7219 = vmatprep.subr.mxu0 0.0
  %7220 = vmatpush1.msra.mxu0 0.0
  %7221 = vmatprep.subr.mxu0 0.0
  %7222 = vmatpush1.msra.mxu0 0.0
  %7223 = vmatprep.subr.mxu0 0.0
  %7224 = vmatpush1.msra.mxu0 0.0
  %7225 = vmatprep.subr.mxu0 0.0
  %7226 = vmatpush1.msra.mxu0 0.0
  %7227 = vmatprep.subr.mxu0 0.0
  %7228 = vmatpush1.msra.mxu0 0.0
  %7229 = vmatprep.subr.mxu0 0.0
  %7230 = vmatpush1.msra.mxu0 0.0
  %7231 = vmatprep.subr.mxu0 0.0
  %7232 = vmatpush1.msra.mxu0 0.0
  %7233 = vmatprep.subr.mxu0 0.0
  %7234 = vmatpush1.msra.mxu0 0.0
  %7235 = vmatprep.subr.mxu0 0.0
  %7236 = vmatpush1.msra.mxu0 0.0
  %7237 = vmatprep.subr.mxu0 0.0
  %7238 = vmatpush1.msra.mxu0 0.0
  %7239 = vmatprep.subr.mxu0 0.0
  %7240 = vmatpush1.msra.mxu0 0.0
  %7241 = vmatprep.subr.mxu0 0.0
  %7242 = vmatpush1.msra.mxu0 0.0
  %7243 = vmatprep.subr.mxu0 0.0
  %7244 = vmatpush1.msra.mxu0 0.0
  %7245 = vmatprep.subr.mxu0 0.0
  %7246 = vmatpush1.msra.mxu0 0.0
  %7247 = vmatprep.subr.mxu0 0.0
  %7248 = vmatpush1.msra.mxu0 0.0
  %7249 = vmatprep.subr.mxu0 0.0
  %7250 = vmatpush1.msra.mxu0 0.0
  %7251 = vmatprep.subr.mxu0 0.0
  %7252 = vmatpush1.msra.mxu0 0.0
  %7253 = vmatprep.subr.mxu0 0.0
  %7254 = vmatpush1.msra.mxu0 0.0
  %7255 = vmatprep.mubr.f32.mxu0 0.0
  %7256 = vmatmul.mubr.f32.gmra.mrb[0].mxu0 %v7059
  %v7257 = vpop.f32.mrb[0].mxu0
  %v7258 = vadd.f32 0.0, %v7257
  %v7259 = vpop.f32.mrb[0].mxu0
  %7260 = vmatprep.mubr.f32.mxu0 0.0
  %7261 = vmatmul.mubr.f32.gmra.mrb[0].mxu0 %v7062
  %v7262 = vpop.f32.mrb[0].mxu0
  %v7263 = vadd.f32 0.0, %v7262
  %v7264 = vpop.f32.mrb[0].mxu0
  %7265 = vmatprep.mubr.f32.mxu0 0.0
  %7266 = vmatmul.mubr.f32.gmra.mrb[0].mxu0 %v7065
  %v7267 = vpop.f32.mrb[0].mxu0
  %v7268 = vadd.f32 0.0, %v7267
  %v7269 = vpop.f32.mrb[0].mxu0
  %7270 = vmatprep.mubr.f32.mxu0 0.0
  %7271 = vmatmul.mubr.f32.gmra.mrb[0].mxu0 %v7068
  %v7272 = vpop.f32.mrb[0].mxu0
  %v7273 = vadd.f32 0.0, %v7272
  %v7274 = vpop.f32.mrb[0].mxu0
  %7275 = vmatprep.mubr.f32.mxu0 0.0
  %7276 = vmatmul.mubr.f32.gmra.mrb[0].mxu0 %v7071
  %v7277 = vpop.f32.mrb[0].mxu0
  %v7278 = vadd.f32 0.0, %v7277
  %v7279 = vpop.f32.mrb[0].mxu0
  %7280 = vmatprep.mubr.f32.mxu0 0.0
  %7281 = vmatmul.mubr.f32.gmra.mrb[0].mxu0 %v7074
  %v7282 = vpop.f32.mrb[0].mxu0
  %v7283 = vadd.f32 0.0, %v7282
  %v7284 = vpop.f32.mrb[0].mxu0
  %7285 = vmatprep.mubr.f32.mxu0 0.0
  %7286 = vmatmul.mubr.f32.gmra.mrb[0].mxu0 %v7077
  %v7287 = vpop.f32.mrb[0].mxu0
  %v7288 = vadd.f32 0.0, %v7287
  %v7289 = vpop.f32.mrb[0].mxu0
  %7290 = vmatprep.mubr.f32.mxu0 0.0
  %7291 = vmatmul.mubr.f32.gmra.mrb[0].mxu0 %v7080
  %v7292 = vpop.f32.mrb[0].mxu0
  %v7293 = vadd.f32 0.0, %v7292
  %v7294 = vpop.f32.mrb[0].mxu0
  %7295 = vdwg.mxu0
  %7296 = vrot.lane.b32.xlu0 %v6001, 120
  %v7297 = vpop.permute.xlu0 %7296
  %7299 = vmatprep.subr.mxu0 0.0
  %7300 = vmatpush1.msra.mxu0 %v7297
  %7301 = vmatprep.subr.mxu0 0.0
  %7302 = vmatpush1.msra.mxu0 0.0
  %7303 = vmatprep.subr.mxu0 0.0
  %7304 = vmatpush1.msra.mxu0 0.0
  %7305 = vmatprep.subr.mxu0 0.0
  %7306 = vmatpush1.msra.mxu0 0.0
  %7307 = vmatprep.subr.mxu0 0.0
  %7308 = vmatpush1.msra.mxu0 0.0
  %7309 = vmatprep.subr.mxu0 0.0
  %7310 = vmatpush1.msra.mxu0 0.0
  %7311 = vmatprep.subr.mxu0 0.0
  %7312 = vmatpush1.msra.mxu0 0.0
  %7313 = vmatprep.subr.mxu0 0.0
  %7314 = vmatpush1.msra.mxu0 0.0
  %7315 = vmatprep.subr.mxu0 0.0
  %7316 = vmatpush1.msra.mxu0 0.0
  %7317 = vmatprep.subr.mxu0 0.0
  %7318 = vmatpush1.msra.mxu0 0.0
  %7319 = vmatprep.subr.mxu0 0.0
  %7320 = vmatpush1.msra.mxu0 0.0
  %7321 = vmatprep.subr.mxu0 0.0
  %7322 = vmatpush1.msra.mxu0 0.0
  %7323 = vmatprep.subr.mxu0 0.0
  %7324 = vmatpush1.msra.mxu0 0.0
  %7325 = vmatprep.subr.mxu0 0.0
  %7326 = vmatpush1.msra.mxu0 0.0
  %7327 = vmatprep.subr.mxu0 0.0
  %7328 = vmatpush1.msra.mxu0 0.0
  %7329 = vmatprep.subr.mxu0 0.0
  %7330 = vmatpush1.msra.mxu0 0.0
  %7331 = vmatprep.subr.mxu0 0.0
  %7332 = vmatpush1.msra.mxu0 0.0
  %7333 = vmatprep.subr.mxu0 0.0
  %7334 = vmatpush1.msra.mxu0 0.0
  %7335 = vmatprep.subr.mxu0 0.0
  %7336 = vmatpush1.msra.mxu0 0.0
  %7337 = vmatprep.subr.mxu0 0.0
  %7338 = vmatpush1.msra.mxu0 0.0
  %7339 = vmatprep.subr.mxu0 0.0
  %7340 = vmatpush1.msra.mxu0 0.0
  %7341 = vmatprep.subr.mxu0 0.0
  %7342 = vmatpush1.msra.mxu0 0.0
  %7343 = vmatprep.subr.mxu0 0.0
  %7344 = vmatpush1.msra.mxu0 0.0
  %7345 = vmatprep.subr.mxu0 0.0
  %7346 = vmatpush1.msra.mxu0 0.0
  %7347 = vmatprep.subr.mxu0 0.0
  %7348 = vmatpush1.msra.mxu0 0.0
  %7349 = vmatprep.subr.mxu0 0.0
  %7350 = vmatpush1.msra.mxu0 0.0
  %7351 = vmatprep.subr.mxu0 0.0
  %7352 = vmatpush1.msra.mxu0 0.0
  %7353 = vmatprep.subr.mxu0 0.0
  %7354 = vmatpush1.msra.mxu0 0.0
  %7355 = vmatprep.subr.mxu0 0.0
  %7356 = vmatpush1.msra.mxu0 0.0
  %7357 = vmatprep.subr.mxu0 0.0
  %7358 = vmatpush1.msra.mxu0 0.0
  %7359 = vmatprep.subr.mxu0 0.0
  %7360 = vmatpush1.msra.mxu0 0.0
  %7361 = vmatprep.subr.mxu0 0.0
  %7362 = vmatpush1.msra.mxu0 0.0
  %7363 = vmatprep.mubr.f32.mxu0 0.0
  %7364 = vmatmul.mubr.f32.gmra.mrb[0].mxu0 %v7059
  %v7365 = vpop.f32.mrb[0].mxu0
  %v7366 = vadd.f32 0.0, %v7365
  %v7367 = vpop.f32.mrb[0].mxu0
  %7368 = vmatprep.mubr.f32.mxu0 0.0
  %7369 = vmatmul.mubr.f32.gmra.mrb[0].mxu0 %v7062
  %v7370 = vpop.f32.mrb[0].mxu0
  %v7371 = vadd.f32 0.0, %v7370
  %v7372 = vpop.f32.mrb[0].mxu0
  %7373 = vmatprep.mubr.f32.mxu0 0.0
  %7374 = vmatmul.mubr.f32.gmra.mrb[0].mxu0 %v7065
  %v7375 = vpop.f32.mrb[0].mxu0
  %v7376 = vadd.f32 0.0, %v7375
  %v7377 = vpop.f32.mrb[0].mxu0
  %7378 = vmatprep.mubr.f32.mxu0 0.0
  %7379 = vmatmul.mubr.f32.gmra.mrb[0].mxu0 %v7068
  %v7380 = vpop.f32.mrb[0].mxu0
  %v7381 = vadd.f32 0.0, %v7380
  %v7382 = vpop.f32.mrb[0].mxu0
  %7383 = vmatprep.mubr.f32.mxu0 0.0
  %7384 = vmatmul.mubr.f32.gmra.mrb[0].mxu0 %v7071
  %v7385 = vpop.f32.mrb[0].mxu0
  %v7386 = vadd.f32 0.0, %v7385
  %v7387 = vpop.f32.mrb[0].mxu0
  %7388 = vmatprep.mubr.f32.mxu0 0.0
  %7389 = vmatmul.mubr.f32.gmra.mrb[0].mxu0 %v7074
  %v7390 = vpop.f32.mrb[0].mxu0
  %v7391 = vadd.f32 0.0, %v7390
  %v7392 = vpop.f32.mrb[0].mxu0
  %7393 = vmatprep.mubr.f32.mxu0 0.0
  %7394 = vmatmul.mubr.f32.gmra.mrb[0].mxu0 %v7077
  %v7395 = vpop.f32.mrb[0].mxu0
  %v7396 = vadd.f32 0.0, %v7395
  %v7397 = vpop.f32.mrb[0].mxu0
  %7398 = vmatprep.mubr.f32.mxu0 0.0
  %7399 = vmatmul.mubr.f32.gmra.mrb[0].mxu0 %v7080
  %v7400 = vpop.f32.mrb[0].mxu0
  %v7401 = vadd.f32 0.0, %v7400
  %v7402 = vpop.f32.mrb[0].mxu0
  %7403 = vdwg.mxu0
  %7404 = vrot.lane.b32.xlu0 %v6001, 116
  %v7405 = vpop.permute.xlu0 %7404
  %7407 = vmatprep.subr.mxu0 0.0
  %7408 = vmatpush1.msra.mxu0 %v7405
  %7409 = vmatprep.subr.mxu0 0.0
  %7410 = vmatpush1.msra.mxu0 0.0
  %7411 = vmatprep.subr.mxu0 0.0
  %7412 = vmatpush1.msra.mxu0 0.0
  %7413 = vmatprep.subr.mxu0 0.0
  %7414 = vmatpush1.msra.mxu0 0.0
  %7415 = vmatprep.subr.mxu0 0.0
  %7416 = vmatpush1.msra.mxu0 0.0
  %7417 = vmatprep.subr.mxu0 0.0
  %7418 = vmatpush1.msra.mxu0 0.0
  %7419 = vmatprep.subr.mxu0 0.0
  %7420 = vmatpush1.msra.mxu0 0.0
  %7421 = vmatprep.subr.mxu0 0.0
  %7422 = vmatpush1.msra.mxu0 0.0
  %7423 = vmatprep.subr.mxu0 0.0
  %7424 = vmatpush1.msra.mxu0 0.0
  %7425 = vmatprep.subr.mxu0 0.0
  %7426 = vmatpush1.msra.mxu0 0.0
  %7427 = vmatprep.subr.mxu0 0.0
  %7428 = vmatpush1.msra.mxu0 0.0
  %7429 = vmatprep.subr.mxu0 0.0
  %7430 = vmatpush1.msra.mxu0 0.0
  %7431 = vmatprep.subr.mxu0 0.0
  %7432 = vmatpush1.msra.mxu0 0.0
  %7433 = vmatprep.subr.mxu0 0.0
  %7434 = vmatpush1.msra.mxu0 0.0
  %7435 = vmatprep.subr.mxu0 0.0
  %7436 = vmatpush1.msra.mxu0 0.0
  %7437 = vmatprep.subr.mxu0 0.0
  %7438 = vmatpush1.msra.mxu0 0.0
  %7439 = vmatprep.subr.mxu0 0.0
  %7440 = vmatpush1.msra.mxu0 0.0
  %7441 = vmatprep.subr.mxu0 0.0
  %7442 = vmatpush1.msra.mxu0 0.0
  %7443 = vmatprep.subr.mxu0 0.0
  %7444 = vmatpush1.msra.mxu0 0.0
  %7445 = vmatprep.subr.mxu0 0.0
  %7446 = vmatpush1.msra.mxu0 0.0
  %7447 = vmatprep.subr.mxu0 0.0
  %7448 = vmatpush1.msra.mxu0 0.0
  %7449 = vmatprep.subr.mxu0 0.0
  %7450 = vmatpush1.msra.mxu0 0.0
  %7451 = vmatprep.subr.mxu0 0.0
  %7452 = vmatpush1.msra.mxu0 0.0
  %7453 = vmatprep.subr.mxu0 0.0
  %7454 = vmatpush1.msra.mxu0 0.0
  %7455 = vmatprep.subr.mxu0 0.0
  %7456 = vmatpush1.msra.mxu0 0.0
  %7457 = vmatprep.subr.mxu0 0.0
  %7458 = vmatpush1.msra.mxu0 0.0
  %7459 = vmatprep.subr.mxu0 0.0
  %7460 = vmatpush1.msra.mxu0 0.0
  %7461 = vmatprep.subr.mxu0 0.0
  %7462 = vmatpush1.msra.mxu0 0.0
  %7463 = vmatprep.subr.mxu0 0.0
  %7464 = vmatpush1.msra.mxu0 0.0
  %7465 = vmatprep.subr.mxu0 0.0
  %7466 = vmatpush1.msra.mxu0 0.0
  %7467 = vmatprep.subr.mxu0 0.0
  %7468 = vmatpush1.msra.mxu0 0.0
  %7469 = vmatprep.subr.mxu0 0.0
  %7470 = vmatpush1.msra.mxu0 0.0
  %7471 = vmatprep.mubr.f32.mxu0 0.0
  %7472 = vmatmul.mubr.f32.gmra.mrb[0].mxu0 %v7059
  %v7473 = vpop.f32.mrb[0].mxu0
  %v7474 = vadd.f32 0.0, %v7473
  %v7475 = vpop.f32.mrb[0].mxu0
  %7476 = vmatprep.mubr.f32.mxu0 0.0
  %7477 = vmatmul.mubr.f32.gmra.mrb[0].mxu0 %v7062
  %v7478 = vpop.f32.mrb[0].mxu0
  %v7479 = vadd.f32 0.0, %v7478
  %v7480 = vpop.f32.mrb[0].mxu0
  %7481 = vmatprep.mubr.f32.mxu0 0.0
  %7482 = vmatmul.mubr.f32.gmra.mrb[0].mxu0 %v7065
  %v7483 = vpop.f32.mrb[0].mxu0
  %v7484 = vadd.f32 0.0, %v7483
  %v7485 = vpop.f32.mrb[0].mxu0
  %7486 = vmatprep.mubr.f32.mxu0 0.0
  %7487 = vmatmul.mubr.f32.gmra.mrb[0].mxu0 %v7068
  %v7488 = vpop.f32.mrb[0].mxu0
  %v7489 = vadd.f32 0.0, %v7488
  %v7490 = vpop.f32.mrb[0].mxu0
  %7491 = vmatprep.mubr.f32.mxu0 0.0
  %7492 = vmatmul.mubr.f32.gmra.mrb[0].mxu0 %v7071
  %v7493 = vpop.f32.mrb[0].mxu0
  %v7494 = vadd.f32 0.0, %v7493
  %v7495 = vpop.f32.mrb[0].mxu0
  %7496 = vmatprep.mubr.f32.mxu0 0.0
  %7497 = vmatmul.mubr.f32.gmra.mrb[0].mxu0 %v7074
  %v7498 = vpop.f32.mrb[0].mxu0
  %v7499 = vadd.f32 0.0, %v7498
  %v7500 = vpop.f32.mrb[0].mxu0
  %7501 = vmatprep.mubr.f32.mxu0 0.0
  %7502 = vmatmul.mubr.f32.gmra.mrb[0].mxu0 %v7077
  %v7503 = vpop.f32.mrb[0].mxu0
  %v7504 = vadd.f32 0.0, %v7503
  %v7505 = vpop.f32.mrb[0].mxu0
  %7506 = vmatprep.mubr.f32.mxu0 0.0
  %7507 = vmatmul.mubr.f32.gmra.mrb[0].mxu0 %v7080
  %v7508 = vpop.f32.mrb[0].mxu0
  %v7509 = vadd.f32 0.0, %v7508
  %v7510 = vpop.f32.mrb[0].mxu0
  %7511 = vdwg.mxu0
  %v7513 = vsel %vm2759, %v7050, 0
  %v7516 = vsel %vm2759, %v7051, 0
  %v7519 = vsel %vm2759, %v7052, 0
  %v7522 = vsel %vm2759, %v7053, 0
  %v7525 = vsel %vm2759, %v7054, 0
  %v7528 = vsel %vm2759, %v7055, 0
  %v7531 = vsel %vm2759, %v7056, 0
  %v7534 = vsel %vm2759, %v7057, 0
  %7536 = vmatprep.subr.mxu0 0.0
  %7537 = vmatpush1.msra.mxu0 %v6001
  %7538 = vmatprep.subr.mxu0 0.0
  %7539 = vmatpush1.msra.mxu0 0.0
  %7540 = vmatprep.subr.mxu0 0.0
  %7541 = vmatpush1.msra.mxu0 0.0
  %7542 = vmatprep.subr.mxu0 0.0
  %7543 = vmatpush1.msra.mxu0 0.0
  %7544 = vmatprep.subr.mxu0 0.0
  %7545 = vmatpush1.msra.mxu0 0.0
  %7546 = vmatprep.subr.mxu0 0.0
  %7547 = vmatpush1.msra.mxu0 0.0
  %7548 = vmatprep.subr.mxu0 0.0
  %7549 = vmatpush1.msra.mxu0 0.0
  %7550 = vmatprep.subr.mxu0 0.0
  %7551 = vmatpush1.msra.mxu0 0.0
  %7552 = vmatprep.subr.mxu0 0.0
  %7553 = vmatpush1.msra.mxu0 0.0
  %7554 = vmatprep.subr.mxu0 0.0
  %7555 = vmatpush1.msra.mxu0 0.0
  %7556 = vmatprep.subr.mxu0 0.0
  %7557 = vmatpush1.msra.mxu0 0.0
  %7558 = vmatprep.subr.mxu0 0.0
  %7559 = vmatpush1.msra.mxu0 0.0
  %7560 = vmatprep.subr.mxu0 0.0
  %7561 = vmatpush1.msra.mxu0 0.0
  %7562 = vmatprep.subr.mxu0 0.0
  %7563 = vmatpush1.msra.mxu0 0.0
  %7564 = vmatprep.subr.mxu0 0.0
  %7565 = vmatpush1.msra.mxu0 0.0
  %7566 = vmatprep.subr.mxu0 0.0
  %7567 = vmatpush1.msra.mxu0 0.0
  %7568 = vmatprep.subr.mxu0 0.0
  %7569 = vmatpush1.msra.mxu0 0.0
  %7570 = vmatprep.subr.mxu0 0.0
  %7571 = vmatpush1.msra.mxu0 0.0
  %7572 = vmatprep.subr.mxu0 0.0
  %7573 = vmatpush1.msra.mxu0 0.0
  %7574 = vmatprep.subr.mxu0 0.0
  %7575 = vmatpush1.msra.mxu0 0.0
  %7576 = vmatprep.subr.mxu0 0.0
  %7577 = vmatpush1.msra.mxu0 0.0
  %7578 = vmatprep.subr.mxu0 0.0
  %7579 = vmatpush1.msra.mxu0 0.0
  %7580 = vmatprep.subr.mxu0 0.0
  %7581 = vmatpush1.msra.mxu0 0.0
  %7582 = vmatprep.subr.mxu0 0.0
  %7583 = vmatpush1.msra.mxu0 0.0
  %7584 = vmatprep.subr.mxu0 0.0
  %7585 = vmatpush1.msra.mxu0 0.0
  %7586 = vmatprep.subr.mxu0 0.0
  %7587 = vmatpush1.msra.mxu0 0.0
  %7588 = vmatprep.subr.mxu0 0.0
  %7589 = vmatpush1.msra.mxu0 0.0
  %7590 = vmatprep.subr.mxu0 0.0
  %7591 = vmatpush1.msra.mxu0 0.0
  %7592 = vmatprep.subr.mxu0 0.0
  %7593 = vmatpush1.msra.mxu0 0.0
  %7594 = vmatprep.subr.mxu0 0.0
  %7595 = vmatpush1.msra.mxu0 0.0
  %7596 = vmatprep.subr.mxu0 0.0
  %7597 = vmatpush1.msra.mxu0 0.0
  %7598 = vmatprep.subr.mxu0 0.0
  %7599 = vmatpush1.msra.mxu0 0.0
  %7600 = vmatprep.mubr.f32.mxu0 0.0
  %7601 = vmatmul.mubr.f32.gmra.mrb[0].mxu0 %v7513
  %v7602 = vpop.f32.mrb[0].mxu0
  %v7603 = vadd.f32 0.0, %v7602
  %v7604 = vpop.f32.mrb[0].mxu0
  %7605 = vmatprep.mubr.f32.mxu0 0.0
  %7606 = vmatmul.mubr.f32.gmra.mrb[0].mxu0 %v7516
  %v7607 = vpop.f32.mrb[0].mxu0
  %v7608 = vadd.f32 0.0, %v7607
  %v7609 = vpop.f32.mrb[0].mxu0
  %7610 = vmatprep.mubr.f32.mxu0 0.0
  %7611 = vmatmul.mubr.f32.gmra.mrb[0].mxu0 %v7519
  %v7612 = vpop.f32.mrb[0].mxu0
  %v7613 = vadd.f32 0.0, %v7612
  %v7614 = vpop.f32.mrb[0].mxu0
  %7615 = vmatprep.mubr.f32.mxu0 0.0
  %7616 = vmatmul.mubr.f32.gmra.mrb[0].mxu0 %v7522
  %v7617 = vpop.f32.mrb[0].mxu0
  %v7618 = vadd.f32 0.0, %v7617
  %v7619 = vpop.f32.mrb[0].mxu0
  %7620 = vmatprep.mubr.f32.mxu0 0.0
  %7621 = vmatmul.mubr.f32.gmra.mrb[0].mxu0 %v7525
  %v7622 = vpop.f32.mrb[0].mxu0
  %v7623 = vadd.f32 0.0, %v7622
  %v7624 = vpop.f32.mrb[0].mxu0
  %7625 = vmatprep.mubr.f32.mxu0 0.0
  %7626 = vmatmul.mubr.f32.gmra.mrb[0].mxu0 %v7528
  %v7627 = vpop.f32.mrb[0].mxu0
  %v7628 = vadd.f32 0.0, %v7627
  %v7629 = vpop.f32.mrb[0].mxu0
  %7630 = vmatprep.mubr.f32.mxu0 0.0
  %7631 = vmatmul.mubr.f32.gmra.mrb[0].mxu0 %v7531
  %v7632 = vpop.f32.mrb[0].mxu0
  %v7633 = vadd.f32 0.0, %v7632
  %v7634 = vpop.f32.mrb[0].mxu0
  %7635 = vmatprep.mubr.f32.mxu0 0.0
  %7636 = vmatmul.mubr.f32.gmra.mrb[0].mxu0 %v7534
  %v7637 = vpop.f32.mrb[0].mxu0
  %v7638 = vadd.f32 0.0, %v7637
  %v7639 = vpop.f32.mrb[0].mxu0
  %7640 = vdwg.mxu0
  %7641 = vmatprep.subr.mxu0 0.0
  %7642 = vmatpush1.msra.mxu0 %v7189
  %7643 = vmatprep.subr.mxu0 0.0
  %7644 = vmatpush1.msra.mxu0 0.0
  %7645 = vmatprep.subr.mxu0 0.0
  %7646 = vmatpush1.msra.mxu0 0.0
  %7647 = vmatprep.subr.mxu0 0.0
  %7648 = vmatpush1.msra.mxu0 0.0
  %7649 = vmatprep.subr.mxu0 0.0
  %7650 = vmatpush1.msra.mxu0 0.0
  %7651 = vmatprep.subr.mxu0 0.0
  %7652 = vmatpush1.msra.mxu0 0.0
  %7653 = vmatprep.subr.mxu0 0.0
  %7654 = vmatpush1.msra.mxu0 0.0
  %7655 = vmatprep.subr.mxu0 0.0
  %7656 = vmatpush1.msra.mxu0 0.0
  %7657 = vmatprep.subr.mxu0 0.0
  %7658 = vmatpush1.msra.mxu0 0.0
  %7659 = vmatprep.subr.mxu0 0.0
  %7660 = vmatpush1.msra.mxu0 0.0
  %7661 = vmatprep.subr.mxu0 0.0
  %7662 = vmatpush1.msra.mxu0 0.0
  %7663 = vmatprep.subr.mxu0 0.0
  %7664 = vmatpush1.msra.mxu0 0.0
  %7665 = vmatprep.subr.mxu0 0.0
  %7666 = vmatpush1.msra.mxu0 0.0
  %7667 = vmatprep.subr.mxu0 0.0
  %7668 = vmatpush1.msra.mxu0 0.0
  %7669 = vmatprep.subr.mxu0 0.0
  %7670 = vmatpush1.msra.mxu0 0.0
  %7671 = vmatprep.subr.mxu0 0.0
  %7672 = vmatpush1.msra.mxu0 0.0
  %7673 = vmatprep.subr.mxu0 0.0
  %7674 = vmatpush1.msra.mxu0 0.0
  %7675 = vmatprep.subr.mxu0 0.0
  %7676 = vmatpush1.msra.mxu0 0.0
  %7677 = vmatprep.subr.mxu0 0.0
  %7678 = vmatpush1.msra.mxu0 0.0
  %7679 = vmatprep.subr.mxu0 0.0
  %7680 = vmatpush1.msra.mxu0 0.0
  %7681 = vmatprep.subr.mxu0 0.0
  %7682 = vmatpush1.msra.mxu0 0.0
  %7683 = vmatprep.subr.mxu0 0.0
  %7684 = vmatpush1.msra.mxu0 0.0
  %7685 = vmatprep.subr.mxu0 0.0
  %7686 = vmatpush1.msra.mxu0 0.0
  %7687 = vmatprep.subr.mxu0 0.0
  %7688 = vmatpush1.msra.mxu0 0.0
  %7689 = vmatprep.subr.mxu0 0.0
  %7690 = vmatpush1.msra.mxu0 0.0
  %7691 = vmatprep.subr.mxu0 0.0
  %7692 = vmatpush1.msra.mxu0 0.0
  %7693 = vmatprep.subr.mxu0 0.0
  %7694 = vmatpush1.msra.mxu0 0.0
  %7695 = vmatprep.subr.mxu0 0.0
  %7696 = vmatpush1.msra.mxu0 0.0
  %7697 = vmatprep.subr.mxu0 0.0
  %7698 = vmatpush1.msra.mxu0 0.0
  %7699 = vmatprep.subr.mxu0 0.0
  %7700 = vmatpush1.msra.mxu0 0.0
  %7701 = vmatprep.subr.mxu0 0.0
  %7702 = vmatpush1.msra.mxu0 0.0
  %7703 = vmatprep.subr.mxu0 0.0
  %7704 = vmatpush1.msra.mxu0 0.0
  %7705 = vmatprep.mubr.f32.mxu0 0.0
  %7706 = vmatmul.mubr.f32.gmra.mrb[0].mxu0 %v7513
  %v7707 = vpop.f32.mrb[0].mxu0
  %v7708 = vadd.f32 0.0, %v7707
  %v7709 = vpop.f32.mrb[0].mxu0
  %7710 = vmatprep.mubr.f32.mxu0 0.0
  %7711 = vmatmul.mubr.f32.gmra.mrb[0].mxu0 %v7516
  %v7712 = vpop.f32.mrb[0].mxu0
  %v7713 = vadd.f32 0.0, %v7712
  %v7714 = vpop.f32.mrb[0].mxu0
  %7715 = vmatprep.mubr.f32.mxu0 0.0
  %7716 = vmatmul.mubr.f32.gmra.mrb[0].mxu0 %v7519
  %v7717 = vpop.f32.mrb[0].mxu0
  %v7718 = vadd.f32 0.0, %v7717
  %v7719 = vpop.f32.mrb[0].mxu0
  %7720 = vmatprep.mubr.f32.mxu0 0.0
  %7721 = vmatmul.mubr.f32.gmra.mrb[0].mxu0 %v7522
  %v7722 = vpop.f32.mrb[0].mxu0
  %v7723 = vadd.f32 0.0, %v7722
  %v7724 = vpop.f32.mrb[0].mxu0
  %7725 = vmatprep.mubr.f32.mxu0 0.0
  %7726 = vmatmul.mubr.f32.gmra.mrb[0].mxu0 %v7525
  %v7727 = vpop.f32.mrb[0].mxu0
  %v7728 = vadd.f32 0.0, %v7727
  %v7729 = vpop.f32.mrb[0].mxu0
  %7730 = vmatprep.mubr.f32.mxu0 0.0
  %7731 = vmatmul.mubr.f32.gmra.mrb[0].mxu0 %v7528
  %v7732 = vpop.f32.mrb[0].mxu0
  %v7733 = vadd.f32 0.0, %v7732
  %v7734 = vpop.f32.mrb[0].mxu0
  %7735 = vmatprep.mubr.f32.mxu0 0.0
  %7736 = vmatmul.mubr.f32.gmra.mrb[0].mxu0 %v7531
  %v7737 = vpop.f32.mrb[0].mxu0
  %v7738 = vadd.f32 0.0, %v7737
  %v7739 = vpop.f32.mrb[0].mxu0
  %7740 = vmatprep.mubr.f32.mxu0 0.0
  %7741 = vmatmul.mubr.f32.gmra.mrb[0].mxu0 %v7534
  %v7742 = vpop.f32.mrb[0].mxu0
  %v7743 = vadd.f32 0.0, %v7742
  %v7744 = vpop.f32.mrb[0].mxu0
  %7745 = vdwg.mxu0
  %7746 = vmatprep.subr.mxu0 0.0
  %7747 = vmatpush1.msra.mxu0 %v7297
  %7748 = vmatprep.subr.mxu0 0.0
  %7749 = vmatpush1.msra.mxu0 0.0
  %7750 = vmatprep.subr.mxu0 0.0
  %7751 = vmatpush1.msra.mxu0 0.0
  %7752 = vmatprep.subr.mxu0 0.0
  %7753 = vmatpush1.msra.mxu0 0.0
  %7754 = vmatprep.subr.mxu0 0.0
  %7755 = vmatpush1.msra.mxu0 0.0
  %7756 = vmatprep.subr.mxu0 0.0
  %7757 = vmatpush1.msra.mxu0 0.0
  %7758 = vmatprep.subr.mxu0 0.0
  %7759 = vmatpush1.msra.mxu0 0.0
  %7760 = vmatprep.subr.mxu0 0.0
  %7761 = vmatpush1.msra.mxu0 0.0
  %7762 = vmatprep.subr.mxu0 0.0
  %7763 = vmatpush1.msra.mxu0 0.0
  %7764 = vmatprep.subr.mxu0 0.0
  %7765 = vmatpush1.msra.mxu0 0.0
  %7766 = vmatprep.subr.mxu0 0.0
  %7767 = vmatpush1.msra.mxu0 0.0
  %7768 = vmatprep.subr.mxu0 0.0
  %7769 = vmatpush1.msra.mxu0 0.0
  %7770 = vmatprep.subr.mxu0 0.0
  %7771 = vmatpush1.msra.mxu0 0.0
  %7772 = vmatprep.subr.mxu0 0.0
  %7773 = vmatpush1.msra.mxu0 0.0
  %7774 = vmatprep.subr.mxu0 0.0
  %7775 = vmatpush1.msra.mxu0 0.0
  %7776 = vmatprep.subr.mxu0 0.0
  %7777 = vmatpush1.msra.mxu0 0.0
  %7778 = vmatprep.subr.mxu0 0.0
  %7779 = vmatpush1.msra.mxu0 0.0
  %7780 = vmatprep.subr.mxu0 0.0
  %7781 = vmatpush1.msra.mxu0 0.0
  %7782 = vmatprep.subr.mxu0 0.0
  %7783 = vmatpush1.msra.mxu0 0.0
  %7784 = vmatprep.subr.mxu0 0.0
  %7785 = vmatpush1.msra.mxu0 0.0
  %7786 = vmatprep.subr.mxu0 0.0
  %7787 = vmatpush1.msra.mxu0 0.0
  %7788 = vmatprep.subr.mxu0 0.0
  %7789 = vmatpush1.msra.mxu0 0.0
  %7790 = vmatprep.subr.mxu0 0.0
  %7791 = vmatpush1.msra.mxu0 0.0
  %7792 = vmatprep.subr.mxu0 0.0
  %7793 = vmatpush1.msra.mxu0 0.0
  %7794 = vmatprep.subr.mxu0 0.0
  %7795 = vmatpush1.msra.mxu0 0.0
  %7796 = vmatprep.subr.mxu0 0.0
  %7797 = vmatpush1.msra.mxu0 0.0
  %7798 = vmatprep.subr.mxu0 0.0
  %7799 = vmatpush1.msra.mxu0 0.0
  %7800 = vmatprep.subr.mxu0 0.0
  %7801 = vmatpush1.msra.mxu0 0.0
  %7802 = vmatprep.subr.mxu0 0.0
  %7803 = vmatpush1.msra.mxu0 0.0
  %7804 = vmatprep.subr.mxu0 0.0
  %7805 = vmatpush1.msra.mxu0 0.0
  %7806 = vmatprep.subr.mxu0 0.0
  %7807 = vmatpush1.msra.mxu0 0.0
  %7808 = vmatprep.subr.mxu0 0.0
  %7809 = vmatpush1.msra.mxu0 0.0
  %7810 = vmatprep.mubr.f32.mxu0 0.0
  %7811 = vmatmul.mubr.f32.gmra.mrb[0].mxu0 %v7513
  %v7812 = vpop.f32.mrb[0].mxu0
  %v7813 = vadd.f32 0.0, %v7812
  %v7814 = vpop.f32.mrb[0].mxu0
  %7815 = vmatprep.mubr.f32.mxu0 0.0
  %7816 = vmatmul.mubr.f32.gmra.mrb[0].mxu0 %v7516
  %v7817 = vpop.f32.mrb[0].mxu0
  %v7818 = vadd.f32 0.0, %v7817
  %v7819 = vpop.f32.mrb[0].mxu0
  %7820 = vmatprep.mubr.f32.mxu0 0.0
  %7821 = vmatmul.mubr.f32.gmra.mrb[0].mxu0 %v7519
  %v7822 = vpop.f32.mrb[0].mxu0
  %v7823 = vadd.f32 0.0, %v7822
  %v7824 = vpop.f32.mrb[0].mxu0
  %7825 = vmatprep.mubr.f32.mxu0 0.0
  %7826 = vmatmul.mubr.f32.gmra.mrb[0].mxu0 %v7522
  %v7827 = vpop.f32.mrb[0].mxu0
  %v7828 = vadd.f32 0.0, %v7827
  %v7829 = vpop.f32.mrb[0].mxu0
  %7830 = vmatprep.mubr.f32.mxu0 0.0
  %7831 = vmatmul.mubr.f32.gmra.mrb[0].mxu0 %v7525
  %v7832 = vpop.f32.mrb[0].mxu0
  %v7833 = vadd.f32 0.0, %v7832
  %v7834 = vpop.f32.mrb[0].mxu0
  %7835 = vmatprep.mubr.f32.mxu0 0.0
  %7836 = vmatmul.mubr.f32.gmra.mrb[0].mxu0 %v7528
  %v7837 = vpop.f32.mrb[0].mxu0
  %v7838 = vadd.f32 0.0, %v7837
  %v7839 = vpop.f32.mrb[0].mxu0
  %7840 = vmatprep.mubr.f32.mxu0 0.0
  %7841 = vmatmul.mubr.f32.gmra.mrb[0].mxu0 %v7531
  %v7842 = vpop.f32.mrb[0].mxu0
  %v7843 = vadd.f32 0.0, %v7842
  %v7844 = vpop.f32.mrb[0].mxu0
  %7845 = vmatprep.mubr.f32.mxu0 0.0
  %7846 = vmatmul.mubr.f32.gmra.mrb[0].mxu0 %v7534
  %v7847 = vpop.f32.mrb[0].mxu0
  %v7848 = vadd.f32 0.0, %v7847
  %v7849 = vpop.f32.mrb[0].mxu0
  %7850 = vdwg.mxu0
  %7851 = vmatprep.subr.mxu0 0.0
  %7852 = vmatpush1.msra.mxu0 %v7405
  %7853 = vmatprep.subr.mxu0 0.0
  %7854 = vmatpush1.msra.mxu0 0.0
  %7855 = vmatprep.subr.mxu0 0.0
  %7856 = vmatpush1.msra.mxu0 0.0
  %7857 = vmatprep.subr.mxu0 0.0
  %7858 = vmatpush1.msra.mxu0 0.0
  %7859 = vmatprep.subr.mxu0 0.0
  %7860 = vmatpush1.msra.mxu0 0.0
  %7861 = vmatprep.subr.mxu0 0.0
  %7862 = vmatpush1.msra.mxu0 0.0
  %7863 = vmatprep.subr.mxu0 0.0
  %7864 = vmatpush1.msra.mxu0 0.0
  %7865 = vmatprep.subr.mxu0 0.0
  %7866 = vmatpush1.msra.mxu0 0.0
  %7867 = vmatprep.subr.mxu0 0.0
  %7868 = vmatpush1.msra.mxu0 0.0
  %7869 = vmatprep.subr.mxu0 0.0
  %7870 = vmatpush1.msra.mxu0 0.0
  %7871 = vmatprep.subr.mxu0 0.0
  %7872 = vmatpush1.msra.mxu0 0.0
  %7873 = vmatprep.subr.mxu0 0.0
  %7874 = vmatpush1.msra.mxu0 0.0
  %7875 = vmatprep.subr.mxu0 0.0
  %7876 = vmatpush1.msra.mxu0 0.0
  %7877 = vmatprep.subr.mxu0 0.0
  %7878 = vmatpush1.msra.mxu0 0.0
  %7879 = vmatprep.subr.mxu0 0.0
  %7880 = vmatpush1.msra.mxu0 0.0
  %7881 = vmatprep.subr.mxu0 0.0
  %7882 = vmatpush1.msra.mxu0 0.0
  %7883 = vmatprep.subr.mxu0 0.0
  %7884 = vmatpush1.msra.mxu0 0.0
  %7885 = vmatprep.subr.mxu0 0.0
  %7886 = vmatpush1.msra.mxu0 0.0
  %7887 = vmatprep.subr.mxu0 0.0
  %7888 = vmatpush1.msra.mxu0 0.0
  %7889 = vmatprep.subr.mxu0 0.0
  %7890 = vmatpush1.msra.mxu0 0.0
  %7891 = vmatprep.subr.mxu0 0.0
  %7892 = vmatpush1.msra.mxu0 0.0
  %7893 = vmatprep.subr.mxu0 0.0
  %7894 = vmatpush1.msra.mxu0 0.0
  %7895 = vmatprep.subr.mxu0 0.0
  %7896 = vmatpush1.msra.mxu0 0.0
  %7897 = vmatprep.subr.mxu0 0.0
  %7898 = vmatpush1.msra.mxu0 0.0
  %7899 = vmatprep.subr.mxu0 0.0
  %7900 = vmatpush1.msra.mxu0 0.0
  %7901 = vmatprep.subr.mxu0 0.0
  %7902 = vmatpush1.msra.mxu0 0.0
  %7903 = vmatprep.subr.mxu0 0.0
  %7904 = vmatpush1.msra.mxu0 0.0
  %7905 = vmatprep.subr.mxu0 0.0
  %7906 = vmatpush1.msra.mxu0 0.0
  %7907 = vmatprep.subr.mxu0 0.0
  %7908 = vmatpush1.msra.mxu0 0.0
  %7909 = vmatprep.subr.mxu0 0.0
  %7910 = vmatpush1.msra.mxu0 0.0
  %7911 = vmatprep.subr.mxu0 0.0
  %7912 = vmatpush1.msra.mxu0 0.0
  %7913 = vmatprep.subr.mxu0 0.0
  %7914 = vmatpush1.msra.mxu0 0.0
  %7915 = vmatprep.mubr.f32.mxu0 0.0
  %7916 = vmatmul.mubr.f32.gmra.mrb[0].mxu0 %v7513
  %v7917 = vpop.f32.mrb[0].mxu0
  %v7918 = vadd.f32 0.0, %v7917
  %v7919 = vpop.f32.mrb[0].mxu0
  %7920 = vmatprep.mubr.f32.mxu0 0.0
  %7921 = vmatmul.mubr.f32.gmra.mrb[0].mxu0 %v7516
  %v7922 = vpop.f32.mrb[0].mxu0
  %v7923 = vadd.f32 0.0, %v7922
  %v7924 = vpop.f32.mrb[0].mxu0
  %7925 = vmatprep.mubr.f32.mxu0 0.0
  %7926 = vmatmul.mubr.f32.gmra.mrb[0].mxu0 %v7519
  %v7927 = vpop.f32.mrb[0].mxu0
  %v7928 = vadd.f32 0.0, %v7927
  %v7929 = vpop.f32.mrb[0].mxu0
  %7930 = vmatprep.mubr.f32.mxu0 0.0
  %7931 = vmatmul.mubr.f32.gmra.mrb[0].mxu0 %v7522
  %v7932 = vpop.f32.mrb[0].mxu0
  %v7933 = vadd.f32 0.0, %v7932
  %v7934 = vpop.f32.mrb[0].mxu0
  %7935 = vmatprep.mubr.f32.mxu0 0.0
  %7936 = vmatmul.mubr.f32.gmra.mrb[0].mxu0 %v7525
  %v7937 = vpop.f32.mrb[0].mxu0
  %v7938 = vadd.f32 0.0, %v7937
  %v7939 = vpop.f32.mrb[0].mxu0
  %7940 = vmatprep.mubr.f32.mxu0 0.0
  %7941 = vmatmul.mubr.f32.gmra.mrb[0].mxu0 %v7528
  %v7942 = vpop.f32.mrb[0].mxu0
  %v7943 = vadd.f32 0.0, %v7942
  %v7944 = vpop.f32.mrb[0].mxu0
  %7945 = vmatprep.mubr.f32.mxu0 0.0
  %7946 = vmatmul.mubr.f32.gmra.mrb[0].mxu0 %v7531
  %v7947 = vpop.f32.mrb[0].mxu0
  %v7948 = vadd.f32 0.0, %v7947
  %v7949 = vpop.f32.mrb[0].mxu0
  %7950 = vmatprep.mubr.f32.mxu0 0.0
  %7951 = vmatmul.mubr.f32.gmra.mrb[0].mxu0 %v7534
  %v7952 = vpop.f32.mrb[0].mxu0
  %v7953 = vadd.f32 0.0, %v7952
  %v7954 = vpop.f32.mrb[0].mxu0
  %7955 = vdwg.mxu0
  %v7956 = vld [vmem:[%s2 + $0x4b8] sm:$0x1]
  %v7957 = vlaneseq
  %v7958 = vshrl.u32 %v7957, 7
  %v7959 = vsub.s32 0, %v7958
  %v7960 = vrot.slane %v7956, %v7959
  %v7961 = vadd.f32 %v7149, %v7960
  %v7962 = vadd.f32 %v7154, %v7960
  %v7963 = vadd.f32 %v7159, %v7960
  %v7964 = vadd.f32 %v7164, %v7960
  %v7965 = vadd.f32 %v7169, %v7960
  %v7966 = vadd.f32 %v7174, %v7960
  %v7967 = vadd.f32 %v7179, %v7960
  %v7968 = vadd.f32 %v7184, %v7960
  %v7969 = vadd.f32 %v7258, %v7960
  %v7970 = vadd.f32 %v7263, %v7960
  %v7971 = vadd.f32 %v7268, %v7960
  %v7972 = vadd.f32 %v7273, %v7960
  %v7973 = vadd.f32 %v7278, %v7960
  %v7974 = vadd.f32 %v7283, %v7960
  %v7975 = vadd.f32 %v7288, %v7960
  %v7976 = vadd.f32 %v7293, %v7960
  %v7977 = vadd.f32 %v7366, %v7960
  %v7978 = vadd.f32 %v7371, %v7960
  %v7979 = vadd.f32 %v7376, %v7960
  %v7980 = vadd.f32 %v7381, %v7960
  %v7981 = vadd.f32 %v7386, %v7960
  %v7982 = vadd.f32 %v7391, %v7960
  %v7983 = vadd.f32 %v7396, %v7960
  %v7984 = vadd.f32 %v7401, %v7960
  %v7985 = vadd.f32 %v7474, %v7960
  %v7986 = vadd.f32 %v7479, %v7960
  %v7987 = vadd.f32 %v7484, %v7960
  %v7988 = vadd.f32 %v7489, %v7960
  %v7989 = vadd.f32 %v7494, %v7960
  %v7990 = vadd.f32 %v7499, %v7960
  %v7991 = vadd.f32 %v7504, %v7960
  %v7992 = vadd.f32 %v7509, %v7960
  %v7993 = vadd.f32 %v7603, %v7960
  %v7994 = vadd.f32 %v7608, %v7960
  %v7995 = vadd.f32 %v7613, %v7960
  %v7996 = vadd.f32 %v7618, %v7960
  %v7997 = vadd.f32 %v7623, %v7960
  %v7998 = vadd.f32 %v7628, %v7960
  %v7999 = vadd.f32 %v7633, %v7960
  %v8000 = vadd.f32 %v7638, %v7960
  %v8001 = vadd.f32 %v7708, %v7960
  %v8002 = vadd.f32 %v7713, %v7960
  %v8003 = vadd.f32 %v7718, %v7960
  %v8004 = vadd.f32 %v7723, %v7960
  %v8005 = vadd.f32 %v7728, %v7960
  %v8006 = vadd.f32 %v7733, %v7960
  %v8007 = vadd.f32 %v7738, %v7960
  %v8008 = vadd.f32 %v7743, %v7960
  %v8009 = vadd.f32 %v7813, %v7960
  %v8010 = vadd.f32 %v7818, %v7960
  %v8011 = vadd.f32 %v7823, %v7960
  %v8012 = vadd.f32 %v7828, %v7960
  %v8013 = vadd.f32 %v7833, %v7960
  %v8014 = vadd.f32 %v7838, %v7960
  %v8015 = vadd.f32 %v7843, %v7960
  %v8016 = vadd.f32 %v7848, %v7960
  %v8017 = vadd.f32 %v7918, %v7960
  %v8018 = vadd.f32 %v7923, %v7960
  %v8019 = vadd.f32 %v7928, %v7960
  %v8020 = vadd.f32 %v7933, %v7960
  %v8021 = vadd.f32 %v7938, %v7960
  %v8022 = vadd.f32 %v7943, %v7960
  %v8023 = vadd.f32 %v7948, %v7960
  %v8024 = vadd.f32 %v7953, %v7960
  %v8025 = vmul.f32 %v7961, %v7961
  %v8026 = vmul.f32 %v7962, %v7962
  %v8027 = vmul.f32 %v7963, %v7963
  %v8028 = vmul.f32 %v7964, %v7964
  %v8029 = vmul.f32 %v7965, %v7965
  %v8030 = vmul.f32 %v7966, %v7966
  %v8031 = vmul.f32 %v7967, %v7967
  %v8032 = vmul.f32 %v7968, %v7968
  %v8033 = vmul.f32 %v7969, %v7969
  %v8034 = vmul.f32 %v7970, %v7970
  %v8035 = vmul.f32 %v7971, %v7971
  %v8036 = vmul.f32 %v7972, %v7972
  %v8037 = vmul.f32 %v7973, %v7973
  %v8038 = vmul.f32 %v7974, %v7974
  %v8039 = vmul.f32 %v7975, %v7975
  %v8040 = vmul.f32 %v7976, %v7976
  %v8041 = vmul.f32 %v7977, %v7977
  %v8042 = vmul.f32 %v7978, %v7978
  %v8043 = vmul.f32 %v7979, %v7979
  %v8044 = vmul.f32 %v7980, %v7980
  %v8045 = vmul.f32 %v7981, %v7981
  %v8046 = vmul.f32 %v7982, %v7982
  %v8047 = vmul.f32 %v7983, %v7983
  %v8048 = vmul.f32 %v7984, %v7984
  %v8049 = vmul.f32 %v7985, %v7985
  %v8050 = vmul.f32 %v7986, %v7986
  %v8051 = vmul.f32 %v7987, %v7987
  %v8052 = vmul.f32 %v7988, %v7988
  %v8053 = vmul.f32 %v7989, %v7989
  %v8054 = vmul.f32 %v7990, %v7990
  %v8055 = vmul.f32 %v7991, %v7991
  %v8056 = vmul.f32 %v7992, %v7992
  %v8057 = vmul.f32 %v7993, %v7993
  %v8058 = vmul.f32 %v7994, %v7994
  %v8059 = vmul.f32 %v7995, %v7995
  %v8060 = vmul.f32 %v7996, %v7996
  %v8061 = vmul.f32 %v7997, %v7997
  %v8062 = vmul.f32 %v7998, %v7998
  %v8063 = vmul.f32 %v7999, %v7999
  %v8064 = vmul.f32 %v8000, %v8000
  %v8065 = vmul.f32 %v8001, %v8001
  %v8066 = vmul.f32 %v8002, %v8002
  %v8067 = vmul.f32 %v8003, %v8003
  %v8068 = vmul.f32 %v8004, %v8004
  %v8069 = vmul.f32 %v8005, %v8005
  %v8070 = vmul.f32 %v8006, %v8006
  %v8071 = vmul.f32 %v8007, %v8007
  %v8072 = vmul.f32 %v8008, %v8008
  %v8073 = vmul.f32 %v8009, %v8009
  %v8074 = vmul.f32 %v8010, %v8010
  %v8075 = vmul.f32 %v8011, %v8011
  %v8076 = vmul.f32 %v8012, %v8012
  %v8077 = vmul.f32 %v8013, %v8013
  %v8078 = vmul.f32 %v8014, %v8014
  %v8079 = vmul.f32 %v8015, %v8015
  %v8080 = vmul.f32 %v8016, %v8016
  %v8081 = vmul.f32 %v8017, %v8017
  %v8082 = vmul.f32 %v8018, %v8018
  %v8083 = vmul.f32 %v8019, %v8019
  %v8084 = vmul.f32 %v8020, %v8020
  %v8085 = vmul.f32 %v8021, %v8021
  %v8086 = vmul.f32 %v8022, %v8022
  %v8087 = vmul.f32 %v8023, %v8023
  %v8088 = vmul.f32 %v8024, %v8024
  %v8089 = vmul.f32 %v7961, %v8025
  %v8090 = vmul.f32 %v7962, %v8026
  %v8091 = vmul.f32 %v7963, %v8027
  %v8092 = vmul.f32 %v7964, %v8028
  %v8093 = vmul.f32 %v7965, %v8029
  %v8094 = vmul.f32 %v7966, %v8030
  %v8095 = vmul.f32 %v7967, %v8031
  %v8096 = vmul.f32 %v7968, %v8032
  %v8097 = vmul.f32 %v7969, %v8033
  %v8098 = vmul.f32 %v7970, %v8034
  %v8099 = vmul.f32 %v7971, %v8035
  %v8100 = vmul.f32 %v7972, %v8036
  %v8101 = vmul.f32 %v7973, %v8037
  %v8102 = vmul.f32 %v7974, %v8038
  %v8103 = vmul.f32 %v7975, %v8039
  %v8104 = vmul.f32 %v7976, %v8040
  %v8105 = vmul.f32 %v7977, %v8041
  %v8106 = vmul.f32 %v7978, %v8042
  %v8107 = vmul.f32 %v7979, %v8043
  %v8108 = vmul.f32 %v7980, %v8044
  %v8109 = vmul.f32 %v7981, %v8045
  %v8110 = vmul.f32 %v7982, %v8046
  %v8111 = vmul.f32 %v7983, %v8047
  %v8112 = vmul.f32 %v7984, %v8048
  %v8113 = vmul.f32 %v7985, %v8049
  %v8114 = vmul.f32 %v7986, %v8050
  %v8115 = vmul.f32 %v7987, %v8051
  %v8116 = vmul.f32 %v7988, %v8052
  %v8117 = vmul.f32 %v7989, %v8053
  %v8118 = vmul.f32 %v7990, %v8054
  %v8119 = vmul.f32 %v7991, %v8055
  %v8120 = vmul.f32 %v7992, %v8056
  %v8121 = vmul.f32 %v7993, %v8057
  %v8122 = vmul.f32 %v7994, %v8058
  %v8123 = vmul.f32 %v7995, %v8059
  %v8124 = vmul.f32 %v7996, %v8060
  %v8125 = vmul.f32 %v7997, %v8061
  %v8126 = vmul.f32 %v7998, %v8062
  %v8127 = vmul.f32 %v7999, %v8063
  %v8128 = vmul.f32 %v8000, %v8064
  %v8129 = vmul.f32 %v8001, %v8065
  %v8130 = vmul.f32 %v8002, %v8066
  %v8131 = vmul.f32 %v8003, %v8067
  %v8132 = vmul.f32 %v8004, %v8068
  %v8133 = vmul.f32 %v8005, %v8069
  %v8134 = vmul.f32 %v8006, %v8070
  %v8135 = vmul.f32 %v8007, %v8071
  %v8136 = vmul.f32 %v8008, %v8072
  %v8137 = vmul.f32 %v8009, %v8073
  %v8138 = vmul.f32 %v8010, %v8074
  %v8139 = vmul.f32 %v8011, %v8075
  %v8140 = vmul.f32 %v8012, %v8076
  %v8141 = vmul.f32 %v8013, %v8077
  %v8142 = vmul.f32 %v8014, %v8078
  %v8143 = vmul.f32 %v8015, %v8079
  %v8144 = vmul.f32 %v8016, %v8080
  %v8145 = vmul.f32 %v8017, %v8081
  %v8146 = vmul.f32 %v8018, %v8082
  %v8147 = vmul.f32 %v8019, %v8083
  %v8148 = vmul.f32 %v8020, %v8084
  %v8149 = vmul.f32 %v8021, %v8085
  %v8150 = vmul.f32 %v8022, %v8086
  %v8151 = vmul.f32 %v8023, %v8087
  %v8152 = vmul.f32 %v8024, %v8088
  %v8153 = vmul.f32 %v8089, 0.044715
  %v8154 = vmul.f32 %v8090, 0.044715
  %v8155 = vmul.f32 %v8091, 0.044715
  %v8156 = vmul.f32 %v8092, 0.044715
  %v8157 = vmul.f32 %v8093, 0.044715
  %v8158 = vmul.f32 %v8094, 0.044715
  %v8159 = vmul.f32 %v8095, 0.044715
  %v8160 = vmul.f32 %v8096, 0.044715
  %v8161 = vmul.f32 %v8097, 0.044715
  %v8162 = vmul.f32 %v8098, 0.044715
  %v8163 = vmul.f32 %v8099, 0.044715
  %v8164 = vmul.f32 %v8100, 0.044715
  %v8165 = vmul.f32 %v8101, 0.044715
  %v8166 = vmul.f32 %v8102, 0.044715
  %v8167 = vmul.f32 %v8103, 0.044715
  %v8168 = vmul.f32 %v8104, 0.044715
  %v8169 = vmul.f32 %v8105, 0.044715
  %v8170 = vmul.f32 %v8106, 0.044715
  %v8171 = vmul.f32 %v8107, 0.044715
  %v8172 = vmul.f32 %v8108, 0.044715
  %v8173 = vmul.f32 %v8109, 0.044715
  %v8174 = vmul.f32 %v8110, 0.044715
  %v8175 = vmul.f32 %v8111, 0.044715
  %v8176 = vmul.f32 %v8112, 0.044715
  %v8177 = vmul.f32 %v8113, 0.044715
  %v8178 = vmul.f32 %v8114, 0.044715
  %v8179 = vmul.f32 %v8115, 0.044715
  %v8180 = vmul.f32 %v8116, 0.044715
  %v8181 = vmul.f32 %v8117, 0.044715
  %v8182 = vmul.f32 %v8118, 0.044715
  %v8183 = vmul.f32 %v8119, 0.044715
  %v8184 = vmul.f32 %v8120, 0.044715
  %v8185 = vmul.f32 %v8121, 0.044715
  %v8186 = vmul.f32 %v8122, 0.044715
  %v8187 = vmul.f32 %v8123, 0.044715
  %v8188 = vmul.f32 %v8124, 0.044715
  %v8189 = vmul.f32 %v8125, 0.044715
  %v8190 = vmul.f32 %v8126, 0.044715
  %v8191 = vmul.f32 %v8127, 0.044715
  %v8192 = vmul.f32 %v8128, 0.044715
  %v8193 = vmul.f32 %v8129, 0.044715
  %v8194 = vmul.f32 %v8130, 0.044715
  %v8195 = vmul.f32 %v8131, 0.044715
  %v8196 = vmul.f32 %v8132, 0.044715
  %v8197 = vmul.f32 %v8133, 0.044715
  %v8198 = vmul.f32 %v8134, 0.044715
  %v8199 = vmul.f32 %v8135, 0.044715
  %v8200 = vmul.f32 %v8136, 0.044715
  %v8201 = vmul.f32 %v8137, 0.044715
  %v8202 = vmul.f32 %v8138, 0.044715
  %v8203 = vmul.f32 %v8139, 0.044715
  %v8204 = vmul.f32 %v8140, 0.044715
  %v8205 = vmul.f32 %v8141, 0.044715
  %v8206 = vmul.f32 %v8142, 0.044715
  %v8207 = vmul.f32 %v8143, 0.044715
  %v8208 = vmul.f32 %v8144, 0.044715
  %v8209 = vmul.f32 %v8145, 0.044715
  %v8210 = vmul.f32 %v8146, 0.044715
  %v8211 = vmul.f32 %v8147, 0.044715
  %v8212 = vmul.f32 %v8148, 0.044715
  %v8213 = vmul.f32 %v8149, 0.044715
  %v8214 = vmul.f32 %v8150, 0.044715
  %v8215 = vmul.f32 %v8151, 0.044715
  %v8216 = vmul.f32 %v8152, 0.044715
  %v8217 = vadd.f32 %v7961, %v8153
  %v8218 = vadd.f32 %v7962, %v8154
  %v8219 = vadd.f32 %v7963, %v8155
  %v8220 = vadd.f32 %v7964, %v8156
  %v8221 = vadd.f32 %v7965, %v8157
  %v8222 = vadd.f32 %v7966, %v8158
  %v8223 = vadd.f32 %v7967, %v8159
  %v8224 = vadd.f32 %v7968, %v8160
  %v8225 = vadd.f32 %v7969, %v8161
  %v8226 = vadd.f32 %v7970, %v8162
  %v8227 = vadd.f32 %v7971, %v8163
  %v8228 = vadd.f32 %v7972, %v8164
  %v8229 = vadd.f32 %v7973, %v8165
  %v8230 = vadd.f32 %v7974, %v8166
  %v8231 = vadd.f32 %v7975, %v8167
  %v8232 = vadd.f32 %v7976, %v8168
  %v8233 = vadd.f32 %v7977, %v8169
  %v8234 = vadd.f32 %v7978, %v8170
  %v8235 = vadd.f32 %v7979, %v8171
  %v8236 = vadd.f32 %v7980, %v8172
  %v8237 = vadd.f32 %v7981, %v8173
  %v8238 = vadd.f32 %v7982, %v8174
  %v8239 = vadd.f32 %v7983, %v8175
  %v8240 = vadd.f32 %v7984, %v8176
  %v8241 = vadd.f32 %v7985, %v8177
  %v8242 = vadd.f32 %v7986, %v8178
  %v8243 = vadd.f32 %v7987, %v8179
  %v8244 = vadd.f32 %v7988, %v8180
  %v8245 = vadd.f32 %v7989, %v8181
  %v8246 = vadd.f32 %v7990, %v8182
  %v8247 = vadd.f32 %v7991, %v8183
  %v8248 = vadd.f32 %v7992, %v8184
  %v8249 = vadd.f32 %v7993, %v8185
  %v8250 = vadd.f32 %v7994, %v8186
  %v8251 = vadd.f32 %v7995, %v8187
  %v8252 = vadd.f32 %v7996, %v8188
  %v8253 = vadd.f32 %v7997, %v8189
  %v8254 = vadd.f32 %v7998, %v8190
  %v8255 = vadd.f32 %v7999, %v8191
  %v8256 = vadd.f32 %v8000, %v8192
  %v8257 = vadd.f32 %v8001, %v8193
  %v8258 = vadd.f32 %v8002, %v8194
  %v8259 = vadd.f32 %v8003, %v8195
  %v8260 = vadd.f32 %v8004, %v8196
  %v8261 = vadd.f32 %v8005, %v8197
  %v8262 = vadd.f32 %v8006, %v8198
  %v8263 = vadd.f32 %v8007, %v8199
  %v8264 = vadd.f32 %v8008, %v8200
  %v8265 = vadd.f32 %v8009, %v8201
  %v8266 = vadd.f32 %v8010, %v8202
  %v8267 = vadd.f32 %v8011, %v8203
  %v8268 = vadd.f32 %v8012, %v8204
  %v8269 = vadd.f32 %v8013, %v8205
  %v8270 = vadd.f32 %v8014, %v8206
  %v8271 = vadd.f32 %v8015, %v8207
  %v8272 = vadd.f32 %v8016, %v8208
  %v8273 = vadd.f32 %v8017, %v8209
  %v8274 = vadd.f32 %v8018, %v8210
  %v8275 = vadd.f32 %v8019, %v8211
  %v8276 = vadd.f32 %v8020, %v8212
  %v8277 = vadd.f32 %v8021, %v8213
  %v8278 = vadd.f32 %v8022, %v8214
  %v8279 = vadd.f32 %v8023, %v8215
  %v8280 = vadd.f32 %v8024, %v8216
  %v8281 = vmul.f32 %v8217, 0.7978846
  %v8282 = vmul.f32 %v8218, 0.7978846
  %v8283 = vmul.f32 %v8219, 0.7978846
  %v8284 = vmul.f32 %v8220, 0.7978846
  %v8285 = vmul.f32 %v8221, 0.7978846
  %v8286 = vmul.f32 %v8222, 0.7978846
  %v8287 = vmul.f32 %v8223, 0.7978846
  %v8288 = vmul.f32 %v8224, 0.7978846
  %v8289 = vmul.f32 %v8225, 0.7978846
  %v8290 = vmul.f32 %v8226, 0.7978846
  %v8291 = vmul.f32 %v8227, 0.7978846
  %v8292 = vmul.f32 %v8228, 0.7978846
  %v8293 = vmul.f32 %v8229, 0.7978846
  %v8294 = vmul.f32 %v8230, 0.7978846
  %v8295 = vmul.f32 %v8231, 0.7978846
  %v8296 = vmul.f32 %v8232, 0.7978846
  %v8297 = vmul.f32 %v8233, 0.7978846
  %v8298 = vmul.f32 %v8234, 0.7978846
  %v8299 = vmul.f32 %v8235, 0.7978846
  %v8300 = vmul.f32 %v8236, 0.7978846
  %v8301 = vmul.f32 %v8237, 0.7978846
  %v8302 = vmul.f32 %v8238, 0.7978846
  %v8303 = vmul.f32 %v8239, 0.7978846
  %v8304 = vmul.f32 %v8240, 0.7978846
  %v8305 = vmul.f32 %v8241, 0.7978846
  %v8306 = vmul.f32 %v8242, 0.7978846
  %v8307 = vmul.f32 %v8243, 0.7978846
  %v8308 = vmul.f32 %v8244, 0.7978846
  %v8309 = vmul.f32 %v8245, 0.7978846
  %v8310 = vmul.f32 %v8246, 0.7978846
  %v8311 = vmul.f32 %v8247, 0.7978846
  %v8312 = vmul.f32 %v8248, 0.7978846
  %v8313 = vmul.f32 %v8249, 0.7978846
  %v8314 = vmul.f32 %v8250, 0.7978846
  %v8315 = vmul.f32 %v8251, 0.7978846
  %v8316 = vmul.f32 %v8252, 0.7978846
  %v8317 = vmul.f32 %v8253, 0.7978846
  %v8318 = vmul.f32 %v8254, 0.7978846
  %v8319 = vmul.f32 %v8255, 0.7978846
  %v8320 = vmul.f32 %v8256, 0.7978846
  %v8321 = vmul.f32 %v8257, 0.7978846
  %v8322 = vmul.f32 %v8258, 0.7978846
  %v8323 = vmul.f32 %v8259, 0.7978846
  %v8324 = vmul.f32 %v8260, 0.7978846
  %v8325 = vmul.f32 %v8261, 0.7978846
  %v8326 = vmul.f32 %v8262, 0.7978846
  %v8327 = vmul.f32 %v8263, 0.7978846
  %v8328 = vmul.f32 %v8264, 0.7978846
  %v8329 = vmul.f32 %v8265, 0.7978846
  %v8330 = vmul.f32 %v8266, 0.7978846
  %v8331 = vmul.f32 %v8267, 0.7978846
  %v8332 = vmul.f32 %v8268, 0.7978846
  %v8333 = vmul.f32 %v8269, 0.7978846
  %v8334 = vmul.f32 %v8270, 0.7978846
  %v8335 = vmul.f32 %v8271, 0.7978846
  %v8336 = vmul.f32 %v8272, 0.7978846
  %v8337 = vmul.f32 %v8273, 0.7978846
  %v8338 = vmul.f32 %v8274, 0.7978846
  %v8339 = vmul.f32 %v8275, 0.7978846
  %v8340 = vmul.f32 %v8276, 0.7978846
  %v8341 = vmul.f32 %v8277, 0.7978846
  %v8342 = vmul.f32 %v8278, 0.7978846
  %v8343 = vmul.f32 %v8279, 0.7978846
  %v8344 = vmul.f32 %v8280, 0.7978846
  %v8345 = vtanh.pop %v8281
  %v8346 = vtanh.pop %v8282
  %v8347 = vtanh.pop %v8283
  %v8348 = vtanh.pop %v8284
  %v8349 = vtanh.pop %v8285
  %v8350 = vtanh.pop %v8286
  %v8351 = vtanh.pop %v8287
  %v8352 = vtanh.pop %v8288
  %v8353 = vtanh.pop %v8289
  %v8354 = vtanh.pop %v8290
  %v8355 = vtanh.pop %v8291
  %v8356 = vtanh.pop %v8292
  %v8357 = vtanh.pop %v8293
  %v8358 = vtanh.pop %v8294
  %v8359 = vtanh.pop %v8295
  %v8360 = vtanh.pop %v8296
  %v8361 = vtanh.pop %v8297
  %v8362 = vtanh.pop %v8298
  %v8363 = vtanh.pop %v8299
  %v8364 = vtanh.pop %v8300
  %v8365 = vtanh.pop %v8301
  %v8366 = vtanh.pop %v8302
  %v8367 = vtanh.pop %v8303
  %v8368 = vtanh.pop %v8304
  %v8369 = vtanh.pop %v8305
  %v8370 = vtanh.pop %v8306
  %v8371 = vtanh.pop %v8307
  %v8372 = vtanh.pop %v8308
  %v8373 = vtanh.pop %v8309
  %v8374 = vtanh.pop %v8310
  %v8375 = vtanh.pop %v8311
  %v8376 = vtanh.pop %v8312
  %v8377 = vtanh.pop %v8313
  %v8378 = vtanh.pop %v8314
  %v8379 = vtanh.pop %v8315
  %v8380 = vtanh.pop %v8316
  %v8381 = vtanh.pop %v8317
  %v8382 = vtanh.pop %v8318
  %v8383 = vtanh.pop %v8319
  %v8384 = vtanh.pop %v8320
  %v8385 = vtanh.pop %v8321
  %v8386 = vtanh.pop %v8322
  %v8387 = vtanh.pop %v8323
  %v8388 = vtanh.pop %v8324
  %v8389 = vtanh.pop %v8325
  %v8390 = vtanh.pop %v8326
  %v8391 = vtanh.pop %v8327
  %v8392 = vtanh.pop %v8328
  %v8393 = vtanh.pop %v8329
  %v8394 = vtanh.pop %v8330
  %v8395 = vtanh.pop %v8331
  %v8396 = vtanh.pop %v8332
  %v8397 = vtanh.pop %v8333
  %v8398 = vtanh.pop %v8334
  %v8399 = vtanh.pop %v8335
  %v8400 = vtanh.pop %v8336
  %v8401 = vtanh.pop %v8337
  %v8402 = vtanh.pop %v8338
  %v8403 = vtanh.pop %v8339
  %v8404 = vtanh.pop %v8340
  %v8405 = vtanh.pop %v8341
  %v8406 = vtanh.pop %v8342
  %v8407 = vtanh.pop %v8343
  %v8408 = vtanh.pop %v8344
  %v8409 = vadd.f32 %v8345, 1.0
  %v8410 = vadd.f32 %v8346, 1.0
  %v8411 = vadd.f32 %v8347, 1.0
  %v8412 = vadd.f32 %v8348, 1.0
  %v8413 = vadd.f32 %v8349, 1.0
  %v8414 = vadd.f32 %v8350, 1.0
  %v8415 = vadd.f32 %v8351, 1.0
  %v8416 = vadd.f32 %v8352, 1.0
  %v8417 = vadd.f32 %v8353, 1.0
  %v8418 = vadd.f32 %v8354, 1.0
  %v8419 = vadd.f32 %v8355, 1.0
  %v8420 = vadd.f32 %v8356, 1.0
  %v8421 = vadd.f32 %v8357, 1.0
  %v8422 = vadd.f32 %v8358, 1.0
  %v8423 = vadd.f32 %v8359, 1.0
  %v8424 = vadd.f32 %v8360, 1.0
  %v8425 = vadd.f32 %v8361, 1.0
  %v8426 = vadd.f32 %v8362, 1.0
  %v8427 = vadd.f32 %v8363, 1.0
  %v8428 = vadd.f32 %v8364, 1.0
  %v8429 = vadd.f32 %v8365, 1.0
  %v8430 = vadd.f32 %v8366, 1.0
  %v8431 = vadd.f32 %v8367, 1.0
  %v8432 = vadd.f32 %v8368, 1.0
  %v8433 = vadd.f32 %v8369, 1.0
  %v8434 = vadd.f32 %v8370, 1.0
  %v8435 = vadd.f32 %v8371, 1.0
  %v8436 = vadd.f32 %v8372, 1.0
  %v8437 = vadd.f32 %v8373, 1.0
  %v8438 = vadd.f32 %v8374, 1.0
  %v8439 = vadd.f32 %v8375, 1.0
  %v8440 = vadd.f32 %v8376, 1.0
  %v8441 = vadd.f32 %v8377, 1.0
  %v8442 = vadd.f32 %v8378, 1.0
  %v8443 = vadd.f32 %v8379, 1.0
  %v8444 = vadd.f32 %v8380, 1.0
  %v8445 = vadd.f32 %v8381, 1.0
  %v8446 = vadd.f32 %v8382, 1.0
  %v8447 = vadd.f32 %v8383, 1.0
  %v8448 = vadd.f32 %v8384, 1.0
  %v8449 = vadd.f32 %v8385, 1.0
  %v8450 = vadd.f32 %v8386, 1.0
  %v8451 = vadd.f32 %v8387, 1.0
  %v8452 = vadd.f32 %v8388, 1.0
  %v8453 = vadd.f32 %v8389, 1.0
  %v8454 = vadd.f32 %v8390, 1.0
  %v8455 = vadd.f32 %v8391, 1.0
  %v8456 = vadd.f32 %v8392, 1.0
  %v8457 = vadd.f32 %v8393, 1.0
  %v8458 = vadd.f32 %v8394, 1.0
  %v8459 = vadd.f32 %v8395, 1.0
  %v8460 = vadd.f32 %v8396, 1.0
  %v8461 = vadd.f32 %v8397, 1.0
  %v8462 = vadd.f32 %v8398, 1.0
  %v8463 = vadd.f32 %v8399, 1.0
  %v8464 = vadd.f32 %v8400, 1.0
  %v8465 = vadd.f32 %v8401, 1.0
  %v8466 = vadd.f32 %v8402, 1.0
  %v8467 = vadd.f32 %v8403, 1.0
  %v8468 = vadd.f32 %v8404, 1.0
  %v8469 = vadd.f32 %v8405, 1.0
  %v8470 = vadd.f32 %v8406, 1.0
  %v8471 = vadd.f32 %v8407, 1.0
  %v8472 = vadd.f32 %v8408, 1.0
  %v8473 = vmul.f32 %v8409, 0.5
  %v8474 = vmul.f32 %v8410, 0.5
  %v8475 = vmul.f32 %v8411, 0.5
  %v8476 = vmul.f32 %v8412, 0.5
  %v8477 = vmul.f32 %v8413, 0.5
  %v8478 = vmul.f32 %v8414, 0.5
  %v8479 = vmul.f32 %v8415, 0.5
  %v8480 = vmul.f32 %v8416, 0.5
  %v8481 = vmul.f32 %v8417, 0.5
  %v8482 = vmul.f32 %v8418, 0.5
  %v8483 = vmul.f32 %v8419, 0.5
  %v8484 = vmul.f32 %v8420, 0.5
  %v8485 = vmul.f32 %v8421, 0.5
  %v8486 = vmul.f32 %v8422, 0.5
  %v8487 = vmul.f32 %v8423, 0.5
  %v8488 = vmul.f32 %v8424, 0.5
  %v8489 = vmul.f32 %v8425, 0.5
  %v8490 = vmul.f32 %v8426, 0.5
  %v8491 = vmul.f32 %v8427, 0.5
  %v8492 = vmul.f32 %v8428, 0.5
  %v8493 = vmul.f32 %v8429, 0.5
  %v8494 = vmul.f32 %v8430, 0.5
  %v8495 = vmul.f32 %v8431, 0.5
  %v8496 = vmul.f32 %v8432, 0.5
  %v8497 = vmul.f32 %v8433, 0.5
  %v8498 = vmul.f32 %v8434, 0.5
  %v8499 = vmul.f32 %v8435, 0.5
  %v8500 = vmul.f32 %v8436, 0.5
  %v8501 = vmul.f32 %v8437, 0.5
  %v8502 = vmul.f32 %v8438, 0.5
  %v8503 = vmul.f32 %v8439, 0.5
  %v8504 = vmul.f32 %v8440, 0.5
  %v8505 = vmul.f32 %v8441, 0.5
  %v8506 = vmul.f32 %v8442, 0.5
  %v8507 = vmul.f32 %v8443, 0.5
  %v8508 = vmul.f32 %v8444, 0.5
  %v8509 = vmul.f32 %v8445, 0.5
  %v8510 = vmul.f32 %v8446, 0.5
  %v8511 = vmul.f32 %v8447, 0.5
  %v8512 = vmul.f32 %v8448, 0.5
  %v8513 = vmul.f32 %v8449, 0.5
  %v8514 = vmul.f32 %v8450, 0.5
  %v8515 = vmul.f32 %v8451, 0.5
  %v8516 = vmul.f32 %v8452, 0.5
  %v8517 = vmul.f32 %v8453, 0.5
  %v8518 = vmul.f32 %v8454, 0.5
  %v8519 = vmul.f32 %v8455, 0.5
  %v8520 = vmul.f32 %v8456, 0.5
  %v8521 = vmul.f32 %v8457, 0.5
  %v8522 = vmul.f32 %v8458, 0.5
  %v8523 = vmul.f32 %v8459, 0.5
  %v8524 = vmul.f32 %v8460, 0.5
  %v8525 = vmul.f32 %v8461, 0.5
  %v8526 = vmul.f32 %v8462, 0.5
  %v8527 = vmul.f32 %v8463, 0.5
  %v8528 = vmul.f32 %v8464, 0.5
  %v8529 = vmul.f32 %v8465, 0.5
  %v8530 = vmul.f32 %v8466, 0.5
  %v8531 = vmul.f32 %v8467, 0.5
  %v8532 = vmul.f32 %v8468, 0.5
  %v8533 = vmul.f32 %v8469, 0.5
  %v8534 = vmul.f32 %v8470, 0.5
  %v8535 = vmul.f32 %v8471, 0.5
  %v8536 = vmul.f32 %v8472, 0.5
  %v8537 = vmul.f32 %v7961, %v8473
  %v8538 = vmul.f32 %v7962, %v8474
  %v8539 = vmul.f32 %v7963, %v8475
  %v8540 = vmul.f32 %v7964, %v8476
  %v8541 = vmul.f32 %v7965, %v8477
  %v8542 = vmul.f32 %v7966, %v8478
  %v8543 = vmul.f32 %v7967, %v8479
  %v8544 = vmul.f32 %v7968, %v8480
  %v8545 = vmul.f32 %v7969, %v8481
  %v8546 = vmul.f32 %v7970, %v8482
  %v8547 = vmul.f32 %v7971, %v8483
  %v8548 = vmul.f32 %v7972, %v8484
  %v8549 = vmul.f32 %v7973, %v8485
  %v8550 = vmul.f32 %v7974, %v8486
  %v8551 = vmul.f32 %v7975, %v8487
  %v8552 = vmul.f32 %v7976, %v8488
  %v8553 = vmul.f32 %v7977, %v8489
  %v8554 = vmul.f32 %v7978, %v8490
  %v8555 = vmul.f32 %v7979, %v8491
  %v8556 = vmul.f32 %v7980, %v8492
  %v8557 = vmul.f32 %v7981, %v8493
  %v8558 = vmul.f32 %v7982, %v8494
  %v8559 = vmul.f32 %v7983, %v8495
  %v8560 = vmul.f32 %v7984, %v8496
  %v8561 = vmul.f32 %v7985, %v8497
  %v8562 = vmul.f32 %v7986, %v8498
  %v8563 = vmul.f32 %v7987, %v8499
  %v8564 = vmul.f32 %v7988, %v8500
  %v8565 = vmul.f32 %v7989, %v8501
  %v8566 = vmul.f32 %v7990, %v8502
  %v8567 = vmul.f32 %v7991, %v8503
  %v8568 = vmul.f32 %v7992, %v8504
  %v8569 = vmul.f32 %v7993, %v8505
  %v8570 = vmul.f32 %v7994, %v8506
  %v8571 = vmul.f32 %v7995, %v8507
  %v8572 = vmul.f32 %v7996, %v8508
  %v8573 = vmul.f32 %v7997, %v8509
  %v8574 = vmul.f32 %v7998, %v8510
  %v8575 = vmul.f32 %v7999, %v8511
  %v8576 = vmul.f32 %v8000, %v8512
  %v8577 = vmul.f32 %v8001, %v8513
  %v8578 = vmul.f32 %v8002, %v8514
  %v8579 = vmul.f32 %v8003, %v8515
  %v8580 = vmul.f32 %v8004, %v8516
  %v8581 = vmul.f32 %v8005, %v8517
  %v8582 = vmul.f32 %v8006, %v8518
  %v8583 = vmul.f32 %v8007, %v8519
  %v8584 = vmul.f32 %v8008, %v8520
  %v8585 = vmul.f32 %v8009, %v8521
  %v8586 = vmul.f32 %v8010, %v8522
  %v8587 = vmul.f32 %v8011, %v8523
  %v8588 = vmul.f32 %v8012, %v8524
  %v8589 = vmul.f32 %v8013, %v8525
  %v8590 = vmul.f32 %v8014, %v8526
  %v8591 = vmul.f32 %v8015, %v8527
  %v8592 = vmul.f32 %v8016, %v8528
  %v8593 = vmul.f32 %v8017, %v8529
  %v8594 = vmul.f32 %v8018, %v8530
  %v8595 = vmul.f32 %v8019, %v8531
  %v8596 = vmul.f32 %v8020, %v8532
  %v8597 = vmul.f32 %v8021, %v8533
  %v8598 = vmul.f32 %v8022, %v8534
  %v8599 = vmul.f32 %v8023, %v8535
  %v8600 = vmul.f32 %v8024, %v8536
  %v8602 = vsel %vm1625, %v5994, 0
  %v8605 = vsel %vm1625, %v8537, 0
  %v8608 = vsel %vm1625, %v8538, 0
  %v8611 = vsel %vm1625, %v8539, 0
  %v8614 = vsel %vm1625, %v8540, 0
  %v8617 = vsel %vm1625, %v8541, 0
  %v8620 = vsel %vm1625, %v8542, 0
  %v8623 = vsel %vm1625, %v8543, 0
  %v8626 = vsel %vm1625, %v8544, 0
  %v8629 = vsel %vm1625, %v8545, 0
  %v8632 = vsel %vm1625, %v8546, 0
  %v8635 = vsel %vm1625, %v8547, 0
  %v8638 = vsel %vm1625, %v8548, 0
  %v8641 = vsel %vm1625, %v8549, 0
  %v8644 = vsel %vm1625, %v8550, 0
  %v8647 = vsel %vm1625, %v8551, 0
  %v8650 = vsel %vm1625, %v8552, 0
  %v8653 = vsel %vm1625, %v8553, 0
  %v8656 = vsel %vm1625, %v8554, 0
  %v8659 = vsel %vm1625, %v8555, 0
  %v8662 = vsel %vm1625, %v8556, 0
  %v8665 = vsel %vm1625, %v8557, 0
  %v8668 = vsel %vm1625, %v8558, 0
  %v8671 = vsel %vm1625, %v8559, 0
  %v8674 = vsel %vm1625, %v8560, 0
  %v8677 = vsel %vm1625, %v8561, 0
  %v8680 = vsel %vm1625, %v8562, 0
  %v8683 = vsel %vm1625, %v8563, 0
  %v8686 = vsel %vm1625, %v8564, 0
  %v8689 = vsel %vm1625, %v8565, 0
  %v8692 = vsel %vm1625, %v8566, 0
  %v8695 = vsel %vm1625, %v8567, 0
  %v8698 = vsel %vm1625, %v8568, 0
  %8700 = vmatprep.subr.mxu0 0.0
  %8701 = vmatpush1.xpose.msra.mxu0 %v8605
  %8702 = vmatprep.subr.mxu0 0.0
  %8703 = vmatpush1.xpose.msra.mxu0 %v8608
  %8704 = vmatprep.subr.mxu0 0.0
  %8705 = vmatpush1.xpose.msra.mxu0 %v8611
  %8706 = vmatprep.subr.mxu0 0.0
  %8707 = vmatpush1.xpose.msra.mxu0 %v8614
  %8708 = vmatprep.subr.mxu0 0.0
  %8709 = vmatpush1.xpose.msra.mxu0 %v8617
  %8710 = vmatprep.subr.mxu0 0.0
  %8711 = vmatpush1.xpose.msra.mxu0 %v8620
  %8712 = vmatprep.subr.mxu0 0.0
  %8713 = vmatpush1.xpose.msra.mxu0 %v8623
  %8714 = vmatprep.subr.mxu0 0.0
  %8715 = vmatpush1.xpose.msra.mxu0 %v8626
  %8716 = vmatprep.subr.mxu0 0.0
  %8717 = vmatpush1.xpose.msra.mxu0 %v8629
  %8718 = vmatprep.subr.mxu0 0.0
  %8719 = vmatpush1.xpose.msra.mxu0 %v8632
  %8720 = vmatprep.subr.mxu0 0.0
  %8721 = vmatpush1.xpose.msra.mxu0 %v8635
  %8722 = vmatprep.subr.mxu0 0.0
  %8723 = vmatpush1.xpose.msra.mxu0 %v8638
  %8724 = vmatprep.subr.mxu0 0.0
  %8725 = vmatpush1.xpose.msra.mxu0 %v8641
  %8726 = vmatprep.subr.mxu0 0.0
  %8727 = vmatpush1.xpose.msra.mxu0 %v8644
  %8728 = vmatprep.subr.mxu0 0.0
  %8729 = vmatpush1.xpose.msra.mxu0 %v8647
  %8730 = vmatprep.subr.mxu0 0.0
  %8731 = vmatpush1.xpose.msra.mxu0 %v8650
  %8732 = vmatprep.subr.mxu0 0.0
  %8733 = vmatpush1.xpose.msra.mxu0 %v8653
  %8734 = vmatprep.subr.mxu0 0.0
  %8735 = vmatpush1.xpose.msra.mxu0 %v8656
  %8736 = vmatprep.subr.mxu0 0.0
  %8737 = vmatpush1.xpose.msra.mxu0 %v8659
  %8738 = vmatprep.subr.mxu0 0.0
  %8739 = vmatpush1.xpose.msra.mxu0 %v8662
  %8740 = vmatprep.subr.mxu0 0.0
  %8741 = vmatpush1.xpose.msra.mxu0 %v8665
  %8742 = vmatprep.subr.mxu0 0.0
  %8743 = vmatpush1.xpose.msra.mxu0 %v8668
  %8744 = vmatprep.subr.mxu0 0.0
  %8745 = vmatpush1.xpose.msra.mxu0 %v8671
  %8746 = vmatprep.subr.mxu0 0.0
  %8747 = vmatpush1.xpose.msra.mxu0 %v8674
  %8748 = vmatprep.subr.mxu0 0.0
  %8749 = vmatpush1.xpose.msra.mxu0 %v8677
  %8750 = vmatprep.subr.mxu0 0.0
  %8751 = vmatpush1.xpose.msra.mxu0 %v8680
  %8752 = vmatprep.subr.mxu0 0.0
  %8753 = vmatpush1.xpose.msra.mxu0 %v8683
  %8754 = vmatprep.subr.mxu0 0.0
  %8755 = vmatpush1.xpose.msra.mxu0 %v8686
  %8756 = vmatprep.subr.mxu0 0.0
  %8757 = vmatpush1.xpose.msra.mxu0 %v8689
  %8758 = vmatprep.subr.mxu0 0.0
  %8759 = vmatpush1.xpose.msra.mxu0 %v8692
  %8760 = vmatprep.subr.mxu0 0.0
  %8761 = vmatpush1.xpose.msra.mxu0 %v8695
  %8762 = vmatprep.subr.mxu0 0.0
  %8763 = vmatpush1.xpose.msra.mxu0 %v8698
  %8764 = vmatprep.mubr.f32.mxu0 0.0
  %8765 = vmatmul.mubr.f32.gmra.mrb[0].mxu0 %v8602
  %v8766 = vpop.f32.mrb[0].mxu0
  %v8767 = vadd.f32 0.0, %v8766
  %v8768 = vpop.f32.mrb[0].mxu0
  %v8769 = vadd.f32 0.0, %v8768
  %8770 = vdwg.mxu0
  %v8771 = vrot.slane %v5994, 1
  %v8772 = vsel %vm1625, %v8771, 0
  %v8775 = vsel %vm1625, %v8569, 0
  %v8778 = vsel %vm1625, %v8570, 0
  %v8781 = vsel %vm1625, %v8571, 0
  %v8784 = vsel %vm1625, %v8572, 0
  %v8787 = vsel %vm1625, %v8573, 0
  %v8790 = vsel %vm1625, %v8574, 0
  %v8793 = vsel %vm1625, %v8575, 0
  %v8796 = vsel %vm1625, %v8576, 0
  %v8799 = vsel %vm1625, %v8577, 0
  %v8802 = vsel %vm1625, %v8578, 0
  %v8805 = vsel %vm1625, %v8579, 0
  %v8808 = vsel %vm1625, %v8580, 0
  %v8811 = vsel %vm1625, %v8581, 0
  %v8814 = vsel %vm1625, %v8582, 0
  %v8817 = vsel %vm1625, %v8583, 0
  %v8820 = vsel %vm1625, %v8584, 0
  %v8823 = vsel %vm1625, %v8585, 0
  %v8826 = vsel %vm1625, %v8586, 0
  %v8829 = vsel %vm1625, %v8587, 0
  %v8832 = vsel %vm1625, %v8588, 0
  %v8835 = vsel %vm1625, %v8589, 0
  %v8838 = vsel %vm1625, %v8590, 0
  %v8841 = vsel %vm1625, %v8591, 0
  %v8844 = vsel %vm1625, %v8592, 0
  %v8847 = vsel %vm1625, %v8593, 0
  %v8850 = vsel %vm1625, %v8594, 0
  %v8853 = vsel %vm1625, %v8595, 0
  %v8856 = vsel %vm1625, %v8596, 0
  %v8859 = vsel %vm1625, %v8597, 0
  %v8862 = vsel %vm1625, %v8598, 0
  %v8865 = vsel %vm1625, %v8599, 0
  %v8868 = vsel %vm1625, %v8600, 0
  %8870 = vmatprep.subr.mxu0 0.0
  %8871 = vmatpush1.xpose.msra.mxu0 %v8775
  %8872 = vmatprep.subr.mxu0 0.0
  %8873 = vmatpush1.xpose.msra.mxu0 %v8778
  %8874 = vmatprep.subr.mxu0 0.0
  %8875 = vmatpush1.xpose.msra.mxu0 %v8781
  %8876 = vmatprep.subr.mxu0 0.0
  %8877 = vmatpush1.xpose.msra.mxu0 %v8784
  %8878 = vmatprep.subr.mxu0 0.0
  %8879 = vmatpush1.xpose.msra.mxu0 %v8787
  %8880 = vmatprep.subr.mxu0 0.0
  %8881 = vmatpush1.xpose.msra.mxu0 %v8790
  %8882 = vmatprep.subr.mxu0 0.0
  %8883 = vmatpush1.xpose.msra.mxu0 %v8793
  %8884 = vmatprep.subr.mxu0 0.0
  %8885 = vmatpush1.xpose.msra.mxu0 %v8796
  %8886 = vmatprep.subr.mxu0 0.0
  %8887 = vmatpush1.xpose.msra.mxu0 %v8799
  %8888 = vmatprep.subr.mxu0 0.0
  %8889 = vmatpush1.xpose.msra.mxu0 %v8802
  %8890 = vmatprep.subr.mxu0 0.0
  %8891 = vmatpush1.xpose.msra.mxu0 %v8805
  %8892 = vmatprep.subr.mxu0 0.0
  %8893 = vmatpush1.xpose.msra.mxu0 %v8808
  %8894 = vmatprep.subr.mxu0 0.0
  %8895 = vmatpush1.xpose.msra.mxu0 %v8811
  %8896 = vmatprep.subr.mxu0 0.0
  %8897 = vmatpush1.xpose.msra.mxu0 %v8814
  %8898 = vmatprep.subr.mxu0 0.0
  %8899 = vmatpush1.xpose.msra.mxu0 %v8817
  %8900 = vmatprep.subr.mxu0 0.0
  %8901 = vmatpush1.xpose.msra.mxu0 %v8820
  %8902 = vmatprep.subr.mxu0 0.0
  %8903 = vmatpush1.xpose.msra.mxu0 %v8823
  %8904 = vmatprep.subr.mxu0 0.0
  %8905 = vmatpush1.xpose.msra.mxu0 %v8826
  %8906 = vmatprep.subr.mxu0 0.0
  %8907 = vmatpush1.xpose.msra.mxu0 %v8829
  %8908 = vmatprep.subr.mxu0 0.0
  %8909 = vmatpush1.xpose.msra.mxu0 %v8832
  %8910 = vmatprep.subr.mxu0 0.0
  %8911 = vmatpush1.xpose.msra.mxu0 %v8835
  %8912 = vmatprep.subr.mxu0 0.0
  %8913 = vmatpush1.xpose.msra.mxu0 %v8838
  %8914 = vmatprep.subr.mxu0 0.0
  %8915 = vmatpush1.xpose.msra.mxu0 %v8841
  %8916 = vmatprep.subr.mxu0 0.0
  %8917 = vmatpush1.xpose.msra.mxu0 %v8844
  %8918 = vmatprep.subr.mxu0 0.0
  %8919 = vmatpush1.xpose.msra.mxu0 %v8847
  %8920 = vmatprep.subr.mxu0 0.0
  %8921 = vmatpush1.xpose.msra.mxu0 %v8850
  %8922 = vmatprep.subr.mxu0 0.0
  %8923 = vmatpush1.xpose.msra.mxu0 %v8853
  %8924 = vmatprep.subr.mxu0 0.0
  %8925 = vmatpush1.xpose.msra.mxu0 %v8856
  %8926 = vmatprep.subr.mxu0 0.0
  %8927 = vmatpush1.xpose.msra.mxu0 %v8859
  %8928 = vmatprep.subr.mxu0 0.0
  %8929 = vmatpush1.xpose.msra.mxu0 %v8862
  %8930 = vmatprep.subr.mxu0 0.0
  %8931 = vmatpush1.xpose.msra.mxu0 %v8865
  %8932 = vmatprep.subr.mxu0 0.0
  %8933 = vmatpush1.xpose.msra.mxu0 %v8868
  %8934 = vmatprep.mubr.f32.mxu0 0.0
  %8935 = vmatmul.mubr.f32.gmra.mrb[0].mxu0 %v8772
  %v8936 = vpop.f32.mrb[0].mxu0
  %v8937 = vadd.f32 0.0, %v8936
  %v8938 = vpop.f32.mrb[0].mxu0
  %v8939 = vadd.f32 0.0, %v8938
  %8940 = vdwg.mxu0
  %v8943 = vrot.slane %v8937, 7
  %v8944 = vrot.slane %v8939, 7
  %vm8947 = vcmask 1040384
  %v8948 = vsel %vm8947, %v8767, %v8943
  %v8949 = vsel %vm8947, %v8769, %v8944
  %v8950 = vpack.c.bf16 %v8948, %v8948
  %v8951 = vpack.c.bf16 %v8949, %v8949
  %v8952 = vld [vmem:[%s3] sm:$0xff]
  %v8953 = vld [vmem:[%s3 + $0x8] sm:$0xff]
  %v8954 = vld [vmem:[%s3 + $0x10] sm:$0xff]
  %v8955 = vld [vmem:[%s3 + $0x18] sm:$0xff]
  %v8956 = vld [vmem:[%s3 + $0x20] sm:$0xff]
  %v8957 = vld [vmem:[%s3 + $0x28] sm:$0xff]
  %v8958 = vld [vmem:[%s3 + $0x30] sm:$0xff]
  %v8959 = vld [vmem:[%s3 + $0x38] sm:$0xff]
  %v8960 = vld [vmem:[%s3 + $0x40] sm:$0xff]
  %v8961 = vld [vmem:[%s3 + $0x48] sm:$0xff]
  %v8962 = vld [vmem:[%s3 + $0x50] sm:$0xff]
  %v8963 = vld [vmem:[%s3 + $0x58] sm:$0xff]
  %v8964 = vld [vmem:[%s3 + $0x60] sm:$0xff]
  %v8965 = vld [vmem:[%s3 + $0x68] sm:$0xff]
  %v8966 = vld [vmem:[%s3 + $0x70] sm:$0xff]
  %v8967 = vld [vmem:[%s3 + $0x78] sm:$0xff]
  %v8968 = vld [vmem:[%s3 + $0x80] sm:$0xff]
  %v8969 = vld [vmem:[%s3 + $0x88] sm:$0xff]
  %v8970 = vld [vmem:[%s3 + $0x90] sm:$0xff]
  %v8971 = vld [vmem:[%s3 + $0x98] sm:$0xff]
  %v8972 = vld [vmem:[%s3 + $0xa0] sm:$0xff]
  %v8973 = vld [vmem:[%s3 + $0xa8] sm:$0xff]
  %v8974 = vld [vmem:[%s3 + $0xb0] sm:$0xff]
  %v8975 = vld [vmem:[%s3 + $0xb8] sm:$0xff]
  %v8976 = vld [vmem:[%s3 + $0xc0] sm:$0xff]
  %v8977 = vld [vmem:[%s3 + $0xc8] sm:$0xff]
  %v8978 = vld [vmem:[%s3 + $0xd0] sm:$0xff]
  %v8979 = vld [vmem:[%s3 + $0xd8] sm:$0xff]
  %v8980 = vld [vmem:[%s3 + $0xe0] sm:$0xff]
  %v8981 = vld [vmem:[%s3 + $0xe8] sm:$0xff]
  %v8982 = vld [vmem:[%s3 + $0xf0] sm:$0xff]
  %v8983 = vld [vmem:[%s3 + $0xf8] sm:$0xff]
  %v8984 = vld [vmem:[%s3 + $0x100] sm:$0xff]
  %v8985 = vld [vmem:[%s3 + $0x108] sm:$0xff]
  %v8986 = vld [vmem:[%s3 + $0x110] sm:$0xff]
  %v8987 = vld [vmem:[%s3 + $0x118] sm:$0xff]
  %v8988 = vld [vmem:[%s3 + $0x120] sm:$0xff]
  %v8989 = vld [vmem:[%s3 + $0x128] sm:$0xff]
  %v8990 = vld [vmem:[%s3 + $0x130] sm:$0xff]
  %v8991 = vld [vmem:[%s3 + $0x138] sm:$0xff]
  %v8992 = vld [vmem:[%s3 + $0x140] sm:$0xff]
  %v8993 = vld [vmem:[%s3 + $0x148] sm:$0xff]
  %v8994 = vld [vmem:[%s3 + $0x150] sm:$0xff]
  %v8995 = vld [vmem:[%s3 + $0x158] sm:$0xff]
  %v8996 = vld [vmem:[%s3 + $0x160] sm:$0xff]
  %v8997 = vld [vmem:[%s3 + $0x168] sm:$0xff]
  %v8998 = vld [vmem:[%s3 + $0x170] sm:$0xff]
  %v8999 = vld [vmem:[%s3 + $0x178] sm:$0xff]
  %v9000 = vld [vmem:[%s3 + $0x180] sm:$0xff]
  %v9001 = vld [vmem:[%s3 + $0x188] sm:$0xff]
  %v9002 = vld [vmem:[%s3 + $0x190] sm:$0xff]
  %v9003 = vld [vmem:[%s3 + $0x198] sm:$0xff]
  %v9004 = vld [vmem:[%s3 + $0x1a0] sm:$0xff]
  %v9005 = vld [vmem:[%s3 + $0x1a8] sm:$0xff]
  %v9006 = vld [vmem:[%s3 + $0x1b0] sm:$0xff]
  %v9007 = vld [vmem:[%s3 + $0x1b8] sm:$0xff]
  %v9008 = vld [vmem:[%s3 + $0x1c0] sm:$0xff]
  %v9009 = vld [vmem:[%s3 + $0x1c8] sm:$0xff]
  %v9010 = vld [vmem:[%s3 + $0x1d0] sm:$0xff]
  %v9011 = vld [vmem:[%s3 + $0x1d8] sm:$0xff]
  %v9012 = vld [vmem:[%s3 + $0x1e0] sm:$0xff]
  %v9013 = vld [vmem:[%s3 + $0x1e8] sm:$0xff]
  %v9014 = vld [vmem:[%s3 + $0x1f0] sm:$0xff]
  %v9015 = vld [vmem:[%s3 + $0x1f8] sm:$0xff]
  %v9016 = vld [vmem:[%s3 + $0x200] sm:$0xff]
  %v9017 = vld [vmem:[%s3 + $0x208] sm:$0xff]
  %v9018 = vld [vmem:[%s3 + $0x210] sm:$0xff]
  %v9019 = vld [vmem:[%s3 + $0x218] sm:$0xff]
  %v9020 = vld [vmem:[%s3 + $0x220] sm:$0xff]
  %v9021 = vld [vmem:[%s3 + $0x228] sm:$0xff]
  %v9022 = vld [vmem:[%s3 + $0x230] sm:$0xff]
  %v9023 = vld [vmem:[%s3 + $0x238] sm:$0xff]
  %v9024 = vld [vmem:[%s3 + $0x240] sm:$0xff]
  %v9025 = vld [vmem:[%s3 + $0x248] sm:$0xff]
  %v9026 = vld [vmem:[%s3 + $0x250] sm:$0xff]
  %v9027 = vld [vmem:[%s3 + $0x258] sm:$0xff]
  %v9028 = vld [vmem:[%s3 + $0x260] sm:$0xff]
  %v9029 = vld [vmem:[%s3 + $0x268] sm:$0xff]
  %v9030 = vld [vmem:[%s3 + $0x270] sm:$0xff]
  %v9031 = vld [vmem:[%s3 + $0x278] sm:$0xff]
  %v9032 = vld [vmem:[%s3 + $0x280] sm:$0xff]
  %v9033 = vld [vmem:[%s3 + $0x288] sm:$0xff]
  %v9034 = vld [vmem:[%s3 + $0x290] sm:$0xff]
  %v9035 = vld [vmem:[%s3 + $0x298] sm:$0xff]
  %v9036 = vld [vmem:[%s3 + $0x2a0] sm:$0xff]
  %v9037 = vld [vmem:[%s3 + $0x2a8] sm:$0xff]
  %v9038 = vld [vmem:[%s3 + $0x2b0] sm:$0xff]
  %v9039 = vld [vmem:[%s3 + $0x2b8] sm:$0xff]
  %v9040 = vld [vmem:[%s3 + $0x2c0] sm:$0xff]
  %v9041 = vld [vmem:[%s3 + $0x2c8] sm:$0xff]
  %v9042 = vld [vmem:[%s3 + $0x2d0] sm:$0xff]
  %v9043 = vld [vmem:[%s3 + $0x2d8] sm:$0xff]
  %v9044 = vld [vmem:[%s3 + $0x2e0] sm:$0xff]
  %v9045 = vld [vmem:[%s3 + $0x2e8] sm:$0xff]
  %v9046 = vld [vmem:[%s3 + $0x2f0] sm:$0xff]
  %v9047 = vld [vmem:[%s3 + $0x2f8] sm:$0xff]
  %v9048 = vld [vmem:[%s3 + $0x300] sm:$0xff]
  %v9049 = vld [vmem:[%s3 + $0x308] sm:$0xff]
  %v9050 = vld [vmem:[%s3 + $0x310] sm:$0xff]
  %v9051 = vld [vmem:[%s3 + $0x318] sm:$0xff]
  %v9052 = vld [vmem:[%s3 + $0x320] sm:$0xff]
  %v9053 = vld [vmem:[%s3 + $0x328] sm:$0xff]
  %v9054 = vld [vmem:[%s3 + $0x330] sm:$0xff]
  %v9055 = vld [vmem:[%s3 + $0x338] sm:$0xff]
  %v9056 = vld [vmem:[%s3 + $0x340] sm:$0xff]
  %v9057 = vld [vmem:[%s3 + $0x348] sm:$0xff]
  %v9058 = vld [vmem:[%s3 + $0x350] sm:$0xff]
  %v9059 = vld [vmem:[%s3 + $0x358] sm:$0xff]
  %v9060 = vld [vmem:[%s3 + $0x360] sm:$0xff]
  %v9061 = vld [vmem:[%s3 + $0x368] sm:$0xff]
  %v9062 = vld [vmem:[%s3 + $0x370] sm:$0xff]
  %v9063 = vld [vmem:[%s3 + $0x378] sm:$0xff]
  %v9064 = vld [vmem:[%s3 + $0x380] sm:$0xff]
  %v9065 = vld [vmem:[%s3 + $0x388] sm:$0xff]
  %v9066 = vld [vmem:[%s3 + $0x390] sm:$0xff]
  %v9067 = vld [vmem:[%s3 + $0x398] sm:$0xff]
  %v9068 = vld [vmem:[%s3 + $0x3a0] sm:$0xff]
  %v9069 = vld [vmem:[%s3 + $0x3a8] sm:$0xff]
  %v9070 = vld [vmem:[%s3 + $0x3b0] sm:$0xff]
  %v9071 = vld [vmem:[%s3 + $0x3b8] sm:$0xff]
  %v9072 = vld [vmem:[%s3 + $0x3c0] sm:$0xff]
  %v9073 = vld [vmem:[%s3 + $0x3c8] sm:$0xff]
  %v9074 = vld [vmem:[%s3 + $0x3d0] sm:$0xff]
  %v9075 = vld [vmem:[%s3 + $0x3d8] sm:$0xff]
  %v9076 = vld [vmem:[%s3 + $0x3e0] sm:$0xff]
  %v9077 = vld [vmem:[%s3 + $0x3e8] sm:$0xff]
  %v9078 = vld [vmem:[%s3 + $0x3f0] sm:$0xff]
  %v9079 = vld [vmem:[%s3 + $0x3f8] sm:$0xff]
  %v9208 = vunpack.c.l.b16 %v8952
  %v9209 = vunpack.c.h.b16 %v8952
  %v9210 = vunpack.c.l.b16 %v8953
  %v9211 = vunpack.c.h.b16 %v8953
  %v9212 = vunpack.c.l.b16 %v8954
  %v9213 = vunpack.c.h.b16 %v8954
  %v9214 = vunpack.c.l.b16 %v8955
  %v9215 = vunpack.c.h.b16 %v8955
  %v9216 = vunpack.c.l.b16 %v8956
  %v9217 = vunpack.c.h.b16 %v8956
  %v9218 = vunpack.c.l.b16 %v8957
  %v9219 = vunpack.c.h.b16 %v8957
  %v9220 = vunpack.c.l.b16 %v8958
  %v9221 = vunpack.c.h.b16 %v8958
  %v9222 = vunpack.c.l.b16 %v8959
  %v9223 = vunpack.c.h.b16 %v8959
  %v9224 = vunpack.c.l.b16 %v8960
  %v9225 = vunpack.c.h.b16 %v8960
  %v9226 = vunpack.c.l.b16 %v8961
  %v9227 = vunpack.c.h.b16 %v8961
  %v9228 = vunpack.c.l.b16 %v8962
  %v9229 = vunpack.c.h.b16 %v8962
  %v9230 = vunpack.c.l.b16 %v8963
  %v9231 = vunpack.c.h.b16 %v8963
  %v9232 = vunpack.c.l.b16 %v8964
  %v9233 = vunpack.c.h.b16 %v8964
  %v9234 = vunpack.c.l.b16 %v8965
  %v9235 = vunpack.c.h.b16 %v8965
  %v9236 = vunpack.c.l.b16 %v8966
  %v9237 = vunpack.c.h.b16 %v8966
  %v9238 = vunpack.c.l.b16 %v8967
  %v9239 = vunpack.c.h.b16 %v8967
  %v9240 = vunpack.c.l.b16 %v8968
  %v9241 = vunpack.c.h.b16 %v8968
  %v9242 = vunpack.c.l.b16 %v8969
  %v9243 = vunpack.c.h.b16 %v8969
  %v9244 = vunpack.c.l.b16 %v8970
  %v9245 = vunpack.c.h.b16 %v8970
  %v9246 = vunpack.c.l.b16 %v8971
  %v9247 = vunpack.c.h.b16 %v8971
  %v9248 = vunpack.c.l.b16 %v8972
  %v9249 = vunpack.c.h.b16 %v8972
  %v9250 = vunpack.c.l.b16 %v8973
  %v9251 = vunpack.c.h.b16 %v8973
  %v9252 = vunpack.c.l.b16 %v8974
  %v9253 = vunpack.c.h.b16 %v8974
  %v9254 = vunpack.c.l.b16 %v8975
  %v9255 = vunpack.c.h.b16 %v8975
  %v9256 = vunpack.c.l.b16 %v8976
  %v9257 = vunpack.c.h.b16 %v8976
  %v9258 = vunpack.c.l.b16 %v8977
  %v9259 = vunpack.c.h.b16 %v8977
  %v9260 = vunpack.c.l.b16 %v8978
  %v9261 = vunpack.c.h.b16 %v8978
  %v9262 = vunpack.c.l.b16 %v8979
  %v9263 = vunpack.c.h.b16 %v8979
  %v9264 = vunpack.c.l.b16 %v8980
  %v9265 = vunpack.c.h.b16 %v8980
  %v9266 = vunpack.c.l.b16 %v8981
  %v9267 = vunpack.c.h.b16 %v8981
  %v9268 = vunpack.c.l.b16 %v8982
  %v9269 = vunpack.c.h.b16 %v8982
  %v9270 = vunpack.c.l.b16 %v8983
  %v9271 = vunpack.c.h.b16 %v8983
  %v9272 = vunpack.c.l.b16 %v8984
  %v9273 = vunpack.c.h.b16 %v8984
  %v9274 = vunpack.c.l.b16 %v8985
  %v9275 = vunpack.c.h.b16 %v8985
  %v9276 = vunpack.c.l.b16 %v8986
  %v9277 = vunpack.c.h.b16 %v8986
  %v9278 = vunpack.c.l.b16 %v8987
  %v9279 = vunpack.c.h.b16 %v8987
  %v9280 = vunpack.c.l.b16 %v8988
  %v9281 = vunpack.c.h.b16 %v8988
  %v9282 = vunpack.c.l.b16 %v8989
  %v9283 = vunpack.c.h.b16 %v8989
  %v9284 = vunpack.c.l.b16 %v8990
  %v9285 = vunpack.c.h.b16 %v8990
  %v9286 = vunpack.c.l.b16 %v8991
  %v9287 = vunpack.c.h.b16 %v8991
  %v9288 = vunpack.c.l.b16 %v8992
  %v9289 = vunpack.c.h.b16 %v8992
  %v9290 = vunpack.c.l.b16 %v8993
  %v9291 = vunpack.c.h.b16 %v8993
  %v9292 = vunpack.c.l.b16 %v8994
  %v9293 = vunpack.c.h.b16 %v8994
  %v9294 = vunpack.c.l.b16 %v8995
  %v9295 = vunpack.c.h.b16 %v8995
  %v9296 = vunpack.c.l.b16 %v8996
  %v9297 = vunpack.c.h.b16 %v8996
  %v9298 = vunpack.c.l.b16 %v8997
  %v9299 = vunpack.c.h.b16 %v8997
  %v9300 = vunpack.c.l.b16 %v8998
  %v9301 = vunpack.c.h.b16 %v8998
  %v9302 = vunpack.c.l.b16 %v8999
  %v9303 = vunpack.c.h.b16 %v8999
  %v9304 = vunpack.c.l.b16 %v9000
  %v9305 = vunpack.c.h.b16 %v9000
  %v9306 = vunpack.c.l.b16 %v9001
  %v9307 = vunpack.c.h.b16 %v9001
  %v9308 = vunpack.c.l.b16 %v9002
  %v9309 = vunpack.c.h.b16 %v9002
  %v9310 = vunpack.c.l.b16 %v9003
  %v9311 = vunpack.c.h.b16 %v9003
  %v9312 = vunpack.c.l.b16 %v9004
  %v9313 = vunpack.c.h.b16 %v9004
  %v9314 = vunpack.c.l.b16 %v9005
  %v9315 = vunpack.c.h.b16 %v9005
  %v9316 = vunpack.c.l.b16 %v9006
  %v9317 = vunpack.c.h.b16 %v9006
  %v9318 = vunpack.c.l.b16 %v9007
  %v9319 = vunpack.c.h.b16 %v9007
  %v9320 = vunpack.c.l.b16 %v9008
  %v9321 = vunpack.c.h.b16 %v9008
  %v9322 = vunpack.c.l.b16 %v9009
  %v9323 = vunpack.c.h.b16 %v9009
  %v9324 = vunpack.c.l.b16 %v9010
  %v9325 = vunpack.c.h.b16 %v9010
  %v9326 = vunpack.c.l.b16 %v9011
  %v9327 = vunpack.c.h.b16 %v9011
  %v9328 = vunpack.c.l.b16 %v9012
  %v9329 = vunpack.c.h.b16 %v9012
  %v9330 = vunpack.c.l.b16 %v9013
  %v9331 = vunpack.c.h.b16 %v9013
  %v9332 = vunpack.c.l.b16 %v9014
  %v9333 = vunpack.c.h.b16 %v9014
  %v9334 = vunpack.c.l.b16 %v9015
  %v9335 = vunpack.c.h.b16 %v9015
  %v9336 = vunpack.c.l.b16 %v9016
  %v9337 = vunpack.c.h.b16 %v9016
  %v9338 = vunpack.c.l.b16 %v9017
  %v9339 = vunpack.c.h.b16 %v9017
  %v9340 = vunpack.c.l.b16 %v9018
  %v9341 = vunpack.c.h.b16 %v9018
  %v9342 = vunpack.c.l.b16 %v9019
  %v9343 = vunpack.c.h.b16 %v9019
  %v9344 = vunpack.c.l.b16 %v9020
  %v9345 = vunpack.c.h.b16 %v9020
  %v9346 = vunpack.c.l.b16 %v9021
  %v9347 = vunpack.c.h.b16 %v9021
  %v9348 = vunpack.c.l.b16 %v9022
  %v9349 = vunpack.c.h.b16 %v9022
  %v9350 = vunpack.c.l.b16 %v9023
  %v9351 = vunpack.c.h.b16 %v9023
  %v9352 = vunpack.c.l.b16 %v9024
  %v9353 = vunpack.c.h.b16 %v9024
  %v9354 = vunpack.c.l.b16 %v9025
  %v9355 = vunpack.c.h.b16 %v9025
  %v9356 = vunpack.c.l.b16 %v9026
  %v9357 = vunpack.c.h.b16 %v9026
  %v9358 = vunpack.c.l.b16 %v9027
  %v9359 = vunpack.c.h.b16 %v9027
  %v9360 = vunpack.c.l.b16 %v9028
  %v9361 = vunpack.c.h.b16 %v9028
  %v9362 = vunpack.c.l.b16 %v9029
  %v9363 = vunpack.c.h.b16 %v9029
  %v9364 = vunpack.c.l.b16 %v9030
  %v9365 = vunpack.c.h.b16 %v9030
  %v9366 = vunpack.c.l.b16 %v9031
  %v9367 = vunpack.c.h.b16 %v9031
  %v9368 = vunpack.c.l.b16 %v9032
  %v9369 = vunpack.c.h.b16 %v9032
  %v9370 = vunpack.c.l.b16 %v9033
  %v9371 = vunpack.c.h.b16 %v9033
  %v9372 = vunpack.c.l.b16 %v9034
  %v9373 = vunpack.c.h.b16 %v9034
  %v9374 = vunpack.c.l.b16 %v9035
  %v9375 = vunpack.c.h.b16 %v9035
  %v9376 = vunpack.c.l.b16 %v9036
  %v9377 = vunpack.c.h.b16 %v9036
  %v9378 = vunpack.c.l.b16 %v9037
  %v9379 = vunpack.c.h.b16 %v9037
  %v9380 = vunpack.c.l.b16 %v9038
  %v9381 = vunpack.c.h.b16 %v9038
  %v9382 = vunpack.c.l.b16 %v9039
  %v9383 = vunpack.c.h.b16 %v9039
  %v9384 = vunpack.c.l.b16 %v9040
  %v9385 = vunpack.c.h.b16 %v9040
  %v9386 = vunpack.c.l.b16 %v9041
  %v9387 = vunpack.c.h.b16 %v9041
  %v9388 = vunpack.c.l.b16 %v9042
  %v9389 = vunpack.c.h.b16 %v9042
  %v9390 = vunpack.c.l.b16 %v9043
  %v9391 = vunpack.c.h.b16 %v9043
  %v9392 = vunpack.c.l.b16 %v9044
  %v9393 = vunpack.c.h.b16 %v9044
  %v9394 = vunpack.c.l.b16 %v9045
  %v9395 = vunpack.c.h.b16 %v9045
  %v9396 = vunpack.c.l.b16 %v9046
  %v9397 = vunpack.c.h.b16 %v9046
  %v9398 = vunpack.c.l.b16 %v9047
  %v9399 = vunpack.c.h.b16 %v9047
  %v9400 = vunpack.c.l.b16 %v9048
  %v9401 = vunpack.c.h.b16 %v9048
  %v9402 = vunpack.c.l.b16 %v9049
  %v9403 = vunpack.c.h.b16 %v9049
  %v9404 = vunpack.c.l.b16 %v9050
  %v9405 = vunpack.c.h.b16 %v9050
  %v9406 = vunpack.c.l.b16 %v9051
  %v9407 = vunpack.c.h.b16 %v9051
  %v9408 = vunpack.c.l.b16 %v9052
  %v9409 = vunpack.c.h.b16 %v9052
  %v9410 = vunpack.c.l.b16 %v9053
  %v9411 = vunpack.c.h.b16 %v9053
  %v9412 = vunpack.c.l.b16 %v9054
  %v9413 = vunpack.c.h.b16 %v9054
  %v9414 = vunpack.c.l.b16 %v9055
  %v9415 = vunpack.c.h.b16 %v9055
  %v9416 = vunpack.c.l.b16 %v9056
  %v9417 = vunpack.c.h.b16 %v9056
  %v9418 = vunpack.c.l.b16 %v9057
  %v9419 = vunpack.c.h.b16 %v9057
  %v9420 = vunpack.c.l.b16 %v9058
  %v9421 = vunpack.c.h.b16 %v9058
  %v9422 = vunpack.c.l.b16 %v9059
  %v9423 = vunpack.c.h.b16 %v9059
  %v9424 = vunpack.c.l.b16 %v9060
  %v9425 = vunpack.c.h.b16 %v9060
  %v9426 = vunpack.c.l.b16 %v9061
  %v9427 = vunpack.c.h.b16 %v9061
  %v9428 = vunpack.c.l.b16 %v9062
  %v9429 = vunpack.c.h.b16 %v9062
  %v9430 = vunpack.c.l.b16 %v9063
  %v9431 = vunpack.c.h.b16 %v9063
  %v9432 = vunpack.c.l.b16 %v9064
  %v9433 = vunpack.c.h.b16 %v9064
  %v9434 = vunpack.c.l.b16 %v9065
  %v9435 = vunpack.c.h.b16 %v9065
  %v9436 = vunpack.c.l.b16 %v9066
  %v9437 = vunpack.c.h.b16 %v9066
  %v9438 = vunpack.c.l.b16 %v9067
  %v9439 = vunpack.c.h.b16 %v9067
  %v9440 = vunpack.c.l.b16 %v9068
  %v9441 = vunpack.c.h.b16 %v9068
  %v9442 = vunpack.c.l.b16 %v9069
  %v9443 = vunpack.c.h.b16 %v9069
  %v9444 = vunpack.c.l.b16 %v9070
  %v9445 = vunpack.c.h.b16 %v9070
  %v9446 = vunpack.c.l.b16 %v9071
  %v9447 = vunpack.c.h.b16 %v9071
  %v9448 = vunpack.c.l.b16 %v9072
  %v9449 = vunpack.c.h.b16 %v9072
  %v9450 = vunpack.c.l.b16 %v9073
  %v9451 = vunpack.c.h.b16 %v9073
  %v9452 = vunpack.c.l.b16 %v9074
  %v9453 = vunpack.c.h.b16 %v9074
  %v9454 = vunpack.c.l.b16 %v9075
  %v9455 = vunpack.c.h.b16 %v9075
  %v9456 = vunpack.c.l.b16 %v9076
  %v9457 = vunpack.c.h.b16 %v9076
  %v9458 = vunpack.c.l.b16 %v9077
  %v9459 = vunpack.c.h.b16 %v9077
  %v9460 = vunpack.c.l.b16 %v9078
  %v9461 = vunpack.c.h.b16 %v9078
  %v9462 = vunpack.c.l.b16 %v9079
  %v9463 = vunpack.c.h.b16 %v9079
  %v9464 = vpack.c.b16 %v9216, %v9208
  %v9465 = vpack.c.b16 %v9217, %v9209
  %v9466 = vpack.c.b16 %v9218, %v9210
  %v9467 = vpack.c.b16 %v9219, %v9211
  %v9468 = vpack.c.b16 %v9220, %v9212
  %v9469 = vpack.c.b16 %v9221, %v9213
  %v9470 = vpack.c.b16 %v9222, %v9214
  %v9471 = vpack.c.b16 %v9223, %v9215
  %v9472 = vpack.c.b16 %v9232, %v9224
  %v9473 = vpack.c.b16 %v9233, %v9225
  %v9474 = vpack.c.b16 %v9234, %v9226
  %v9475 = vpack.c.b16 %v9235, %v9227
  %v9476 = vpack.c.b16 %v9236, %v9228
  %v9477 = vpack.c.b16 %v9237, %v9229
  %v9478 = vpack.c.b16 %v9238, %v9230
  %v9479 = vpack.c.b16 %v9239, %v9231
  %v9480 = vpack.c.b16 %v9248, %v9240
  %v9481 = vpack.c.b16 %v9249, %v9241
  %v9482 = vpack.c.b16 %v9250, %v9242
  %v9483 = vpack.c.b16 %v9251, %v9243
  %v9484 = vpack.c.b16 %v9252, %v9244
  %v9485 = vpack.c.b16 %v9253, %v9245
  %v9486 = vpack.c.b16 %v9254, %v9246
  %v9487 = vpack.c.b16 %v9255, %v9247
  %v9488 = vpack.c.b16 %v9264, %v9256
  %v9489 = vpack.c.b16 %v9265, %v9257
  %v9490 = vpack.c.b16 %v9266, %v9258
  %v9491 = vpack.c.b16 %v9267, %v9259
  %v9492 = vpack.c.b16 %v9268, %v9260
  %v9493 = vpack.c.b16 %v9269, %v9261
  %v9494 = vpack.c.b16 %v9270, %v9262
  %v9495 = vpack.c.b16 %v9271, %v9263
  %v9496 = vpack.c.b16 %v9280, %v9272
  %v9497 = vpack.c.b16 %v9281, %v9273
  %v9498 = vpack.c.b16 %v9282, %v9274
  %v9499 = vpack.c.b16 %v9283, %v9275
  %v9500 = vpack.c.b16 %v9284, %v9276
  %v9501 = vpack.c.b16 %v9285, %v9277
  %v9502 = vpack.c.b16 %v9286, %v9278
  %v9503 = vpack.c.b16 %v9287, %v9279
  %v9504 = vpack.c.b16 %v9296, %v9288
  %v9505 = vpack.c.b16 %v9297, %v9289
  %v9506 = vpack.c.b16 %v9298, %v9290
  %v9507 = vpack.c.b16 %v9299, %v9291
  %v9508 = vpack.c.b16 %v9300, %v9292
  %v9509 = vpack.c.b16 %v9301, %v9293
  %v9510 = vpack.c.b16 %v9302, %v9294
  %v9511 = vpack.c.b16 %v9303, %v9295
  %v9512 = vpack.c.b16 %v9312, %v9304
  %v9513 = vpack.c.b16 %v9313, %v9305
  %v9514 = vpack.c.b16 %v9314, %v9306
  %v9515 = vpack.c.b16 %v9315, %v9307
  %v9516 = vpack.c.b16 %v9316, %v9308
  %v9517 = vpack.c.b16 %v9317, %v9309
  %v9518 = vpack.c.b16 %v9318, %v9310
  %v9519 = vpack.c.b16 %v9319, %v9311
  %v9520 = vpack.c.b16 %v9328, %v9320
  %v9521 = vpack.c.b16 %v9329, %v9321
  %v9522 = vpack.c.b16 %v9330, %v9322
  %v9523 = vpack.c.b16 %v9331, %v9323
  %v9524 = vpack.c.b16 %v9332, %v9324
  %v9525 = vpack.c.b16 %v9333, %v9325
  %v9526 = vpack.c.b16 %v9334, %v9326
  %v9527 = vpack.c.b16 %v9335, %v9327
  %v9528 = vpack.c.b16 %v9344, %v9336
  %v9529 = vpack.c.b16 %v9345, %v9337
  %v9530 = vpack.c.b16 %v9346, %v9338
  %v9531 = vpack.c.b16 %v9347, %v9339
  %v9532 = vpack.c.b16 %v9348, %v9340
  %v9533 = vpack.c.b16 %v9349, %v9341
  %v9534 = vpack.c.b16 %v9350, %v9342
  %v9535 = vpack.c.b16 %v9351, %v9343
  %v9536 = vpack.c.b16 %v9360, %v9352
  %v9537 = vpack.c.b16 %v9361, %v9353
  %v9538 = vpack.c.b16 %v9362, %v9354
  %v9539 = vpack.c.b16 %v9363, %v9355
  %v9540 = vpack.c.b16 %v9364, %v9356
  %v9541 = vpack.c.b16 %v9365, %v9357
  %v9542 = vpack.c.b16 %v9366, %v9358
  %v9543 = vpack.c.b16 %v9367, %v9359
  %v9544 = vpack.c.b16 %v9376, %v9368
  %v9545 = vpack.c.b16 %v9377, %v9369
  %v9546 = vpack.c.b16 %v9378, %v9370
  %v9547 = vpack.c.b16 %v9379, %v9371
  %v9548 = vpack.c.b16 %v9380, %v9372
  %v9549 = vpack.c.b16 %v9381, %v9373
  %v9550 = vpack.c.b16 %v9382, %v9374
  %v9551 = vpack.c.b16 %v9383, %v9375
  %v9552 = vpack.c.b16 %v9392, %v9384
  %v9553 = vpack.c.b16 %v9393, %v9385
  %v9554 = vpack.c.b16 %v9394, %v9386
  %v9555 = vpack.c.b16 %v9395, %v9387
  %v9556 = vpack.c.b16 %v9396, %v9388
  %v9557 = vpack.c.b16 %v9397, %v9389
  %v9558 = vpack.c.b16 %v9398, %v9390
  %v9559 = vpack.c.b16 %v9399, %v9391
  %v9560 = vpack.c.b16 %v9408, %v9400
  %v9561 = vpack.c.b16 %v9409, %v9401
  %v9562 = vpack.c.b16 %v9410, %v9402
  %v9563 = vpack.c.b16 %v9411, %v9403
  %v9564 = vpack.c.b16 %v9412, %v9404
  %v9565 = vpack.c.b16 %v9413, %v9405
  %v9566 = vpack.c.b16 %v9414, %v9406
  %v9567 = vpack.c.b16 %v9415, %v9407
  %v9568 = vpack.c.b16 %v9424, %v9416
  %v9569 = vpack.c.b16 %v9425, %v9417
  %v9570 = vpack.c.b16 %v9426, %v9418
  %v9571 = vpack.c.b16 %v9427, %v9419
  %v9572 = vpack.c.b16 %v9428, %v9420
  %v9573 = vpack.c.b16 %v9429, %v9421
  %v9574 = vpack.c.b16 %v9430, %v9422
  %v9575 = vpack.c.b16 %v9431, %v9423
  %v9576 = vpack.c.b16 %v9440, %v9432
  %v9577 = vpack.c.b16 %v9441, %v9433
  %v9578 = vpack.c.b16 %v9442, %v9434
  %v9579 = vpack.c.b16 %v9443, %v9435
  %v9580 = vpack.c.b16 %v9444, %v9436
  %v9581 = vpack.c.b16 %v9445, %v9437
  %v9582 = vpack.c.b16 %v9446, %v9438
  %v9583 = vpack.c.b16 %v9447, %v9439
  %v9584 = vpack.c.b16 %v9456, %v9448
  %v9585 = vpack.c.b16 %v9457, %v9449
  %v9586 = vpack.c.b16 %v9458, %v9450
  %v9587 = vpack.c.b16 %v9459, %v9451
  %v9588 = vpack.c.b16 %v9460, %v9452
  %v9589 = vpack.c.b16 %v9461, %v9453
  %v9590 = vpack.c.b16 %v9462, %v9454
  %v9591 = vpack.c.b16 %v9463, %v9455
  %9720 = vmatprep.subr.bf16.mxu0 %v9465
  %9721 = vmatpush1.bf16.msra.mxu0 %v9464
  %9722 = vmatprep.subr.bf16.mxu0 %v9473
  %9723 = vmatpush1.bf16.msra.mxu0 %v9472
  %9724 = vmatprep.subr.bf16.mxu0 %v9481
  %9725 = vmatpush1.bf16.msra.mxu0 %v9480
  %9726 = vmatprep.subr.bf16.mxu0 %v9489
  %9727 = vmatpush1.bf16.msra.mxu0 %v9488
  %9728 = vmatprep.subr.bf16.mxu0 %v9497
  %9729 = vmatpush1.bf16.msra.mxu0 %v9496
  %9730 = vmatprep.subr.bf16.mxu0 %v9505
  %9731 = vmatpush1.bf16.msra.mxu0 %v9504
  %9732 = vmatprep.subr.bf16.mxu0 %v9513
  %9733 = vmatpush1.bf16.msra.mxu0 %v9512
  %9734 = vmatprep.subr.bf16.mxu0 %v9521
  %9735 = vmatpush1.bf16.msra.mxu0 %v9520
  %9736 = vmatprep.subr.bf16.mxu0 %v9529
  %9737 = vmatpush1.bf16.msra.mxu0 %v9528
  %9738 = vmatprep.subr.bf16.mxu0 %v9537
  %9739 = vmatpush1.bf16.msra.mxu0 %v9536
  %9740 = vmatprep.subr.bf16.mxu0 %v9545
  %9741 = vmatpush1.bf16.msra.mxu0 %v9544
  %9742 = vmatprep.subr.bf16.mxu0 %v9553
  %9743 = vmatpush1.bf16.msra.mxu0 %v9552
  %9744 = vmatprep.subr.bf16.mxu0 %v9561
  %9745 = vmatpush1.bf16.msra.mxu0 %v9560
  %9746 = vmatprep.subr.bf16.mxu0 %v9569
  %9747 = vmatpush1.bf16.msra.mxu0 %v9568
  %9748 = vmatprep.subr.bf16.mxu0 %v9577
  %9749 = vmatpush1.bf16.msra.mxu0 %v9576
  %9750 = vmatprep.subr.bf16.mxu0 %v9585
  %9751 = vmatpush1.bf16.msra.mxu0 %v9584
  %9752 = vmatprep.mubr.bf16.mxu0 %v8951
  %9753 = vmatmul.mubr.bf16.gmra.mrb[0].mxu0 %v8950
  %v9754 = vpop.f32.mrb[0].mxu0
  %v9755 = vadd.f32 0.0, %v9754
  %v9756 = vpop.f32.mrb[0].mxu0
  %v9757 = vadd.f32 0.0, %v9756
  %v9758 = vpop.f32.mrb[0].mxu0
  %v9759 = vpop.f32.mrb[0].mxu0
  %9760 = vdwg.mxu0
  %9761 = vmatprep.subr.bf16.mxu0 %v9467
  %9762 = vmatpush1.bf16.msra.mxu0 %v9466
  %9763 = vmatprep.subr.bf16.mxu0 %v9475
  %9764 = vmatpush1.bf16.msra.mxu0 %v9474
  %9765 = vmatprep.subr.bf16.mxu0 %v9483
  %9766 = vmatpush1.bf16.msra.mxu0 %v9482
  %9767 = vmatprep.subr.bf16.mxu0 %v9491
  %9768 = vmatpush1.bf16.msra.mxu0 %v9490
  %9769 = vmatprep.subr.bf16.mxu0 %v9499
  %9770 = vmatpush1.bf16.msra.mxu0 %v9498
  %9771 = vmatprep.subr.bf16.mxu0 %v9507
  %9772 = vmatpush1.bf16.msra.mxu0 %v9506
  %9773 = vmatprep.subr.bf16.mxu0 %v9515
  %9774 = vmatpush1.bf16.msra.mxu0 %v9514
  %9775 = vmatprep.subr.bf16.mxu0 %v9523
  %9776 = vmatpush1.bf16.msra.mxu0 %v9522
  %9777 = vmatprep.subr.bf16.mxu0 %v9531
  %9778 = vmatpush1.bf16.msra.mxu0 %v9530
  %9779 = vmatprep.subr.bf16.mxu0 %v9539
  %9780 = vmatpush1.bf16.msra.mxu0 %v9538
  %9781 = vmatprep.subr.bf16.mxu0 %v9547
  %9782 = vmatpush1.bf16.msra.mxu0 %v9546
  %9783 = vmatprep.subr.bf16.mxu0 %v9555
  %9784 = vmatpush1.bf16.msra.mxu0 %v9554
  %9785 = vmatprep.subr.bf16.mxu0 %v9563
  %9786 = vmatpush1.bf16.msra.mxu0 %v9562
  %9787 = vmatprep.subr.bf16.mxu0 %v9571
  %9788 = vmatpush1.bf16.msra.mxu0 %v9570
  %9789 = vmatprep.subr.bf16.mxu0 %v9579
  %9790 = vmatpush1.bf16.msra.mxu0 %v9578
  %9791 = vmatprep.subr.bf16.mxu0 %v9587
  %9792 = vmatpush1.bf16.msra.mxu0 %v9586
  %9793 = vmatprep.mubr.bf16.mxu0 %v8951
  %9794 = vmatmul.mubr.bf16.gmra.mrb[0].mxu0 %v8950
  %v9795 = vpop.f32.mrb[0].mxu0
  %v9796 = vadd.f32 0.0, %v9795
  %v9797 = vpop.f32.mrb[0].mxu0
  %v9798 = vadd.f32 0.0, %v9797
  %v9799 = vpop.f32.mrb[0].mxu0
  %v9800 = vpop.f32.mrb[0].mxu0
  %9801 = vdwg.mxu0
  %9802 = vmatprep.subr.bf16.mxu0 %v9469
  %9803 = vmatpush1.bf16.msra.mxu0 %v9468
  %9804 = vmatprep.subr.bf16.mxu0 %v9477
  %9805 = vmatpush1.bf16.msra.mxu0 %v9476
  %9806 = vmatprep.subr.bf16.mxu0 %v9485
  %9807 = vmatpush1.bf16.msra.mxu0 %v9484
  %9808 = vmatprep.subr.bf16.mxu0 %v9493
  %9809 = vmatpush1.bf16.msra.mxu0 %v9492
  %9810 = vmatprep.subr.bf16.mxu0 %v9501
  %9811 = vmatpush1.bf16.msra.mxu0 %v9500
  %9812 = vmatprep.subr.bf16.mxu0 %v9509
  %9813 = vmatpush1.bf16.msra.mxu0 %v9508
  %9814 = vmatprep.subr.bf16.mxu0 %v9517
  %9815 = vmatpush1.bf16.msra.mxu0 %v9516
  %9816 = vmatprep.subr.bf16.mxu0 %v9525
  %9817 = vmatpush1.bf16.msra.mxu0 %v9524
  %9818 = vmatprep.subr.bf16.mxu0 %v9533
  %9819 = vmatpush1.bf16.msra.mxu0 %v9532
  %9820 = vmatprep.subr.bf16.mxu0 %v9541
  %9821 = vmatpush1.bf16.msra.mxu0 %v9540
  %9822 = vmatprep.subr.bf16.mxu0 %v9549
  %9823 = vmatpush1.bf16.msra.mxu0 %v9548
  %9824 = vmatprep.subr.bf16.mxu0 %v9557
  %9825 = vmatpush1.bf16.msra.mxu0 %v9556
  %9826 = vmatprep.subr.bf16.mxu0 %v9565
  %9827 = vmatpush1.bf16.msra.mxu0 %v9564
  %9828 = vmatprep.subr.bf16.mxu0 %v9573
  %9829 = vmatpush1.bf16.msra.mxu0 %v9572
  %9830 = vmatprep.subr.bf16.mxu0 %v9581
  %9831 = vmatpush1.bf16.msra.mxu0 %v9580
  %9832 = vmatprep.subr.bf16.mxu0 %v9589
  %9833 = vmatpush1.bf16.msra.mxu0 %v9588
  %9834 = vmatprep.mubr.bf16.mxu0 %v8951
  %9835 = vmatmul.mubr.bf16.gmra.mrb[0].mxu0 %v8950
  %v9836 = vpop.f32.mrb[0].mxu0
  %v9837 = vadd.f32 0.0, %v9836
  %v9838 = vpop.f32.mrb[0].mxu0
  %v9839 = vadd.f32 0.0, %v9838
  %v9840 = vpop.f32.mrb[0].mxu0
  %v9841 = vpop.f32.mrb[0].mxu0
  %9842 = vdwg.mxu0
  %9843 = vmatprep.subr.bf16.mxu0 %v9471
  %9844 = vmatpush1.bf16.msra.mxu0 %v9470
  %9845 = vmatprep.subr.bf16.mxu0 %v9479
  %9846 = vmatpush1.bf16.msra.mxu0 %v9478
  %9847 = vmatprep.subr.bf16.mxu0 %v9487
  %9848 = vmatpush1.bf16.msra.mxu0 %v9486
  %9849 = vmatprep.subr.bf16.mxu0 %v9495
  %9850 = vmatpush1.bf16.msra.mxu0 %v9494
  %9851 = vmatprep.subr.bf16.mxu0 %v9503
  %9852 = vmatpush1.bf16.msra.mxu0 %v9502
  %9853 = vmatprep.subr.bf16.mxu0 %v9511
  %9854 = vmatpush1.bf16.msra.mxu0 %v9510
  %9855 = vmatprep.subr.bf16.mxu0 %v9519
  %9856 = vmatpush1.bf16.msra.mxu0 %v9518
  %9857 = vmatprep.subr.bf16.mxu0 %v9527
  %9858 = vmatpush1.bf16.msra.mxu0 %v9526
  %9859 = vmatprep.subr.bf16.mxu0 %v9535
  %9860 = vmatpush1.bf16.msra.mxu0 %v9534
  %9861 = vmatprep.subr.bf16.mxu0 %v9543
  %9862 = vmatpush1.bf16.msra.mxu0 %v9542
  %9863 = vmatprep.subr.bf16.mxu0 %v9551
  %9864 = vmatpush1.bf16.msra.mxu0 %v9550
  %9865 = vmatprep.subr.bf16.mxu0 %v9559
  %9866 = vmatpush1.bf16.msra.mxu0 %v9558
  %9867 = vmatprep.subr.bf16.mxu0 %v9567
  %9868 = vmatpush1.bf16.msra.mxu0 %v9566
  %9869 = vmatprep.subr.bf16.mxu0 %v9575
  %9870 = vmatpush1.bf16.msra.mxu0 %v9574
  %9871 = vmatprep.subr.bf16.mxu0 %v9583
  %9872 = vmatpush1.bf16.msra.mxu0 %v9582
  %9873 = vmatprep.subr.bf16.mxu0 %v9591
  %9874 = vmatpush1.bf16.msra.mxu0 %v9590
  %9875 = vmatprep.mubr.bf16.mxu0 %v8951
  %9876 = vmatmul.mubr.bf16.gmra.mrb[0].mxu0 %v8950
  %v9877 = vpop.f32.mrb[0].mxu0
  %v9878 = vadd.f32 0.0, %v9877
  %v9879 = vpop.f32.mrb[0].mxu0
  %v9880 = vadd.f32 0.0, %v9879
  %v9881 = vpop.f32.mrb[0].mxu0
  %v9882 = vpop.f32.mrb[0].mxu0
  %9883 = vdwg.mxu0
  %v9892 = vcombine.low %v9755, %v9757
  %v9893 = vcombine.low %v9796, %v9798
  %v9895 = vunpack.c.l.s4 1983009808
  %v9896 = vunpack.c.0.s8 %v9895
  %v9897 = vlaneseq
  %v9898 = vshrl.u32 %v9897, 7
  %v9899 = vsub.s32 %v9896, %v9898
  %v9900 = vrot.slane %v9892, %v9899
  %v9902 = vunpack.c.l.s4 1983009808
  %v9903 = vunpack.c.0.s8 %v9902
  %v9904 = vlaneseq
  %v9905 = vshrl.u32 %v9904, 7
  %v9906 = vsub.s32 %v9903, %v9905
  %v9907 = vrot.slane %v9893, %v9906
  %v9908 = vcombine.low %v9900, %v9907
  %v9909 = vcombine.low %v9837, %v9839
  %v9910 = vcombine.low %v9878, %v9880
  %v9912 = vunpack.c.l.s4 1983009808
  %v9913 = vunpack.c.0.s8 %v9912
  %v9914 = vlaneseq
  %v9915 = vshrl.u32 %v9914, 7
  %v9916 = vsub.s32 %v9913, %v9915
  %v9917 = vrot.slane %v9909, %v9916
  %v9919 = vunpack.c.l.s4 1983009808
  %v9920 = vunpack.c.0.s8 %v9919
  %v9921 = vlaneseq
  %v9922 = vshrl.u32 %v9921, 7
  %v9923 = vsub.s32 %v9920, %v9922
  %v9924 = vrot.slane %v9910, %v9923
  %v9925 = vcombine.low %v9917, %v9924
  %9928 = vst [vmem:[%s4] sm:$0xff] %v9908
  %9929 = vst [vmem:[%s4 + $0x8] sm:$0xff] %v9925
  // Predicated region
  $region18: #{medsam_forward.1} parent=0 // pred_check
    _
  $region19: #{medsam_forward.1} parent=0 // pred_check_branch
    %9931 = sbr.rel (0) target = $region21
  $region20: #{medsam_forward.1} parent=0 // pred_region
    _
  $region21: #{medsam_forward.1} parent=0 // pred_fallthru
    _
  // Predicated region
  $region22: #{medsam_forward.1} parent=0 // pred_check
    _
  $region23: #{medsam_forward.1} parent=0 // pred_check_branch
    %9933 = sbr.rel (0) target = $region25
  $region24: #{medsam_forward.1} parent=0 // pred_region
    _
  $region25: #{medsam_forward.1} parent=0 // pred_fallthru
    _

</llo_original>
